<compile_context>
chip_gen: v7x
topology: tpu7x:2x2x1
jax: 0.10.0
libtpu: 0.0.40
codegen_flags: <defaults>
</compile_context>

<pallas_src>
import jax
import jax.numpy as jnp
from jax.experimental import pallas as pl
from jax.experimental.pallas import tpu as pltpu

BN_EPS = 1e-5
VMEM_LIMIT_BYTES = 32 * 1024 * 1024    # requested scoped VMEM (safe on v5e/v6e/v7x)
VMEM_BUDGET_BYTES = 20 * 1024 * 1024   # what tiles are sized against (headroom)
MAX_TM = 1024


def _round_up(x, m):
    return ((x + m - 1) // m) * m


# ----------------------------- Pallas kernels ------------------------------ #

def _mm_stats_kernel(p_ref, w_ref, y_ref, s_ref):
    # p_ref: (TM, K) bf16 patches, w_ref: (K, Cpad) bf16 weights (resident).
    y = jnp.dot(p_ref[...], w_ref[...], preferred_element_type=jnp.float32)
    y_ref[...] = y
    # Per-tile BatchNorm partial stats (finalized in the wrapper).
    s_ref[...] = jnp.concatenate(
        [jnp.sum(y, axis=0, keepdims=True),
         jnp.sum(y * y, axis=0, keepdims=True)], axis=0)


def _bn_relu_kernel(y_ref, sc_ref, sh_ref, o_ref):
    # BN affine folded into per-channel scale/shift: one mul + one add + ReLU.
    o_ref[...] = jnp.maximum(y_ref[...] * sc_ref[...] + sh_ref[...], 0.0)


def _mm_bias_tanh_kernel(p_ref, w_ref, b_ref, o_ref):
    y = jnp.dot(p_ref[...], w_ref[...], preferred_element_type=jnp.float32)
    o_ref[...] = jnp.tanh(y + b_ref[...])


# --------------------------- pallas_call wrappers --------------------------- #

def _cparams():
    return pltpu.CompilerParams(
        dimension_semantics=("parallel", "parallel"),
        vmem_limit_bytes=VMEM_LIMIT_BYTES)


def _choose_tm(m, kdim, cpad):
    """Largest row-tile (multiple of 8, <= MAX_TM) that fits the VMEM budget
    with double buffering of patches/outputs and resident bf16 weights."""
    fixed = 2 * kdim * cpad * 2                 # weights, both pipeline buffers
    per_row = 2 * (kdim * 2 + 2 * cpad * 4)     # patches (bf16) + y/out (f32)
    tm = (VMEM_BUDGET_BYTES - fixed) // max(per_row, 1)
    tm = max(8, min(MAX_TM, (tm // 8) * 8))
    tm = min(tm, _round_up(m, 8))
    return int(tm)


def _matmul_stats(patches, wmat, tm):
    npar, mpad, kdim = patches.shape
    cpad = wmat.shape[-1]
    nt = mpad // tm
    return pl.pallas_call(
        _mm_stats_kernel,
        out_shape=(jax.ShapeDtypeStruct((npar, mpad, cpad), jnp.float32),
                   jax.ShapeDtypeStruct((npar, nt, 2, cpad), jnp.float32)),
        grid=(npar, nt),
        in_specs=[pl.BlockSpec((None, tm, kdim), lambda i, j: (i, j, 0)),
                  pl.BlockSpec((None, kdim, cpad), lambda i, j: (i, 0, 0))],
        out_specs=(pl.BlockSpec((None, tm, cpad), lambda i, j: (i, j, 0)),
                   pl.BlockSpec((None, None, 2, cpad),
                                lambda i, j: (i, j, 0, 0))),
        compiler_params=_cparams(),
    )(patches, wmat)


def _bn_relu(y, scale, shift, tm):
    npar, mpad, cpad = y.shape
    nt = mpad // tm
    return pl.pallas_call(
        _bn_relu_kernel,
        out_shape=jax.ShapeDtypeStruct((npar, mpad, cpad), jnp.float32),
        grid=(npar, nt),
        in_specs=[pl.BlockSpec((None, tm, cpad), lambda i, j: (i, j, 0)),
                  pl.BlockSpec((1, cpad), lambda i, j: (0, 0)),
                  pl.BlockSpec((1, cpad), lambda i, j: (0, 0))],
        out_specs=pl.BlockSpec((None, tm, cpad), lambda i, j: (i, j, 0)),
        compiler_params=_cparams(),
    )(y, scale, shift)


def _matmul_bias_tanh(patches, wmat, bias, tm):
    npar, mpad, kdim = patches.shape
    cpad = wmat.shape[-1]
    nt = mpad // tm
    return pl.pallas_call(
        _mm_bias_tanh_kernel,
        out_shape=jax.ShapeDtypeStruct((npar, mpad, cpad), jnp.float32),
        grid=(npar, nt),
        in_specs=[pl.BlockSpec((None, tm, kdim), lambda i, j: (i, j, 0)),
                  pl.BlockSpec((None, kdim, cpad), lambda i, j: (i, 0, 0)),
                  pl.BlockSpec((1, cpad), lambda i, j: (0, 0))],
        out_specs=pl.BlockSpec((None, tm, cpad), lambda i, j: (i, j, 0)),
        compiler_params=_cparams(),
    )(patches, wmat, bias)


# ------------------------------- JAX glue ----------------------------------- #

def _bn_scale_shift(stats, count, gamma_p, beta_p, groups=1):
    """Finalize training-mode BN from per-tile (sum, sumsq) and fold the affine
    into per-channel scale/shift.  `groups` > 1 when several output columns map
    to the same channel (layer 1 lays out (kh,kw,co) along columns)."""
    s = jnp.sum(stats[:, :, 0, :], axis=(0, 1))
    ss = jnp.sum(stats[:, :, 1, :], axis=(0, 1))
    if groups > 1:
        c = s.shape[0] // groups
        s = s.reshape(groups, c).sum(axis=0)
        ss = ss.reshape(groups, c).sum(axis=0)
    mean = s / count
    var = jnp.maximum(ss / count - mean * mean, 0.0)   # guard f32 cancellation
    scale = gamma_p * jax.lax.rsqrt(var + BN_EPS)
    shift = beta_p - mean * scale
    if groups > 1:
        scale = jnp.tile(scale, (groups,))
        shift = jnp.tile(shift, (groups,))
    return scale.reshape(1, -1), shift.reshape(1, -1)


def _subpixel_patches(x_nhwc):
    """(N,H,W,Cin) -> (4, N*H*W, 4*Cin) bf16 patches: the 4 output parities of a
    k=4, s=2, p=1 ConvTranspose2d, each a 2x2-tap regular conv (no zero taps)."""
    n, h, w, c = x_nhwc.shape
    xp = jnp.pad(x_nhwc, ((0, 0), (1, 1), (1, 1), (0, 0)))
    parities = []
    for py in range(2):
        for px in range(2):
            taps = [xp[:, py + d:py + d + h, px + e:px + e + w, :]
                    for d in range(2) for e in range(2)]
            p = jnp.stack(taps, axis=3)                      # (N,H,W,4,Cin)
            parities.append(p.reshape(n * h * w, 4 * c))
    return jnp.stack(parities, axis=0).astype(jnp.bfloat16)


def _pixel_shuffle(y, n, h, w, c):
    """(4, N*H*W, C) parity-major rows -> (N, 2H, 2W, C)."""
    y = y.reshape(2, 2, n, h, w, c)
    return jnp.transpose(y, (2, 3, 0, 4, 1, 5)).reshape(n, 2 * h, 2 * w, c)


def _pad_rows(patches, mpad):
    m = patches.shape[1]
    if mpad == m:
        return patches
    return jnp.pad(patches, ((0, 0), (0, mpad - m), (0, 0)))


def _first_layer(x2d, layer):
    # ConvTranspose2d(k=4, s=1, p=0) on a 1x1 input is a plain matmul.
    n, cin = x2d.shape
    cout, cpad = layer["cout"], layer["cout_pad"]
    ceff = 16 * cpad
    tm = _choose_tm(n, cin, ceff)
    mpad = _round_up(n, tm)
    patches = _pad_rows(x2d.astype(jnp.bfloat16)[None], mpad)     # (1, Mpad, Cin)
    y, stats = _matmul_stats(patches, layer["wmat"], tm)
    scale, shift = _bn_scale_shift(stats, n * 16, layer["gamma"],
                                   layer["beta"], groups=16)
    a = _bn_relu(y, scale, shift, tm)                             # (1, Mpad, 16*cpad)
    return a[0, :n].reshape(n, 4, 4, cpad)[:, :, :, :cout]


def _block_layer(x_nhwc, layer):
    # ConvTranspose2d(k=4,s=2,p=1, bias=False) + BatchNorm(train) + ReLU.
    n, h, w, cin = x_nhwc.shape
    cout, cpad = layer["cout"], layer["cout_pad"]
    m = n * h * w
    tm = _choose_tm(m, 4 * cin, cpad)
    mpad = _round_up(m, tm)
    patches = _pad_rows(_subpixel_patches(x_nhwc), mpad)          # (4, Mpad, 4*Cin)
    y, stats = _matmul_stats(patches, layer["wmat"], tm)
    scale, shift = _bn_scale_shift(stats, 4 * m, layer["gamma"], layer["beta"])
    a = _bn_relu(y, scale, shift, tm)                             # (4, Mpad, Cpad)
    return _pixel_shuffle(a[:, :m, :cout], n, h, w, cout)


def _final_layer(x_nhwc, layer):
    # ConvTranspose2d(k=4,s=2,p=1, bias=True) + Tanh, fused in one kernel.
    n, h, w, cin = x_nhwc.shape
    cout, cpad = layer["cout"], layer["cout_pad"]
    m = n * h * w
    tm = _choose_tm(m, 4 * cin, cpad)
    mpad = _round_up(m, tm)
    patches = _pad_rows(_subpixel_patches(x_nhwc), mpad)
    y = _matmul_bias_tanh(patches, layer["wmat"], layer["bias"], tm)
    return _pixel_shuffle(y[:, :m, :cout], n, h, w, cout)


def generator_forward(x_nchw, params):
    n, cn = x_nchw.shape[0], x_nchw.shape[1]
    x = _first_layer(x_nchw.reshape(n, cn).astype(jnp.float32), params[0])
    for layer in params[1:-1]:
        x = _block_layer(x, layer)
    x = _final_layer(x, params[-1])
    return jnp.transpose(x, (0, 3, 1, 2))                         # NHWC -> NCHW


# --------------------------- parameter handling ----------------------------- #

def _layer_configs(features_g, channels_noise, channels_img):
    return [
        # (Cin, Cout, stride, padding, final)
        (channels_noise,  features_g * 16, 1, 0, False),
        (features_g * 16, features_g * 8,  2, 1, False),
        (features_g * 8,  features_g * 4,  2, 1, False),
        (features_g * 4,  features_g * 2,  2, 1, False),
        (features_g * 2,  channels_img,    2, 1, True),
    ]


def init_torch_params(key, features_g, channels_noise, channels_img):
    """Random parameters in the PyTorch layouts (ConvTranspose2d weight = (Cin,Cout,K,K))."""
    params = []
    for cin, cout, s, p, final in _layer_configs(features_g, channels_noise, channels_img):
        key, wk, bk = jax.random.split(key, 3)
        layer = {"w": 0.05 * jax.random.normal(wk, (cin, cout, 4, 4), jnp.float32),
                 "stride": s, "padding": p, "final": final}
        if final:
            layer["bias"] = 0.05 * jax.random.normal(bk, (cout,), jnp.float32)
        else:
            layer["gamma"] = jnp.ones((cout,), jnp.float32)   # BN default weight
            layer["beta"] = jnp.zeros((cout,), jnp.float32)   # BN default bias
        params.append(layer)
    return params


def prepare_params(torch_params):
    """One-time conversion to kernel-ready params: sub-pixel weight matrices,
    bf16 cast, channel padding to lane-dense widths (done once, not per call)."""
    prepared = []
    for idx, lp in enumerate(torch_params):
        w = lp["w"]
        cin, cout = w.shape[0], w.shape[1]
        if idx == 0:
            # out[n, kh, kw, co] = sum_ci x[n, ci] * w[ci, co, kh, kw]
            cpad = _round_up(cout, 8)                      # 16*cpad % 128 == 0
            wmat = jnp.transpose(w, (0, 2, 3, 1))          # (Cin, kh, kw, Cout)
            wmat = jnp.pad(wmat, ((0, 0), (0, 0), (0, 0), (0, cpad - cout)))
            wmat = wmat.reshape(cin, 16 * cpad)[None]      # (1, Cin, 16*cpad)
        else:
            # Sub-pixel decomposition: out[2j+py, 2i+px] uses the 2x2 taps
            # xp[j+py+d, i+px+e] with kernel (kh,kw) = (3-py-2d, 3-px-2e).
            cpad = _round_up(cout, 128)
            mats = []
            for py in range(2):
                for px in range(2):
                    taps = [w[:, :, 3 - py - 2 * d, 3 - px - 2 * e]
                            for d in range(2) for e in range(2)]
                    mats.append(jnp.stack(taps, axis=0).reshape(4 * cin, cout))
            wmat = jnp.stack(mats, axis=0)                 # (4, 4*Cin, Cout)
            wmat = jnp.pad(wmat, ((0, 0), (0, 0), (0, cpad - cout)))
        layer = {"wmat": wmat.astype(jnp.bfloat16), "cout": cout, "cout_pad": cpad}
        if lp["final"]:
            layer["bias"] = jnp.pad(lp["bias"], (0, cpad - cout)).reshape(1, cpad)
        else:
            layer["gamma"] = jnp.pad(lp["gamma"], (0, cpad - cout))
            layer["beta"] = jnp.pad(lp["beta"], (0, cpad - cout))
        prepared.append(layer)
    return prepared


# ------------------------------- reference ---------------------------------- #

def _reference_forward(x_nchw, torch_params):
    """Pure-XLA reference: ConvTranspose2d == conv(dilate(x,s), flip(W^T), pad=k-1-p)."""
    x = jnp.transpose(x_nchw, (0, 2, 3, 1)).astype(jnp.float32)
    for lp in torch_params:
        w = lp["w"]
        k, s, p = w.shape[2], lp["stride"], lp["padding"]
        w_hwio = jnp.transpose(w[:, :, ::-1, ::-1], (2, 3, 0, 1))
        y = jax.lax.conv_general_dilated(
            x, w_hwio, window_strides=(1, 1),
            padding=[(k - 1 - p, k - 1 - p)] * 2,
            lhs_dilation=(s, s),
            dimension_numbers=("NHWC", "HWIO", "NHWC"))
        if lp["final"]:
            y = jnp.tanh(y + lp["bias"])
        else:
            mean = jnp.mean(y, axis=(0, 1, 2))
            var = jnp.mean(jnp.square(y - mean), axis=(0, 1, 2))
            y = lp["gamma"] * (y - mean) * jax.lax.rsqrt(var + BN_EPS) + lp["beta"]
            y = jnp.maximum(y, 0.0)
        x = y
    return jnp.transpose(x, (0, 3, 1, 2))


if __name__ == "__main__":
    key = jax.random.PRNGKey(0)
    features_g, channels_noise, channels_img, batch = 4, 8, 3, 2

    pkey, xkey = jax.random.split(key)
    torch_params = init_torch_params(pkey, features_g, channels_noise, channels_img)
    params = prepare_params(torch_params)
    x = jax.random.normal(xkey, (batch, channels_noise, 1, 1), jnp.float32)

    forward = jax.jit(lambda inp: generator_forward(inp, params))
    out = jax.block_until_ready(forward(x))

    assert out.shape == (batch, channels_img, 64, 64), out.shape
    assert bool(jnp.all(jnp.isfinite(out)))
    assert bool(jnp.all(jnp.abs(out) <= 1.0))          # Tanh output range

    ref = _reference_forward(x, torch_params)
    max_err = float(jnp.max(jnp.abs(out - ref)))
    assert max_err < 1e-1, f"max abs error vs XLA reference: {max_err}"

    print("KERNEL_OK")
</pallas_src>

<mosaic_0001>
module attributes {stable_mosaic.version = 11 : i64} {
  func.func @_mm_stats_kernel(%arg0: i32, %arg1: i32, %arg2: memref<1x8x8xbf16, #tpu.memory_space<vmem>>, %arg3: memref<1x8x1024xbf16, #tpu.memory_space<vmem>>, %arg4: memref<1x8x1024xf32, #tpu.memory_space<vmem>>, %arg5: memref<1x1x2x1024xf32, #tpu.memory_space<vmem>>) attributes {dimension_semantics = [#tpu.dimension_semantics<parallel>, #tpu.dimension_semantics<parallel>], iteration_bounds = array<i64: 1, 1>, scalar_prefetch = 0 : i64, scratch_operands = 0 : i64, tpu.core_type = #tpu.core_type<tc>, window_params = [{transform_indices = @transform_0, window_bounds = array<i64: 1, 8, 8>}, {transform_indices = @transform_1, window_bounds = array<i64: 1, 8, 1024>}, {transform_indices = @transform_2, window_bounds = array<i64: 1, 8, 1024>}, {transform_indices = @transform_3, window_bounds = array<i64: 1, 1, 2, 1024>}]} {
    %c0 = arith.constant 0 : index
    %c0_0 = arith.constant 0 : index
    %c0_1 = arith.constant 0 : index
    %0 = vector.load %arg2[%c0, %c0_0, %c0_1] : memref<1x8x8xbf16, #tpu.memory_space<vmem>>, vector<1x8x8xbf16>
    %1 = vector.shape_cast %0 : vector<1x8x8xbf16> to vector<8x8xbf16>
    %c0_2 = arith.constant 0 : index
    %c0_3 = arith.constant 0 : index
    %c0_4 = arith.constant 0 : index
    %2 = vector.load %arg3[%c0_2, %c0_3, %c0_4] : memref<1x8x1024xbf16, #tpu.memory_space<vmem>>, vector<1x8x1024xbf16>
    %3 = vector.shape_cast %2 : vector<1x8x1024xbf16> to vector<8x1024xbf16>
    %cst = arith.constant dense<0.000000e+00> : vector<8x1024xf32>
    %4 = tpu.matmul %1, %3, %cst {dimension_numbers = #tpu.dot_dimension_numbers<[1], [0], [0], [1], [0, 0, 1, 1], [], []>} : vector<8x8xbf16>, vector<8x1024xbf16>, vector<8x1024xf32> -> vector<8x1024xf32>
    %c0_5 = arith.constant 0 : index
    %c0_6 = arith.constant 0 : index
    %c0_7 = arith.constant 0 : index
    %5 = vector.load %arg4[%c0_5, %c0_6, %c0_7] : memref<1x8x1024xf32, #tpu.memory_space<vmem>>, vector<1x8x1024xf32>
    %6 = vector.shape_cast %5 : vector<1x8x1024xf32> to vector<8x1024xf32>
    %7 = vector.shape_cast %4 : vector<8x1024xf32> to vector<1x8x1024xf32>
    tpu.vector_store %arg4[%c0_5, %c0_6, %c0_7], %7 {strides = array<i32>} : memref<1x8x1024xf32, #tpu.memory_space<vmem>>, vector<1x8x1024xf32>,
    %cst_8 = arith.constant dense<0.000000e+00> : vector<1024xf32>
    %8 = vector.multi_reduction <add>, %4, %cst_8 [0] : vector<8x1024xf32> to vector<1024xf32>
    %9 = vector.shape_cast %8 : vector<1024xf32> to vector<1x1024xf32>
    %10 = arith.mulf %4, %4 : vector<8x1024xf32>
    %cst_9 = arith.constant dense<0.000000e+00> : vector<1024xf32>
    %11 = vector.multi_reduction <add>, %10, %cst_9 [0] : vector<8x1024xf32> to vector<1024xf32>
    %12 = vector.shape_cast %11 : vector<1024xf32> to vector<1x1024xf32>
    %13 = tpu.concatenate %9, %12 in 0 : vector<1x1024xf32>, vector<1x1024xf32> -> vector<2x1024xf32>
    %c0_10 = arith.constant 0 : index
    %c0_11 = arith.constant 0 : index
    %c0_12 = arith.constant 0 : index
    %c0_13 = arith.constant 0 : index
    %14 = vector.load %arg5[%c0_10, %c0_11, %c0_12, %c0_13] : memref<1x1x2x1024xf32, #tpu.memory_space<vmem>>, vector<1x1x2x1024xf32>
    %15 = vector.shape_cast %14 : vector<1x1x2x1024xf32> to vector<2x1024xf32>
    %16 = vector.shape_cast %13 : vector<2x1024xf32> to vector<1x1x2x1024xf32>
    tpu.vector_store %arg5[%c0_10, %c0_11, %c0_12, %c0_13], %16 {strides = array<i32>} : memref<1x1x2x1024xf32, #tpu.memory_space<vmem>>, vector<1x1x2x1024xf32>,
    return
  }
  func.func @transform_0(%arg0: i32, %arg1: i32) -> (i32, i32, i32) {
    %c0_i32 = arith.constant 0 : i32
    %c0_i32_0 = arith.constant 0 : i32
    return %arg0, %arg1, %c0_i32 : i32, i32, i32
  }
  func.func @transform_1(%arg0: i32, %arg1: i32) -> (i32, i32, i32) {
    %c0_i32 = arith.constant 0 : i32
    %c0_i32_0 = arith.constant 0 : i32
    %c0_i32_1 = arith.constant 0 : i32
    return %arg0, %c0_i32, %c0_i32_0 : i32, i32, i32
  }
  func.func @transform_2(%arg0: i32, %arg1: i32) -> (i32, i32, i32) {
    %c0_i32 = arith.constant 0 : i32
    %c0_i32_0 = arith.constant 0 : i32
    return %arg0, %arg1, %c0_i32 : i32, i32, i32
  }
  func.func @transform_3(%arg0: i32, %arg1: i32) -> (i32, i32, i32, i32) {
    %c0_i32 = arith.constant 0 : i32
    %c0_i32_0 = arith.constant 0 : i32
    %c0_i32_1 = arith.constant 0 : i32
    return %arg0, %arg1, %c0_i32, %c0_i32_0 : i32, i32, i32, i32
  }
}

module attributes {stable_mosaic.version = 11 : i64} {
  func.func @_bn_relu_kernel(%arg0: i32, %arg1: i32, %arg2: memref<1x8x1024xf32, #tpu.memory_space<vmem>>, %arg3: memref<1x1024xf32, #tpu.memory_space<vmem>>, %arg4: memref<1x1024xf32, #tpu.memory_space<vmem>>, %arg5: memref<1x8x1024xf32, #tpu.memory_space<vmem>>) attributes {dimension_semantics = [#tpu.dimension_semantics<parallel>, #tpu.dimension_semantics<parallel>], iteration_bounds = array<i64: 1, 1>, scalar_prefetch = 0 : i64, scratch_operands = 0 : i64, tpu.core_type = #tpu.core_type<tc>, window_params = [{transform_indices = @transform_0, window_bounds = array<i64: 1, 8, 1024>}, {pipeline_mode = #tpu.pipeline_mode<synchronous>, transform_indices = @transform_1, window_bounds = array<i64: 1, 1024>}, {pipeline_mode = #tpu.pipeline_mode<synchronous>, transform_indices = @transform_2, window_bounds = array<i64: 1, 1024>}, {transform_indices = @transform_3, window_bounds = array<i64: 1, 8, 1024>}]} {
    %c0 = arith.constant 0 : index
    %c0_0 = arith.constant 0 : index
    %c0_1 = arith.constant 0 : index
    %0 = vector.load %arg2[%c0, %c0_0, %c0_1] : memref<1x8x1024xf32, #tpu.memory_space<vmem>>, vector<1x8x1024xf32>
    %1 = vector.shape_cast %0 : vector<1x8x1024xf32> to vector<8x1024xf32>
    %c0_2 = arith.constant 0 : index
    %c0_3 = arith.constant 0 : index
    %2 = vector.load %arg3[%c0_2, %c0_3] : memref<1x1024xf32, #tpu.memory_space<vmem>>, vector<1x1024xf32>
    %3 = vector.broadcast %2 : vector<1x1024xf32> to vector<8x1024xf32>
    %4 = arith.mulf %1, %3 : vector<8x1024xf32>
    %c0_4 = arith.constant 0 : index
    %c0_5 = arith.constant 0 : index
    %5 = vector.load %arg4[%c0_4, %c0_5] : memref<1x1024xf32, #tpu.memory_space<vmem>>, vector<1x1024xf32>
    %6 = vector.broadcast %5 : vector<1x1024xf32> to vector<8x1024xf32>
    %7 = arith.addf %4, %6 : vector<8x1024xf32>
    %cst = arith.constant 0.000000e+00 : f32
    %8 = vector.broadcast %cst : f32 to vector<8x1024xf32>
    %9 = arith.maximumf %7, %8 : vector<8x1024xf32>
    %c0_6 = arith.constant 0 : index
    %c0_7 = arith.constant 0 : index
    %c0_8 = arith.constant 0 : index
    %10 = vector.load %arg5[%c0_6, %c0_7, %c0_8] : memref<1x8x1024xf32, #tpu.memory_space<vmem>>, vector<1x8x1024xf32>
    %11 = vector.shape_cast %10 : vector<1x8x1024xf32> to vector<8x1024xf32>
    %12 = vector.shape_cast %9 : vector<8x1024xf32> to vector<1x8x1024xf32>
    tpu.vector_store %arg5[%c0_6, %c0_7, %c0_8], %12 {strides = array<i32>} : memref<1x8x1024xf32, #tpu.memory_space<vmem>>, vector<1x8x1024xf32>,
    return
  }
  func.func @transform_0(%arg0: i32, %arg1: i32) -> (i32, i32, i32) {
    %c0_i32 = arith.constant 0 : i32
    %c0_i32_0 = arith.constant 0 : i32
    return %arg0, %arg1, %c0_i32 : i32, i32, i32
  }
  func.func @transform_1(%arg0: i32, %arg1: i32) -> (i32, i32) {
    %c0_i32 = arith.constant 0 : i32
    %c0_i32_0 = arith.constant 0 : i32
    %c0_i32_1 = arith.constant 0 : i32
    return %c0_i32, %c0_i32_0 : i32, i32
  }
  func.func @transform_2(%arg0: i32, %arg1: i32) -> (i32, i32) {
    %c0_i32 = arith.constant 0 : i32
    %c0_i32_0 = arith.constant 0 : i32
    %c0_i32_1 = arith.constant 0 : i32
    return %c0_i32, %c0_i32_0 : i32, i32
  }
  func.func @transform_3(%arg0: i32, %arg1: i32) -> (i32, i32, i32) {
    %c0_i32 = arith.constant 0 : i32
    %c0_i32_0 = arith.constant 0 : i32
    return %arg0, %arg1, %c0_i32 : i32, i32, i32
  }
}

module attributes {stable_mosaic.version = 11 : i64} {
  func.func @_mm_stats_kernel(%arg0: i32, %arg1: i32, %arg2: memref<1x32x256xbf16, #tpu.memory_space<vmem>>, %arg3: memref<1x256x128xbf16, #tpu.memory_space<vmem>>, %arg4: memref<1x32x128xf32, #tpu.memory_space<vmem>>, %arg5: memref<1x1x2x128xf32, #tpu.memory_space<vmem>>) attributes {dimension_semantics = [#tpu.dimension_semantics<parallel>, #tpu.dimension_semantics<parallel>], iteration_bounds = array<i64: 4, 1>, scalar_prefetch = 0 : i64, scratch_operands = 0 : i64, tpu.core_type = #tpu.core_type<tc>, window_params = [{transform_indices = @transform_0, window_bounds = array<i64: 1, 32, 256>}, {transform_indices = @transform_1, window_bounds = array<i64: 1, 256, 128>}, {transform_indices = @transform_2, window_bounds = array<i64: 1, 32, 128>}, {transform_indices = @transform_3, window_bounds = array<i64: 1, 1, 2, 128>}]} {
    %c0 = arith.constant 0 : index
    %c0_0 = arith.constant 0 : index
    %c0_1 = arith.constant 0 : index
    %0 = vector.load %arg2[%c0, %c0_0, %c0_1] : memref<1x32x256xbf16, #tpu.memory_space<vmem>>, vector<1x32x256xbf16>
    %1 = vector.shape_cast %0 : vector<1x32x256xbf16> to vector<32x256xbf16>
    %c0_2 = arith.constant 0 : index
    %c0_3 = arith.constant 0 : index
    %c0_4 = arith.constant 0 : index
    %2 = vector.load %arg3[%c0_2, %c0_3, %c0_4] : memref<1x256x128xbf16, #tpu.memory_space<vmem>>, vector<1x256x128xbf16>
    %3 = vector.shape_cast %2 : vector<1x256x128xbf16> to vector<256x128xbf16>
    %cst = arith.constant dense<0.000000e+00> : vector<32x128xf32>
    %4 = tpu.matmul %1, %3, %cst {dimension_numbers = #tpu.dot_dimension_numbers<[1], [0], [0], [1], [0, 0, 1, 1], [], []>} : vector<32x256xbf16>, vector<256x128xbf16>, vector<32x128xf32> -> vector<32x128xf32>
    %c0_5 = arith.constant 0 : index
    %c0_6 = arith.constant 0 : index
    %c0_7 = arith.constant 0 : index
    %5 = vector.load %arg4[%c0_5, %c0_6, %c0_7] : memref<1x32x128xf32, #tpu.memory_space<vmem>>, vector<1x32x128xf32>
    %6 = vector.shape_cast %5 : vector<1x32x128xf32> to vector<32x128xf32>
    %7 = vector.shape_cast %4 : vector<32x128xf32> to vector<1x32x128xf32>
    tpu.vector_store %arg4[%c0_5, %c0_6, %c0_7], %7 {strides = array<i32>} : memref<1x32x128xf32, #tpu.memory_space<vmem>>, vector<1x32x128xf32>,
    %cst_8 = arith.constant dense<0.000000e+00> : vector<128xf32>
    %8 = vector.multi_reduction <add>, %4, %cst_8 [0] : vector<32x128xf32> to vector<128xf32>
    %9 = vector.shape_cast %8 : vector<128xf32> to vector<1x128xf32>
    %10 = arith.mulf %4, %4 : vector<32x128xf32>
    %cst_9 = arith.constant dense<0.000000e+00> : vector<128xf32>
    %11 = vector.multi_reduction <add>, %10, %cst_9 [0] : vector<32x128xf32> to vector<128xf32>
    %12 = vector.shape_cast %11 : vector<128xf32> to vector<1x128xf32>
    %13 = tpu.concatenate %9, %12 in 0 : vector<1x128xf32>, vector<1x128xf32> -> vector<2x128xf32>
    %c0_10 = arith.constant 0 : index
    %c0_11 = arith.constant 0 : index
    %c0_12 = arith.constant 0 : index
    %c0_13 = arith.constant 0 : index
    %14 = vector.load %arg5[%c0_10, %c0_11, %c0_12, %c0_13] : memref<1x1x2x128xf32, #tpu.memory_space<vmem>>, vector<1x1x2x128xf32>
    %15 = vector.shape_cast %14 : vector<1x1x2x128xf32> to vector<2x128xf32>
    %16 = vector.shape_cast %13 : vector<2x128xf32> to vector<1x1x2x128xf32>
    tpu.vector_store %arg5[%c0_10, %c0_11, %c0_12, %c0_13], %16 {strides = array<i32>} : memref<1x1x2x128xf32, #tpu.memory_space<vmem>>, vector<1x1x2x128xf32>,
    return
  }
  func.func @transform_0(%arg0: i32, %arg1: i32) -> (i32, i32, i32) {
    %c0_i32 = arith.constant 0 : i32
    %c0_i32_0 = arith.constant 0 : i32
    return %arg0, %arg1, %c0_i32 : i32, i32, i32
  }
  func.func @transform_1(%arg0: i32, %arg1: i32) -> (i32, i32, i32) {
    %c0_i32 = arith.constant 0 : i32
    %c0_i32_0 = arith.constant 0 : i32
    %c0_i32_1 = arith.constant 0 : i32
    return %arg0, %c0_i32, %c0_i32_0 : i32, i32, i32
  }
  func.func @transform_2(%arg0: i32, %arg1: i32) -> (i32, i32, i32) {
    %c0_i32 = arith.constant 0 : i32
    %c0_i32_0 = arith.constant 0 : i32
    return %arg0, %arg1, %c0_i32 : i32, i32, i32
  }
  func.func @transform_3(%arg0: i32, %arg1: i32) -> (i32, i32, i32, i32) {
    %c0_i32 = arith.constant 0 : i32
    %c0_i32_0 = arith.constant 0 : i32
    %c0_i32_1 = arith.constant 0 : i32
    return %arg0, %arg1, %c0_i32, %c0_i32_0 : i32, i32, i32, i32
  }
}

module attributes {stable_mosaic.version = 11 : i64} {
  func.func @_bn_relu_kernel(%arg0: i32, %arg1: i32, %arg2: memref<1x32x128xf32, #tpu.memory_space<vmem>>, %arg3: memref<1x128xf32, #tpu.memory_space<vmem>>, %arg4: memref<1x128xf32, #tpu.memory_space<vmem>>, %arg5: memref<1x32x128xf32, #tpu.memory_space<vmem>>) attributes {dimension_semantics = [#tpu.dimension_semantics<parallel>, #tpu.dimension_semantics<parallel>], iteration_bounds = array<i64: 4, 1>, scalar_prefetch = 0 : i64, scratch_operands = 0 : i64, tpu.core_type = #tpu.core_type<tc>, window_params = [{transform_indices = @transform_0, window_bounds = array<i64: 1, 32, 128>}, {pipeline_mode = #tpu.pipeline_mode<synchronous>, transform_indices = @transform_1, window_bounds = array<i64: 1, 128>}, {pipeline_mode = #tpu.pipeline_mode<synchronous>, transform_indices = @transform_2, window_bounds = array<i64: 1, 128>}, {transform_indices = @transform_3, window_bounds = array<i64: 1, 32, 128>}]} {
    %c0 = arith.constant 0 : index
    %c0_0 = arith.constant 0 : index
    %c0_1 = arith.constant 0 : index
    %0 = vector.load %arg2[%c0, %c0_0, %c0_1] : memref<1x32x128xf32, #tpu.memory_space<vmem>>, vector<1x32x128xf32>
    %1 = vector.shape_cast %0 : vector<1x32x128xf32> to vector<32x128xf32>
    %c0_2 = arith.constant 0 : index
    %c0_3 = arith.constant 0 : index
    %2 = vector.load %arg3[%c0_2, %c0_3] : memref<1x128xf32, #tpu.memory_space<vmem>>, vector<1x128xf32>
    %3 = vector.broadcast %2 : vector<1x128xf32> to vector<32x128xf32>
    %4 = arith.mulf %1, %3 : vector<32x128xf32>
    %c0_4 = arith.constant 0 : index
    %c0_5 = arith.constant 0 : index
    %5 = vector.load %arg4[%c0_4, %c0_5] : memref<1x128xf32, #tpu.memory_space<vmem>>, vector<1x128xf32>
    %6 = vector.broadcast %5 : vector<1x128xf32> to vector<32x128xf32>
    %7 = arith.addf %4, %6 : vector<32x128xf32>
    %cst = arith.constant 0.000000e+00 : f32
    %8 = vector.broadcast %cst : f32 to vector<32x128xf32>
    %9 = arith.maximumf %7, %8 : vector<32x128xf32>
    %c0_6 = arith.constant 0 : index
    %c0_7 = arith.constant 0 : index
    %c0_8 = arith.constant 0 : index
    %10 = vector.load %arg5[%c0_6, %c0_7, %c0_8] : memref<1x32x128xf32, #tpu.memory_space<vmem>>, vector<1x32x128xf32>
    %11 = vector.shape_cast %10 : vector<1x32x128xf32> to vector<32x128xf32>
    %12 = vector.shape_cast %9 : vector<32x128xf32> to vector<1x32x128xf32>
    tpu.vector_store %arg5[%c0_6, %c0_7, %c0_8], %12 {strides = array<i32>} : memref<1x32x128xf32, #tpu.memory_space<vmem>>, vector<1x32x128xf32>,
    return
  }
  func.func @transform_0(%arg0: i32, %arg1: i32) -> (i32, i32, i32) {
    %c0_i32 = arith.constant 0 : i32
    %c0_i32_0 = arith.constant 0 : i32
    return %arg0, %arg1, %c0_i32 : i32, i32, i32
  }
  func.func @transform_1(%arg0: i32, %arg1: i32) -> (i32, i32) {
    %c0_i32 = arith.constant 0 : i32
    %c0_i32_0 = arith.constant 0 : i32
    %c0_i32_1 = arith.constant 0 : i32
    return %c0_i32, %c0_i32_0 : i32, i32
  }
  func.func @transform_2(%arg0: i32, %arg1: i32) -> (i32, i32) {
    %c0_i32 = arith.constant 0 : i32
    %c0_i32_0 = arith.constant 0 : i32
    %c0_i32_1 = arith.constant 0 : i32
    return %c0_i32, %c0_i32_0 : i32, i32
  }
  func.func @transform_3(%arg0: i32, %arg1: i32) -> (i32, i32, i32) {
    %c0_i32 = arith.constant 0 : i32
    %c0_i32_0 = arith.constant 0 : i32
    return %arg0, %arg1, %c0_i32 : i32, i32, i32
  }
}

module attributes {stable_mosaic.version = 11 : i64} {
  func.func @_mm_stats_kernel(%arg0: i32, %arg1: i32, %arg2: memref<1x128x128xbf16, #tpu.memory_space<vmem>>, %arg3: memref<1x128x128xbf16, #tpu.memory_space<vmem>>, %arg4: memref<1x128x128xf32, #tpu.memory_space<vmem>>, %arg5: memref<1x1x2x128xf32, #tpu.memory_space<vmem>>) attributes {dimension_semantics = [#tpu.dimension_semantics<parallel>, #tpu.dimension_semantics<parallel>], iteration_bounds = array<i64: 4, 1>, scalar_prefetch = 0 : i64, scratch_operands = 0 : i64, tpu.core_type = #tpu.core_type<tc>, window_params = [{transform_indices = @transform_0, window_bounds = array<i64: 1, 128, 128>}, {transform_indices = @transform_1, window_bounds = array<i64: 1, 128, 128>}, {transform_indices = @transform_2, window_bounds = array<i64: 1, 128, 128>}, {transform_indices = @transform_3, window_bounds = array<i64: 1, 1, 2, 128>}]} {
    %c0 = arith.constant 0 : index
    %c0_0 = arith.constant 0 : index
    %c0_1 = arith.constant 0 : index
    %0 = vector.load %arg2[%c0, %c0_0, %c0_1] : memref<1x128x128xbf16, #tpu.memory_space<vmem>>, vector<1x128x128xbf16>
    %1 = vector.shape_cast %0 : vector<1x128x128xbf16> to vector<128x128xbf16>
    %c0_2 = arith.constant 0 : index
    %c0_3 = arith.constant 0 : index
    %c0_4 = arith.constant 0 : index
    %2 = vector.load %arg3[%c0_2, %c0_3, %c0_4] : memref<1x128x128xbf16, #tpu.memory_space<vmem>>, vector<1x128x128xbf16>
    %3 = vector.shape_cast %2 : vector<1x128x128xbf16> to vector<128x128xbf16>
    %cst = arith.constant dense<0.000000e+00> : vector<128x128xf32>
    %4 = tpu.matmul %1, %3, %cst {dimension_numbers = #tpu.dot_dimension_numbers<[1], [0], [0], [1], [0, 0, 1, 1], [], []>} : vector<128x128xbf16>, vector<128x128xbf16>, vector<128x128xf32> -> vector<128x128xf32>
    %c0_5 = arith.constant 0 : index
    %c0_6 = arith.constant 0 : index
    %c0_7 = arith.constant 0 : index
    %5 = vector.load %arg4[%c0_5, %c0_6, %c0_7] : memref<1x128x128xf32, #tpu.memory_space<vmem>>, vector<1x128x128xf32>
    %6 = vector.shape_cast %5 : vector<1x128x128xf32> to vector<128x128xf32>
    %7 = vector.shape_cast %4 : vector<128x128xf32> to vector<1x128x128xf32>
    tpu.vector_store %arg4[%c0_5, %c0_6, %c0_7], %7 {strides = array<i32>} : memref<1x128x128xf32, #tpu.memory_space<vmem>>, vector<1x128x128xf32>,
    %cst_8 = arith.constant dense<0.000000e+00> : vector<128xf32>
    %8 = vector.multi_reduction <add>, %4, %cst_8 [0] : vector<128x128xf32> to vector<128xf32>
    %9 = vector.shape_cast %8 : vector<128xf32> to vector<1x128xf32>
    %10 = arith.mulf %4, %4 : vector<128x128xf32>
    %cst_9 = arith.constant dense<0.000000e+00> : vector<128xf32>
    %11 = vector.multi_reduction <add>, %10, %cst_9 [0] : vector<128x128xf32> to vector<128xf32>
    %12 = vector.shape_cast %11 : vector<128xf32> to vector<1x128xf32>
    %13 = tpu.concatenate %9, %12 in 0 : vector<1x128xf32>, vector<1x128xf32> -> vector<2x128xf32>
    %c0_10 = arith.constant 0 : index
    %c0_11 = arith.constant 0 : index
    %c0_12 = arith.constant 0 : index
    %c0_13 = arith.constant 0 : index
    %14 = vector.load %arg5[%c0_10, %c0_11, %c0_12, %c0_13] : memref<1x1x2x128xf32, #tpu.memory_space<vmem>>, vector<1x1x2x128xf32>
    %15 = vector.shape_cast %14 : vector<1x1x2x128xf32> to vector<2x128xf32>
    %16 = vector.shape_cast %13 : vector<2x128xf32> to vector<1x1x2x128xf32>
    tpu.vector_store %arg5[%c0_10, %c0_11, %c0_12, %c0_13], %16 {strides = array<i32>} : memref<1x1x2x128xf32, #tpu.memory_space<vmem>>, vector<1x1x2x128xf32>,
    return
  }
  func.func @transform_0(%arg0: i32, %arg1: i32) -> (i32, i32, i32) {
    %c0_i32 = arith.constant 0 : i32
    %c0_i32_0 = arith.constant 0 : i32
    return %arg0, %arg1, %c0_i32 : i32, i32, i32
  }
  func.func @transform_1(%arg0: i32, %arg1: i32) -> (i32, i32, i32) {
    %c0_i32 = arith.constant 0 : i32
    %c0_i32_0 = arith.constant 0 : i32
    %c0_i32_1 = arith.constant 0 : i32
    return %arg0, %c0_i32, %c0_i32_0 : i32, i32, i32
  }
  func.func @transform_2(%arg0: i32, %arg1: i32) -> (i32, i32, i32) {
    %c0_i32 = arith.constant 0 : i32
    %c0_i32_0 = arith.constant 0 : i32
    return %arg0, %arg1, %c0_i32 : i32, i32, i32
  }
  func.func @transform_3(%arg0: i32, %arg1: i32) -> (i32, i32, i32, i32) {
    %c0_i32 = arith.constant 0 : i32
    %c0_i32_0 = arith.constant 0 : i32
    %c0_i32_1 = arith.constant 0 : i32
    return %arg0, %arg1, %c0_i32, %c0_i32_0 : i32, i32, i32, i32
  }
}

module attributes {stable_mosaic.version = 11 : i64} {
  func.func @_bn_relu_kernel(%arg0: i32, %arg1: i32, %arg2: memref<1x128x128xf32, #tpu.memory_space<vmem>>, %arg3: memref<1x128xf32, #tpu.memory_space<vmem>>, %arg4: memref<1x128xf32, #tpu.memory_space<vmem>>, %arg5: memref<1x128x128xf32, #tpu.memory_space<vmem>>) attributes {dimension_semantics = [#tpu.dimension_semantics<parallel>, #tpu.dimension_semantics<parallel>], iteration_bounds = array<i64: 4, 1>, scalar_prefetch = 0 : i64, scratch_operands = 0 : i64, tpu.core_type = #tpu.core_type<tc>, window_params = [{transform_indices = @transform_0, window_bounds = array<i64: 1, 128, 128>}, {pipeline_mode = #tpu.pipeline_mode<synchronous>, transform_indices = @transform_1, window_bounds = array<i64: 1, 128>}, {pipeline_mode = #tpu.pipeline_mode<synchronous>, transform_indices = @transform_2, window_bounds = array<i64: 1, 128>}, {transform_indices = @transform_3, window_bounds = array<i64: 1, 128, 128>}]} {
    %c0 = arith.constant 0 : index
    %c0_0 = arith.constant 0 : index
    %c0_1 = arith.constant 0 : index
    %0 = vector.load %arg2[%c0, %c0_0, %c0_1] : memref<1x128x128xf32, #tpu.memory_space<vmem>>, vector<1x128x128xf32>
    %1 = vector.shape_cast %0 : vector<1x128x128xf32> to vector<128x128xf32>
    %c0_2 = arith.constant 0 : index
    %c0_3 = arith.constant 0 : index
    %2 = vector.load %arg3[%c0_2, %c0_3] : memref<1x128xf32, #tpu.memory_space<vmem>>, vector<1x128xf32>
    %3 = vector.broadcast %2 : vector<1x128xf32> to vector<128x128xf32>
    %4 = arith.mulf %1, %3 : vector<128x128xf32>
    %c0_4 = arith.constant 0 : index
    %c0_5 = arith.constant 0 : index
    %5 = vector.load %arg4[%c0_4, %c0_5] : memref<1x128xf32, #tpu.memory_space<vmem>>, vector<1x128xf32>
    %6 = vector.broadcast %5 : vector<1x128xf32> to vector<128x128xf32>
    %7 = arith.addf %4, %6 : vector<128x128xf32>
    %cst = arith.constant 0.000000e+00 : f32
    %8 = vector.broadcast %cst : f32 to vector<128x128xf32>
    %9 = arith.maximumf %7, %8 : vector<128x128xf32>
    %c0_6 = arith.constant 0 : index
    %c0_7 = arith.constant 0 : index
    %c0_8 = arith.constant 0 : index
    %10 = vector.load %arg5[%c0_6, %c0_7, %c0_8] : memref<1x128x128xf32, #tpu.memory_space<vmem>>, vector<1x128x128xf32>
    %11 = vector.shape_cast %10 : vector<1x128x128xf32> to vector<128x128xf32>
    %12 = vector.shape_cast %9 : vector<128x128xf32> to vector<1x128x128xf32>
    tpu.vector_store %arg5[%c0_6, %c0_7, %c0_8], %12 {strides = array<i32>} : memref<1x128x128xf32, #tpu.memory_space<vmem>>, vector<1x128x128xf32>,
    return
  }
  func.func @transform_0(%arg0: i32, %arg1: i32) -> (i32, i32, i32) {
    %c0_i32 = arith.constant 0 : i32
    %c0_i32_0 = arith.constant 0 : i32
    return %arg0, %arg1, %c0_i32 : i32, i32, i32
  }
  func.func @transform_1(%arg0: i32, %arg1: i32) -> (i32, i32) {
    %c0_i32 = arith.constant 0 : i32
    %c0_i32_0 = arith.constant 0 : i32
    %c0_i32_1 = arith.constant 0 : i32
    return %c0_i32, %c0_i32_0 : i32, i32
  }
  func.func @transform_2(%arg0: i32, %arg1: i32) -> (i32, i32) {
    %c0_i32 = arith.constant 0 : i32
    %c0_i32_0 = arith.constant 0 : i32
    %c0_i32_1 = arith.constant 0 : i32
    return %c0_i32, %c0_i32_0 : i32, i32
  }
  func.func @transform_3(%arg0: i32, %arg1: i32) -> (i32, i32, i32) {
    %c0_i32 = arith.constant 0 : i32
    %c0_i32_0 = arith.constant 0 : i32
    return %arg0, %arg1, %c0_i32 : i32, i32, i32
  }
}

module attributes {stable_mosaic.version = 11 : i64} {
  func.func @_mm_stats_kernel(%arg0: i32, %arg1: i32, %arg2: memref<1x512x64xbf16, #tpu.memory_space<vmem>>, %arg3: memref<1x64x128xbf16, #tpu.memory_space<vmem>>, %arg4: memref<1x512x128xf32, #tpu.memory_space<vmem>>, %arg5: memref<1x1x2x128xf32, #tpu.memory_space<vmem>>) attributes {dimension_semantics = [#tpu.dimension_semantics<parallel>, #tpu.dimension_semantics<parallel>], iteration_bounds = array<i64: 4, 1>, scalar_prefetch = 0 : i64, scratch_operands = 0 : i64, tpu.core_type = #tpu.core_type<tc>, window_params = [{transform_indices = @transform_0, window_bounds = array<i64: 1, 512, 64>}, {transform_indices = @transform_1, window_bounds = array<i64: 1, 64, 128>}, {transform_indices = @transform_2, window_bounds = array<i64: 1, 512, 128>}, {transform_indices = @transform_3, window_bounds = array<i64: 1, 1, 2, 128>}]} {
    %c0 = arith.constant 0 : index
    %c0_0 = arith.constant 0 : index
    %c0_1 = arith.constant 0 : index
    %0 = vector.load %arg2[%c0, %c0_0, %c0_1] : memref<1x512x64xbf16, #tpu.memory_space<vmem>>, vector<1x512x64xbf16>
    %1 = vector.shape_cast %0 : vector<1x512x64xbf16> to vector<512x64xbf16>
    %c0_2 = arith.constant 0 : index
    %c0_3 = arith.constant 0 : index
    %c0_4 = arith.constant 0 : index
    %2 = vector.load %arg3[%c0_2, %c0_3, %c0_4] : memref<1x64x128xbf16, #tpu.memory_space<vmem>>, vector<1x64x128xbf16>
    %3 = vector.shape_cast %2 : vector<1x64x128xbf16> to vector<64x128xbf16>
    %cst = arith.constant dense<0.000000e+00> : vector<512x128xf32>
    %4 = tpu.matmul %1, %3, %cst {dimension_numbers = #tpu.dot_dimension_numbers<[1], [0], [0], [1], [0, 0, 1, 1], [], []>} : vector<512x64xbf16>, vector<64x128xbf16>, vector<512x128xf32> -> vector<512x128xf32>
    %c0_5 = arith.constant 0 : index
    %c0_6 = arith.constant 0 : index
    %c0_7 = arith.constant 0 : index
    %5 = vector.load %arg4[%c0_5, %c0_6, %c0_7] : memref<1x512x128xf32, #tpu.memory_space<vmem>>, vector<1x512x128xf32>
    %6 = vector.shape_cast %5 : vector<1x512x128xf32> to vector<512x128xf32>
    %7 = vector.shape_cast %4 : vector<512x128xf32> to vector<1x512x128xf32>
    tpu.vector_store %arg4[%c0_5, %c0_6, %c0_7], %7 {strides = array<i32>} : memref<1x512x128xf32, #tpu.memory_space<vmem>>, vector<1x512x128xf32>,
    %cst_8 = arith.constant dense<0.000000e+00> : vector<128xf32>
    %8 = vector.multi_reduction <add>, %4, %cst_8 [0] : vector<512x128xf32> to vector<128xf32>
    %9 = vector.shape_cast %8 : vector<128xf32> to vector<1x128xf32>
    %10 = arith.mulf %4, %4 : vector<512x128xf32>
    %cst_9 = arith.constant dense<0.000000e+00> : vector<128xf32>
    %11 = vector.multi_reduction <add>, %10, %cst_9 [0] : vector<512x128xf32> to vector<128xf32>
    %12 = vector.shape_cast %11 : vector<128xf32> to vector<1x128xf32>
    %13 = tpu.concatenate %9, %12 in 0 : vector<1x128xf32>, vector<1x128xf32> -> vector<2x128xf32>
    %c0_10 = arith.constant 0 : index
    %c0_11 = arith.constant 0 : index
    %c0_12 = arith.constant 0 : index
    %c0_13 = arith.constant 0 : index
    %14 = vector.load %arg5[%c0_10, %c0_11, %c0_12, %c0_13] : memref<1x1x2x128xf32, #tpu.memory_space<vmem>>, vector<1x1x2x128xf32>
    %15 = vector.shape_cast %14 : vector<1x1x2x128xf32> to vector<2x128xf32>
    %16 = vector.shape_cast %13 : vector<2x128xf32> to vector<1x1x2x128xf32>
    tpu.vector_store %arg5[%c0_10, %c0_11, %c0_12, %c0_13], %16 {strides = array<i32>} : memref<1x1x2x128xf32, #tpu.memory_space<vmem>>, vector<1x1x2x128xf32>,
    return
  }
  func.func @transform_0(%arg0: i32, %arg1: i32) -> (i32, i32, i32) {
    %c0_i32 = arith.constant 0 : i32
    %c0_i32_0 = arith.constant 0 : i32
    return %arg0, %arg1, %c0_i32 : i32, i32, i32
  }
  func.func @transform_1(%arg0: i32, %arg1: i32) -> (i32, i32, i32) {
    %c0_i32 = arith.constant 0 : i32
    %c0_i32_0 = arith.constant 0 : i32
    %c0_i32_1 = arith.constant 0 : i32
    return %arg0, %c0_i32, %c0_i32_0 : i32, i32, i32
  }
  func.func @transform_2(%arg0: i32, %arg1: i32) -> (i32, i32, i32) {
    %c0_i32 = arith.constant 0 : i32
    %c0_i32_0 = arith.constant 0 : i32
    return %arg0, %arg1, %c0_i32 : i32, i32, i32
  }
  func.func @transform_3(%arg0: i32, %arg1: i32) -> (i32, i32, i32, i32) {
    %c0_i32 = arith.constant 0 : i32
    %c0_i32_0 = arith.constant 0 : i32
    %c0_i32_1 = arith.constant 0 : i32
    return %arg0, %arg1, %c0_i32, %c0_i32_0 : i32, i32, i32, i32
  }
}

module attributes {stable_mosaic.version = 11 : i64} {
  func.func @_bn_relu_kernel(%arg0: i32, %arg1: i32, %arg2: memref<1x512x128xf32, #tpu.memory_space<vmem>>, %arg3: memref<1x128xf32, #tpu.memory_space<vmem>>, %arg4: memref<1x128xf32, #tpu.memory_space<vmem>>, %arg5: memref<1x512x128xf32, #tpu.memory_space<vmem>>) attributes {dimension_semantics = [#tpu.dimension_semantics<parallel>, #tpu.dimension_semantics<parallel>], iteration_bounds = array<i64: 4, 1>, scalar_prefetch = 0 : i64, scratch_operands = 0 : i64, tpu.core_type = #tpu.core_type<tc>, window_params = [{transform_indices = @transform_0, window_bounds = array<i64: 1, 512, 128>}, {pipeline_mode = #tpu.pipeline_mode<synchronous>, transform_indices = @transform_1, window_bounds = array<i64: 1, 128>}, {pipeline_mode = #tpu.pipeline_mode<synchronous>, transform_indices = @transform_2, window_bounds = array<i64: 1, 128>}, {transform_indices = @transform_3, window_bounds = array<i64: 1, 512, 128>}]} {
    %c0 = arith.constant 0 : index
    %c0_0 = arith.constant 0 : index
    %c0_1 = arith.constant 0 : index
    %0 = vector.load %arg2[%c0, %c0_0, %c0_1] : memref<1x512x128xf32, #tpu.memory_space<vmem>>, vector<1x512x128xf32>
    %1 = vector.shape_cast %0 : vector<1x512x128xf32> to vector<512x128xf32>
    %c0_2 = arith.constant 0 : index
    %c0_3 = arith.constant 0 : index
    %2 = vector.load %arg3[%c0_2, %c0_3] : memref<1x128xf32, #tpu.memory_space<vmem>>, vector<1x128xf32>
    %3 = vector.broadcast %2 : vector<1x128xf32> to vector<512x128xf32>
    %4 = arith.mulf %1, %3 : vector<512x128xf32>
    %c0_4 = arith.constant 0 : index
    %c0_5 = arith.constant 0 : index
    %5 = vector.load %arg4[%c0_4, %c0_5] : memref<1x128xf32, #tpu.memory_space<vmem>>, vector<1x128xf32>
    %6 = vector.broadcast %5 : vector<1x128xf32> to vector<512x128xf32>
    %7 = arith.addf %4, %6 : vector<512x128xf32>
    %cst = arith.constant 0.000000e+00 : f32
    %8 = vector.broadcast %cst : f32 to vector<512x128xf32>
    %9 = arith.maximumf %7, %8 : vector<512x128xf32>
    %c0_6 = arith.constant 0 : index
    %c0_7 = arith.constant 0 : index
    %c0_8 = arith.constant 0 : index
    %10 = vector.load %arg5[%c0_6, %c0_7, %c0_8] : memref<1x512x128xf32, #tpu.memory_space<vmem>>, vector<1x512x128xf32>
    %11 = vector.shape_cast %10 : vector<1x512x128xf32> to vector<512x128xf32>
    %12 = vector.shape_cast %9 : vector<512x128xf32> to vector<1x512x128xf32>
    tpu.vector_store %arg5[%c0_6, %c0_7, %c0_8], %12 {strides = array<i32>} : memref<1x512x128xf32, #tpu.memory_space<vmem>>, vector<1x512x128xf32>,
    return
  }
  func.func @transform_0(%arg0: i32, %arg1: i32) -> (i32, i32, i32) {
    %c0_i32 = arith.constant 0 : i32
    %c0_i32_0 = arith.constant 0 : i32
    return %arg0, %arg1, %c0_i32 : i32, i32, i32
  }
  func.func @transform_1(%arg0: i32, %arg1: i32) -> (i32, i32) {
    %c0_i32 = arith.constant 0 : i32
    %c0_i32_0 = arith.constant 0 : i32
    %c0_i32_1 = arith.constant 0 : i32
    return %c0_i32, %c0_i32_0 : i32, i32
  }
  func.func @transform_2(%arg0: i32, %arg1: i32) -> (i32, i32) {
    %c0_i32 = arith.constant 0 : i32
    %c0_i32_0 = arith.constant 0 : i32
    %c0_i32_1 = arith.constant 0 : i32
    return %c0_i32, %c0_i32_0 : i32, i32
  }
  func.func @transform_3(%arg0: i32, %arg1: i32) -> (i32, i32, i32) {
    %c0_i32 = arith.constant 0 : i32
    %c0_i32_0 = arith.constant 0 : i32
    return %arg0, %arg1, %c0_i32 : i32, i32, i32
  }
}

module attributes {stable_mosaic.version = 11 : i64} {
  func.func @_mm_bias_tanh_kernel(%arg0: i32, %arg1: i32, %arg2: memref<1x1024x32xbf16, #tpu.memory_space<vmem>>, %arg3: memref<1x32x128xbf16, #tpu.memory_space<vmem>>, %arg4: memref<1x128xf32, #tpu.memory_space<vmem>>, %arg5: memref<1x1024x128xf32, #tpu.memory_space<vmem>>) attributes {dimension_semantics = [#tpu.dimension_semantics<parallel>, #tpu.dimension_semantics<parallel>], iteration_bounds = array<i64: 4, 2>, scalar_prefetch = 0 : i64, scratch_operands = 0 : i64, tpu.core_type = #tpu.core_type<tc>, window_params = [{transform_indices = @transform_0, window_bounds = array<i64: 1, 1024, 32>}, {transform_indices = @transform_1, window_bounds = array<i64: 1, 32, 128>}, {pipeline_mode = #tpu.pipeline_mode<synchronous>, transform_indices = @transform_2, window_bounds = array<i64: 1, 128>}, {transform_indices = @transform_3, window_bounds = array<i64: 1, 1024, 128>}]} {
    %c0 = arith.constant 0 : index
    %c0_0 = arith.constant 0 : index
    %c0_1 = arith.constant 0 : index
    %0 = vector.load %arg2[%c0, %c0_0, %c0_1] : memref<1x1024x32xbf16, #tpu.memory_space<vmem>>, vector<1x1024x32xbf16>
    %1 = vector.shape_cast %0 : vector<1x1024x32xbf16> to vector<1024x32xbf16>
    %c0_2 = arith.constant 0 : index
    %c0_3 = arith.constant 0 : index
    %c0_4 = arith.constant 0 : index
    %2 = vector.load %arg3[%c0_2, %c0_3, %c0_4] : memref<1x32x128xbf16, #tpu.memory_space<vmem>>, vector<1x32x128xbf16>
    %3 = vector.shape_cast %2 : vector<1x32x128xbf16> to vector<32x128xbf16>
    %cst = arith.constant dense<0.000000e+00> : vector<1024x128xf32>
    %4 = tpu.matmul %1, %3, %cst {dimension_numbers = #tpu.dot_dimension_numbers<[1], [0], [0], [1], [0, 0, 1, 1], [], []>} : vector<1024x32xbf16>, vector<32x128xbf16>, vector<1024x128xf32> -> vector<1024x128xf32>
    %c0_5 = arith.constant 0 : index
    %c0_6 = arith.constant 0 : index
    %5 = vector.load %arg4[%c0_5, %c0_6] : memref<1x128xf32, #tpu.memory_space<vmem>>, vector<1x128xf32>
    %6 = vector.broadcast %5 : vector<1x128xf32> to vector<1024x128xf32>
    %7 = arith.addf %4, %6 : vector<1024x128xf32>
    %8 = math.tanh %7 : vector<1024x128xf32>
    %c0_7 = arith.constant 0 : index
    %c0_8 = arith.constant 0 : index
    %c0_9 = arith.constant 0 : index
    %9 = vector.load %arg5[%c0_7, %c0_8, %c0_9] : memref<1x1024x128xf32, #tpu.memory_space<vmem>>, vector<1x1024x128xf32>
    %10 = vector.shape_cast %9 : vector<1x1024x128xf32> to vector<1024x128xf32>
    %11 = vector.shape_cast %8 : vector<1024x128xf32> to vector<1x1024x128xf32>
    tpu.vector_store %arg5[%c0_7, %c0_8, %c0_9], %11 {strides = array<i32>} : memref<1x1024x128xf32, #tpu.memory_space<vmem>>, vector<1x1024x128xf32>,
    return
  }
  func.func @transform_0(%arg0: i32, %arg1: i32) -> (i32, i32, i32) {
    %c0_i32 = arith.constant 0 : i32
    %c0_i32_0 = arith.constant 0 : i32
    return %arg0, %arg1, %c0_i32 : i32, i32, i32
  }
  func.func @transform_1(%arg0: i32, %arg1: i32) -> (i32, i32, i32) {
    %c0_i32 = arith.constant 0 : i32
    %c0_i32_0 = arith.constant 0 : i32
    %c0_i32_1 = arith.constant 0 : i32
    return %arg0, %c0_i32, %c0_i32_0 : i32, i32, i32
  }
  func.func @transform_2(%arg0: i32, %arg1: i32) -> (i32, i32) {
    %c0_i32 = arith.constant 0 : i32
    %c0_i32_0 = arith.constant 0 : i32
    %c0_i32_1 = arith.constant 0 : i32
    return %c0_i32, %c0_i32_0 : i32, i32
  }
  func.func @transform_3(%arg0: i32, %arg1: i32) -> (i32, i32, i32) {
    %c0_i32 = arith.constant 0 : i32
    %c0_i32_0 = arith.constant 0 : i32
    return %arg0, %arg1, %c0_i32 : i32, i32, i32
  }
}

</mosaic_0001>

<llo_original>
// kernel: tile.17
$region0: #{tile.17}
  #allocation0 [shape = 's32[1]{0}', space=sflag, size = 0x4, scoped, tag = 'scoped memory for tile.17']
  %s0 = inlined_call_operand.vmem [shape: f32[64], index: 0, kind: input, shape index: {}]
  %s1 = inlined_call_operand.vmem [shape: f32[16,64], index: 1, kind: output, shape index: {}]
  // Predicated region
  $region2: #{tile.17} parent=0 // pred_check
    _
  $region3: #{tile.17} parent=0 // pred_check_branch
    %3 = sbr.rel (0) target = $region5
  $region4: #{tile.17} parent=0 // pred_region
    _
  $region5: #{tile.17} parent=0 // pred_fallthru
    _
  %v4 = vld [vmem:[%s0] ss:$0 sm:$0xff]
  %5 = vst [vmem:[%s1] sm:$0xff] %v4
  %s6 = scalar_lea.vmem %s1, 8
  %7 = vst [vmem:[%s6] sm:$0xff] %v4

// kernel: tile.19
$region0: #{tile.19}
  %s0 = inlined_call_operand.vmem [shape: f32[16,64], index: 0, kind: input, shape index: {}]
  %s1 = inlined_call_operand.vmem [shape: f32[1,1024], index: 1, kind: output, shape index: {}]
  $region1: #{tile.19} parent=0
    #allocation0 [shape = 'u8[32768]{0}', space=vmem, size = 0x8000, scoped, tag = 'scoped mem for output reshape']
    %v2 = vld [vmem:[%s0] ss:$2 sm:$0xff]
    %vm3 = vcmask 523264
    %4 = vst.msk [vmem:[#allocation0] ss:$8 sm:$0xf] %vm3, %v2
    %5 = vst.msk [vmem:[#allocation0] ss:$8 sm:$0xf0] %vm3, %v2
    %s6 = scalar_lea.vmem %s0, 1
    %v7 = vld [vmem:[%s6] ss:$2 sm:$0xff]
    %8 = vrot.lane.b32.xlu0 %v7, 64
    %v9 = vpop.permute.xlu0 %8
    %vm10 = vcmask 1048064
    %11 = vst.msk [vmem:[#allocation0] ss:$8 sm:$0xf] %vm10, %v9
    %12 = vst.msk [vmem:[#allocation0] ss:$8 sm:$0xf0] %vm10, %v9
    %s14 = sshllo.u32 0, 1
    %v16 = vld [vmem:[#allocation0] sm:%s14]
    %s17 = sshllo.u32 0, 1
    %18 = vst [vmem:[%s1] sm:%s17] %v16
    %s19 = scalar_lea.vmem [#allocation0], 8
    %v20 = vld [vmem:[%s19] sm:%s14]
    %s21 = sshllo.u32 0, 1
    %s22 = scalar_lea.vmem %s1, 1
    %23 = vst [vmem:[%s22] sm:%s21] %v20
    %s24 = scalar_lea.vmem [#allocation0], 16
    %v25 = vld [vmem:[%s24] sm:%s14]
    %s26 = sshllo.u32 0, 1
    %s27 = smul.addr 1, 2
    %s28 = scalar_lea.vmem %s1, %s27
    %29 = vst [vmem:[%s28] sm:%s26] %v25
    %s30 = scalar_lea.vmem [#allocation0], 24
    %v31 = vld [vmem:[%s30] sm:%s14]
    %s32 = sshllo.u32 0, 1
    %s33 = smul.addr 1, 3
    %s34 = scalar_lea.vmem %s1, %s33
    %35 = vst [vmem:[%s34] sm:%s32] %v31
    %s36 = scalar_lea.vmem [#allocation0], 32
    %v37 = vld [vmem:[%s36] sm:%s14]
    %s38 = sshllo.u32 0, 1
    %s39 = smul.addr 1, 4
    %s40 = scalar_lea.vmem %s1, %s39
    %41 = vst [vmem:[%s40] sm:%s38] %v37
    %s42 = scalar_lea.vmem [#allocation0], 40
    %v43 = vld [vmem:[%s42] sm:%s14]
    %s44 = sshllo.u32 0, 1
    %s45 = smul.addr 1, 5
    %s46 = scalar_lea.vmem %s1, %s45
    %47 = vst [vmem:[%s46] sm:%s44] %v43
    %s48 = scalar_lea.vmem [#allocation0], 48
    %v49 = vld [vmem:[%s48] sm:%s14]
    %s50 = sshllo.u32 0, 1
    %s51 = smul.addr 1, 6
    %s52 = scalar_lea.vmem %s1, %s51
    %53 = vst [vmem:[%s52] sm:%s50] %v49
    %s54 = scalar_lea.vmem [#allocation0], 56
    %v55 = vld [vmem:[%s54] sm:%s14]
    %s56 = sshllo.u32 0, 1
    %s57 = smul.addr 1, 7
    %s58 = scalar_lea.vmem %s1, %s57
    %59 = vst [vmem:[%s58] sm:%s56] %v55

// kernel: squeeze.11
$region0: #{squeeze.11}
  %s0 = inlined_call_operand.vmem [shape: bf16[1,2,1024], index: 0, kind: input, shape index: {}]
  %s1 = inlined_call_operand.vmem [shape: bf16[2,4,4,64], index: 1, kind: output, shape index: {}]
  $region1: #{squeeze.11} parent=0
    #allocation0 [shape = 'u8[32768]{0}', space=vmem, size = 0x8000, scoped, tag = 'scoped mem for output reshape']
    #allocation1 [shape = 'u8[32768]{0}', space=vmem, size = 0x8000, scoped, tag = 'scoped mem for input reshape']
    %s3 = smul.u32 1, 2
    %s4 = sshllo.u32 0, %s3
    %s5 = smul.addr 1, 7
    %s6 = scalar_lea.vmem %s0, %s5
    %s7 = sshrl.u32 %s4, 1
    %s8 = sor.u32 %s4, %s7
    %s9 = sand.u32 %s8, 85
    %s10 = sshrl.u32 %s9, 1
    %s11 = sor.u32 %s9, %s10
    %s12 = sand.u32 51, %s11
    %s13 = sshrl.u32 %s12, 2
    %s14 = sor.u32 %s12, %s13
    %s15 = sand.u32 15, %s14
    %v16 = vld [vmem:[%s6] sm:%s15]
    %v17 = vunpack.c.l.bf16 %v16
    %v18 = vunpack.c.h.bf16 %v16
    %s19 = scalar_lea.vmem [#allocation1], 56
    %20 = vst [vmem:[%s19] sm:%s4] %v17
    %s21 = smul.addr 1, 6
    %s22 = scalar_lea.vmem %s0, %s21
    %s23 = sshrl.u32 %s4, 1
    %s24 = sor.u32 %s4, %s23
    %s25 = sand.u32 %s24, 85
    %s26 = sshrl.u32 %s25, 1
    %s27 = sor.u32 %s25, %s26
    %s28 = sand.u32 51, %s27
    %s29 = sshrl.u32 %s28, 2
    %s30 = sor.u32 %s28, %s29
    %s31 = sand.u32 15, %s30
    %v32 = vld [vmem:[%s22] sm:%s31]
    %v33 = vunpack.c.l.bf16 %v32
    %v34 = vunpack.c.h.bf16 %v32
    %s35 = scalar_lea.vmem [#allocation1], 48
    %36 = vst [vmem:[%s35] sm:%s4] %v33
    %s37 = smul.addr 1, 5
    %s38 = scalar_lea.vmem %s0, %s37
    %s39 = sshrl.u32 %s4, 1
    %s40 = sor.u32 %s4, %s39
    %s41 = sand.u32 %s40, 85
    %s42 = sshrl.u32 %s41, 1
    %s43 = sor.u32 %s41, %s42
    %s44 = sand.u32 51, %s43
    %s45 = sshrl.u32 %s44, 2
    %s46 = sor.u32 %s44, %s45
    %s47 = sand.u32 15, %s46
    %v48 = vld [vmem:[%s38] sm:%s47]
    %v49 = vunpack.c.l.bf16 %v48
    %v50 = vunpack.c.h.bf16 %v48
    %s51 = scalar_lea.vmem [#allocation1], 40
    %52 = vst [vmem:[%s51] sm:%s4] %v49
    %s53 = smul.addr 1, 4
    %s54 = scalar_lea.vmem %s0, %s53
    %s55 = sshrl.u32 %s4, 1
    %s56 = sor.u32 %s4, %s55
    %s57 = sand.u32 %s56, 85
    %s58 = sshrl.u32 %s57, 1
    %s59 = sor.u32 %s57, %s58
    %s60 = sand.u32 51, %s59
    %s61 = sshrl.u32 %s60, 2
    %s62 = sor.u32 %s60, %s61
    %s63 = sand.u32 15, %s62
    %v64 = vld [vmem:[%s54] sm:%s63]
    %v65 = vunpack.c.l.bf16 %v64
    %v66 = vunpack.c.h.bf16 %v64
    %s67 = scalar_lea.vmem [#allocation1], 32
    %68 = vst [vmem:[%s67] sm:%s4] %v65
    %s69 = smul.addr 1, 3
    %s70 = scalar_lea.vmem %s0, %s69
    %s71 = sshrl.u32 %s4, 1
    %s72 = sor.u32 %s4, %s71
    %s73 = sand.u32 %s72, 85
    %s74 = sshrl.u32 %s73, 1
    %s75 = sor.u32 %s73, %s74
    %s76 = sand.u32 51, %s75
    %s77 = sshrl.u32 %s76, 2
    %s78 = sor.u32 %s76, %s77
    %s79 = sand.u32 15, %s78
    %v80 = vld [vmem:[%s70] sm:%s79]
    %v81 = vunpack.c.l.bf16 %v80
    %v82 = vunpack.c.h.bf16 %v80
    %s83 = scalar_lea.vmem [#allocation1], 24
    %84 = vst [vmem:[%s83] sm:%s4] %v81
    %s85 = smul.addr 1, 2
    %s86 = scalar_lea.vmem %s0, %s85
    %s87 = sshrl.u32 %s4, 1
    %s88 = sor.u32 %s4, %s87
    %s89 = sand.u32 %s88, 85
    %s90 = sshrl.u32 %s89, 1
    %s91 = sor.u32 %s89, %s90
    %s92 = sand.u32 51, %s91
    %s93 = sshrl.u32 %s92, 2
    %s94 = sor.u32 %s92, %s93
    %s95 = sand.u32 15, %s94
    %v96 = vld [vmem:[%s86] sm:%s95]
    %v97 = vunpack.c.l.bf16 %v96
    %v98 = vunpack.c.h.bf16 %v96
    %s99 = scalar_lea.vmem [#allocation1], 16
    %100 = vst [vmem:[%s99] sm:%s4] %v97
    %s101 = scalar_lea.vmem %s0, 1
    %s102 = sshrl.u32 %s4, 1
    %s103 = sor.u32 %s4, %s102
    %s104 = sand.u32 %s103, 85
    %s105 = sshrl.u32 %s104, 1
    %s106 = sor.u32 %s104, %s105
    %s107 = sand.u32 51, %s106
    %s108 = sshrl.u32 %s107, 2
    %s109 = sor.u32 %s107, %s108
    %s110 = sand.u32 15, %s109
    %v111 = vld [vmem:[%s101] sm:%s110]
    %v112 = vunpack.c.l.bf16 %v111
    %v113 = vunpack.c.h.bf16 %v111
    %s114 = scalar_lea.vmem [#allocation1], 8
    %115 = vst [vmem:[%s114] sm:%s4] %v112
    %s116 = sshrl.u32 %s4, 1
    %s117 = sor.u32 %s4, %s116
    %s118 = sand.u32 %s117, 85
    %s119 = sshrl.u32 %s118, 1
    %s120 = sor.u32 %s118, %s119
    %s121 = sand.u32 51, %s120
    %s122 = sshrl.u32 %s121, 2
    %s123 = sor.u32 %s121, %s122
    %s124 = sand.u32 15, %s123
    %v125 = vld [vmem:[%s0] sm:%s124]
    %v126 = vunpack.c.l.bf16 %v125
    %v127 = vunpack.c.h.bf16 %v125
    %128 = vst [vmem:[#allocation1] sm:%s4] %v126
    %v129 = vld [vmem:[#allocation1] sm:$0x3]
    %vm130 = vcmask 523264
    %131 = vst.msk [vmem:[#allocation0] sm:$0x1] %vm130, %v129
    %s132 = scalar_lea.vmem [#allocation0], 31
    %133 = vst.msk [vmem:[%s132] sm:$0x2] %vm130, %v129
    %s134 = scalar_lea.vmem [#allocation1], 8
    %v135 = vld [vmem:[%s134] sm:$0x3]
    %vm136 = vcmask 523264
    %s137 = scalar_lea.vmem [#allocation0], 2
    %138 = vst.msk [vmem:[%s137] sm:$0x1] %vm136, %v135
    %s139 = scalar_lea.vmem [#allocation0], 33
    %140 = vst.msk [vmem:[%s139] sm:$0x2] %vm136, %v135
    %s141 = scalar_lea.vmem [#allocation1], 16
    %v142 = vld [vmem:[%s141] sm:$0x3]
    %vm143 = vcmask 523264
    %s144 = scalar_lea.vmem [#allocation0], 8
    %145 = vst.msk [vmem:[%s144] sm:$0x1] %vm143, %v142
    %s146 = scalar_lea.vmem [#allocation0], 39
    %147 = vst.msk [vmem:[%s146] sm:$0x2] %vm143, %v142
    %s148 = scalar_lea.vmem [#allocation1], 24
    %v149 = vld [vmem:[%s148] sm:$0x3]
    %vm150 = vcmask 523264
    %s151 = scalar_lea.vmem [#allocation0], 10
    %152 = vst.msk [vmem:[%s151] sm:$0x1] %vm150, %v149
    %s153 = scalar_lea.vmem [#allocation0], 41
    %154 = vst.msk [vmem:[%s153] sm:$0x2] %vm150, %v149
    %s155 = scalar_lea.vmem [#allocation1], 32
    %v156 = vld [vmem:[%s155] sm:$0x3]
    %vm157 = vcmask 523264
    %s158 = scalar_lea.vmem [#allocation0], 16
    %159 = vst.msk [vmem:[%s158] sm:$0x1] %vm157, %v156
    %s160 = scalar_lea.vmem [#allocation0], 47
    %161 = vst.msk [vmem:[%s160] sm:$0x2] %vm157, %v156
    %s162 = scalar_lea.vmem [#allocation1], 40
    %v163 = vld [vmem:[%s162] sm:$0x3]
    %vm164 = vcmask 523264
    %s165 = scalar_lea.vmem [#allocation0], 18
    %166 = vst.msk [vmem:[%s165] sm:$0x1] %vm164, %v163
    %s167 = scalar_lea.vmem [#allocation0], 49
    %168 = vst.msk [vmem:[%s167] sm:$0x2] %vm164, %v163
    %s169 = scalar_lea.vmem [#allocation1], 48
    %v170 = vld [vmem:[%s169] sm:$0x3]
    %vm171 = vcmask 523264
    %s172 = scalar_lea.vmem [#allocation0], 24
    %173 = vst.msk [vmem:[%s172] sm:$0x1] %vm171, %v170
    %s174 = scalar_lea.vmem [#allocation0], 55
    %175 = vst.msk [vmem:[%s174] sm:$0x2] %vm171, %v170
    %s176 = scalar_lea.vmem [#allocation1], 56
    %v177 = vld [vmem:[%s176] sm:$0x3]
    %vm178 = vcmask 523264
    %s179 = scalar_lea.vmem [#allocation0], 26
    %180 = vst.msk [vmem:[%s179] sm:$0x1] %vm178, %v177
    %s181 = scalar_lea.vmem [#allocation0], 57
    %182 = vst.msk [vmem:[%s181] sm:$0x2] %vm178, %v177
    %v183 = vld [vmem:[#allocation1] ss:$8 sm:$0xf]
    %v184 = vld [vmem:[#allocation1] ss:$8 sm:$0xf0]
    %vm185 = vcmask 1047556
    %v186 = vsel %vm185, %v184, %v183
    %187 = vrot.lane.b32.xlu0 %v186, 64
    %v188 = vpop.permute.xlu0 %187
    %vm189 = vcmask 523264
    %s190 = scalar_lea.vmem [#allocation0], 1
    %191 = vst.msk [vmem:[%s190] ss:$2 sm:$0x3] %vm189, %v188
    %s192 = scalar_lea.vmem [#allocation0], 5
    %193 = vst.msk [vmem:[%s192] ss:$2 sm:$0xc] %vm189, %v188
    %s194 = scalar_lea.vmem [#allocation0], 9
    %195 = vst.msk [vmem:[%s194] ss:$2 sm:$0x30] %vm189, %v188
    %s196 = scalar_lea.vmem [#allocation0], 13
    %197 = vst.msk [vmem:[%s196] ss:$2 sm:$0xc0] %vm189, %v188
    %s198 = scalar_lea.vmem [#allocation1], 1
    %v199 = vld [vmem:[%s198] ss:$8 sm:$0xf]
    %s200 = scalar_lea.vmem [#allocation1], 1
    %v201 = vld [vmem:[%s200] ss:$8 sm:$0xf0]
    %vm202 = vcmask 1047556
    %v203 = vsel %vm202, %v201, %v199
    %204 = vrot.lane.b32.xlu0 %v203, 64
    %v205 = vpop.permute.xlu0 %204
    %vm206 = vcmask 523264
    %s207 = scalar_lea.vmem [#allocation0], 33
    %208 = vst.msk [vmem:[%s207] ss:$2 sm:$0x3] %vm206, %v205
    %s209 = scalar_lea.vmem [#allocation0], 37
    %210 = vst.msk [vmem:[%s209] ss:$2 sm:$0xc] %vm206, %v205
    %s211 = scalar_lea.vmem [#allocation0], 41
    %212 = vst.msk [vmem:[%s211] ss:$2 sm:$0x30] %vm206, %v205
    %s213 = scalar_lea.vmem [#allocation0], 45
    %214 = vst.msk [vmem:[%s213] ss:$2 sm:$0xc0] %vm206, %v205
    %s216 = smul.u32 2, 2
    %s217 = sshllo.u32 0, %s216
    %s218 = sshrl.u32 %s216, 1
    %v219 = vld [vmem:[#allocation0] sm:%s217]
    %v220 = vpack.c.bf16 0.0, %v219
    %s221 = sshllo.u32 0, %s218
    %222 = vst [vmem:[%s1] sm:%s221] %v220
    %s223 = scalar_lea.vmem [#allocation0], 8
    %v224 = vld [vmem:[%s223] sm:%s217]
    %v225 = vpack.c.bf16 0.0, %v224
    %s226 = sshllo.u32 0, %s218
    %s227 = scalar_lea.vmem %s1, 2
    %228 = vst [vmem:[%s227] sm:%s226] %v225
    %s229 = scalar_lea.vmem [#allocation0], 16
    %v230 = vld [vmem:[%s229] sm:%s217]
    %v231 = vpack.c.bf16 0.0, %v230
    %s232 = sshllo.u32 0, %s218
    %s233 = smul.addr 2, 2
    %s234 = scalar_lea.vmem %s1, %s233
    %235 = vst [vmem:[%s234] sm:%s232] %v231
    %s236 = scalar_lea.vmem [#allocation0], 24
    %v237 = vld [vmem:[%s236] sm:%s217]
    %v238 = vpack.c.bf16 0.0, %v237
    %s239 = sshllo.u32 0, %s218
    %s240 = smul.addr 2, 3
    %s241 = scalar_lea.vmem %s1, %s240
    %242 = vst [vmem:[%s241] sm:%s239] %v238
    %s243 = scalar_lea.vmem [#allocation0], 32
    %v244 = vld [vmem:[%s243] sm:%s217]
    %v245 = vpack.c.bf16 0.0, %v244
    %s246 = sshllo.u32 0, %s218
    %s247 = smul.addr 2, 4
    %s248 = scalar_lea.vmem %s1, %s247
    %249 = vst [vmem:[%s248] sm:%s246] %v245
    %s250 = scalar_lea.vmem [#allocation0], 40
    %v251 = vld [vmem:[%s250] sm:%s217]
    %v252 = vpack.c.bf16 0.0, %v251
    %s253 = sshllo.u32 0, %s218
    %s254 = smul.addr 2, 5
    %s255 = scalar_lea.vmem %s1, %s254
    %256 = vst [vmem:[%s255] sm:%s253] %v252
    %s257 = scalar_lea.vmem [#allocation0], 48
    %v258 = vld [vmem:[%s257] sm:%s217]
    %v259 = vpack.c.bf16 0.0, %v258
    %s260 = sshllo.u32 0, %s218
    %s261 = smul.addr 2, 6
    %s262 = scalar_lea.vmem %s1, %s261
    %263 = vst [vmem:[%s262] sm:%s260] %v259
    %s264 = scalar_lea.vmem [#allocation0], 56
    %v265 = vld [vmem:[%s264] sm:%s217]
    %v266 = vpack.c.bf16 0.0, %v265
    %s267 = sshllo.u32 0, %s218
    %s268 = smul.addr 2, 7
    %s269 = scalar_lea.vmem %s1, %s268
    %270 = vst [vmem:[%s269] sm:%s267] %v266

// kernel: _lambda_.9
$region0: #{_lambda_.9}
  #allocation0 [shape = 'u32[]', space=smem, size = 0x4, offset = 0x4, fixed_abs, tag = 'smem constant byte address 0x4 - core index']
  #allocation1 [shape = 'u32[144,128]{1,0:T(1,128)}', space=vmem, size = 0x12000, scoped, tag = 'internal scratch']
  %s0 = inlined_call_operand.vmem [shape: bf16[1,8,8], index: 0, kind: input, shape index: {}]
  %s1 = inlined_call_operand.hbm [shape: bf16[1,8,1024], index: 1, kind: input, shape index: {}]
  %s2 = inlined_call_operand.vmem [shape: f32[1,8,1024], index: 2, kind: output, shape index: {0}]
  %s3 = inlined_call_operand.vmem [shape: f32[1,1,2,1024], index: 3, kind: output, shape index: {1}]
  %4 = xla_tuple %s2, %s3
  %s5 = sld [smem:[#allocation0]]
  $region30: #{_lambda_.9} parent=0
    _
  %s7 = ssub.s32 1, %s5
  %s8 = scalar_select 0, %s7, %s5
  $region1: #{_lambda_.9} parent=0
    #allocation2 [shape = 'u8[16384]{0}', space=vmem, size = 0x4000, scoped, tag = 'input window, operand 1, single buffered']
    #allocation3 [shape = 's32[1]{0}', space=sflag, size = 0x4, scoped, tag = 'scoped memory for _lambda_.9']
    %9 = vsyncpa [#allocation3], 0
    // Predicated region
    $region2: #{_lambda_.9} parent=1 // pred_check
      _
    $region3: #{_lambda_.9} parent=1 // pred_check_branch
      %11 = sbr.rel (0) target = $region5
    $region4: #{_lambda_.9} parent=1 // pred_region
      _
    $region5: #{_lambda_.9} parent=1 // pred_fallthru
      _
    // Predicated region
    $region6: #{_lambda_.9} parent=1 // pred_check
      _
    $region7: #{_lambda_.9} parent=1 // pred_check_branch
      %13 = sbr.rel (0) target = $region9
    $region8: #{_lambda_.9} parent=1 // pred_region
      %s15 = ssub.s32 512, 512
      %16 = vsyncadd [#allocation3], %s15
      %s18 = sshll.u32 [#allocation2], 4
      %s19 = int_to_ptr.vmem [resolvable:$true] %s18
      %21 = dma.hbm_to_vmem [thread:$0]  %s1, 512, %s19, [#allocation3]
    $region9: #{_lambda_.9} parent=1 // pred_fallthru
      _
    // Predicated region
    $region10: #{_lambda_.9} parent=1 // pred_check
      _
    $region11: #{_lambda_.9} parent=1 // pred_check_branch
      %23 = sbr.rel (0) target = $region13
    $region12: #{_lambda_.9} parent=1 // pred_region
      %24 = dma.done [#allocation3], 512
    $region13: #{_lambda_.9} parent=1 // pred_fallthru
      _
    %v26 = vld [vmem:[%s0] sm:$0xf]
    %v27 = vld [vmem:[#allocation2] sm:$0xff]
    %v28 = vld [vmem:[#allocation2 + $0x8] sm:$0xff]
    %v29 = vld [vmem:[#allocation2 + $0x10] sm:$0xff]
    %v30 = vld [vmem:[#allocation2 + $0x18] sm:$0xff]
    %v35 = vunpack.c.l.b16 %v27
    %v36 = vunpack.c.h.b16 %v27
    %v37 = vunpack.c.l.b16 %v28
    %v38 = vunpack.c.h.b16 %v28
    %v39 = vunpack.c.l.b16 %v29
    %v40 = vunpack.c.h.b16 %v29
    %v41 = vunpack.c.l.b16 %v30
    %v42 = vunpack.c.h.b16 %v30
    %v43 = vpack.c.b16 %v35, %v35
    %v44 = vpack.c.b16 %v36, %v36
    %v45 = vpack.c.b16 %v37, %v37
    %v46 = vpack.c.b16 %v38, %v38
    %v47 = vpack.c.b16 %v39, %v39
    %v48 = vpack.c.b16 %v40, %v40
    %v49 = vpack.c.b16 %v41, %v41
    %v50 = vpack.c.b16 %v42, %v42
    %vm51 = vcmask 64512
    %v53 = vsel %vm51, %v26, 0
    %vm55 = vcmask 1043456
    %v57 = vsel %vm55, %v43, 0
    %v60 = vsel %vm55, %v44, 0
    %v63 = vsel %vm55, %v45, 0
    %v66 = vsel %vm55, %v46, 0
    %v69 = vsel %vm55, %v47, 0
    %v72 = vsel %vm55, %v48, 0
    %v75 = vsel %vm55, %v49, 0
    %v78 = vsel %vm55, %v50, 0
    %80 = vmatprep.subr.bf16.mxu0 %v60
    %81 = vmatpush1.bf16.msra.mxu0 %v57
    %82 = vmatprep.subr.bf16.mxu0 0
    %83 = vmatpush1.bf16.msra.mxu0 0
    %84 = vmatprep.subr.bf16.mxu0 0
    %85 = vmatpush1.bf16.msra.mxu0 0
    %86 = vmatprep.subr.bf16.mxu0 0
    %87 = vmatpush1.bf16.msra.mxu0 0
    %88 = vmatprep.subr.bf16.mxu0 0
    %89 = vmatpush1.bf16.msra.mxu0 0
    %90 = vmatprep.subr.bf16.mxu0 0
    %91 = vmatpush1.bf16.msra.mxu0 0
    %92 = vmatprep.subr.bf16.mxu0 0
    %93 = vmatpush1.bf16.msra.mxu0 0
    %94 = vmatprep.subr.bf16.mxu0 0
    %95 = vmatpush1.bf16.msra.mxu0 0
    %96 = vmatprep.subr.bf16.mxu0 0
    %97 = vmatpush1.bf16.msra.mxu0 0
    %98 = vmatprep.subr.bf16.mxu0 0
    %99 = vmatpush1.bf16.msra.mxu0 0
    %100 = vmatprep.subr.bf16.mxu0 0
    %101 = vmatpush1.bf16.msra.mxu0 0
    %102 = vmatprep.subr.bf16.mxu0 0
    %103 = vmatpush1.bf16.msra.mxu0 0
    %104 = vmatprep.subr.bf16.mxu0 0
    %105 = vmatpush1.bf16.msra.mxu0 0
    %106 = vmatprep.subr.bf16.mxu0 0
    %107 = vmatpush1.bf16.msra.mxu0 0
    %108 = vmatprep.subr.bf16.mxu0 0
    %109 = vmatpush1.bf16.msra.mxu0 0
    %110 = vmatprep.subr.bf16.mxu0 0
    %111 = vmatpush1.bf16.msra.mxu0 0
    %112 = vmatprep.mubr.bf16.mxu0 0
    %113 = vmatmul.mubr.bf16.gmra.mrb[0].mxu0 %v53
    %v114 = vpop.f32.mrb[0].mxu0
    %v115 = vadd.f32 0.0, %v114
    %v116 = vpop.f32.mrb[0].mxu0
    %v117 = vadd.f32 0.0, %v116
    %v118 = vpop.f32.mrb[0].mxu0
    %v119 = vpop.f32.mrb[0].mxu0
    %120 = vdwg.mxu0
    %121 = vmatprep.subr.bf16.mxu0 %v66
    %122 = vmatpush1.bf16.msra.mxu0 %v63
    %123 = vmatprep.subr.bf16.mxu0 0
    %124 = vmatpush1.bf16.msra.mxu0 0
    %125 = vmatprep.subr.bf16.mxu0 0
    %126 = vmatpush1.bf16.msra.mxu0 0
    %127 = vmatprep.subr.bf16.mxu0 0
    %128 = vmatpush1.bf16.msra.mxu0 0
    %129 = vmatprep.subr.bf16.mxu0 0
    %130 = vmatpush1.bf16.msra.mxu0 0
    %131 = vmatprep.subr.bf16.mxu0 0
    %132 = vmatpush1.bf16.msra.mxu0 0
    %133 = vmatprep.subr.bf16.mxu0 0
    %134 = vmatpush1.bf16.msra.mxu0 0
    %135 = vmatprep.subr.bf16.mxu0 0
    %136 = vmatpush1.bf16.msra.mxu0 0
    %137 = vmatprep.subr.bf16.mxu0 0
    %138 = vmatpush1.bf16.msra.mxu0 0
    %139 = vmatprep.subr.bf16.mxu0 0
    %140 = vmatpush1.bf16.msra.mxu0 0
    %141 = vmatprep.subr.bf16.mxu0 0
    %142 = vmatpush1.bf16.msra.mxu0 0
    %143 = vmatprep.subr.bf16.mxu0 0
    %144 = vmatpush1.bf16.msra.mxu0 0
    %145 = vmatprep.subr.bf16.mxu0 0
    %146 = vmatpush1.bf16.msra.mxu0 0
    %147 = vmatprep.subr.bf16.mxu0 0
    %148 = vmatpush1.bf16.msra.mxu0 0
    %149 = vmatprep.subr.bf16.mxu0 0
    %150 = vmatpush1.bf16.msra.mxu0 0
    %151 = vmatprep.subr.bf16.mxu0 0
    %152 = vmatpush1.bf16.msra.mxu0 0
    %153 = vmatprep.mubr.bf16.mxu0 0
    %154 = vmatmul.mubr.bf16.gmra.mrb[0].mxu0 %v53
    %v155 = vpop.f32.mrb[0].mxu0
    %v156 = vadd.f32 0.0, %v155
    %v157 = vpop.f32.mrb[0].mxu0
    %v158 = vadd.f32 0.0, %v157
    %v159 = vpop.f32.mrb[0].mxu0
    %v160 = vpop.f32.mrb[0].mxu0
    %161 = vdwg.mxu0
    %162 = vmatprep.subr.bf16.mxu0 %v72
    %163 = vmatpush1.bf16.msra.mxu0 %v69
    %164 = vmatprep.subr.bf16.mxu0 0
    %165 = vmatpush1.bf16.msra.mxu0 0
    %166 = vmatprep.subr.bf16.mxu0 0
    %167 = vmatpush1.bf16.msra.mxu0 0
    %168 = vmatprep.subr.bf16.mxu0 0
    %169 = vmatpush1.bf16.msra.mxu0 0
    %170 = vmatprep.subr.bf16.mxu0 0
    %171 = vmatpush1.bf16.msra.mxu0 0
    %172 = vmatprep.subr.bf16.mxu0 0
    %173 = vmatpush1.bf16.msra.mxu0 0
    %174 = vmatprep.subr.bf16.mxu0 0
    %175 = vmatpush1.bf16.msra.mxu0 0
    %176 = vmatprep.subr.bf16.mxu0 0
    %177 = vmatpush1.bf16.msra.mxu0 0
    %178 = vmatprep.subr.bf16.mxu0 0
    %179 = vmatpush1.bf16.msra.mxu0 0
    %180 = vmatprep.subr.bf16.mxu0 0
    %181 = vmatpush1.bf16.msra.mxu0 0
    %182 = vmatprep.subr.bf16.mxu0 0
    %183 = vmatpush1.bf16.msra.mxu0 0
    %184 = vmatprep.subr.bf16.mxu0 0
    %185 = vmatpush1.bf16.msra.mxu0 0
    %186 = vmatprep.subr.bf16.mxu0 0
    %187 = vmatpush1.bf16.msra.mxu0 0
    %188 = vmatprep.subr.bf16.mxu0 0
    %189 = vmatpush1.bf16.msra.mxu0 0
    %190 = vmatprep.subr.bf16.mxu0 0
    %191 = vmatpush1.bf16.msra.mxu0 0
    %192 = vmatprep.subr.bf16.mxu0 0
    %193 = vmatpush1.bf16.msra.mxu0 0
    %194 = vmatprep.mubr.bf16.mxu0 0
    %195 = vmatmul.mubr.bf16.gmra.mrb[0].mxu0 %v53
    %v196 = vpop.f32.mrb[0].mxu0
    %v197 = vadd.f32 0.0, %v196
    %v198 = vpop.f32.mrb[0].mxu0
    %v199 = vadd.f32 0.0, %v198
    %v200 = vpop.f32.mrb[0].mxu0
    %v201 = vpop.f32.mrb[0].mxu0
    %202 = vdwg.mxu0
    %203 = vmatprep.subr.bf16.mxu0 %v78
    %204 = vmatpush1.bf16.msra.mxu0 %v75
    %205 = vmatprep.subr.bf16.mxu0 0
    %206 = vmatpush1.bf16.msra.mxu0 0
    %207 = vmatprep.subr.bf16.mxu0 0
    %208 = vmatpush1.bf16.msra.mxu0 0
    %209 = vmatprep.subr.bf16.mxu0 0
    %210 = vmatpush1.bf16.msra.mxu0 0
    %211 = vmatprep.subr.bf16.mxu0 0
    %212 = vmatpush1.bf16.msra.mxu0 0
    %213 = vmatprep.subr.bf16.mxu0 0
    %214 = vmatpush1.bf16.msra.mxu0 0
    %215 = vmatprep.subr.bf16.mxu0 0
    %216 = vmatpush1.bf16.msra.mxu0 0
    %217 = vmatprep.subr.bf16.mxu0 0
    %218 = vmatpush1.bf16.msra.mxu0 0
    %219 = vmatprep.subr.bf16.mxu0 0
    %220 = vmatpush1.bf16.msra.mxu0 0
    %221 = vmatprep.subr.bf16.mxu0 0
    %222 = vmatpush1.bf16.msra.mxu0 0
    %223 = vmatprep.subr.bf16.mxu0 0
    %224 = vmatpush1.bf16.msra.mxu0 0
    %225 = vmatprep.subr.bf16.mxu0 0
    %226 = vmatpush1.bf16.msra.mxu0 0
    %227 = vmatprep.subr.bf16.mxu0 0
    %228 = vmatpush1.bf16.msra.mxu0 0
    %229 = vmatprep.subr.bf16.mxu0 0
    %230 = vmatpush1.bf16.msra.mxu0 0
    %231 = vmatprep.subr.bf16.mxu0 0
    %232 = vmatpush1.bf16.msra.mxu0 0
    %233 = vmatprep.subr.bf16.mxu0 0
    %234 = vmatpush1.bf16.msra.mxu0 0
    %235 = vmatprep.mubr.bf16.mxu0 0
    %236 = vmatmul.mubr.bf16.gmra.mrb[0].mxu0 %v53
    %v237 = vpop.f32.mrb[0].mxu0
    %v238 = vadd.f32 0.0, %v237
    %v239 = vpop.f32.mrb[0].mxu0
    %v240 = vadd.f32 0.0, %v239
    %v241 = vpop.f32.mrb[0].mxu0
    %v242 = vpop.f32.mrb[0].mxu0
    %243 = vdwg.mxu0
    %244 = vst [vmem:[%s2] sm:$0xff] %v115
    %245 = vst [vmem:[%s2 + $0x8] sm:$0xff] %v117
    %246 = vst [vmem:[%s2 + $0x10] sm:$0xff] %v156
    %247 = vst [vmem:[%s2 + $0x18] sm:$0xff] %v158
    %248 = vst [vmem:[%s2 + $0x20] sm:$0xff] %v197
    %249 = vst [vmem:[%s2 + $0x28] sm:$0xff] %v199
    %250 = vst [vmem:[%s2 + $0x30] sm:$0xff] %v238
    %251 = vst [vmem:[%s2 + $0x38] sm:$0xff] %v240
    %v252 = vrot.slane %v115, 4
    %v253 = vadd.f32 %v115, %v252
    %v254 = vrot.slane %v253, 2
    %v255 = vadd.f32 %v253, %v254
    %v256 = vrot.slane %v255, 1
    %v257 = vadd.f32 %v255, %v256
    %v258 = vrot.slane %v117, 4
    %v259 = vadd.f32 %v117, %v258
    %v260 = vrot.slane %v259, 2
    %v261 = vadd.f32 %v259, %v260
    %v262 = vrot.slane %v261, 1
    %v263 = vadd.f32 %v261, %v262
    %v264 = vrot.slane %v156, 4
    %v265 = vadd.f32 %v156, %v264
    %v266 = vrot.slane %v265, 2
    %v267 = vadd.f32 %v265, %v266
    %v268 = vrot.slane %v267, 1
    %v269 = vadd.f32 %v267, %v268
    %v270 = vrot.slane %v158, 4
    %v271 = vadd.f32 %v158, %v270
    %v272 = vrot.slane %v271, 2
    %v273 = vadd.f32 %v271, %v272
    %v274 = vrot.slane %v273, 1
    %v275 = vadd.f32 %v273, %v274
    %v276 = vrot.slane %v197, 4
    %v277 = vadd.f32 %v197, %v276
    %v278 = vrot.slane %v277, 2
    %v279 = vadd.f32 %v277, %v278
    %v280 = vrot.slane %v279, 1
    %v281 = vadd.f32 %v279, %v280
    %v282 = vrot.slane %v199, 4
    %v283 = vadd.f32 %v199, %v282
    %v284 = vrot.slane %v283, 2
    %v285 = vadd.f32 %v283, %v284
    %v286 = vrot.slane %v285, 1
    %v287 = vadd.f32 %v285, %v286
    %v288 = vrot.slane %v238, 4
    %v289 = vadd.f32 %v238, %v288
    %v290 = vrot.slane %v289, 2
    %v291 = vadd.f32 %v289, %v290
    %v292 = vrot.slane %v291, 1
    %v293 = vadd.f32 %v291, %v292
    %v294 = vrot.slane %v240, 4
    %v295 = vadd.f32 %v240, %v294
    %v296 = vrot.slane %v295, 2
    %v297 = vadd.f32 %v295, %v296
    %v298 = vrot.slane %v297, 1
    %v299 = vadd.f32 %v297, %v298
    %v300 = vmul.f32 %v115, %v115
    %v301 = vmul.f32 %v117, %v117
    %v302 = vmul.f32 %v156, %v156
    %v303 = vmul.f32 %v158, %v158
    %v304 = vmul.f32 %v197, %v197
    %v305 = vmul.f32 %v199, %v199
    %v306 = vmul.f32 %v238, %v238
    %v307 = vmul.f32 %v240, %v240
    %v308 = vrot.slane %v300, 4
    %v309 = vadd.f32 %v300, %v308
    %v310 = vrot.slane %v309, 2
    %v311 = vadd.f32 %v309, %v310
    %v312 = vrot.slane %v311, 1
    %v313 = vadd.f32 %v311, %v312
    %v314 = vrot.slane %v301, 4
    %v315 = vadd.f32 %v301, %v314
    %v316 = vrot.slane %v315, 2
    %v317 = vadd.f32 %v315, %v316
    %v318 = vrot.slane %v317, 1
    %v319 = vadd.f32 %v317, %v318
    %v320 = vrot.slane %v302, 4
    %v321 = vadd.f32 %v302, %v320
    %v322 = vrot.slane %v321, 2
    %v323 = vadd.f32 %v321, %v322
    %v324 = vrot.slane %v323, 1
    %v325 = vadd.f32 %v323, %v324
    %v326 = vrot.slane %v303, 4
    %v327 = vadd.f32 %v303, %v326
    %v328 = vrot.slane %v327, 2
    %v329 = vadd.f32 %v327, %v328
    %v330 = vrot.slane %v329, 1
    %v331 = vadd.f32 %v329, %v330
    %v332 = vrot.slane %v304, 4
    %v333 = vadd.f32 %v304, %v332
    %v334 = vrot.slane %v333, 2
    %v335 = vadd.f32 %v333, %v334
    %v336 = vrot.slane %v335, 1
    %v337 = vadd.f32 %v335, %v336
    %v338 = vrot.slane %v305, 4
    %v339 = vadd.f32 %v305, %v338
    %v340 = vrot.slane %v339, 2
    %v341 = vadd.f32 %v339, %v340
    %v342 = vrot.slane %v341, 1
    %v343 = vadd.f32 %v341, %v342
    %v344 = vrot.slane %v306, 4
    %v345 = vadd.f32 %v306, %v344
    %v346 = vrot.slane %v345, 2
    %v347 = vadd.f32 %v345, %v346
    %v348 = vrot.slane %v347, 1
    %v349 = vadd.f32 %v347, %v348
    %v350 = vrot.slane %v307, 4
    %v351 = vadd.f32 %v307, %v350
    %v352 = vrot.slane %v351, 2
    %v353 = vadd.f32 %v351, %v352
    %v354 = vrot.slane %v353, 1
    %v355 = vadd.f32 %v353, %v354
    %vm356 = vcmask 1040384
    %v357 = vsel %vm356, %v257, %v313
    %v358 = vsel %vm356, %v263, %v319
    %v359 = vsel %vm356, %v269, %v325
    %v360 = vsel %vm356, %v275, %v331
    %v361 = vsel %vm356, %v281, %v337
    %v362 = vsel %vm356, %v287, %v343
    %v363 = vsel %vm356, %v293, %v349
    %v364 = vsel %vm356, %v299, %v355
    %v373 = vcombine.low %v357, %v358
    %v374 = vcombine.low %v359, %v360
    %v376 = vunpack.c.l.s4 1983009808
    %v377 = vunpack.c.0.s8 %v376
    %v378 = vlaneseq
    %v379 = vshrl.u32 %v378, 7
    %v380 = vsub.s32 %v377, %v379
    %v381 = vrot.slane %v373, %v380
    %v383 = vunpack.c.l.s4 1983009808
    %v384 = vunpack.c.0.s8 %v383
    %v385 = vlaneseq
    %v386 = vshrl.u32 %v385, 7
    %v387 = vsub.s32 %v384, %v386
    %v388 = vrot.slane %v374, %v387
    %v389 = vcombine.low %v381, %v388
    %v390 = vcombine.low %v361, %v362
    %v391 = vcombine.low %v363, %v364
    %v393 = vunpack.c.l.s4 1983009808
    %v394 = vunpack.c.0.s8 %v393
    %v395 = vlaneseq
    %v396 = vshrl.u32 %v395, 7
    %v397 = vsub.s32 %v394, %v396
    %v398 = vrot.slane %v390, %v397
    %v400 = vunpack.c.l.s4 1983009808
    %v401 = vunpack.c.0.s8 %v400
    %v402 = vlaneseq
    %v403 = vshrl.u32 %v402, 7
    %v404 = vsub.s32 %v401, %v403
    %v405 = vrot.slane %v391, %v404
    %v406 = vcombine.low %v398, %v405
    %409 = vst [vmem:[%s3] sm:$0xff] %v389
    %410 = vst [vmem:[%s3 + $0x8] sm:$0xff] %v406
    // Predicated region
    $region14: #{_lambda_.9} parent=1 // pred_check
      _
    $region15: #{_lambda_.9} parent=1 // pred_check_branch
      %412 = sbr.rel (0) target = $region17
    $region16: #{_lambda_.9} parent=1 // pred_region
      _
    $region17: #{_lambda_.9} parent=1 // pred_fallthru
      _
    // Predicated region
    $region18: #{_lambda_.9} parent=1 // pred_check
      _
    $region19: #{_lambda_.9} parent=1 // pred_check_branch
      %414 = sbr.rel (0) target = $region21
    $region20: #{_lambda_.9} parent=1 // pred_region
      _
    $region21: #{_lambda_.9} parent=1 // pred_fallthru
      _
    // Predicated region
    $region22: #{_lambda_.9} parent=1 // pred_check
      _
    $region23: #{_lambda_.9} parent=1 // pred_check_branch
      %416 = sbr.rel (0) target = $region25
    $region24: #{_lambda_.9} parent=1 // pred_region
      _
    $region25: #{_lambda_.9} parent=1 // pred_fallthru
      _
    // Predicated region
    $region26: #{_lambda_.9} parent=1 // pred_check
      _
    $region27: #{_lambda_.9} parent=1 // pred_check_branch
      %418 = sbr.rel (0) target = $region29
    $region28: #{_lambda_.9} parent=1 // pred_region
      _
    $region29: #{_lambda_.9} parent=1 // pred_fallthru
      _
    %419 = vsyncpa [#allocation3], 1

// kernel: _lambda_.10
$region0: #{_lambda_.10}
  #allocation0 [shape = 'u32[]', space=smem, size = 0x4, offset = 0x4, fixed_abs, tag = 'smem constant byte address 0x4 - core index']
  #allocation1 [shape = 'u32[144,128]{1,0:T(1,128)}', space=vmem, size = 0x12000, scoped, tag = 'internal scratch']
  %s0 = inlined_call_operand.vmem [shape: f32[1,8,1024], index: 0, kind: input, shape index: {}]
  %s1 = inlined_call_operand.vmem [shape: f32[1,1024], index: 1, kind: input, shape index: {}]
  %s2 = inlined_call_operand.vmem [shape: f32[1,1024], index: 2, kind: input, shape index: {}]
  %s3 = inlined_call_operand.vmem [shape: f32[1,8,1024], index: 3, kind: output, shape index: {}]
  %s4 = sld [smem:[#allocation0]]
  $region22: #{_lambda_.10} parent=0
    _
  %s6 = ssub.s32 1, %s4
  %s7 = scalar_select 0, %s6, %s4
  // Predicated region
  $region2: #{_lambda_.10} parent=0 // pred_check
    _
  $region3: #{_lambda_.10} parent=0 // pred_check_branch
    %9 = sbr.rel (0) target = $region5
  $region4: #{_lambda_.10} parent=0 // pred_region
    _
  $region5: #{_lambda_.10} parent=0 // pred_fallthru
    _
  // Predicated region
  $region6: #{_lambda_.10} parent=0 // pred_check
    _
  $region7: #{_lambda_.10} parent=0 // pred_check_branch
    %11 = sbr.rel (0) target = $region9
  $region8: #{_lambda_.10} parent=0 // pred_region
    _
  $region9: #{_lambda_.10} parent=0 // pred_fallthru
    _
  // Predicated region
  $region10: #{_lambda_.10} parent=0 // pred_check
    _
  $region11: #{_lambda_.10} parent=0 // pred_check_branch
    %13 = sbr.rel (0) target = $region13
  $region12: #{_lambda_.10} parent=0 // pred_region
    _
  $region13: #{_lambda_.10} parent=0 // pred_fallthru
    _
  %v14 = vld [vmem:[%s0] sm:$0xff]
  %v15 = vld [vmem:[%s0 + $0x8] sm:$0xff]
  %v16 = vld [vmem:[%s0 + $0x10] sm:$0xff]
  %v17 = vld [vmem:[%s0 + $0x18] sm:$0xff]
  %v18 = vld [vmem:[%s0 + $0x20] sm:$0xff]
  %v19 = vld [vmem:[%s0 + $0x28] sm:$0xff]
  %v20 = vld [vmem:[%s0 + $0x30] sm:$0xff]
  %v21 = vld [vmem:[%s0 + $0x38] sm:$0xff]
  %v22 = vld [vmem:[%s1] sm:$0xff]
  %v24 = vlaneseq
  %v25 = vshrl.u32 %v24, 7
  %v26 = vsub.s32 0, %v25
  %v27 = vrot.slane %v22, %v26
  %v28 = vlaneseq
  %v29 = vshrl.u32 %v28, 7
  %v30 = vsub.s32 1, %v29
  %v31 = vrot.slane %v22, %v30
  %v32 = vlaneseq
  %v33 = vshrl.u32 %v32, 7
  %v34 = vsub.s32 2, %v33
  %v35 = vrot.slane %v22, %v34
  %v36 = vlaneseq
  %v37 = vshrl.u32 %v36, 7
  %v38 = vsub.s32 3, %v37
  %v39 = vrot.slane %v22, %v38
  %v40 = vlaneseq
  %v41 = vshrl.u32 %v40, 7
  %v42 = vsub.s32 4, %v41
  %v43 = vrot.slane %v22, %v42
  %v44 = vlaneseq
  %v45 = vshrl.u32 %v44, 7
  %v46 = vsub.s32 5, %v45
  %v47 = vrot.slane %v22, %v46
  %v48 = vlaneseq
  %v49 = vshrl.u32 %v48, 7
  %v50 = vsub.s32 6, %v49
  %v51 = vrot.slane %v22, %v50
  %v52 = vlaneseq
  %v53 = vshrl.u32 %v52, 7
  %v54 = vsub.s32 7, %v53
  %v55 = vrot.slane %v22, %v54
  %v64 = vmul.f32 %v14, %v27
  %v65 = vmul.f32 %v15, %v31
  %v66 = vmul.f32 %v16, %v35
  %v67 = vmul.f32 %v17, %v39
  %v68 = vmul.f32 %v18, %v43
  %v69 = vmul.f32 %v19, %v47
  %v70 = vmul.f32 %v20, %v51
  %v71 = vmul.f32 %v21, %v55
  %v72 = vld [vmem:[%s2] sm:$0xff]
  %v74 = vlaneseq
  %v75 = vshrl.u32 %v74, 7
  %v76 = vsub.s32 0, %v75
  %v77 = vrot.slane %v72, %v76
  %v78 = vlaneseq
  %v79 = vshrl.u32 %v78, 7
  %v80 = vsub.s32 1, %v79
  %v81 = vrot.slane %v72, %v80
  %v82 = vlaneseq
  %v83 = vshrl.u32 %v82, 7
  %v84 = vsub.s32 2, %v83
  %v85 = vrot.slane %v72, %v84
  %v86 = vlaneseq
  %v87 = vshrl.u32 %v86, 7
  %v88 = vsub.s32 3, %v87
  %v89 = vrot.slane %v72, %v88
  %v90 = vlaneseq
  %v91 = vshrl.u32 %v90, 7
  %v92 = vsub.s32 4, %v91
  %v93 = vrot.slane %v72, %v92
  %v94 = vlaneseq
  %v95 = vshrl.u32 %v94, 7
  %v96 = vsub.s32 5, %v95
  %v97 = vrot.slane %v72, %v96
  %v98 = vlaneseq
  %v99 = vshrl.u32 %v98, 7
  %v100 = vsub.s32 6, %v99
  %v101 = vrot.slane %v72, %v100
  %v102 = vlaneseq
  %v103 = vshrl.u32 %v102, 7
  %v104 = vsub.s32 7, %v103
  %v105 = vrot.slane %v72, %v104
  %v114 = vadd.f32 %v64, %v77
  %v115 = vadd.f32 %v65, %v81
  %v116 = vadd.f32 %v66, %v85
  %v117 = vadd.f32 %v67, %v89
  %v118 = vadd.f32 %v68, %v93
  %v119 = vadd.f32 %v69, %v97
  %v120 = vadd.f32 %v70, %v101
  %v121 = vadd.f32 %v71, %v105
  %v122 = vmax.f32 %v114, 0.0
  %v123 = vmax.f32 %v115, 0.0
  %v124 = vmax.f32 %v116, 0.0
  %v125 = vmax.f32 %v117, 0.0
  %v126 = vmax.f32 %v118, 0.0
  %v127 = vmax.f32 %v119, 0.0
  %v128 = vmax.f32 %v120, 0.0
  %v129 = vmax.f32 %v121, 0.0
  %130 = vst [vmem:[%s3] sm:$0xff] %v122
  %131 = vst [vmem:[%s3 + $0x8] sm:$0xff] %v123
  %132 = vst [vmem:[%s3 + $0x10] sm:$0xff] %v124
  %133 = vst [vmem:[%s3 + $0x18] sm:$0xff] %v125
  %134 = vst [vmem:[%s3 + $0x20] sm:$0xff] %v126
  %135 = vst [vmem:[%s3 + $0x28] sm:$0xff] %v127
  %136 = vst [vmem:[%s3 + $0x30] sm:$0xff] %v128
  %137 = vst [vmem:[%s3 + $0x38] sm:$0xff] %v129
  // Predicated region
  $region14: #{_lambda_.10} parent=0 // pred_check
    _
  $region15: #{_lambda_.10} parent=0 // pred_check_branch
    %139 = sbr.rel (0) target = $region17
  $region16: #{_lambda_.10} parent=0 // pred_region
    _
  $region17: #{_lambda_.10} parent=0 // pred_fallthru
    _
  // Predicated region
  $region18: #{_lambda_.10} parent=0 // pred_check
    _
  $region19: #{_lambda_.10} parent=0 // pred_check_branch
    %141 = sbr.rel (0) target = $region21
  $region20: #{_lambda_.10} parent=0 // pred_region
    _
  $region21: #{_lambda_.10} parent=0 // pred_fallthru
    _

// kernel: _lambda_.12
$region0: #{_lambda_.12}
  #allocation0 [shape = 'u32[]', space=smem, size = 0x4, offset = 0x4, fixed_abs, tag = 'smem constant byte address 0x4 - core index']
  #allocation1 [shape = 'u32[144,128]{1,0:T(1,128)}', space=vmem, size = 0x12000, scoped, tag = 'internal scratch']
  %s0 = inlined_call_operand.vmem [shape: f32[4,32,128], index: 0, kind: input, shape index: {}]
  %s1 = inlined_call_operand.vmem [shape: f32[1,128], index: 1, kind: input, shape index: {}]
  %s2 = inlined_call_operand.vmem [shape: f32[1,128], index: 2, kind: input, shape index: {}]
  %s3 = inlined_call_operand.vmem [shape: f32[4,32,128], index: 3, kind: output, shape index: {}]
  %s4 = sld [smem:[#allocation0]]
  $region45: #{_lambda_.12} parent=0
    _
  %s6 = ssub.s32 1, %s4
  %s7 = scalar_select 0, %s6, %s4
  loop: start=0, step=1, limit=6
  $region2: #{_lambda_.12} parent=0 // loop_pre_header
    _
  $region3: #{_lambda_.12} parent=0 // loop_header
    %s9 = sphi 0, %s13
    %p10 = scmp.ge.s32.totalorder %s9, 6
    %s16 = sphi 0, %s28
    %s17 = sphi 0, %s24
    %s18 = sphi 0, %s16
    %s19 = sphi 0, %s17
    %s20 = sphi 0, %s18
    %s21 = sphi 0, %s19
    %s33 = sphi 0, %s35
    %s36 = sphi 0, %s33
    %s37 = sphi 0, %s36
    %s53 = sphi 0, %s37
    %s57 = sphi 0, %s57
    %s59 = sphi 0, %s57
    %s60 = sphi 0, %s59
    %s74 = sphi 0, %s60
    %s78 = sphi 0, %s78
    %s80 = sphi 0, %s78
    %s81 = sphi 0, %s80
    %s95 = sphi 0, %s81
    %s103 = sphi 0, %s105
    %s106 = sphi 0, %s103
    %s107 = sphi 0, %s106
    %s123 = sphi 0, %s107
  $region4: #{_lambda_.12} parent=0 // loop_header_branch
    %12 = sbr.rel (%p10) target = $region8
  $region5: #{_lambda_.12} parent=0 // loop_body
    %s14 = ssub.s32 %s9, 1
    %s15 = ssub.s32 %s9, 2
    %s22 = sadd.s32 1, %s17
    %p23 = scmp.ge.s32.totalorder %s22, 1
    %s24 = scalar_select %p23, 0, %s22
    %s25 = sadd.s32 1, %s16
    %s26 = scalar_select %p23, %s25, %s16
    %p27 = scmp.ge.s32.totalorder %s26, 4
    %s28 = scalar_select %p27, 0, %s26
    %s29 = ssub.s32 %s16, %s28
    %s30 = ssub.s32 %s17, %s24
    %s31 = sor.u32 %s29, %s30
    %p32 = scmp.eq.s32.totalorder %s31, 0
    %s34 = sadd.s32 %s33, 1
    %s35 = scalar_select %p32, %s33, %s34
    %p38 = pneg %p32
    %p39 = scmp.eq.s32.totalorder %s9, 3
    %p40 = por %p38, %p39
    %p41 = scmp.ne.s32.totalorder %s33, %s36
    %p42 = scmp.eq.s32.totalorder %s9, 0
    %p43 = por %p41, %p42
    %p44 = scmp.ne.s32.totalorder %s33, %s36
    %p45 = scmp.eq.s32.totalorder %s14, 3
    %p46 = por %p44, %p45
    %p47 = scmp.ne.s32.totalorder %s36, %s37
    %p48 = scmp.eq.s32.totalorder %s14, 0
    %p49 = por %p47, %p48
    %p50 = scmp.ne.s32.totalorder %s36, %s37
    %p51 = scmp.eq.s32.totalorder %s15, 3
    %p52 = por %p50, %p51
    %p54 = scmp.ne.s32.totalorder %s37, %s53
    %p55 = scmp.eq.s32.totalorder %s15, 0
    %p56 = por %p54, %p55
    %s58 = sadd.s32 %s57, 1
    %p61 = scmp.eq.s32.totalorder %s9, 3
    %p62 = scmp.ne.s32.totalorder %s57, %s59
    %p63 = scmp.eq.s32.totalorder %s9, 0
    %p64 = por %p62, %p63
    %p65 = scmp.ne.s32.totalorder %s57, %s59
    %p66 = scmp.eq.s32.totalorder %s14, 3
    %p67 = por %p65, %p66
    %p68 = scmp.ne.s32.totalorder %s59, %s60
    %p69 = scmp.eq.s32.totalorder %s14, 0
    %p70 = por %p68, %p69
    %p71 = scmp.ne.s32.totalorder %s59, %s60
    %p72 = scmp.eq.s32.totalorder %s15, 3
    %p73 = por %p71, %p72
    %p75 = scmp.ne.s32.totalorder %s60, %s74
    %p76 = scmp.eq.s32.totalorder %s15, 0
    %p77 = por %p75, %p76
    %s79 = sadd.s32 %s78, 1
    %p82 = scmp.eq.s32.totalorder %s9, 3
    %p83 = scmp.ne.s32.totalorder %s78, %s80
    %p84 = scmp.eq.s32.totalorder %s9, 0
    %p85 = por %p83, %p84
    %p86 = scmp.ne.s32.totalorder %s78, %s80
    %p87 = scmp.eq.s32.totalorder %s14, 3
    %p88 = por %p86, %p87
    %p89 = scmp.ne.s32.totalorder %s80, %s81
    %p90 = scmp.eq.s32.totalorder %s14, 0
    %p91 = por %p89, %p90
    %p92 = scmp.ne.s32.totalorder %s80, %s81
    %p93 = scmp.eq.s32.totalorder %s15, 3
    %p94 = por %p92, %p93
    %p96 = scmp.ne.s32.totalorder %s81, %s95
    %p97 = scmp.eq.s32.totalorder %s15, 0
    %p98 = por %p96, %p97
    %s99 = ssub.s32 %s16, %s28
    %s100 = ssub.s32 %s17, %s24
    %s101 = sor.u32 %s99, %s100
    %p102 = scmp.eq.s32.totalorder %s101, 0
    %s104 = sadd.s32 %s103, 1
    %s105 = scalar_select %p102, %s103, %s104
    %p108 = pneg %p102
    %p109 = scmp.eq.s32.totalorder %s9, 3
    %p110 = por %p108, %p109
    %p111 = scmp.ne.s32.totalorder %s103, %s106
    %p112 = scmp.eq.s32.totalorder %s9, 0
    %p113 = por %p111, %p112
    %p114 = scmp.ne.s32.totalorder %s103, %s106
    %p115 = scmp.eq.s32.totalorder %s14, 3
    %p116 = por %p114, %p115
    %p117 = scmp.ne.s32.totalorder %s106, %s107
    %p118 = scmp.eq.s32.totalorder %s14, 0
    %p119 = por %p117, %p118
    %p120 = scmp.ne.s32.totalorder %s106, %s107
    %p121 = scmp.eq.s32.totalorder %s15, 3
    %p122 = por %p120, %p121
    %p124 = scmp.ne.s32.totalorder %s107, %s123
    %p125 = scmp.eq.s32.totalorder %s15, 0
    %p126 = por %p124, %p125
    %p127 = scmp.le.s32.totalorder 1, %s9
    %p128 = scmp.lt.s32.totalorder %s9, 5
    %p129 = pnand %p127, %p128
    %p130 = pneg %p129
    // Predicated region
    $region9: #{_lambda_.12} parent=5 // pred_check
      _
    $region10: #{_lambda_.12} parent=5 // pred_check_branch
      %132 = sbr.rel (%p129) target = $region12
    $region11: #{_lambda_.12} parent=5 // pred_region
      %s133 = ssub.s32 %s9, 1
      // Predicated region
      $region13: #{_lambda_.12} parent=11 // pred_check
        %p134 = pneg %p70
      $region14: #{_lambda_.12} parent=11 // pred_check_branch
        %136 = sbr.rel (%p134) target = $region16
      $region15: #{_lambda_.12} parent=11 // pred_region
        _
      $region16: #{_lambda_.12} parent=11 // pred_fallthru
        _
      // Predicated region
      $region17: #{_lambda_.12} parent=11 // pred_check
        %p137 = pneg %p91
      $region18: #{_lambda_.12} parent=11 // pred_check_branch
        %139 = sbr.rel (%p137) target = $region20
      $region19: #{_lambda_.12} parent=11 // pred_region
        _
      $region20: #{_lambda_.12} parent=11 // pred_fallthru
        _
    $region12: #{_lambda_.12} parent=5 // pred_fallthru
      _
    %p140 = scmp.lt.s32.totalorder %s9, 4
    // Predicated region
    $region21: #{_lambda_.12} parent=5 // pred_check
      %p141 = pneg %p140
    $region22: #{_lambda_.12} parent=5 // pred_check_branch
      %143 = sbr.rel (%p141) target = $region24
    $region23: #{_lambda_.12} parent=5 // pred_region
      // Predicated region
      $region25: #{_lambda_.12} parent=23 // pred_check
        %p144 = pneg %p43
      $region26: #{_lambda_.12} parent=23 // pred_check_branch
        %146 = sbr.rel (%p144) target = $region28
      $region27: #{_lambda_.12} parent=23 // pred_region
        %s147 = smul.u32 4, %s17
        %p148 = scmp.lt.s32.totalorder %s16, 3
        %s149 = scalar_select %p148, %s16, 3
        %p150 = scmp.lt.s32.totalorder %s147, 3
        %s151 = scalar_select %p150, %s147, 3
        %s152 = smul.addr %s149, 4
        %s153 = sadd.s32 %s151, %s152
        %s154 = smul.addr %s153, 8
        %s155 = scalar_lea.vmem %s0, %s154
        %s156 = smul.u32 4, %s17
      $region28: #{_lambda_.12} parent=23 // pred_fallthru
        _
    $region24: #{_lambda_.12} parent=5 // pred_fallthru
      _
    %p157 = scmp.le.s32.totalorder 1, %s9
    %p158 = scmp.lt.s32.totalorder %s9, 5
    %p159 = pnand %p157, %p158
    %p160 = pneg %p159
    // Predicated region
    $region29: #{_lambda_.12} parent=5 // pred_check
      _
    $region30: #{_lambda_.12} parent=5 // pred_check_branch
      %162 = sbr.rel (%p159) target = $region32
    $region31: #{_lambda_.12} parent=5 // pred_region
      %s163 = ssub.s32 %s9, 1
      %s164 = smul.u32 4, %s19
      %p165 = scmp.lt.s32.totalorder %s18, 3
      %s166 = scalar_select %p165, %s18, 3
      %p167 = scmp.lt.s32.totalorder %s164, 3
      %s168 = scalar_select %p167, %s164, 3
      %s169 = smul.addr %s166, 4
      %s170 = sadd.s32 %s168, %s169
      %s171 = smul.addr %s170, 8
      %s172 = scalar_lea.vmem %s0, %s171
      %p173 = pneg %p49
      %p174 = pneg %p46
      %p175 = pneg %p70
      %p176 = pneg %p67
      %p177 = pneg %p91
      %p178 = pneg %p88
      %p179 = pneg %p119
      %p180 = pneg %p116
      %s181 = smul.u32 4, %s19
      %p182 = scmp.lt.s32.totalorder %s18, 3
      %s183 = scalar_select %p182, %s18, 3
      %p184 = scmp.lt.s32.totalorder %s181, 3
      %s185 = scalar_select %p184, %s181, 3
      %s186 = smul.addr %s183, 4
      %s187 = sadd.s32 %s185, %s186
      %s188 = smul.addr %s187, 8
      %s189 = scalar_lea.vmem %s3, %s188
      %s190 = smul.u32 4, %s19
      %p191 = scmp.lt.s32.totalorder %s18, 3
      %s192 = scalar_select %p191, %s18, 3
      %p193 = scmp.lt.s32.totalorder %s190, 3
      %s194 = scalar_select %p193, %s190, 3
      %s195 = smul.addr %s192, 4
      %s196 = sadd.s32 %s194, %s195
      %s197 = smul.addr %s196, 8
      %s198 = scalar_lea.vmem %s0, %s197
      %s199 = smul.u32 4, %s19
      %s200 = smul.u32 4, %s19
      %p201 = scmp.lt.s32.totalorder %s18, 3
      %s202 = scalar_select %p201, %s18, 3
      %p203 = scmp.lt.s32.totalorder %s200, 3
      %s204 = scalar_select %p203, %s200, 3
      %s205 = smul.addr %s202, 4
      %s206 = sadd.s32 %s204, %s205
      %s207 = smul.addr %s206, 8
      %s208 = scalar_lea.vmem %s3, %s207
      %s209 = smul.u32 4, %s19
      %v210 = vld [vmem:[%s198] sm:$0xff]
      %v211 = vld [vmem:[%s198 + $0x8] sm:$0xff]
      %v212 = vld [vmem:[%s198 + $0x10] sm:$0xff]
      %v213 = vld [vmem:[%s198 + $0x18] sm:$0xff]
      %v214 = vld [vmem:[%s1] sm:$0x1]
      %v216 = vlaneseq
      %v217 = vshrl.u32 %v216, 7
      %v218 = vsub.s32 0, %v217
      %v219 = vrot.slane %v214, %v218
      %v221 = vmul.f32 %v210, %v219
      %v222 = vmul.f32 %v211, %v219
      %v223 = vmul.f32 %v212, %v219
      %v224 = vmul.f32 %v213, %v219
      %v225 = vld [vmem:[%s2] sm:$0x1]
      %v227 = vlaneseq
      %v228 = vshrl.u32 %v227, 7
      %v229 = vsub.s32 0, %v228
      %v230 = vrot.slane %v225, %v229
      %v232 = vadd.f32 %v221, %v230
      %v233 = vadd.f32 %v222, %v230
      %v234 = vadd.f32 %v223, %v230
      %v235 = vadd.f32 %v224, %v230
      %v236 = vmax.f32 %v232, 0.0
      %v237 = vmax.f32 %v233, 0.0
      %v238 = vmax.f32 %v234, 0.0
      %v239 = vmax.f32 %v235, 0.0
      %240 = vst [vmem:[%s208] sm:$0xff] %v236
      %241 = vst [vmem:[%s208 + $0x8] sm:$0xff] %v237
      %242 = vst [vmem:[%s208 + $0x10] sm:$0xff] %v238
      %243 = vst [vmem:[%s208 + $0x18] sm:$0xff] %v239
      %s244 = smul.u32 4, %s19
      %p245 = scmp.lt.s32.totalorder %s18, 3
      %s246 = scalar_select %p245, %s18, 3
      %p247 = scmp.lt.s32.totalorder %s244, 3
      %s248 = scalar_select %p247, %s244, 3
      %s249 = smul.addr %s246, 4
      %s250 = sadd.s32 %s248, %s249
      %s251 = smul.addr %s250, 8
      %s252 = scalar_lea.vmem %s3, %s251
      // Predicated region
      $region33: #{_lambda_.12} parent=31 // pred_check
        %p253 = pneg %p116
      $region34: #{_lambda_.12} parent=31 // pred_check_branch
        %255 = sbr.rel (%p253) target = $region36
      $region35: #{_lambda_.12} parent=31 // pred_region
        %s256 = smul.u32 4, %s19
      $region36: #{_lambda_.12} parent=31 // pred_fallthru
        _
    $region32: #{_lambda_.12} parent=5 // pred_fallthru
      _
    %p257 = scmp.le.s32.totalorder 2, %s9
    // Predicated region
    $region37: #{_lambda_.12} parent=5 // pred_check
      %p258 = pneg %p257
    $region38: #{_lambda_.12} parent=5 // pred_check_branch
      %260 = sbr.rel (%p258) target = $region40
    $region39: #{_lambda_.12} parent=5 // pred_region
      %s261 = ssub.s32 %s9, 2
      // Predicated region
      $region41: #{_lambda_.12} parent=39 // pred_check
        %p262 = pneg %p122
      $region42: #{_lambda_.12} parent=39 // pred_check_branch
        %264 = sbr.rel (%p262) target = $region44
      $region43: #{_lambda_.12} parent=39 // pred_region
        %s265 = smul.u32 4, %s21
        %p266 = scmp.lt.s32.totalorder %s20, 3
        %s267 = scalar_select %p266, %s20, 3
        %p268 = scmp.lt.s32.totalorder %s265, 3
        %s269 = scalar_select %p268, %s265, 3
        %s270 = smul.addr %s267, 4
        %s271 = sadd.s32 %s269, %s270
        %s272 = smul.addr %s271, 8
        %s273 = scalar_lea.vmem %s3, %s272
      $region44: #{_lambda_.12} parent=39 // pred_fallthru
        _
    $region40: #{_lambda_.12} parent=5 // pred_fallthru
      _
  $region6: #{_lambda_.12} parent=0 // loop_footer
    %s13 = sadd.s32 1, %s9
  $region7: #{_lambda_.12} parent=0 // loop_footer_branch
    %8 = sbr.rel target = $region3
  $region8: #{_lambda_.12} parent=0 // loop_exit
    _

// kernel: _lambda_.11
$region0: #{_lambda_.11}
  #allocation0 [shape = 'u32[]', space=smem, size = 0x4, offset = 0x4, fixed_abs, tag = 'smem constant byte address 0x4 - core index']
  #allocation1 [shape = 'u32[144,128]{1,0:T(1,128)}', space=vmem, size = 0x12000, scoped, tag = 'internal scratch']
  %s0 = inlined_call_operand.vmem [shape: bf16[4,32,256], index: 0, kind: input, shape index: {}]
  %s1 = inlined_call_operand.hbm [shape: bf16[4,256,128], index: 1, kind: input, shape index: {}]
  %s2 = inlined_call_operand.vmem [shape: f32[4,32,128], index: 2, kind: output, shape index: {0}]
  %s3 = inlined_call_operand.vmem [shape: f32[4,1,2,128], index: 3, kind: output, shape index: {1}]
  %4 = xla_tuple %s2, %s3
  %s5 = sld [smem:[#allocation0]]
  $region53: #{_lambda_.11} parent=0
    _
  %s7 = ssub.s32 1, %s5
  %s8 = scalar_select 0, %s7, %s5
  $region1: #{_lambda_.11} parent=0
    #allocation2 [shape = 'u8[131072]{0}', space=vmem, size = 0x20000, scoped, tag = 'input window, operand 1']
    #allocation3 [shape = 's32[2]{0}', space=sflag, size = 0x8, scoped, tag = 'scoped memory for _lambda_.11']
    %9 = vsyncpa [#allocation3], 0
    %s10 = scalar_lea.sflag [#allocation3], 1
    %11 = vsyncpa %s10, 0
    loop: start=0, step=1, limit=6
    $region2: #{_lambda_.11} parent=1 // loop_pre_header
      _
    $region3: #{_lambda_.11} parent=1 // loop_header
      %s13 = sphi 0, %s17
      %p14 = scmp.ge.s32.totalorder %s13, 6
      %s20 = sphi 0, %s32
      %s21 = sphi 0, %s28
      %s22 = sphi 0, %s20
      %s23 = sphi 0, %s21
      %s24 = sphi 0, %s22
      %s25 = sphi 0, %s23
      %s37 = sphi 0, %s39
      %s40 = sphi 0, %s37
      %s41 = sphi 0, %s40
      %s57 = sphi 0, %s41
      %s63 = sphi 0, %s65
      %s66 = sphi 0, %s63
      %s67 = sphi 0, %s66
      %s83 = sphi 0, %s67
      %s91 = sphi 0, %s93
      %s94 = sphi 0, %s91
      %s95 = sphi 0, %s94
      %s111 = sphi 0, %s95
      %s119 = sphi 0, %s121
      %s122 = sphi 0, %s119
      %s123 = sphi 0, %s122
      %s139 = sphi 0, %s123
    $region4: #{_lambda_.11} parent=1 // loop_header_branch
      %16 = sbr.rel (%p14) target = $region8
    $region5: #{_lambda_.11} parent=1 // loop_body
      %s18 = ssub.s32 %s13, 1
      %s19 = ssub.s32 %s13, 2
      %s26 = sadd.s32 1, %s21
      %p27 = scmp.ge.s32.totalorder %s26, 1
      %s28 = scalar_select %p27, 0, %s26
      %s29 = sadd.s32 1, %s20
      %s30 = scalar_select %p27, %s29, %s20
      %p31 = scmp.ge.s32.totalorder %s30, 4
      %s32 = scalar_select %p31, 0, %s30
      %s33 = ssub.s32 %s20, %s32
      %s34 = ssub.s32 %s21, %s28
      %s35 = sor.u32 %s33, %s34
      %p36 = scmp.eq.s32.totalorder %s35, 0
      %s38 = sadd.s32 %s37, 1
      %s39 = scalar_select %p36, %s37, %s38
      %p42 = pneg %p36
      %p43 = scmp.eq.s32.totalorder %s13, 3
      %p44 = por %p42, %p43
      %p45 = scmp.ne.s32.totalorder %s37, %s40
      %p46 = scmp.eq.s32.totalorder %s13, 0
      %p47 = por %p45, %p46
      %p48 = scmp.ne.s32.totalorder %s37, %s40
      %p49 = scmp.eq.s32.totalorder %s18, 3
      %p50 = por %p48, %p49
      %p51 = scmp.ne.s32.totalorder %s40, %s41
      %p52 = scmp.eq.s32.totalorder %s18, 0
      %p53 = por %p51, %p52
      %p54 = scmp.ne.s32.totalorder %s40, %s41
      %p55 = scmp.eq.s32.totalorder %s19, 3
      %p56 = por %p54, %p55
      %p58 = scmp.ne.s32.totalorder %s41, %s57
      %p59 = scmp.eq.s32.totalorder %s19, 0
      %p60 = por %p58, %p59
      %s61 = ssub.s32 %s20, %s32
      %p62 = scmp.eq.s32.totalorder %s61, 0
      %s64 = sadd.s32 %s63, 1
      %s65 = scalar_select %p62, %s63, %s64
      %p68 = pneg %p62
      %p69 = scmp.eq.s32.totalorder %s13, 3
      %p70 = por %p68, %p69
      %p71 = scmp.ne.s32.totalorder %s63, %s66
      %p72 = scmp.eq.s32.totalorder %s13, 0
      %p73 = por %p71, %p72
      %p74 = scmp.ne.s32.totalorder %s63, %s66
      %p75 = scmp.eq.s32.totalorder %s18, 3
      %p76 = por %p74, %p75
      %p77 = scmp.ne.s32.totalorder %s66, %s67
      %p78 = scmp.eq.s32.totalorder %s18, 0
      %p79 = por %p77, %p78
      %p80 = scmp.ne.s32.totalorder %s66, %s67
      %p81 = scmp.eq.s32.totalorder %s19, 3
      %p82 = por %p80, %p81
      %p84 = scmp.ne.s32.totalorder %s67, %s83
      %p85 = scmp.eq.s32.totalorder %s19, 0
      %p86 = por %p84, %p85
      %s87 = ssub.s32 %s20, %s32
      %s88 = ssub.s32 %s21, %s28
      %s89 = sor.u32 %s87, %s88
      %p90 = scmp.eq.s32.totalorder %s89, 0
      %s92 = sadd.s32 %s91, 1
      %s93 = scalar_select %p90, %s91, %s92
      %p96 = pneg %p90
      %p97 = scmp.eq.s32.totalorder %s13, 3
      %p98 = por %p96, %p97
      %p99 = scmp.ne.s32.totalorder %s91, %s94
      %p100 = scmp.eq.s32.totalorder %s13, 0
      %p101 = por %p99, %p100
      %p102 = scmp.ne.s32.totalorder %s91, %s94
      %p103 = scmp.eq.s32.totalorder %s18, 3
      %p104 = por %p102, %p103
      %p105 = scmp.ne.s32.totalorder %s94, %s95
      %p106 = scmp.eq.s32.totalorder %s18, 0
      %p107 = por %p105, %p106
      %p108 = scmp.ne.s32.totalorder %s94, %s95
      %p109 = scmp.eq.s32.totalorder %s19, 3
      %p110 = por %p108, %p109
      %p112 = scmp.ne.s32.totalorder %s95, %s111
      %p113 = scmp.eq.s32.totalorder %s19, 0
      %p114 = por %p112, %p113
      %s115 = ssub.s32 %s20, %s32
      %s116 = ssub.s32 %s21, %s28
      %s117 = sor.u32 %s115, %s116
      %p118 = scmp.eq.s32.totalorder %s117, 0
      %s120 = sadd.s32 %s119, 1
      %s121 = scalar_select %p118, %s119, %s120
      %p124 = pneg %p118
      %p125 = scmp.eq.s32.totalorder %s13, 3
      %p126 = por %p124, %p125
      %p127 = scmp.ne.s32.totalorder %s119, %s122
      %p128 = scmp.eq.s32.totalorder %s13, 0
      %p129 = por %p127, %p128
      %p130 = scmp.ne.s32.totalorder %s119, %s122
      %p131 = scmp.eq.s32.totalorder %s18, 3
      %p132 = por %p130, %p131
      %p133 = scmp.ne.s32.totalorder %s122, %s123
      %p134 = scmp.eq.s32.totalorder %s18, 0
      %p135 = por %p133, %p134
      %p136 = scmp.ne.s32.totalorder %s122, %s123
      %p137 = scmp.eq.s32.totalorder %s19, 3
      %p138 = por %p136, %p137
      %p140 = scmp.ne.s32.totalorder %s123, %s139
      %p141 = scmp.eq.s32.totalorder %s19, 0
      %p142 = por %p140, %p141
      %p143 = scmp.le.s32.totalorder 1, %s13
      %p144 = scmp.lt.s32.totalorder %s13, 5
      %p145 = pnand %p143, %p144
      %p146 = pneg %p145
      // Predicated region
      $region9: #{_lambda_.11} parent=5 // pred_check
        _
      $region10: #{_lambda_.11} parent=5 // pred_check_branch
        %148 = sbr.rel (%p145) target = $region12
      $region11: #{_lambda_.11} parent=5 // pred_region
        %s149 = ssub.s32 %s13, 1
      $region12: #{_lambda_.11} parent=5 // pred_fallthru
        _
      %p150 = scmp.lt.s32.totalorder %s13, 4
      // Predicated region
      $region13: #{_lambda_.11} parent=5 // pred_check
        %p151 = pneg %p150
      $region14: #{_lambda_.11} parent=5 // pred_check_branch
        %153 = sbr.rel (%p151) target = $region16
      $region15: #{_lambda_.11} parent=5 // pred_region
        // Predicated region
        $region17: #{_lambda_.11} parent=15 // pred_check
          %p154 = pneg %p47
        $region18: #{_lambda_.11} parent=15 // pred_check_branch
          %156 = sbr.rel (%p154) target = $region20
        $region19: #{_lambda_.11} parent=15 // pred_region
          %s157 = smul.u32 4, %s21
          %p158 = scmp.lt.s32.totalorder %s20, 3
          %s159 = scalar_select %p158, %s20, 3
          %p160 = scmp.lt.s32.totalorder %s157, 3
          %s161 = scalar_select %p160, %s157, 3
          %s162 = smul.addr %s161, 2
          %s163 = smul.addr %s159, 8
          %s164 = sadd.s32 %s162, %s163
          %s165 = smul.addr %s164, 4
          %s166 = scalar_lea.vmem %s0, %s165
          %s167 = smul.u32 4, %s21
        $region20: #{_lambda_.11} parent=15 // pred_fallthru
          _
        // Predicated region
        $region21: #{_lambda_.11} parent=15 // pred_check
          %p168 = pneg %p73
        $region22: #{_lambda_.11} parent=15 // pred_check_branch
          %170 = sbr.rel (%p168) target = $region24
        $region23: #{_lambda_.11} parent=15 // pred_region
          %s171 = sand.u32 %s63, 1
          %s172 = scalar_lea.sflag [#allocation3], %s171
          %s173 = sand.u32 %s63, 1
          %s174 = smul.addr %s173, 128
          %s175 = scalar_lea.vmem [#allocation2], %s174
          %s177 = ssub.s32 2048, 2048
          %178 = vsyncadd %s172, %s177
          %s179 = smul.addr %s20, 32
          %s180 = smul.addr %s179, 64
          %s181 = scalar_lea.hbm %s1, %s180
          %s182 = sshll.u32 %s175, 4
          %s183 = int_to_ptr.vmem [resolvable:$true] %s182
          %188 = dma.hbm_to_vmem [thread:$0]  %s181, 2048, %s183, %s172, 64, 64, 4
        $region24: #{_lambda_.11} parent=15 // pred_fallthru
          _
      $region16: #{_lambda_.11} parent=5 // pred_fallthru
        _
      %p189 = scmp.le.s32.totalorder 1, %s13
      %p190 = scmp.lt.s32.totalorder %s13, 5
      %p191 = pnand %p189, %p190
      %p192 = pneg %p191
      // Predicated region
      $region25: #{_lambda_.11} parent=5 // pred_check
        _
      $region26: #{_lambda_.11} parent=5 // pred_check_branch
        %194 = sbr.rel (%p191) target = $region28
      $region27: #{_lambda_.11} parent=5 // pred_region
        %s195 = ssub.s32 %s13, 1
        %s196 = sand.u32 %s66, 1
        %s197 = scalar_lea.sflag [#allocation3], %s196
        %s198 = sand.u32 %s66, 1
        %s199 = smul.addr %s198, 128
        %s200 = scalar_lea.vmem [#allocation2], %s199
        // Predicated region
        $region29: #{_lambda_.11} parent=27 // pred_check
          %p201 = pneg %p79
        $region30: #{_lambda_.11} parent=27 // pred_check_branch
          %203 = sbr.rel (%p201) target = $region32
        $region31: #{_lambda_.11} parent=27 // pred_region
          %204 = dma.done %s197, 2048
        $region32: #{_lambda_.11} parent=27 // pred_fallthru
          _
        %s205 = smul.u32 4, %s23
        %p206 = scmp.lt.s32.totalorder %s22, 3
        %s207 = scalar_select %p206, %s22, 3
        %p208 = scmp.lt.s32.totalorder %s205, 3
        %s209 = scalar_select %p208, %s205, 3
        %s210 = smul.addr %s209, 2
        %s211 = smul.addr %s207, 8
        %s212 = sadd.s32 %s210, %s211
        %s213 = smul.addr %s212, 4
        %s214 = scalar_lea.vmem %s0, %s213
        %p215 = pneg %p53
        %p216 = pneg %p50
        %s217 = sand.u32 %s66, 1
        %s218 = scalar_lea.sflag [#allocation3], %s217
        %s219 = sand.u32 %s66, 1
        %s220 = smul.addr %s219, 128
        %s221 = scalar_lea.vmem [#allocation2], %s220
        %p222 = pneg %p79
        %p223 = pneg %p76
        %p224 = pneg %p107
        %p225 = pneg %p104
        %s226 = smul.u32 4, %s23
        %p227 = scmp.lt.s32.totalorder %s22, 3
        %s228 = scalar_select %p227, %s22, 3
        %p229 = scmp.lt.s32.totalorder %s226, 3
        %s230 = scalar_select %p229, %s226, 3
        %s231 = smul.addr %s228, 4
        %s232 = sadd.s32 %s230, %s231
        %s233 = smul.addr %s232, 8
        %s234 = scalar_lea.vmem %s2, %s233
        %p235 = pneg %p135
        %p236 = pneg %p132
        %p237 = scmp.lt.s32.totalorder %s22, 3
        %s238 = scalar_select %p237, %s22, 3
        %p239 = scmp.lt.s32.totalorder %s23, 0
        %s240 = scalar_select %p239, %s23, 0
        %s241 = sadd.s32 %s240, %s238
        %s242 = smul.addr %s241, 2
        %s243 = scalar_lea.vmem %s3, %s242
        %s244 = smul.u32 4, %s23
        %p245 = scmp.lt.s32.totalorder %s22, 3
        %s246 = scalar_select %p245, %s22, 3
        %p247 = scmp.lt.s32.totalorder %s244, 3
        %s248 = scalar_select %p247, %s244, 3
        %s249 = smul.addr %s248, 2
        %s250 = smul.addr %s246, 8
        %s251 = sadd.s32 %s249, %s250
        %s252 = smul.addr %s251, 4
        %s253 = scalar_lea.vmem %s0, %s252
        %s254 = smul.u32 4, %s23
        %s255 = smul.u32 4, %s23
        %p256 = scmp.lt.s32.totalorder %s22, 3
        %s257 = scalar_select %p256, %s22, 3
        %p258 = scmp.lt.s32.totalorder %s255, 3
        %s259 = scalar_select %p258, %s255, 3
        %s260 = smul.addr %s257, 4
        %s261 = sadd.s32 %s259, %s260
        %s262 = smul.addr %s261, 8
        %s263 = scalar_lea.vmem %s2, %s262
        %s264 = smul.u32 4, %s23
        %p265 = scmp.lt.s32.totalorder %s22, 3
        %s266 = scalar_select %p265, %s22, 3
        %p267 = scmp.lt.s32.totalorder %s23, 0
        %s268 = scalar_select %p267, %s23, 0
        %s269 = sadd.s32 %s268, %s266
        %s270 = smul.addr %s269, 2
        %s271 = scalar_lea.vmem %s3, %s270
        %v273 = vld [vmem:[%s253] sm:$0xff]
        %v274 = vld [vmem:[%s253 + $0x8] sm:$0xff]
        %v275 = vld [vmem:[%s253 + $0x10] sm:$0xff]
        %v276 = vld [vmem:[%s253 + $0x18] sm:$0xff]
        %v277 = vld [vmem:[%s200] sm:$0xf]
        %v278 = vld [vmem:[%s200 + $0x4] sm:$0xf]
        %v279 = vld [vmem:[%s200 + $0x8] sm:$0xf]
        %v280 = vld [vmem:[%s200 + $0xc] sm:$0xf]
        %v281 = vld [vmem:[%s200 + $0x10] sm:$0xf]
        %v282 = vld [vmem:[%s200 + $0x14] sm:$0xf]
        %v283 = vld [vmem:[%s200 + $0x18] sm:$0xf]
        %v284 = vld [vmem:[%s200 + $0x1c] sm:$0xf]
        %v285 = vld [vmem:[%s200 + $0x20] sm:$0xf]
        %v286 = vld [vmem:[%s200 + $0x24] sm:$0xf]
        %v287 = vld [vmem:[%s200 + $0x28] sm:$0xf]
        %v288 = vld [vmem:[%s200 + $0x2c] sm:$0xf]
        %v289 = vld [vmem:[%s200 + $0x30] sm:$0xf]
        %v290 = vld [vmem:[%s200 + $0x34] sm:$0xf]
        %v291 = vld [vmem:[%s200 + $0x38] sm:$0xf]
        %v292 = vld [vmem:[%s200 + $0x3c] sm:$0xf]
        %v293 = vld [vmem:[%s200 + $0x40] sm:$0xf]
        %v294 = vld [vmem:[%s200 + $0x44] sm:$0xf]
        %v295 = vld [vmem:[%s200 + $0x48] sm:$0xf]
        %v296 = vld [vmem:[%s200 + $0x4c] sm:$0xf]
        %v297 = vld [vmem:[%s200 + $0x50] sm:$0xf]
        %v298 = vld [vmem:[%s200 + $0x54] sm:$0xf]
        %v299 = vld [vmem:[%s200 + $0x58] sm:$0xf]
        %v300 = vld [vmem:[%s200 + $0x5c] sm:$0xf]
        %v301 = vld [vmem:[%s200 + $0x60] sm:$0xf]
        %v302 = vld [vmem:[%s200 + $0x64] sm:$0xf]
        %v303 = vld [vmem:[%s200 + $0x68] sm:$0xf]
        %v304 = vld [vmem:[%s200 + $0x6c] sm:$0xf]
        %v305 = vld [vmem:[%s200 + $0x70] sm:$0xf]
        %v306 = vld [vmem:[%s200 + $0x74] sm:$0xf]
        %v307 = vld [vmem:[%s200 + $0x78] sm:$0xf]
        %v308 = vld [vmem:[%s200 + $0x7c] sm:$0xf]
        %v313 = vunpack.c.l.b16 %v273
        %v314 = vunpack.c.h.b16 %v273
        %v315 = vunpack.c.l.b16 %v274
        %v316 = vunpack.c.h.b16 %v274
        %v317 = vunpack.c.l.b16 %v275
        %v318 = vunpack.c.h.b16 %v275
        %v319 = vunpack.c.l.b16 %v276
        %v320 = vunpack.c.h.b16 %v276
        %v321 = vpack.c.b16 %v315, %v313
        %v322 = vpack.c.b16 %v316, %v314
        %v323 = vpack.c.b16 %v319, %v317
        %v324 = vpack.c.b16 %v320, %v318
        %v361 = vunpack.c.l.b16 %v277
        %v362 = vunpack.c.l.b16 %v278
        %v363 = vunpack.c.l.b16 %v279
        %v364 = vunpack.c.l.b16 %v280
        %v365 = vunpack.c.l.b16 %v281
        %v366 = vunpack.c.l.b16 %v282
        %v367 = vunpack.c.l.b16 %v283
        %v368 = vunpack.c.l.b16 %v284
        %v369 = vunpack.c.l.b16 %v285
        %v370 = vunpack.c.l.b16 %v286
        %v371 = vunpack.c.l.b16 %v287
        %v372 = vunpack.c.l.b16 %v288
        %v373 = vunpack.c.l.b16 %v289
        %v374 = vunpack.c.l.b16 %v290
        %v375 = vunpack.c.l.b16 %v291
        %v376 = vunpack.c.l.b16 %v292
        %v377 = vunpack.c.l.b16 %v293
        %v378 = vunpack.c.l.b16 %v294
        %v379 = vunpack.c.l.b16 %v295
        %v380 = vunpack.c.l.b16 %v296
        %v381 = vunpack.c.l.b16 %v297
        %v382 = vunpack.c.l.b16 %v298
        %v383 = vunpack.c.l.b16 %v299
        %v384 = vunpack.c.l.b16 %v300
        %v385 = vunpack.c.l.b16 %v301
        %v386 = vunpack.c.l.b16 %v302
        %v387 = vunpack.c.l.b16 %v303
        %v388 = vunpack.c.l.b16 %v304
        %v389 = vunpack.c.l.b16 %v305
        %v390 = vunpack.c.l.b16 %v306
        %v391 = vunpack.c.l.b16 %v307
        %v392 = vunpack.c.l.b16 %v308
        %v393 = vpack.c.b16 %v362, %v361
        %v394 = vpack.c.b16 %v364, %v363
        %v395 = vpack.c.b16 %v366, %v365
        %v396 = vpack.c.b16 %v368, %v367
        %v397 = vpack.c.b16 %v370, %v369
        %v398 = vpack.c.b16 %v372, %v371
        %v399 = vpack.c.b16 %v374, %v373
        %v400 = vpack.c.b16 %v376, %v375
        %v401 = vpack.c.b16 %v378, %v377
        %v402 = vpack.c.b16 %v380, %v379
        %v403 = vpack.c.b16 %v382, %v381
        %v404 = vpack.c.b16 %v384, %v383
        %v405 = vpack.c.b16 %v386, %v385
        %v406 = vpack.c.b16 %v388, %v387
        %v407 = vpack.c.b16 %v390, %v389
        %v408 = vpack.c.b16 %v392, %v391
        %425 = vmatprep.subr.bf16.mxu0 0
        %426 = vmatpush1.bf16.msra.mxu0 %v393
        %427 = vmatprep.subr.bf16.mxu0 0
        %428 = vmatpush1.bf16.msra.mxu0 %v394
        %429 = vmatprep.subr.bf16.mxu0 0
        %430 = vmatpush1.bf16.msra.mxu0 %v395
        %431 = vmatprep.subr.bf16.mxu0 0
        %432 = vmatpush1.bf16.msra.mxu0 %v396
        %433 = vmatprep.subr.bf16.mxu0 0
        %434 = vmatpush1.bf16.msra.mxu0 %v397
        %435 = vmatprep.subr.bf16.mxu0 0
        %436 = vmatpush1.bf16.msra.mxu0 %v398
        %437 = vmatprep.subr.bf16.mxu0 0
        %438 = vmatpush1.bf16.msra.mxu0 %v399
        %439 = vmatprep.subr.bf16.mxu0 0
        %440 = vmatpush1.bf16.msra.mxu0 %v400
        %441 = vmatprep.subr.bf16.mxu0 0
        %442 = vmatpush1.bf16.msra.mxu0 %v401
        %443 = vmatprep.subr.bf16.mxu0 0
        %444 = vmatpush1.bf16.msra.mxu0 %v402
        %445 = vmatprep.subr.bf16.mxu0 0
        %446 = vmatpush1.bf16.msra.mxu0 %v403
        %447 = vmatprep.subr.bf16.mxu0 0
        %448 = vmatpush1.bf16.msra.mxu0 %v404
        %449 = vmatprep.subr.bf16.mxu0 0
        %450 = vmatpush1.bf16.msra.mxu0 %v405
        %451 = vmatprep.subr.bf16.mxu0 0
        %452 = vmatpush1.bf16.msra.mxu0 %v406
        %453 = vmatprep.subr.bf16.mxu0 0
        %454 = vmatpush1.bf16.msra.mxu0 %v407
        %455 = vmatprep.subr.bf16.mxu0 0
        %456 = vmatpush1.bf16.msra.mxu0 %v408
        %457 = vmatprep.mubr.bf16.mxu0 %v322
        %458 = vmatmul.mubr.bf16.gmra.mrb[0].mxu0 %v321
        %v459 = vpop.f32.mrb[0].mxu0
        %v460 = vadd.f32 0.0, %v459
        %v461 = vpop.f32.mrb[0].mxu0
        %v462 = vpop.f32.mrb[0].mxu0
        %v463 = vadd.f32 0.0, %v462
        %v464 = vpop.f32.mrb[0].mxu0
        %465 = vmatprep.mubr.bf16.mxu0 %v324
        %466 = vmatmul.mubr.bf16.gmra.mrb[0].mxu0 %v323
        %v467 = vpop.f32.mrb[0].mxu0
        %v468 = vadd.f32 0.0, %v467
        %v469 = vpop.f32.mrb[0].mxu0
        %v470 = vpop.f32.mrb[0].mxu0
        %v471 = vadd.f32 0.0, %v470
        %v472 = vpop.f32.mrb[0].mxu0
        %473 = vdwg.mxu0
        %474 = vst [vmem:[%s263] sm:$0xff] %v460
        %475 = vst [vmem:[%s263 + $0x8] sm:$0xff] %v463
        %476 = vst [vmem:[%s263 + $0x10] sm:$0xff] %v468
        %477 = vst [vmem:[%s263 + $0x18] sm:$0xff] %v471
        %v478 = vadd.f32 %v460, %v463
        %v479 = vadd.f32 %v478, %v468
        %v480 = vadd.f32 %v479, %v471
        %v481 = vrot.slane %v480, 4
        %v482 = vadd.f32 %v480, %v481
        %v483 = vrot.slane %v482, 2
        %v484 = vadd.f32 %v482, %v483
        %v485 = vrot.slane %v484, 1
        %v486 = vadd.f32 %v484, %v485
        %v487 = vmul.f32 %v460, %v460
        %v488 = vmul.f32 %v463, %v463
        %v489 = vmul.f32 %v468, %v468
        %v490 = vmul.f32 %v471, %v471
        %v491 = vadd.f32 %v487, %v488
        %v492 = vadd.f32 %v491, %v489
        %v493 = vadd.f32 %v492, %v490
        %v494 = vrot.slane %v493, 4
        %v495 = vadd.f32 %v493, %v494
        %v496 = vrot.slane %v495, 2
        %v497 = vadd.f32 %v495, %v496
        %v498 = vrot.slane %v497, 1
        %v499 = vadd.f32 %v497, %v498
        %vm500 = vcmask 1040384
        %v501 = vsel %vm500, %v486, %v499
        %502 = vst [vmem:[%s271] sm:$0x3] %v501
        %s503 = smul.u32 4, %s23
        %p504 = scmp.lt.s32.totalorder %s22, 3
        %s505 = scalar_select %p504, %s22, 3
        %p506 = scmp.lt.s32.totalorder %s503, 3
        %s507 = scalar_select %p506, %s503, 3
        %s508 = smul.addr %s505, 4
        %s509 = sadd.s32 %s507, %s508
        %s510 = smul.addr %s509, 8
        %s511 = scalar_lea.vmem %s2, %s510
        %p512 = scmp.lt.s32.totalorder %s22, 3
        %s513 = scalar_select %p512, %s22, 3
        %p514 = scmp.lt.s32.totalorder %s23, 0
        %s515 = scalar_select %p514, %s23, 0
        %s516 = sadd.s32 %s515, %s513
        %s517 = smul.addr %s516, 2
        %s518 = scalar_lea.vmem %s3, %s517
        // Predicated region
        $region33: #{_lambda_.11} parent=27 // pred_check
          %p519 = pneg %p104
        $region34: #{_lambda_.11} parent=27 // pred_check_branch
          %521 = sbr.rel (%p519) target = $region36
        $region35: #{_lambda_.11} parent=27 // pred_region
          %s522 = smul.u32 4, %s23
        $region36: #{_lambda_.11} parent=27 // pred_fallthru
          _
        // Predicated region
        $region37: #{_lambda_.11} parent=27 // pred_check
          %p523 = pneg %p132
        $region38: #{_lambda_.11} parent=27 // pred_check_branch
          %525 = sbr.rel (%p523) target = $region40
        $region39: #{_lambda_.11} parent=27 // pred_region
          _
        $region40: #{_lambda_.11} parent=27 // pred_fallthru
          _
      $region28: #{_lambda_.11} parent=5 // pred_fallthru
        _
      %p526 = scmp.le.s32.totalorder 2, %s13
      // Predicated region
      $region41: #{_lambda_.11} parent=5 // pred_check
        %p527 = pneg %p526
      $region42: #{_lambda_.11} parent=5 // pred_check_branch
        %529 = sbr.rel (%p527) target = $region44
      $region43: #{_lambda_.11} parent=5 // pred_region
        %s530 = ssub.s32 %s13, 2
        // Predicated region
        $region45: #{_lambda_.11} parent=43 // pred_check
          %p531 = pneg %p110
        $region46: #{_lambda_.11} parent=43 // pred_check_branch
          %533 = sbr.rel (%p531) target = $region48
        $region47: #{_lambda_.11} parent=43 // pred_region
          %s534 = smul.u32 4, %s25
          %p535 = scmp.lt.s32.totalorder %s24, 3
          %s536 = scalar_select %p535, %s24, 3
          %p537 = scmp.lt.s32.totalorder %s534, 3
          %s538 = scalar_select %p537, %s534, 3
          %s539 = smul.addr %s536, 4
          %s540 = sadd.s32 %s538, %s539
          %s541 = smul.addr %s540, 8
          %s542 = scalar_lea.vmem %s2, %s541
        $region48: #{_lambda_.11} parent=43 // pred_fallthru
          _
        // Predicated region
        $region49: #{_lambda_.11} parent=43 // pred_check
          %p543 = pneg %p138
        $region50: #{_lambda_.11} parent=43 // pred_check_branch
          %545 = sbr.rel (%p543) target = $region52
        $region51: #{_lambda_.11} parent=43 // pred_region
          %p546 = scmp.lt.s32.totalorder %s24, 3
          %s547 = scalar_select %p546, %s24, 3
          %p548 = scmp.lt.s32.totalorder %s25, 0
          %s549 = scalar_select %p548, %s25, 0
          %s550 = sadd.s32 %s549, %s547
          %s551 = smul.addr %s550, 2
          %s552 = scalar_lea.vmem %s3, %s551
        $region52: #{_lambda_.11} parent=43 // pred_fallthru
          _
      $region44: #{_lambda_.11} parent=5 // pred_fallthru
        _
    $region6: #{_lambda_.11} parent=1 // loop_footer
      %s17 = sadd.s32 1, %s13
    $region7: #{_lambda_.11} parent=1 // loop_footer_branch
      %12 = sbr.rel target = $region3
    $region8: #{_lambda_.11} parent=1 // loop_exit
      _
    %553 = vsyncpa [#allocation3], 1
    %s554 = scalar_lea.sflag [#allocation3], 1
    %555 = vsyncpa %s554, 1

// kernel: _lambda_.13
$region0: #{_lambda_.13}
  #allocation0 [shape = 'u32[]', space=smem, size = 0x4, offset = 0x4, fixed_abs, tag = 'smem constant byte address 0x4 - core index']
  #allocation1 [shape = 'u32[144,128]{1,0:T(1,128)}', space=vmem, size = 0x12000, scoped, tag = 'internal scratch']
  %s0 = inlined_call_operand.vmem [shape: bf16[4,128,128], index: 0, kind: input, shape index: {}]
  %s1 = inlined_call_operand.vmem [shape: bf16[4,128,128], index: 1, kind: input, shape index: {}]
  %s2 = inlined_call_operand.vmem [shape: f32[4,128,128], index: 2, kind: output, shape index: {0}]
  %s3 = inlined_call_operand.vmem [shape: f32[4,1,2,128], index: 3, kind: output, shape index: {1}]
  %4 = xla_tuple %s2, %s3
  %s5 = sld [smem:[#allocation0]]
  $region49: #{_lambda_.13} parent=0
    _
  %s7 = ssub.s32 1, %s5
  %s8 = scalar_select 0, %s7, %s5
  loop: start=0, step=1, limit=6
  $region2: #{_lambda_.13} parent=0 // loop_pre_header
    _
  $region3: #{_lambda_.13} parent=0 // loop_header
    %s10 = sphi 0, %s14
    %p11 = scmp.ge.s32.totalorder %s10, 6
    %s17 = sphi 0, %s29
    %s18 = sphi 0, %s25
    %s19 = sphi 0, %s17
    %s20 = sphi 0, %s18
    %s21 = sphi 0, %s19
    %s22 = sphi 0, %s20
    %s34 = sphi 0, %s36
    %s37 = sphi 0, %s34
    %s38 = sphi 0, %s37
    %s54 = sphi 0, %s38
    %s60 = sphi 0, %s62
    %s63 = sphi 0, %s60
    %s64 = sphi 0, %s63
    %s80 = sphi 0, %s64
    %s88 = sphi 0, %s90
    %s91 = sphi 0, %s88
    %s92 = sphi 0, %s91
    %s108 = sphi 0, %s92
    %s116 = sphi 0, %s118
    %s119 = sphi 0, %s116
    %s120 = sphi 0, %s119
    %s136 = sphi 0, %s120
  $region4: #{_lambda_.13} parent=0 // loop_header_branch
    %13 = sbr.rel (%p11) target = $region8
  $region5: #{_lambda_.13} parent=0 // loop_body
    %s15 = ssub.s32 %s10, 1
    %s16 = ssub.s32 %s10, 2
    %s23 = sadd.s32 1, %s18
    %p24 = scmp.ge.s32.totalorder %s23, 1
    %s25 = scalar_select %p24, 0, %s23
    %s26 = sadd.s32 1, %s17
    %s27 = scalar_select %p24, %s26, %s17
    %p28 = scmp.ge.s32.totalorder %s27, 4
    %s29 = scalar_select %p28, 0, %s27
    %s30 = ssub.s32 %s17, %s29
    %s31 = ssub.s32 %s18, %s25
    %s32 = sor.u32 %s30, %s31
    %p33 = scmp.eq.s32.totalorder %s32, 0
    %s35 = sadd.s32 %s34, 1
    %s36 = scalar_select %p33, %s34, %s35
    %p39 = pneg %p33
    %p40 = scmp.eq.s32.totalorder %s10, 3
    %p41 = por %p39, %p40
    %p42 = scmp.ne.s32.totalorder %s34, %s37
    %p43 = scmp.eq.s32.totalorder %s10, 0
    %p44 = por %p42, %p43
    %p45 = scmp.ne.s32.totalorder %s34, %s37
    %p46 = scmp.eq.s32.totalorder %s15, 3
    %p47 = por %p45, %p46
    %p48 = scmp.ne.s32.totalorder %s37, %s38
    %p49 = scmp.eq.s32.totalorder %s15, 0
    %p50 = por %p48, %p49
    %p51 = scmp.ne.s32.totalorder %s37, %s38
    %p52 = scmp.eq.s32.totalorder %s16, 3
    %p53 = por %p51, %p52
    %p55 = scmp.ne.s32.totalorder %s38, %s54
    %p56 = scmp.eq.s32.totalorder %s16, 0
    %p57 = por %p55, %p56
    %s58 = ssub.s32 %s17, %s29
    %p59 = scmp.eq.s32.totalorder %s58, 0
    %s61 = sadd.s32 %s60, 1
    %s62 = scalar_select %p59, %s60, %s61
    %p65 = pneg %p59
    %p66 = scmp.eq.s32.totalorder %s10, 3
    %p67 = por %p65, %p66
    %p68 = scmp.ne.s32.totalorder %s60, %s63
    %p69 = scmp.eq.s32.totalorder %s10, 0
    %p70 = por %p68, %p69
    %p71 = scmp.ne.s32.totalorder %s60, %s63
    %p72 = scmp.eq.s32.totalorder %s15, 3
    %p73 = por %p71, %p72
    %p74 = scmp.ne.s32.totalorder %s63, %s64
    %p75 = scmp.eq.s32.totalorder %s15, 0
    %p76 = por %p74, %p75
    %p77 = scmp.ne.s32.totalorder %s63, %s64
    %p78 = scmp.eq.s32.totalorder %s16, 3
    %p79 = por %p77, %p78
    %p81 = scmp.ne.s32.totalorder %s64, %s80
    %p82 = scmp.eq.s32.totalorder %s16, 0
    %p83 = por %p81, %p82
    %s84 = ssub.s32 %s17, %s29
    %s85 = ssub.s32 %s18, %s25
    %s86 = sor.u32 %s84, %s85
    %p87 = scmp.eq.s32.totalorder %s86, 0
    %s89 = sadd.s32 %s88, 1
    %s90 = scalar_select %p87, %s88, %s89
    %p93 = pneg %p87
    %p94 = scmp.eq.s32.totalorder %s10, 3
    %p95 = por %p93, %p94
    %p96 = scmp.ne.s32.totalorder %s88, %s91
    %p97 = scmp.eq.s32.totalorder %s10, 0
    %p98 = por %p96, %p97
    %p99 = scmp.ne.s32.totalorder %s88, %s91
    %p100 = scmp.eq.s32.totalorder %s15, 3
    %p101 = por %p99, %p100
    %p102 = scmp.ne.s32.totalorder %s91, %s92
    %p103 = scmp.eq.s32.totalorder %s15, 0
    %p104 = por %p102, %p103
    %p105 = scmp.ne.s32.totalorder %s91, %s92
    %p106 = scmp.eq.s32.totalorder %s16, 3
    %p107 = por %p105, %p106
    %p109 = scmp.ne.s32.totalorder %s92, %s108
    %p110 = scmp.eq.s32.totalorder %s16, 0
    %p111 = por %p109, %p110
    %s112 = ssub.s32 %s17, %s29
    %s113 = ssub.s32 %s18, %s25
    %s114 = sor.u32 %s112, %s113
    %p115 = scmp.eq.s32.totalorder %s114, 0
    %s117 = sadd.s32 %s116, 1
    %s118 = scalar_select %p115, %s116, %s117
    %p121 = pneg %p115
    %p122 = scmp.eq.s32.totalorder %s10, 3
    %p123 = por %p121, %p122
    %p124 = scmp.ne.s32.totalorder %s116, %s119
    %p125 = scmp.eq.s32.totalorder %s10, 0
    %p126 = por %p124, %p125
    %p127 = scmp.ne.s32.totalorder %s116, %s119
    %p128 = scmp.eq.s32.totalorder %s15, 3
    %p129 = por %p127, %p128
    %p130 = scmp.ne.s32.totalorder %s119, %s120
    %p131 = scmp.eq.s32.totalorder %s15, 0
    %p132 = por %p130, %p131
    %p133 = scmp.ne.s32.totalorder %s119, %s120
    %p134 = scmp.eq.s32.totalorder %s16, 3
    %p135 = por %p133, %p134
    %p137 = scmp.ne.s32.totalorder %s120, %s136
    %p138 = scmp.eq.s32.totalorder %s16, 0
    %p139 = por %p137, %p138
    %p140 = scmp.le.s32.totalorder 1, %s10
    %p141 = scmp.lt.s32.totalorder %s10, 5
    %p142 = pnand %p140, %p141
    %p143 = pneg %p142
    // Predicated region
    $region9: #{_lambda_.13} parent=5 // pred_check
      _
    $region10: #{_lambda_.13} parent=5 // pred_check_branch
      %145 = sbr.rel (%p142) target = $region12
    $region11: #{_lambda_.13} parent=5 // pred_region
      %s146 = ssub.s32 %s10, 1
    $region12: #{_lambda_.13} parent=5 // pred_fallthru
      _
    %p147 = scmp.lt.s32.totalorder %s10, 4
    // Predicated region
    $region13: #{_lambda_.13} parent=5 // pred_check
      %p148 = pneg %p147
    $region14: #{_lambda_.13} parent=5 // pred_check_branch
      %150 = sbr.rel (%p148) target = $region16
    $region15: #{_lambda_.13} parent=5 // pred_region
      // Predicated region
      $region17: #{_lambda_.13} parent=15 // pred_check
        %p151 = pneg %p44
      $region18: #{_lambda_.13} parent=15 // pred_check_branch
        %153 = sbr.rel (%p151) target = $region20
      $region19: #{_lambda_.13} parent=15 // pred_region
        %s154 = smul.u32 16, %s18
        %p155 = scmp.lt.s32.totalorder %s17, 3
        %s156 = scalar_select %p155, %s17, 3
        %p157 = scmp.lt.s32.totalorder %s154, 15
        %s158 = scalar_select %p157, %s154, 15
        %s159 = smul.addr %s156, 16
        %s160 = sadd.s32 %s158, %s159
        %s161 = smul.addr %s160, 4
        %s162 = scalar_lea.vmem %s0, %s161
        %s163 = smul.u32 16, %s18
      $region20: #{_lambda_.13} parent=15 // pred_fallthru
        _
      // Predicated region
      $region21: #{_lambda_.13} parent=15 // pred_check
        %p164 = pneg %p70
      $region22: #{_lambda_.13} parent=15 // pred_check_branch
        %166 = sbr.rel (%p164) target = $region24
      $region23: #{_lambda_.13} parent=15 // pred_region
        %p167 = scmp.lt.s32.totalorder %s17, 3
        %s168 = scalar_select %p167, %s17, 3
        %s169 = smul.addr %s168, 16
        %s170 = smul.addr %s169, 4
        %s171 = scalar_lea.vmem %s1, %s170
      $region24: #{_lambda_.13} parent=15 // pred_fallthru
        _
    $region16: #{_lambda_.13} parent=5 // pred_fallthru
      _
    %p172 = scmp.le.s32.totalorder 1, %s10
    %p173 = scmp.lt.s32.totalorder %s10, 5
    %p174 = pnand %p172, %p173
    %p175 = pneg %p174
    // Predicated region
    $region25: #{_lambda_.13} parent=5 // pred_check
      _
    $region26: #{_lambda_.13} parent=5 // pred_check_branch
      %177 = sbr.rel (%p174) target = $region28
    $region27: #{_lambda_.13} parent=5 // pred_region
      %s178 = ssub.s32 %s10, 1
      %s179 = smul.u32 16, %s20
      %p180 = scmp.lt.s32.totalorder %s19, 3
      %s181 = scalar_select %p180, %s19, 3
      %p182 = scmp.lt.s32.totalorder %s179, 15
      %s183 = scalar_select %p182, %s179, 15
      %s184 = smul.addr %s181, 16
      %s185 = sadd.s32 %s183, %s184
      %s186 = smul.addr %s185, 4
      %s187 = scalar_lea.vmem %s0, %s186
      %p188 = pneg %p50
      %p189 = pneg %p47
      %p190 = scmp.lt.s32.totalorder %s19, 3
      %s191 = scalar_select %p190, %s19, 3
      %s192 = smul.addr %s191, 16
      %s193 = smul.addr %s192, 4
      %s194 = scalar_lea.vmem %s1, %s193
      %p195 = pneg %p76
      %p196 = pneg %p73
      %p197 = pneg %p104
      %p198 = pneg %p101
      %s199 = smul.u32 16, %s20
      %p200 = scmp.lt.s32.totalorder %s19, 3
      %s201 = scalar_select %p200, %s19, 3
      %p202 = scmp.lt.s32.totalorder %s199, 15
      %s203 = scalar_select %p202, %s199, 15
      %s204 = smul.addr %s201, 16
      %s205 = sadd.s32 %s203, %s204
      %s206 = smul.addr %s205, 8
      %s207 = scalar_lea.vmem %s2, %s206
      %p208 = pneg %p132
      %p209 = pneg %p129
      %p210 = scmp.lt.s32.totalorder %s19, 3
      %s211 = scalar_select %p210, %s19, 3
      %p212 = scmp.lt.s32.totalorder %s20, 0
      %s213 = scalar_select %p212, %s20, 0
      %s214 = sadd.s32 %s213, %s211
      %s215 = smul.addr %s214, 2
      %s216 = scalar_lea.vmem %s3, %s215
      %s217 = smul.u32 16, %s20
      %p218 = scmp.lt.s32.totalorder %s19, 3
      %s219 = scalar_select %p218, %s19, 3
      %p220 = scmp.lt.s32.totalorder %s217, 15
      %s221 = scalar_select %p220, %s217, 15
      %s222 = smul.addr %s219, 16
      %s223 = sadd.s32 %s221, %s222
      %s224 = smul.addr %s223, 4
      %s225 = scalar_lea.vmem %s0, %s224
      %s226 = smul.u32 16, %s20
      %p227 = scmp.lt.s32.totalorder %s19, 3
      %s228 = scalar_select %p227, %s19, 3
      %s229 = smul.addr %s228, 16
      %s230 = smul.addr %s229, 4
      %s231 = scalar_lea.vmem %s1, %s230
      %s232 = smul.u32 16, %s20
      %p233 = scmp.lt.s32.totalorder %s19, 3
      %s234 = scalar_select %p233, %s19, 3
      %p235 = scmp.lt.s32.totalorder %s232, 15
      %s236 = scalar_select %p235, %s232, 15
      %s237 = smul.addr %s234, 16
      %s238 = sadd.s32 %s236, %s237
      %s239 = smul.addr %s238, 8
      %s240 = scalar_lea.vmem %s2, %s239
      %s241 = smul.u32 16, %s20
      %p242 = scmp.lt.s32.totalorder %s19, 3
      %s243 = scalar_select %p242, %s19, 3
      %p244 = scmp.lt.s32.totalorder %s20, 0
      %s245 = scalar_select %p244, %s20, 0
      %s246 = sadd.s32 %s245, %s243
      %s247 = smul.addr %s246, 2
      %s248 = scalar_lea.vmem %s3, %s247
      %v250 = vld [vmem:[%s225] sm:$0xf]
      %v251 = vld [vmem:[%s225 + $0x4] sm:$0xf]
      %v252 = vld [vmem:[%s225 + $0x8] sm:$0xf]
      %v253 = vld [vmem:[%s225 + $0xc] sm:$0xf]
      %v254 = vld [vmem:[%s225 + $0x10] sm:$0xf]
      %v255 = vld [vmem:[%s225 + $0x14] sm:$0xf]
      %v256 = vld [vmem:[%s225 + $0x18] sm:$0xf]
      %v257 = vld [vmem:[%s225 + $0x1c] sm:$0xf]
      %v258 = vld [vmem:[%s225 + $0x20] sm:$0xf]
      %v259 = vld [vmem:[%s225 + $0x24] sm:$0xf]
      %v260 = vld [vmem:[%s225 + $0x28] sm:$0xf]
      %v261 = vld [vmem:[%s225 + $0x2c] sm:$0xf]
      %v262 = vld [vmem:[%s225 + $0x30] sm:$0xf]
      %v263 = vld [vmem:[%s225 + $0x34] sm:$0xf]
      %v264 = vld [vmem:[%s225 + $0x38] sm:$0xf]
      %v265 = vld [vmem:[%s225 + $0x3c] sm:$0xf]
      %v266 = vld [vmem:[%s231] sm:$0xf]
      %v267 = vld [vmem:[%s231 + $0x4] sm:$0xf]
      %v268 = vld [vmem:[%s231 + $0x8] sm:$0xf]
      %v269 = vld [vmem:[%s231 + $0xc] sm:$0xf]
      %v270 = vld [vmem:[%s231 + $0x10] sm:$0xf]
      %v271 = vld [vmem:[%s231 + $0x14] sm:$0xf]
      %v272 = vld [vmem:[%s231 + $0x18] sm:$0xf]
      %v273 = vld [vmem:[%s231 + $0x1c] sm:$0xf]
      %v274 = vld [vmem:[%s231 + $0x20] sm:$0xf]
      %v275 = vld [vmem:[%s231 + $0x24] sm:$0xf]
      %v276 = vld [vmem:[%s231 + $0x28] sm:$0xf]
      %v277 = vld [vmem:[%s231 + $0x2c] sm:$0xf]
      %v278 = vld [vmem:[%s231 + $0x30] sm:$0xf]
      %v279 = vld [vmem:[%s231 + $0x34] sm:$0xf]
      %v280 = vld [vmem:[%s231 + $0x38] sm:$0xf]
      %v281 = vld [vmem:[%s231 + $0x3c] sm:$0xf]
      %v298 = vunpack.c.l.b16 %v250
      %v299 = vunpack.c.l.b16 %v251
      %v300 = vunpack.c.l.b16 %v252
      %v301 = vunpack.c.l.b16 %v253
      %v302 = vunpack.c.l.b16 %v254
      %v303 = vunpack.c.l.b16 %v255
      %v304 = vunpack.c.l.b16 %v256
      %v305 = vunpack.c.l.b16 %v257
      %v306 = vunpack.c.l.b16 %v258
      %v307 = vunpack.c.l.b16 %v259
      %v308 = vunpack.c.l.b16 %v260
      %v309 = vunpack.c.l.b16 %v261
      %v310 = vunpack.c.l.b16 %v262
      %v311 = vunpack.c.l.b16 %v263
      %v312 = vunpack.c.l.b16 %v264
      %v313 = vunpack.c.l.b16 %v265
      %v314 = vpack.c.b16 %v299, %v298
      %v315 = vpack.c.b16 %v301, %v300
      %v316 = vpack.c.b16 %v303, %v302
      %v317 = vpack.c.b16 %v305, %v304
      %v318 = vpack.c.b16 %v307, %v306
      %v319 = vpack.c.b16 %v309, %v308
      %v320 = vpack.c.b16 %v311, %v310
      %v321 = vpack.c.b16 %v313, %v312
      %v346 = vunpack.c.l.b16 %v266
      %v347 = vunpack.c.l.b16 %v267
      %v348 = vunpack.c.l.b16 %v268
      %v349 = vunpack.c.l.b16 %v269
      %v350 = vunpack.c.l.b16 %v270
      %v351 = vunpack.c.l.b16 %v271
      %v352 = vunpack.c.l.b16 %v272
      %v353 = vunpack.c.l.b16 %v273
      %v354 = vunpack.c.l.b16 %v274
      %v355 = vunpack.c.l.b16 %v275
      %v356 = vunpack.c.l.b16 %v276
      %v357 = vunpack.c.l.b16 %v277
      %v358 = vunpack.c.l.b16 %v278
      %v359 = vunpack.c.l.b16 %v279
      %v360 = vunpack.c.l.b16 %v280
      %v361 = vunpack.c.l.b16 %v281
      %v362 = vpack.c.b16 %v347, %v346
      %v363 = vpack.c.b16 %v349, %v348
      %v364 = vpack.c.b16 %v351, %v350
      %v365 = vpack.c.b16 %v353, %v352
      %v366 = vpack.c.b16 %v355, %v354
      %v367 = vpack.c.b16 %v357, %v356
      %v368 = vpack.c.b16 %v359, %v358
      %v369 = vpack.c.b16 %v361, %v360
      %378 = vmatprep.subr.bf16.mxu0 0
      %379 = vmatpush1.bf16.msra.mxu0 %v362
      %380 = vmatprep.subr.bf16.mxu0 0
      %381 = vmatpush1.bf16.msra.mxu0 %v363
      %382 = vmatprep.subr.bf16.mxu0 0
      %383 = vmatpush1.bf16.msra.mxu0 %v364
      %384 = vmatprep.subr.bf16.mxu0 0
      %385 = vmatpush1.bf16.msra.mxu0 %v365
      %386 = vmatprep.subr.bf16.mxu0 0
      %387 = vmatpush1.bf16.msra.mxu0 %v366
      %388 = vmatprep.subr.bf16.mxu0 0
      %389 = vmatpush1.bf16.msra.mxu0 %v367
      %390 = vmatprep.subr.bf16.mxu0 0
      %391 = vmatpush1.bf16.msra.mxu0 %v368
      %392 = vmatprep.subr.bf16.mxu0 0
      %393 = vmatpush1.bf16.msra.mxu0 %v369
      %394 = vmatprep.subr.bf16.mxu0 0
      %395 = vmatpush1.bf16.msra.mxu0 0
      %396 = vmatprep.subr.bf16.mxu0 0
      %397 = vmatpush1.bf16.msra.mxu0 0
      %398 = vmatprep.subr.bf16.mxu0 0
      %399 = vmatpush1.bf16.msra.mxu0 0
      %400 = vmatprep.subr.bf16.mxu0 0
      %401 = vmatpush1.bf16.msra.mxu0 0
      %402 = vmatprep.subr.bf16.mxu0 0
      %403 = vmatpush1.bf16.msra.mxu0 0
      %404 = vmatprep.subr.bf16.mxu0 0
      %405 = vmatpush1.bf16.msra.mxu0 0
      %406 = vmatprep.subr.bf16.mxu0 0
      %407 = vmatpush1.bf16.msra.mxu0 0
      %408 = vmatprep.subr.bf16.mxu0 0
      %409 = vmatpush1.bf16.msra.mxu0 0
      %410 = vmatprep.mubr.bf16.mxu0 0
      %411 = vmatmul.mubr.bf16.gmra.mrb[0].mxu0 %v314
      %v412 = vpop.f32.mrb[0].mxu0
      %v413 = vadd.f32 0.0, %v412
      %v414 = vpop.f32.mrb[0].mxu0
      %v415 = vpop.f32.mrb[0].mxu0
      %v416 = vadd.f32 0.0, %v415
      %v417 = vpop.f32.mrb[0].mxu0
      %418 = vmatprep.mubr.bf16.mxu0 0
      %419 = vmatmul.mubr.bf16.gmra.mrb[0].mxu0 %v315
      %v420 = vpop.f32.mrb[0].mxu0
      %v421 = vadd.f32 0.0, %v420
      %v422 = vpop.f32.mrb[0].mxu0
      %v423 = vpop.f32.mrb[0].mxu0
      %v424 = vadd.f32 0.0, %v423
      %v425 = vpop.f32.mrb[0].mxu0
      %426 = vmatprep.mubr.bf16.mxu0 0
      %427 = vmatmul.mubr.bf16.gmra.mrb[0].mxu0 %v316
      %v428 = vpop.f32.mrb[0].mxu0
      %v429 = vadd.f32 0.0, %v428
      %v430 = vpop.f32.mrb[0].mxu0
      %v431 = vpop.f32.mrb[0].mxu0
      %v432 = vadd.f32 0.0, %v431
      %v433 = vpop.f32.mrb[0].mxu0
      %434 = vmatprep.mubr.bf16.mxu0 0
      %435 = vmatmul.mubr.bf16.gmra.mrb[0].mxu0 %v317
      %v436 = vpop.f32.mrb[0].mxu0
      %v437 = vadd.f32 0.0, %v436
      %v438 = vpop.f32.mrb[0].mxu0
      %v439 = vpop.f32.mrb[0].mxu0
      %v440 = vadd.f32 0.0, %v439
      %v441 = vpop.f32.mrb[0].mxu0
      %442 = vmatprep.mubr.bf16.mxu0 0
      %443 = vmatmul.mubr.bf16.gmra.mrb[0].mxu0 %v318
      %v444 = vpop.f32.mrb[0].mxu0
      %v445 = vadd.f32 0.0, %v444
      %v446 = vpop.f32.mrb[0].mxu0
      %v447 = vpop.f32.mrb[0].mxu0
      %v448 = vadd.f32 0.0, %v447
      %v449 = vpop.f32.mrb[0].mxu0
      %450 = vmatprep.mubr.bf16.mxu0 0
      %451 = vmatmul.mubr.bf16.gmra.mrb[0].mxu0 %v319
      %v452 = vpop.f32.mrb[0].mxu0
      %v453 = vadd.f32 0.0, %v452
      %v454 = vpop.f32.mrb[0].mxu0
      %v455 = vpop.f32.mrb[0].mxu0
      %v456 = vadd.f32 0.0, %v455
      %v457 = vpop.f32.mrb[0].mxu0
      %458 = vmatprep.mubr.bf16.mxu0 0
      %459 = vmatmul.mubr.bf16.gmra.mrb[0].mxu0 %v320
      %v460 = vpop.f32.mrb[0].mxu0
      %v461 = vadd.f32 0.0, %v460
      %v462 = vpop.f32.mrb[0].mxu0
      %v463 = vpop.f32.mrb[0].mxu0
      %v464 = vadd.f32 0.0, %v463
      %v465 = vpop.f32.mrb[0].mxu0
      %466 = vmatprep.mubr.bf16.mxu0 0
      %467 = vmatmul.mubr.bf16.gmra.mrb[0].mxu0 %v321
      %v468 = vpop.f32.mrb[0].mxu0
      %v469 = vadd.f32 0.0, %v468
      %v470 = vpop.f32.mrb[0].mxu0
      %v471 = vpop.f32.mrb[0].mxu0
      %v472 = vadd.f32 0.0, %v471
      %v473 = vpop.f32.mrb[0].mxu0
      %474 = vdwg.mxu0
      %475 = vst [vmem:[%s240] sm:$0xff] %v413
      %476 = vst [vmem:[%s240 + $0x8] sm:$0xff] %v416
      %477 = vst [vmem:[%s240 + $0x10] sm:$0xff] %v421
      %478 = vst [vmem:[%s240 + $0x18] sm:$0xff] %v424
      %479 = vst [vmem:[%s240 + $0x20] sm:$0xff] %v429
      %480 = vst [vmem:[%s240 + $0x28] sm:$0xff] %v432
      %481 = vst [vmem:[%s240 + $0x30] sm:$0xff] %v437
      %482 = vst [vmem:[%s240 + $0x38] sm:$0xff] %v440
      %483 = vst [vmem:[%s240 + $0x40] sm:$0xff] %v445
      %484 = vst [vmem:[%s240 + $0x48] sm:$0xff] %v448
      %485 = vst [vmem:[%s240 + $0x50] sm:$0xff] %v453
      %486 = vst [vmem:[%s240 + $0x58] sm:$0xff] %v456
      %487 = vst [vmem:[%s240 + $0x60] sm:$0xff] %v461
      %488 = vst [vmem:[%s240 + $0x68] sm:$0xff] %v464
      %489 = vst [vmem:[%s240 + $0x70] sm:$0xff] %v469
      %490 = vst [vmem:[%s240 + $0x78] sm:$0xff] %v472
      %v491 = vadd.f32 %v413, %v416
      %v492 = vadd.f32 %v491, %v421
      %v493 = vadd.f32 %v492, %v424
      %v494 = vadd.f32 %v493, %v429
      %v495 = vadd.f32 %v494, %v432
      %v496 = vadd.f32 %v495, %v437
      %v497 = vadd.f32 %v496, %v440
      %v498 = vadd.f32 %v497, %v445
      %v499 = vadd.f32 %v498, %v448
      %v500 = vadd.f32 %v499, %v453
      %v501 = vadd.f32 %v500, %v456
      %v502 = vadd.f32 %v501, %v461
      %v503 = vadd.f32 %v502, %v464
      %v504 = vadd.f32 %v503, %v469
      %v505 = vadd.f32 %v504, %v472
      %v506 = vrot.slane %v505, 4
      %v507 = vadd.f32 %v505, %v506
      %v508 = vrot.slane %v507, 2
      %v509 = vadd.f32 %v507, %v508
      %v510 = vrot.slane %v509, 1
      %v511 = vadd.f32 %v509, %v510
      %v512 = vmul.f32 %v413, %v413
      %v513 = vmul.f32 %v416, %v416
      %v514 = vmul.f32 %v421, %v421
      %v515 = vmul.f32 %v424, %v424
      %v516 = vmul.f32 %v429, %v429
      %v517 = vmul.f32 %v432, %v432
      %v518 = vmul.f32 %v437, %v437
      %v519 = vmul.f32 %v440, %v440
      %v520 = vmul.f32 %v445, %v445
      %v521 = vmul.f32 %v448, %v448
      %v522 = vmul.f32 %v453, %v453
      %v523 = vmul.f32 %v456, %v456
      %v524 = vmul.f32 %v461, %v461
      %v525 = vmul.f32 %v464, %v464
      %v526 = vmul.f32 %v469, %v469
      %v527 = vmul.f32 %v472, %v472
      %v528 = vadd.f32 %v512, %v513
      %v529 = vadd.f32 %v528, %v514
      %v530 = vadd.f32 %v529, %v515
      %v531 = vadd.f32 %v530, %v516
      %v532 = vadd.f32 %v531, %v517
      %v533 = vadd.f32 %v532, %v518
      %v534 = vadd.f32 %v533, %v519
      %v535 = vadd.f32 %v534, %v520
      %v536 = vadd.f32 %v535, %v521
      %v537 = vadd.f32 %v536, %v522
      %v538 = vadd.f32 %v537, %v523
      %v539 = vadd.f32 %v538, %v524
      %v540 = vadd.f32 %v539, %v525
      %v541 = vadd.f32 %v540, %v526
      %v542 = vadd.f32 %v541, %v527
      %v543 = vrot.slane %v542, 4
      %v544 = vadd.f32 %v542, %v543
      %v545 = vrot.slane %v544, 2
      %v546 = vadd.f32 %v544, %v545
      %v547 = vrot.slane %v546, 1
      %v548 = vadd.f32 %v546, %v547
      %vm549 = vcmask 1040384
      %v550 = vsel %vm549, %v511, %v548
      %551 = vst [vmem:[%s248] sm:$0x3] %v550
      %s552 = smul.u32 16, %s20
      %p553 = scmp.lt.s32.totalorder %s19, 3
      %s554 = scalar_select %p553, %s19, 3
      %p555 = scmp.lt.s32.totalorder %s552, 15
      %s556 = scalar_select %p555, %s552, 15
      %s557 = smul.addr %s554, 16
      %s558 = sadd.s32 %s556, %s557
      %s559 = smul.addr %s558, 8
      %s560 = scalar_lea.vmem %s2, %s559
      %p561 = scmp.lt.s32.totalorder %s19, 3
      %s562 = scalar_select %p561, %s19, 3
      %p563 = scmp.lt.s32.totalorder %s20, 0
      %s564 = scalar_select %p563, %s20, 0
      %s565 = sadd.s32 %s564, %s562
      %s566 = smul.addr %s565, 2
      %s567 = scalar_lea.vmem %s3, %s566
      // Predicated region
      $region29: #{_lambda_.13} parent=27 // pred_check
        %p568 = pneg %p101
      $region30: #{_lambda_.13} parent=27 // pred_check_branch
        %570 = sbr.rel (%p568) target = $region32
      $region31: #{_lambda_.13} parent=27 // pred_region
        %s571 = smul.u32 16, %s20
      $region32: #{_lambda_.13} parent=27 // pred_fallthru
        _
      // Predicated region
      $region33: #{_lambda_.13} parent=27 // pred_check
        %p572 = pneg %p129
      $region34: #{_lambda_.13} parent=27 // pred_check_branch
        %574 = sbr.rel (%p572) target = $region36
      $region35: #{_lambda_.13} parent=27 // pred_region
        _
      $region36: #{_lambda_.13} parent=27 // pred_fallthru
        _
    $region28: #{_lambda_.13} parent=5 // pred_fallthru
      _
    %p575 = scmp.le.s32.totalorder 2, %s10
    // Predicated region
    $region37: #{_lambda_.13} parent=5 // pred_check
      %p576 = pneg %p575
    $region38: #{_lambda_.13} parent=5 // pred_check_branch
      %578 = sbr.rel (%p576) target = $region40
    $region39: #{_lambda_.13} parent=5 // pred_region
      %s579 = ssub.s32 %s10, 2
      // Predicated region
      $region41: #{_lambda_.13} parent=39 // pred_check
        %p580 = pneg %p107
      $region42: #{_lambda_.13} parent=39 // pred_check_branch
        %582 = sbr.rel (%p580) target = $region44
      $region43: #{_lambda_.13} parent=39 // pred_region
        %s583 = smul.u32 16, %s22
        %p584 = scmp.lt.s32.totalorder %s21, 3
        %s585 = scalar_select %p584, %s21, 3
        %p586 = scmp.lt.s32.totalorder %s583, 15
        %s587 = scalar_select %p586, %s583, 15
        %s588 = smul.addr %s585, 16
        %s589 = sadd.s32 %s587, %s588
        %s590 = smul.addr %s589, 8
        %s591 = scalar_lea.vmem %s2, %s590
      $region44: #{_lambda_.13} parent=39 // pred_fallthru
        _
      // Predicated region
      $region45: #{_lambda_.13} parent=39 // pred_check
        %p592 = pneg %p135
      $region46: #{_lambda_.13} parent=39 // pred_check_branch
        %594 = sbr.rel (%p592) target = $region48
      $region47: #{_lambda_.13} parent=39 // pred_region
        %p595 = scmp.lt.s32.totalorder %s21, 3
        %s596 = scalar_select %p595, %s21, 3
        %p597 = scmp.lt.s32.totalorder %s22, 0
        %s598 = scalar_select %p597, %s22, 0
        %s599 = sadd.s32 %s598, %s596
        %s600 = smul.addr %s599, 2
        %s601 = scalar_lea.vmem %s3, %s600
      $region48: #{_lambda_.13} parent=39 // pred_fallthru
        _
    $region40: #{_lambda_.13} parent=5 // pred_fallthru
      _
  $region6: #{_lambda_.13} parent=0 // loop_footer
    %s14 = sadd.s32 1, %s10
  $region7: #{_lambda_.13} parent=0 // loop_footer_branch
    %9 = sbr.rel target = $region3
  $region8: #{_lambda_.13} parent=0 // loop_exit
    _

// kernel: _lambda_.14
$region0: #{_lambda_.14}
  #allocation0 [shape = 'u32[]', space=smem, size = 0x4, offset = 0x4, fixed_abs, tag = 'smem constant byte address 0x4 - core index']
  #allocation1 [shape = 'u32[144,128]{1,0:T(1,128)}', space=vmem, size = 0x12000, scoped, tag = 'internal scratch']
  %s0 = inlined_call_operand.vmem [shape: f32[4,128,128], index: 0, kind: input, shape index: {}]
  %s1 = inlined_call_operand.vmem [shape: f32[1,128], index: 1, kind: input, shape index: {}]
  %s2 = inlined_call_operand.vmem [shape: f32[1,128], index: 2, kind: input, shape index: {}]
  %s3 = inlined_call_operand.vmem [shape: f32[4,128,128], index: 3, kind: output, shape index: {}]
  %s4 = sld [smem:[#allocation0]]
  $region45: #{_lambda_.14} parent=0
    _
  %s6 = ssub.s32 1, %s4
  %s7 = scalar_select 0, %s6, %s4
  loop: start=0, step=1, limit=6
  $region2: #{_lambda_.14} parent=0 // loop_pre_header
    _
  $region3: #{_lambda_.14} parent=0 // loop_header
    %s9 = sphi 0, %s13
    %p10 = scmp.ge.s32.totalorder %s9, 6
    %s16 = sphi 0, %s28
    %s17 = sphi 0, %s24
    %s18 = sphi 0, %s16
    %s19 = sphi 0, %s17
    %s20 = sphi 0, %s18
    %s21 = sphi 0, %s19
    %s33 = sphi 0, %s35
    %s36 = sphi 0, %s33
    %s37 = sphi 0, %s36
    %s53 = sphi 0, %s37
    %s57 = sphi 0, %s57
    %s59 = sphi 0, %s57
    %s60 = sphi 0, %s59
    %s74 = sphi 0, %s60
    %s78 = sphi 0, %s78
    %s80 = sphi 0, %s78
    %s81 = sphi 0, %s80
    %s95 = sphi 0, %s81
    %s103 = sphi 0, %s105
    %s106 = sphi 0, %s103
    %s107 = sphi 0, %s106
    %s123 = sphi 0, %s107
  $region4: #{_lambda_.14} parent=0 // loop_header_branch
    %12 = sbr.rel (%p10) target = $region8
  $region5: #{_lambda_.14} parent=0 // loop_body
    %s14 = ssub.s32 %s9, 1
    %s15 = ssub.s32 %s9, 2
    %s22 = sadd.s32 1, %s17
    %p23 = scmp.ge.s32.totalorder %s22, 1
    %s24 = scalar_select %p23, 0, %s22
    %s25 = sadd.s32 1, %s16
    %s26 = scalar_select %p23, %s25, %s16
    %p27 = scmp.ge.s32.totalorder %s26, 4
    %s28 = scalar_select %p27, 0, %s26
    %s29 = ssub.s32 %s16, %s28
    %s30 = ssub.s32 %s17, %s24
    %s31 = sor.u32 %s29, %s30
    %p32 = scmp.eq.s32.totalorder %s31, 0
    %s34 = sadd.s32 %s33, 1
    %s35 = scalar_select %p32, %s33, %s34
    %p38 = pneg %p32
    %p39 = scmp.eq.s32.totalorder %s9, 3
    %p40 = por %p38, %p39
    %p41 = scmp.ne.s32.totalorder %s33, %s36
    %p42 = scmp.eq.s32.totalorder %s9, 0
    %p43 = por %p41, %p42
    %p44 = scmp.ne.s32.totalorder %s33, %s36
    %p45 = scmp.eq.s32.totalorder %s14, 3
    %p46 = por %p44, %p45
    %p47 = scmp.ne.s32.totalorder %s36, %s37
    %p48 = scmp.eq.s32.totalorder %s14, 0
    %p49 = por %p47, %p48
    %p50 = scmp.ne.s32.totalorder %s36, %s37
    %p51 = scmp.eq.s32.totalorder %s15, 3
    %p52 = por %p50, %p51
    %p54 = scmp.ne.s32.totalorder %s37, %s53
    %p55 = scmp.eq.s32.totalorder %s15, 0
    %p56 = por %p54, %p55
    %s58 = sadd.s32 %s57, 1
    %p61 = scmp.eq.s32.totalorder %s9, 3
    %p62 = scmp.ne.s32.totalorder %s57, %s59
    %p63 = scmp.eq.s32.totalorder %s9, 0
    %p64 = por %p62, %p63
    %p65 = scmp.ne.s32.totalorder %s57, %s59
    %p66 = scmp.eq.s32.totalorder %s14, 3
    %p67 = por %p65, %p66
    %p68 = scmp.ne.s32.totalorder %s59, %s60
    %p69 = scmp.eq.s32.totalorder %s14, 0
    %p70 = por %p68, %p69
    %p71 = scmp.ne.s32.totalorder %s59, %s60
    %p72 = scmp.eq.s32.totalorder %s15, 3
    %p73 = por %p71, %p72
    %p75 = scmp.ne.s32.totalorder %s60, %s74
    %p76 = scmp.eq.s32.totalorder %s15, 0
    %p77 = por %p75, %p76
    %s79 = sadd.s32 %s78, 1
    %p82 = scmp.eq.s32.totalorder %s9, 3
    %p83 = scmp.ne.s32.totalorder %s78, %s80
    %p84 = scmp.eq.s32.totalorder %s9, 0
    %p85 = por %p83, %p84
    %p86 = scmp.ne.s32.totalorder %s78, %s80
    %p87 = scmp.eq.s32.totalorder %s14, 3
    %p88 = por %p86, %p87
    %p89 = scmp.ne.s32.totalorder %s80, %s81
    %p90 = scmp.eq.s32.totalorder %s14, 0
    %p91 = por %p89, %p90
    %p92 = scmp.ne.s32.totalorder %s80, %s81
    %p93 = scmp.eq.s32.totalorder %s15, 3
    %p94 = por %p92, %p93
    %p96 = scmp.ne.s32.totalorder %s81, %s95
    %p97 = scmp.eq.s32.totalorder %s15, 0
    %p98 = por %p96, %p97
    %s99 = ssub.s32 %s16, %s28
    %s100 = ssub.s32 %s17, %s24
    %s101 = sor.u32 %s99, %s100
    %p102 = scmp.eq.s32.totalorder %s101, 0
    %s104 = sadd.s32 %s103, 1
    %s105 = scalar_select %p102, %s103, %s104
    %p108 = pneg %p102
    %p109 = scmp.eq.s32.totalorder %s9, 3
    %p110 = por %p108, %p109
    %p111 = scmp.ne.s32.totalorder %s103, %s106
    %p112 = scmp.eq.s32.totalorder %s9, 0
    %p113 = por %p111, %p112
    %p114 = scmp.ne.s32.totalorder %s103, %s106
    %p115 = scmp.eq.s32.totalorder %s14, 3
    %p116 = por %p114, %p115
    %p117 = scmp.ne.s32.totalorder %s106, %s107
    %p118 = scmp.eq.s32.totalorder %s14, 0
    %p119 = por %p117, %p118
    %p120 = scmp.ne.s32.totalorder %s106, %s107
    %p121 = scmp.eq.s32.totalorder %s15, 3
    %p122 = por %p120, %p121
    %p124 = scmp.ne.s32.totalorder %s107, %s123
    %p125 = scmp.eq.s32.totalorder %s15, 0
    %p126 = por %p124, %p125
    %p127 = scmp.le.s32.totalorder 1, %s9
    %p128 = scmp.lt.s32.totalorder %s9, 5
    %p129 = pnand %p127, %p128
    %p130 = pneg %p129
    // Predicated region
    $region9: #{_lambda_.14} parent=5 // pred_check
      _
    $region10: #{_lambda_.14} parent=5 // pred_check_branch
      %132 = sbr.rel (%p129) target = $region12
    $region11: #{_lambda_.14} parent=5 // pred_region
      %s133 = ssub.s32 %s9, 1
      // Predicated region
      $region13: #{_lambda_.14} parent=11 // pred_check
        %p134 = pneg %p70
      $region14: #{_lambda_.14} parent=11 // pred_check_branch
        %136 = sbr.rel (%p134) target = $region16
      $region15: #{_lambda_.14} parent=11 // pred_region
        _
      $region16: #{_lambda_.14} parent=11 // pred_fallthru
        _
      // Predicated region
      $region17: #{_lambda_.14} parent=11 // pred_check
        %p137 = pneg %p91
      $region18: #{_lambda_.14} parent=11 // pred_check_branch
        %139 = sbr.rel (%p137) target = $region20
      $region19: #{_lambda_.14} parent=11 // pred_region
        _
      $region20: #{_lambda_.14} parent=11 // pred_fallthru
        _
    $region12: #{_lambda_.14} parent=5 // pred_fallthru
      _
    %p140 = scmp.lt.s32.totalorder %s9, 4
    // Predicated region
    $region21: #{_lambda_.14} parent=5 // pred_check
      %p141 = pneg %p140
    $region22: #{_lambda_.14} parent=5 // pred_check_branch
      %143 = sbr.rel (%p141) target = $region24
    $region23: #{_lambda_.14} parent=5 // pred_region
      // Predicated region
      $region25: #{_lambda_.14} parent=23 // pred_check
        %p144 = pneg %p43
      $region26: #{_lambda_.14} parent=23 // pred_check_branch
        %146 = sbr.rel (%p144) target = $region28
      $region27: #{_lambda_.14} parent=23 // pred_region
        %s147 = smul.u32 16, %s17
        %p148 = scmp.lt.s32.totalorder %s16, 3
        %s149 = scalar_select %p148, %s16, 3
        %p150 = scmp.lt.s32.totalorder %s147, 15
        %s151 = scalar_select %p150, %s147, 15
        %s152 = smul.addr %s149, 16
        %s153 = sadd.s32 %s151, %s152
        %s154 = smul.addr %s153, 8
        %s155 = scalar_lea.vmem %s0, %s154
        %s156 = smul.u32 16, %s17
      $region28: #{_lambda_.14} parent=23 // pred_fallthru
        _
    $region24: #{_lambda_.14} parent=5 // pred_fallthru
      _
    %p157 = scmp.le.s32.totalorder 1, %s9
    %p158 = scmp.lt.s32.totalorder %s9, 5
    %p159 = pnand %p157, %p158
    %p160 = pneg %p159
    // Predicated region
    $region29: #{_lambda_.14} parent=5 // pred_check
      _
    $region30: #{_lambda_.14} parent=5 // pred_check_branch
      %162 = sbr.rel (%p159) target = $region32
    $region31: #{_lambda_.14} parent=5 // pred_region
      %s163 = ssub.s32 %s9, 1
      %s164 = smul.u32 16, %s19
      %p165 = scmp.lt.s32.totalorder %s18, 3
      %s166 = scalar_select %p165, %s18, 3
      %p167 = scmp.lt.s32.totalorder %s164, 15
      %s168 = scalar_select %p167, %s164, 15
      %s169 = smul.addr %s166, 16
      %s170 = sadd.s32 %s168, %s169
      %s171 = smul.addr %s170, 8
      %s172 = scalar_lea.vmem %s0, %s171
      %p173 = pneg %p49
      %p174 = pneg %p46
      %p175 = pneg %p70
      %p176 = pneg %p67
      %p177 = pneg %p91
      %p178 = pneg %p88
      %p179 = pneg %p119
      %p180 = pneg %p116
      %s181 = smul.u32 16, %s19
      %p182 = scmp.lt.s32.totalorder %s18, 3
      %s183 = scalar_select %p182, %s18, 3
      %p184 = scmp.lt.s32.totalorder %s181, 15
      %s185 = scalar_select %p184, %s181, 15
      %s186 = smul.addr %s183, 16
      %s187 = sadd.s32 %s185, %s186
      %s188 = smul.addr %s187, 8
      %s189 = scalar_lea.vmem %s3, %s188
      %s190 = smul.u32 16, %s19
      %p191 = scmp.lt.s32.totalorder %s18, 3
      %s192 = scalar_select %p191, %s18, 3
      %p193 = scmp.lt.s32.totalorder %s190, 15
      %s194 = scalar_select %p193, %s190, 15
      %s195 = smul.addr %s192, 16
      %s196 = sadd.s32 %s194, %s195
      %s197 = smul.addr %s196, 8
      %s198 = scalar_lea.vmem %s0, %s197
      %s199 = smul.u32 16, %s19
      %s200 = smul.u32 16, %s19
      %p201 = scmp.lt.s32.totalorder %s18, 3
      %s202 = scalar_select %p201, %s18, 3
      %p203 = scmp.lt.s32.totalorder %s200, 15
      %s204 = scalar_select %p203, %s200, 15
      %s205 = smul.addr %s202, 16
      %s206 = sadd.s32 %s204, %s205
      %s207 = smul.addr %s206, 8
      %s208 = scalar_lea.vmem %s3, %s207
      %s209 = smul.u32 16, %s19
      %v210 = vld [vmem:[%s198] sm:$0xff]
      %v211 = vld [vmem:[%s198 + $0x8] sm:$0xff]
      %v212 = vld [vmem:[%s198 + $0x10] sm:$0xff]
      %v213 = vld [vmem:[%s198 + $0x18] sm:$0xff]
      %v214 = vld [vmem:[%s198 + $0x20] sm:$0xff]
      %v215 = vld [vmem:[%s198 + $0x28] sm:$0xff]
      %v216 = vld [vmem:[%s198 + $0x30] sm:$0xff]
      %v217 = vld [vmem:[%s198 + $0x38] sm:$0xff]
      %v218 = vld [vmem:[%s198 + $0x40] sm:$0xff]
      %v219 = vld [vmem:[%s198 + $0x48] sm:$0xff]
      %v220 = vld [vmem:[%s198 + $0x50] sm:$0xff]
      %v221 = vld [vmem:[%s198 + $0x58] sm:$0xff]
      %v222 = vld [vmem:[%s198 + $0x60] sm:$0xff]
      %v223 = vld [vmem:[%s198 + $0x68] sm:$0xff]
      %v224 = vld [vmem:[%s198 + $0x70] sm:$0xff]
      %v225 = vld [vmem:[%s198 + $0x78] sm:$0xff]
      %v226 = vld [vmem:[%s1] sm:$0x1]
      %v228 = vlaneseq
      %v229 = vshrl.u32 %v228, 7
      %v230 = vsub.s32 0, %v229
      %v231 = vrot.slane %v226, %v230
      %v233 = vmul.f32 %v210, %v231
      %v234 = vmul.f32 %v211, %v231
      %v235 = vmul.f32 %v212, %v231
      %v236 = vmul.f32 %v213, %v231
      %v237 = vmul.f32 %v214, %v231
      %v238 = vmul.f32 %v215, %v231
      %v239 = vmul.f32 %v216, %v231
      %v240 = vmul.f32 %v217, %v231
      %v241 = vmul.f32 %v218, %v231
      %v242 = vmul.f32 %v219, %v231
      %v243 = vmul.f32 %v220, %v231
      %v244 = vmul.f32 %v221, %v231
      %v245 = vmul.f32 %v222, %v231
      %v246 = vmul.f32 %v223, %v231
      %v247 = vmul.f32 %v224, %v231
      %v248 = vmul.f32 %v225, %v231
      %v249 = vld [vmem:[%s2] sm:$0x1]
      %v251 = vlaneseq
      %v252 = vshrl.u32 %v251, 7
      %v253 = vsub.s32 0, %v252
      %v254 = vrot.slane %v249, %v253
      %v256 = vadd.f32 %v233, %v254
      %v257 = vadd.f32 %v234, %v254
      %v258 = vadd.f32 %v235, %v254
      %v259 = vadd.f32 %v236, %v254
      %v260 = vadd.f32 %v237, %v254
      %v261 = vadd.f32 %v238, %v254
      %v262 = vadd.f32 %v239, %v254
      %v263 = vadd.f32 %v240, %v254
      %v264 = vadd.f32 %v241, %v254
      %v265 = vadd.f32 %v242, %v254
      %v266 = vadd.f32 %v243, %v254
      %v267 = vadd.f32 %v244, %v254
      %v268 = vadd.f32 %v245, %v254
      %v269 = vadd.f32 %v246, %v254
      %v270 = vadd.f32 %v247, %v254
      %v271 = vadd.f32 %v248, %v254
      %v272 = vmax.f32 %v256, 0.0
      %v273 = vmax.f32 %v257, 0.0
      %v274 = vmax.f32 %v258, 0.0
      %v275 = vmax.f32 %v259, 0.0
      %v276 = vmax.f32 %v260, 0.0
      %v277 = vmax.f32 %v261, 0.0
      %v278 = vmax.f32 %v262, 0.0
      %v279 = vmax.f32 %v263, 0.0
      %v280 = vmax.f32 %v264, 0.0
      %v281 = vmax.f32 %v265, 0.0
      %v282 = vmax.f32 %v266, 0.0
      %v283 = vmax.f32 %v267, 0.0
      %v284 = vmax.f32 %v268, 0.0
      %v285 = vmax.f32 %v269, 0.0
      %v286 = vmax.f32 %v270, 0.0
      %v287 = vmax.f32 %v271, 0.0
      %288 = vst [vmem:[%s208] sm:$0xff] %v272
      %289 = vst [vmem:[%s208 + $0x8] sm:$0xff] %v273
      %290 = vst [vmem:[%s208 + $0x10] sm:$0xff] %v274
      %291 = vst [vmem:[%s208 + $0x18] sm:$0xff] %v275
      %292 = vst [vmem:[%s208 + $0x20] sm:$0xff] %v276
      %293 = vst [vmem:[%s208 + $0x28] sm:$0xff] %v277
      %294 = vst [vmem:[%s208 + $0x30] sm:$0xff] %v278
      %295 = vst [vmem:[%s208 + $0x38] sm:$0xff] %v279
      %296 = vst [vmem:[%s208 + $0x40] sm:$0xff] %v280
      %297 = vst [vmem:[%s208 + $0x48] sm:$0xff] %v281
      %298 = vst [vmem:[%s208 + $0x50] sm:$0xff] %v282
      %299 = vst [vmem:[%s208 + $0x58] sm:$0xff] %v283
      %300 = vst [vmem:[%s208 + $0x60] sm:$0xff] %v284
      %301 = vst [vmem:[%s208 + $0x68] sm:$0xff] %v285
      %302 = vst [vmem:[%s208 + $0x70] sm:$0xff] %v286
      %303 = vst [vmem:[%s208 + $0x78] sm:$0xff] %v287
      %s304 = smul.u32 16, %s19
      %p305 = scmp.lt.s32.totalorder %s18, 3
      %s306 = scalar_select %p305, %s18, 3
      %p307 = scmp.lt.s32.totalorder %s304, 15
      %s308 = scalar_select %p307, %s304, 15
      %s309 = smul.addr %s306, 16
      %s310 = sadd.s32 %s308, %s309
      %s311 = smul.addr %s310, 8
      %s312 = scalar_lea.vmem %s3, %s311
      // Predicated region
      $region33: #{_lambda_.14} parent=31 // pred_check
        %p313 = pneg %p116
      $region34: #{_lambda_.14} parent=31 // pred_check_branch
        %315 = sbr.rel (%p313) target = $region36
      $region35: #{_lambda_.14} parent=31 // pred_region
        %s316 = smul.u32 16, %s19
      $region36: #{_lambda_.14} parent=31 // pred_fallthru
        _
    $region32: #{_lambda_.14} parent=5 // pred_fallthru
      _
    %p317 = scmp.le.s32.totalorder 2, %s9
    // Predicated region
    $region37: #{_lambda_.14} parent=5 // pred_check
      %p318 = pneg %p317
    $region38: #{_lambda_.14} parent=5 // pred_check_branch
      %320 = sbr.rel (%p318) target = $region40
    $region39: #{_lambda_.14} parent=5 // pred_region
      %s321 = ssub.s32 %s9, 2
      // Predicated region
      $region41: #{_lambda_.14} parent=39 // pred_check
        %p322 = pneg %p122
      $region42: #{_lambda_.14} parent=39 // pred_check_branch
        %324 = sbr.rel (%p322) target = $region44
      $region43: #{_lambda_.14} parent=39 // pred_region
        %s325 = smul.u32 16, %s21
        %p326 = scmp.lt.s32.totalorder %s20, 3
        %s327 = scalar_select %p326, %s20, 3
        %p328 = scmp.lt.s32.totalorder %s325, 15
        %s329 = scalar_select %p328, %s325, 15
        %s330 = smul.addr %s327, 16
        %s331 = sadd.s32 %s329, %s330
        %s332 = smul.addr %s331, 8
        %s333 = scalar_lea.vmem %s3, %s332
      $region44: #{_lambda_.14} parent=39 // pred_fallthru
        _
    $region40: #{_lambda_.14} parent=5 // pred_fallthru
      _
  $region6: #{_lambda_.14} parent=0 // loop_footer
    %s13 = sadd.s32 1, %s9
  $region7: #{_lambda_.14} parent=0 // loop_footer_branch
    %8 = sbr.rel target = $region3
  $region8: #{_lambda_.14} parent=0 // loop_exit
    _

// kernel: _lambda_.15
$region0: #{_lambda_.15}
  #allocation0 [shape = 'u32[]', space=smem, size = 0x4, offset = 0x4, fixed_abs, tag = 'smem constant byte address 0x4 - core index']
  #allocation1 [shape = 'u32[144,128]{1,0:T(1,128)}', space=vmem, size = 0x12000, scoped, tag = 'internal scratch']
  %s0 = inlined_call_operand.vmem [shape: bf16[4,512,64], index: 0, kind: input, shape index: {}]
  %s1 = inlined_call_operand.vmem [shape: bf16[4,64,128], index: 1, kind: input, shape index: {}]
  %s2 = inlined_call_operand.vmem [shape: f32[4,512,128], index: 2, kind: output, shape index: {0}]
  %s3 = inlined_call_operand.vmem [shape: f32[4,1,2,128], index: 3, kind: output, shape index: {1}]
  %4 = xla_tuple %s2, %s3
  %s5 = sld [smem:[#allocation0]]
  $region49: #{_lambda_.15} parent=0
    _
  %s7 = ssub.s32 1, %s5
  %s8 = scalar_select 0, %s7, %s5
  loop: start=0, step=1, limit=6
  $region2: #{_lambda_.15} parent=0 // loop_pre_header
    _
  $region3: #{_lambda_.15} parent=0 // loop_header
    %s10 = sphi 0, %s14
    %p11 = scmp.ge.s32.totalorder %s10, 6
    %s17 = sphi 0, %s29
    %s18 = sphi 0, %s25
    %s19 = sphi 0, %s17
    %s20 = sphi 0, %s18
    %s21 = sphi 0, %s19
    %s22 = sphi 0, %s20
    %s34 = sphi 0, %s36
    %s37 = sphi 0, %s34
    %s38 = sphi 0, %s37
    %s54 = sphi 0, %s38
    %s60 = sphi 0, %s62
    %s63 = sphi 0, %s60
    %s64 = sphi 0, %s63
    %s80 = sphi 0, %s64
    %s88 = sphi 0, %s90
    %s91 = sphi 0, %s88
    %s92 = sphi 0, %s91
    %s108 = sphi 0, %s92
    %s116 = sphi 0, %s118
    %s119 = sphi 0, %s116
    %s120 = sphi 0, %s119
    %s136 = sphi 0, %s120
  $region4: #{_lambda_.15} parent=0 // loop_header_branch
    %13 = sbr.rel (%p11) target = $region8
  $region5: #{_lambda_.15} parent=0 // loop_body
    %s15 = ssub.s32 %s10, 1
    %s16 = ssub.s32 %s10, 2
    %s23 = sadd.s32 1, %s18
    %p24 = scmp.ge.s32.totalorder %s23, 1
    %s25 = scalar_select %p24, 0, %s23
    %s26 = sadd.s32 1, %s17
    %s27 = scalar_select %p24, %s26, %s17
    %p28 = scmp.ge.s32.totalorder %s27, 4
    %s29 = scalar_select %p28, 0, %s27
    %s30 = ssub.s32 %s17, %s29
    %s31 = ssub.s32 %s18, %s25
    %s32 = sor.u32 %s30, %s31
    %p33 = scmp.eq.s32.totalorder %s32, 0
    %s35 = sadd.s32 %s34, 1
    %s36 = scalar_select %p33, %s34, %s35
    %p39 = pneg %p33
    %p40 = scmp.eq.s32.totalorder %s10, 3
    %p41 = por %p39, %p40
    %p42 = scmp.ne.s32.totalorder %s34, %s37
    %p43 = scmp.eq.s32.totalorder %s10, 0
    %p44 = por %p42, %p43
    %p45 = scmp.ne.s32.totalorder %s34, %s37
    %p46 = scmp.eq.s32.totalorder %s15, 3
    %p47 = por %p45, %p46
    %p48 = scmp.ne.s32.totalorder %s37, %s38
    %p49 = scmp.eq.s32.totalorder %s15, 0
    %p50 = por %p48, %p49
    %p51 = scmp.ne.s32.totalorder %s37, %s38
    %p52 = scmp.eq.s32.totalorder %s16, 3
    %p53 = por %p51, %p52
    %p55 = scmp.ne.s32.totalorder %s38, %s54
    %p56 = scmp.eq.s32.totalorder %s16, 0
    %p57 = por %p55, %p56
    %s58 = ssub.s32 %s17, %s29
    %p59 = scmp.eq.s32.totalorder %s58, 0
    %s61 = sadd.s32 %s60, 1
    %s62 = scalar_select %p59, %s60, %s61
    %p65 = pneg %p59
    %p66 = scmp.eq.s32.totalorder %s10, 3
    %p67 = por %p65, %p66
    %p68 = scmp.ne.s32.totalorder %s60, %s63
    %p69 = scmp.eq.s32.totalorder %s10, 0
    %p70 = por %p68, %p69
    %p71 = scmp.ne.s32.totalorder %s60, %s63
    %p72 = scmp.eq.s32.totalorder %s15, 3
    %p73 = por %p71, %p72
    %p74 = scmp.ne.s32.totalorder %s63, %s64
    %p75 = scmp.eq.s32.totalorder %s15, 0
    %p76 = por %p74, %p75
    %p77 = scmp.ne.s32.totalorder %s63, %s64
    %p78 = scmp.eq.s32.totalorder %s16, 3
    %p79 = por %p77, %p78
    %p81 = scmp.ne.s32.totalorder %s64, %s80
    %p82 = scmp.eq.s32.totalorder %s16, 0
    %p83 = por %p81, %p82
    %s84 = ssub.s32 %s17, %s29
    %s85 = ssub.s32 %s18, %s25
    %s86 = sor.u32 %s84, %s85
    %p87 = scmp.eq.s32.totalorder %s86, 0
    %s89 = sadd.s32 %s88, 1
    %s90 = scalar_select %p87, %s88, %s89
    %p93 = pneg %p87
    %p94 = scmp.eq.s32.totalorder %s10, 3
    %p95 = por %p93, %p94
    %p96 = scmp.ne.s32.totalorder %s88, %s91
    %p97 = scmp.eq.s32.totalorder %s10, 0
    %p98 = por %p96, %p97
    %p99 = scmp.ne.s32.totalorder %s88, %s91
    %p100 = scmp.eq.s32.totalorder %s15, 3
    %p101 = por %p99, %p100
    %p102 = scmp.ne.s32.totalorder %s91, %s92
    %p103 = scmp.eq.s32.totalorder %s15, 0
    %p104 = por %p102, %p103
    %p105 = scmp.ne.s32.totalorder %s91, %s92
    %p106 = scmp.eq.s32.totalorder %s16, 3
    %p107 = por %p105, %p106
    %p109 = scmp.ne.s32.totalorder %s92, %s108
    %p110 = scmp.eq.s32.totalorder %s16, 0
    %p111 = por %p109, %p110
    %s112 = ssub.s32 %s17, %s29
    %s113 = ssub.s32 %s18, %s25
    %s114 = sor.u32 %s112, %s113
    %p115 = scmp.eq.s32.totalorder %s114, 0
    %s117 = sadd.s32 %s116, 1
    %s118 = scalar_select %p115, %s116, %s117
    %p121 = pneg %p115
    %p122 = scmp.eq.s32.totalorder %s10, 3
    %p123 = por %p121, %p122
    %p124 = scmp.ne.s32.totalorder %s116, %s119
    %p125 = scmp.eq.s32.totalorder %s10, 0
    %p126 = por %p124, %p125
    %p127 = scmp.ne.s32.totalorder %s116, %s119
    %p128 = scmp.eq.s32.totalorder %s15, 3
    %p129 = por %p127, %p128
    %p130 = scmp.ne.s32.totalorder %s119, %s120
    %p131 = scmp.eq.s32.totalorder %s15, 0
    %p132 = por %p130, %p131
    %p133 = scmp.ne.s32.totalorder %s119, %s120
    %p134 = scmp.eq.s32.totalorder %s16, 3
    %p135 = por %p133, %p134
    %p137 = scmp.ne.s32.totalorder %s120, %s136
    %p138 = scmp.eq.s32.totalorder %s16, 0
    %p139 = por %p137, %p138
    %p140 = scmp.le.s32.totalorder 1, %s10
    %p141 = scmp.lt.s32.totalorder %s10, 5
    %p142 = pnand %p140, %p141
    %p143 = pneg %p142
    // Predicated region
    $region9: #{_lambda_.15} parent=5 // pred_check
      _
    $region10: #{_lambda_.15} parent=5 // pred_check_branch
      %145 = sbr.rel (%p142) target = $region12
    $region11: #{_lambda_.15} parent=5 // pred_region
      %s146 = ssub.s32 %s10, 1
    $region12: #{_lambda_.15} parent=5 // pred_fallthru
      _
    %p147 = scmp.lt.s32.totalorder %s10, 4
    // Predicated region
    $region13: #{_lambda_.15} parent=5 // pred_check
      %p148 = pneg %p147
    $region14: #{_lambda_.15} parent=5 // pred_check_branch
      %150 = sbr.rel (%p148) target = $region16
    $region15: #{_lambda_.15} parent=5 // pred_region
      // Predicated region
      $region17: #{_lambda_.15} parent=15 // pred_check
        %p151 = pneg %p44
      $region18: #{_lambda_.15} parent=15 // pred_check_branch
        %153 = sbr.rel (%p151) target = $region20
      $region19: #{_lambda_.15} parent=15 // pred_region
        %s154 = smul.u32 64, %s18
        %p155 = scmp.lt.s32.totalorder %s17, 3
        %s156 = scalar_select %p155, %s17, 3
        %p157 = scmp.lt.s32.totalorder %s154, 63
        %s158 = scalar_select %p157, %s154, 63
        %s159 = smul.addr %s156, 64
        %s160 = sadd.s32 %s158, %s159
        %s161 = smul.addr %s160, 4
        %s162 = scalar_lea.vmem %s0, %s161
        %s163 = smul.u32 64, %s18
      $region20: #{_lambda_.15} parent=15 // pred_fallthru
        _
      // Predicated region
      $region21: #{_lambda_.15} parent=15 // pred_check
        %p164 = pneg %p70
      $region22: #{_lambda_.15} parent=15 // pred_check_branch
        %166 = sbr.rel (%p164) target = $region24
      $region23: #{_lambda_.15} parent=15 // pred_region
        %p167 = scmp.lt.s32.totalorder %s17, 3
        %s168 = scalar_select %p167, %s17, 3
        %s169 = smul.addr %s168, 8
        %s170 = smul.addr %s169, 4
        %s171 = scalar_lea.vmem %s1, %s170
      $region24: #{_lambda_.15} parent=15 // pred_fallthru
        _
    $region16: #{_lambda_.15} parent=5 // pred_fallthru
      _
    %p172 = scmp.le.s32.totalorder 1, %s10
    %p173 = scmp.lt.s32.totalorder %s10, 5
    %p174 = pnand %p172, %p173
    %p175 = pneg %p174
    // Predicated region
    $region25: #{_lambda_.15} parent=5 // pred_check
      _
    $region26: #{_lambda_.15} parent=5 // pred_check_branch
      %177 = sbr.rel (%p174) target = $region28
    $region27: #{_lambda_.15} parent=5 // pred_region
      %s178 = ssub.s32 %s10, 1
      %s179 = smul.u32 64, %s20
      %p180 = scmp.lt.s32.totalorder %s19, 3
      %s181 = scalar_select %p180, %s19, 3
      %p182 = scmp.lt.s32.totalorder %s179, 63
      %s183 = scalar_select %p182, %s179, 63
      %s184 = smul.addr %s181, 64
      %s185 = sadd.s32 %s183, %s184
      %s186 = smul.addr %s185, 4
      %s187 = scalar_lea.vmem %s0, %s186
      %p188 = pneg %p50
      %p189 = pneg %p47
      %p190 = scmp.lt.s32.totalorder %s19, 3
      %s191 = scalar_select %p190, %s19, 3
      %s192 = smul.addr %s191, 8
      %s193 = smul.addr %s192, 4
      %s194 = scalar_lea.vmem %s1, %s193
      %p195 = pneg %p76
      %p196 = pneg %p73
      %p197 = pneg %p104
      %p198 = pneg %p101
      %s199 = smul.u32 64, %s20
      %p200 = scmp.lt.s32.totalorder %s19, 3
      %s201 = scalar_select %p200, %s19, 3
      %p202 = scmp.lt.s32.totalorder %s199, 63
      %s203 = scalar_select %p202, %s199, 63
      %s204 = smul.addr %s201, 64
      %s205 = sadd.s32 %s203, %s204
      %s206 = smul.addr %s205, 8
      %s207 = scalar_lea.vmem %s2, %s206
      %p208 = pneg %p132
      %p209 = pneg %p129
      %p210 = scmp.lt.s32.totalorder %s19, 3
      %s211 = scalar_select %p210, %s19, 3
      %p212 = scmp.lt.s32.totalorder %s20, 0
      %s213 = scalar_select %p212, %s20, 0
      %s214 = sadd.s32 %s213, %s211
      %s215 = smul.addr %s214, 2
      %s216 = scalar_lea.vmem %s3, %s215
      %s217 = smul.u32 64, %s20
      %p218 = scmp.lt.s32.totalorder %s19, 3
      %s219 = scalar_select %p218, %s19, 3
      %p220 = scmp.lt.s32.totalorder %s217, 63
      %s221 = scalar_select %p220, %s217, 63
      %s222 = smul.addr %s219, 64
      %s223 = sadd.s32 %s221, %s222
      %s224 = smul.addr %s223, 4
      %s225 = scalar_lea.vmem %s0, %s224
      %s226 = smul.u32 64, %s20
      %p227 = scmp.lt.s32.totalorder %s19, 3
      %s228 = scalar_select %p227, %s19, 3
      %s229 = smul.addr %s228, 8
      %s230 = smul.addr %s229, 4
      %s231 = scalar_lea.vmem %s1, %s230
      %s232 = smul.u32 64, %s20
      %p233 = scmp.lt.s32.totalorder %s19, 3
      %s234 = scalar_select %p233, %s19, 3
      %p235 = scmp.lt.s32.totalorder %s232, 63
      %s236 = scalar_select %p235, %s232, 63
      %s237 = smul.addr %s234, 64
      %s238 = sadd.s32 %s236, %s237
      %s239 = smul.addr %s238, 8
      %s240 = scalar_lea.vmem %s2, %s239
      %s241 = smul.u32 64, %s20
      %p242 = scmp.lt.s32.totalorder %s19, 3
      %s243 = scalar_select %p242, %s19, 3
      %p244 = scmp.lt.s32.totalorder %s20, 0
      %s245 = scalar_select %p244, %s20, 0
      %s246 = sadd.s32 %s245, %s243
      %s247 = smul.addr %s246, 2
      %s248 = scalar_lea.vmem %s3, %s247
      %v250 = vld [vmem:[%s225] sm:$0xf]
      %v251 = vld [vmem:[%s225 + $0x4] sm:$0xf]
      %v252 = vld [vmem:[%s225 + $0x8] sm:$0xf]
      %v253 = vld [vmem:[%s225 + $0xc] sm:$0xf]
      %v254 = vld [vmem:[%s225 + $0x10] sm:$0xf]
      %v255 = vld [vmem:[%s225 + $0x14] sm:$0xf]
      %v256 = vld [vmem:[%s225 + $0x18] sm:$0xf]
      %v257 = vld [vmem:[%s225 + $0x1c] sm:$0xf]
      %v258 = vld [vmem:[%s225 + $0x20] sm:$0xf]
      %v259 = vld [vmem:[%s225 + $0x24] sm:$0xf]
      %v260 = vld [vmem:[%s225 + $0x28] sm:$0xf]
      %v261 = vld [vmem:[%s225 + $0x2c] sm:$0xf]
      %v262 = vld [vmem:[%s225 + $0x30] sm:$0xf]
      %v263 = vld [vmem:[%s225 + $0x34] sm:$0xf]
      %v264 = vld [vmem:[%s225 + $0x38] sm:$0xf]
      %v265 = vld [vmem:[%s225 + $0x3c] sm:$0xf]
      %v266 = vld [vmem:[%s225 + $0x40] sm:$0xf]
      %v267 = vld [vmem:[%s225 + $0x44] sm:$0xf]
      %v268 = vld [vmem:[%s225 + $0x48] sm:$0xf]
      %v269 = vld [vmem:[%s225 + $0x4c] sm:$0xf]
      %v270 = vld [vmem:[%s225 + $0x50] sm:$0xf]
      %v271 = vld [vmem:[%s225 + $0x54] sm:$0xf]
      %v272 = vld [vmem:[%s225 + $0x58] sm:$0xf]
      %v273 = vld [vmem:[%s225 + $0x5c] sm:$0xf]
      %v274 = vld [vmem:[%s225 + $0x60] sm:$0xf]
      %v275 = vld [vmem:[%s225 + $0x64] sm:$0xf]
      %v276 = vld [vmem:[%s225 + $0x68] sm:$0xf]
      %v277 = vld [vmem:[%s225 + $0x6c] sm:$0xf]
      %v278 = vld [vmem:[%s225 + $0x70] sm:$0xf]
      %v279 = vld [vmem:[%s225 + $0x74] sm:$0xf]
      %v280 = vld [vmem:[%s225 + $0x78] sm:$0xf]
      %v281 = vld [vmem:[%s225 + $0x7c] sm:$0xf]
      %v282 = vld [vmem:[%s225 + $0x80] sm:$0xf]
      %v283 = vld [vmem:[%s225 + $0x84] sm:$0xf]
      %v284 = vld [vmem:[%s225 + $0x88] sm:$0xf]
      %v285 = vld [vmem:[%s225 + $0x8c] sm:$0xf]
      %v286 = vld [vmem:[%s225 + $0x90] sm:$0xf]
      %v287 = vld [vmem:[%s225 + $0x94] sm:$0xf]
      %v288 = vld [vmem:[%s225 + $0x98] sm:$0xf]
      %v289 = vld [vmem:[%s225 + $0x9c] sm:$0xf]
      %v290 = vld [vmem:[%s225 + $0xa0] sm:$0xf]
      %v291 = vld [vmem:[%s225 + $0xa4] sm:$0xf]
      %v292 = vld [vmem:[%s225 + $0xa8] sm:$0xf]
      %v293 = vld [vmem:[%s225 + $0xac] sm:$0xf]
      %v294 = vld [vmem:[%s225 + $0xb0] sm:$0xf]
      %v295 = vld [vmem:[%s225 + $0xb4] sm:$0xf]
      %v296 = vld [vmem:[%s225 + $0xb8] sm:$0xf]
      %v297 = vld [vmem:[%s225 + $0xbc] sm:$0xf]
      %v298 = vld [vmem:[%s225 + $0xc0] sm:$0xf]
      %v299 = vld [vmem:[%s225 + $0xc4] sm:$0xf]
      %v300 = vld [vmem:[%s225 + $0xc8] sm:$0xf]
      %v301 = vld [vmem:[%s225 + $0xcc] sm:$0xf]
      %v302 = vld [vmem:[%s225 + $0xd0] sm:$0xf]
      %v303 = vld [vmem:[%s225 + $0xd4] sm:$0xf]
      %v304 = vld [vmem:[%s225 + $0xd8] sm:$0xf]
      %v305 = vld [vmem:[%s225 + $0xdc] sm:$0xf]
      %v306 = vld [vmem:[%s225 + $0xe0] sm:$0xf]
      %v307 = vld [vmem:[%s225 + $0xe4] sm:$0xf]
      %v308 = vld [vmem:[%s225 + $0xe8] sm:$0xf]
      %v309 = vld [vmem:[%s225 + $0xec] sm:$0xf]
      %v310 = vld [vmem:[%s225 + $0xf0] sm:$0xf]
      %v311 = vld [vmem:[%s225 + $0xf4] sm:$0xf]
      %v312 = vld [vmem:[%s225 + $0xf8] sm:$0xf]
      %v313 = vld [vmem:[%s225 + $0xfc] sm:$0xf]
      %v314 = vld [vmem:[%s231] sm:$0xf]
      %v315 = vld [vmem:[%s231 + $0x4] sm:$0xf]
      %v316 = vld [vmem:[%s231 + $0x8] sm:$0xf]
      %v317 = vld [vmem:[%s231 + $0xc] sm:$0xf]
      %v318 = vld [vmem:[%s231 + $0x10] sm:$0xf]
      %v319 = vld [vmem:[%s231 + $0x14] sm:$0xf]
      %v320 = vld [vmem:[%s231 + $0x18] sm:$0xf]
      %v321 = vld [vmem:[%s231 + $0x1c] sm:$0xf]
      %v386 = vunpack.c.l.b16 %v250
      %v387 = vunpack.c.l.b16 %v251
      %v388 = vunpack.c.l.b16 %v252
      %v389 = vunpack.c.l.b16 %v253
      %v390 = vunpack.c.l.b16 %v254
      %v391 = vunpack.c.l.b16 %v255
      %v392 = vunpack.c.l.b16 %v256
      %v393 = vunpack.c.l.b16 %v257
      %v394 = vunpack.c.l.b16 %v258
      %v395 = vunpack.c.l.b16 %v259
      %v396 = vunpack.c.l.b16 %v260
      %v397 = vunpack.c.l.b16 %v261
      %v398 = vunpack.c.l.b16 %v262
      %v399 = vunpack.c.l.b16 %v263
      %v400 = vunpack.c.l.b16 %v264
      %v401 = vunpack.c.l.b16 %v265
      %v402 = vunpack.c.l.b16 %v266
      %v403 = vunpack.c.l.b16 %v267
      %v404 = vunpack.c.l.b16 %v268
      %v405 = vunpack.c.l.b16 %v269
      %v406 = vunpack.c.l.b16 %v270
      %v407 = vunpack.c.l.b16 %v271
      %v408 = vunpack.c.l.b16 %v272
      %v409 = vunpack.c.l.b16 %v273
      %v410 = vunpack.c.l.b16 %v274
      %v411 = vunpack.c.l.b16 %v275
      %v412 = vunpack.c.l.b16 %v276
      %v413 = vunpack.c.l.b16 %v277
      %v414 = vunpack.c.l.b16 %v278
      %v415 = vunpack.c.l.b16 %v279
      %v416 = vunpack.c.l.b16 %v280
      %v417 = vunpack.c.l.b16 %v281
      %v418 = vunpack.c.l.b16 %v282
      %v419 = vunpack.c.l.b16 %v283
      %v420 = vunpack.c.l.b16 %v284
      %v421 = vunpack.c.l.b16 %v285
      %v422 = vunpack.c.l.b16 %v286
      %v423 = vunpack.c.l.b16 %v287
      %v424 = vunpack.c.l.b16 %v288
      %v425 = vunpack.c.l.b16 %v289
      %v426 = vunpack.c.l.b16 %v290
      %v427 = vunpack.c.l.b16 %v291
      %v428 = vunpack.c.l.b16 %v292
      %v429 = vunpack.c.l.b16 %v293
      %v430 = vunpack.c.l.b16 %v294
      %v431 = vunpack.c.l.b16 %v295
      %v432 = vunpack.c.l.b16 %v296
      %v433 = vunpack.c.l.b16 %v297
      %v434 = vunpack.c.l.b16 %v298
      %v435 = vunpack.c.l.b16 %v299
      %v436 = vunpack.c.l.b16 %v300
      %v437 = vunpack.c.l.b16 %v301
      %v438 = vunpack.c.l.b16 %v302
      %v439 = vunpack.c.l.b16 %v303
      %v440 = vunpack.c.l.b16 %v304
      %v441 = vunpack.c.l.b16 %v305
      %v442 = vunpack.c.l.b16 %v306
      %v443 = vunpack.c.l.b16 %v307
      %v444 = vunpack.c.l.b16 %v308
      %v445 = vunpack.c.l.b16 %v309
      %v446 = vunpack.c.l.b16 %v310
      %v447 = vunpack.c.l.b16 %v311
      %v448 = vunpack.c.l.b16 %v312
      %v449 = vunpack.c.l.b16 %v313
      %v450 = vpack.c.b16 %v387, %v386
      %v451 = vpack.c.b16 %v389, %v388
      %v452 = vpack.c.b16 %v391, %v390
      %v453 = vpack.c.b16 %v393, %v392
      %v454 = vpack.c.b16 %v395, %v394
      %v455 = vpack.c.b16 %v397, %v396
      %v456 = vpack.c.b16 %v399, %v398
      %v457 = vpack.c.b16 %v401, %v400
      %v458 = vpack.c.b16 %v403, %v402
      %v459 = vpack.c.b16 %v405, %v404
      %v460 = vpack.c.b16 %v407, %v406
      %v461 = vpack.c.b16 %v409, %v408
      %v462 = vpack.c.b16 %v411, %v410
      %v463 = vpack.c.b16 %v413, %v412
      %v464 = vpack.c.b16 %v415, %v414
      %v465 = vpack.c.b16 %v417, %v416
      %v466 = vpack.c.b16 %v419, %v418
      %v467 = vpack.c.b16 %v421, %v420
      %v468 = vpack.c.b16 %v423, %v422
      %v469 = vpack.c.b16 %v425, %v424
      %v470 = vpack.c.b16 %v427, %v426
      %v471 = vpack.c.b16 %v429, %v428
      %v472 = vpack.c.b16 %v431, %v430
      %v473 = vpack.c.b16 %v433, %v432
      %v474 = vpack.c.b16 %v435, %v434
      %v475 = vpack.c.b16 %v437, %v436
      %v476 = vpack.c.b16 %v439, %v438
      %v477 = vpack.c.b16 %v441, %v440
      %v478 = vpack.c.b16 %v443, %v442
      %v479 = vpack.c.b16 %v445, %v444
      %v480 = vpack.c.b16 %v447, %v446
      %v481 = vpack.c.b16 %v449, %v448
      %v490 = vunpack.c.l.b16 %v314
      %v491 = vunpack.c.l.b16 %v315
      %v492 = vunpack.c.l.b16 %v316
      %v493 = vunpack.c.l.b16 %v317
      %v494 = vunpack.c.l.b16 %v318
      %v495 = vunpack.c.l.b16 %v319
      %v496 = vunpack.c.l.b16 %v320
      %v497 = vunpack.c.l.b16 %v321
      %v498 = vpack.c.b16 %v491, %v490
      %v499 = vpack.c.b16 %v493, %v492
      %v500 = vpack.c.b16 %v495, %v494
      %v501 = vpack.c.b16 %v497, %v496
      %vm506 = vcmask 523264
      %v508 = vsel %vm506, %v450, 0
      %v511 = vsel %vm506, %v451, 0
      %v514 = vsel %vm506, %v452, 0
      %v517 = vsel %vm506, %v453, 0
      %v520 = vsel %vm506, %v454, 0
      %v523 = vsel %vm506, %v455, 0
      %v526 = vsel %vm506, %v456, 0
      %v529 = vsel %vm506, %v457, 0
      %v532 = vsel %vm506, %v458, 0
      %v535 = vsel %vm506, %v459, 0
      %v538 = vsel %vm506, %v460, 0
      %v541 = vsel %vm506, %v461, 0
      %v544 = vsel %vm506, %v462, 0
      %v547 = vsel %vm506, %v463, 0
      %v550 = vsel %vm506, %v464, 0
      %v553 = vsel %vm506, %v465, 0
      %v556 = vsel %vm506, %v466, 0
      %v559 = vsel %vm506, %v467, 0
      %v562 = vsel %vm506, %v468, 0
      %v565 = vsel %vm506, %v469, 0
      %v568 = vsel %vm506, %v470, 0
      %v571 = vsel %vm506, %v471, 0
      %v574 = vsel %vm506, %v472, 0
      %v577 = vsel %vm506, %v473, 0
      %v580 = vsel %vm506, %v474, 0
      %v583 = vsel %vm506, %v475, 0
      %v586 = vsel %vm506, %v476, 0
      %v589 = vsel %vm506, %v477, 0
      %v592 = vsel %vm506, %v478, 0
      %v595 = vsel %vm506, %v479, 0
      %v598 = vsel %vm506, %v480, 0
      %v601 = vsel %vm506, %v481, 0
      %603 = vmatprep.subr.bf16.mxu0 0
      %604 = vmatpush1.bf16.msra.mxu0 %v498
      %605 = vmatprep.subr.bf16.mxu0 0
      %606 = vmatpush1.bf16.msra.mxu0 %v499
      %607 = vmatprep.subr.bf16.mxu0 0
      %608 = vmatpush1.bf16.msra.mxu0 %v500
      %609 = vmatprep.subr.bf16.mxu0 0
      %610 = vmatpush1.bf16.msra.mxu0 %v501
      %611 = vmatprep.subr.bf16.mxu0 0
      %612 = vmatpush1.bf16.msra.mxu0 0
      %613 = vmatprep.subr.bf16.mxu0 0
      %614 = vmatpush1.bf16.msra.mxu0 0
      %615 = vmatprep.subr.bf16.mxu0 0
      %616 = vmatpush1.bf16.msra.mxu0 0
      %617 = vmatprep.subr.bf16.mxu0 0
      %618 = vmatpush1.bf16.msra.mxu0 0
      %619 = vmatprep.subr.bf16.mxu0 0
      %620 = vmatpush1.bf16.msra.mxu0 0
      %621 = vmatprep.subr.bf16.mxu0 0
      %622 = vmatpush1.bf16.msra.mxu0 0
      %623 = vmatprep.subr.bf16.mxu0 0
      %624 = vmatpush1.bf16.msra.mxu0 0
      %625 = vmatprep.subr.bf16.mxu0 0
      %626 = vmatpush1.bf16.msra.mxu0 0
      %627 = vmatprep.subr.bf16.mxu0 0
      %628 = vmatpush1.bf16.msra.mxu0 0
      %629 = vmatprep.subr.bf16.mxu0 0
      %630 = vmatpush1.bf16.msra.mxu0 0
      %631 = vmatprep.subr.bf16.mxu0 0
      %632 = vmatpush1.bf16.msra.mxu0 0
      %633 = vmatprep.subr.bf16.mxu0 0
      %634 = vmatpush1.bf16.msra.mxu0 0
      %635 = vmatprep.mubr.bf16.mxu0 0
      %636 = vmatmul.mubr.bf16.gmra.mrb[0].mxu0 %v508
      %v637 = vpop.f32.mrb[0].mxu0
      %v638 = vadd.f32 0.0, %v637
      %v639 = vpop.f32.mrb[0].mxu0
      %v640 = vpop.f32.mrb[0].mxu0
      %v641 = vadd.f32 0.0, %v640
      %v642 = vpop.f32.mrb[0].mxu0
      %643 = vmatprep.mubr.bf16.mxu0 0
      %644 = vmatmul.mubr.bf16.gmra.mrb[0].mxu0 %v511
      %v645 = vpop.f32.mrb[0].mxu0
      %v646 = vadd.f32 0.0, %v645
      %v647 = vpop.f32.mrb[0].mxu0
      %v648 = vpop.f32.mrb[0].mxu0
      %v649 = vadd.f32 0.0, %v648
      %v650 = vpop.f32.mrb[0].mxu0
      %651 = vmatprep.mubr.bf16.mxu0 0
      %652 = vmatmul.mubr.bf16.gmra.mrb[0].mxu0 %v514
      %v653 = vpop.f32.mrb[0].mxu0
      %v654 = vadd.f32 0.0, %v653
      %v655 = vpop.f32.mrb[0].mxu0
      %v656 = vpop.f32.mrb[0].mxu0
      %v657 = vadd.f32 0.0, %v656
      %v658 = vpop.f32.mrb[0].mxu0
      %659 = vmatprep.mubr.bf16.mxu0 0
      %660 = vmatmul.mubr.bf16.gmra.mrb[0].mxu0 %v517
      %v661 = vpop.f32.mrb[0].mxu0
      %v662 = vadd.f32 0.0, %v661
      %v663 = vpop.f32.mrb[0].mxu0
      %v664 = vpop.f32.mrb[0].mxu0
      %v665 = vadd.f32 0.0, %v664
      %v666 = vpop.f32.mrb[0].mxu0
      %667 = vmatprep.mubr.bf16.mxu0 0
      %668 = vmatmul.mubr.bf16.gmra.mrb[0].mxu0 %v520
      %v669 = vpop.f32.mrb[0].mxu0
      %v670 = vadd.f32 0.0, %v669
      %v671 = vpop.f32.mrb[0].mxu0
      %v672 = vpop.f32.mrb[0].mxu0
      %v673 = vadd.f32 0.0, %v672
      %v674 = vpop.f32.mrb[0].mxu0
      %675 = vmatprep.mubr.bf16.mxu0 0
      %676 = vmatmul.mubr.bf16.gmra.mrb[0].mxu0 %v523
      %v677 = vpop.f32.mrb[0].mxu0
      %v678 = vadd.f32 0.0, %v677
      %v679 = vpop.f32.mrb[0].mxu0
      %v680 = vpop.f32.mrb[0].mxu0
      %v681 = vadd.f32 0.0, %v680
      %v682 = vpop.f32.mrb[0].mxu0
      %683 = vmatprep.mubr.bf16.mxu0 0
      %684 = vmatmul.mubr.bf16.gmra.mrb[0].mxu0 %v526
      %v685 = vpop.f32.mrb[0].mxu0
      %v686 = vadd.f32 0.0, %v685
      %v687 = vpop.f32.mrb[0].mxu0
      %v688 = vpop.f32.mrb[0].mxu0
      %v689 = vadd.f32 0.0, %v688
      %v690 = vpop.f32.mrb[0].mxu0
      %691 = vmatprep.mubr.bf16.mxu0 0
      %692 = vmatmul.mubr.bf16.gmra.mrb[0].mxu0 %v529
      %v693 = vpop.f32.mrb[0].mxu0
      %v694 = vadd.f32 0.0, %v693
      %v695 = vpop.f32.mrb[0].mxu0
      %v696 = vpop.f32.mrb[0].mxu0
      %v697 = vadd.f32 0.0, %v696
      %v698 = vpop.f32.mrb[0].mxu0
      %699 = vmatprep.mubr.bf16.mxu0 0
      %700 = vmatmul.mubr.bf16.gmra.mrb[0].mxu0 %v532
      %v701 = vpop.f32.mrb[0].mxu0
      %v702 = vadd.f32 0.0, %v701
      %v703 = vpop.f32.mrb[0].mxu0
      %v704 = vpop.f32.mrb[0].mxu0
      %v705 = vadd.f32 0.0, %v704
      %v706 = vpop.f32.mrb[0].mxu0
      %707 = vmatprep.mubr.bf16.mxu0 0
      %708 = vmatmul.mubr.bf16.gmra.mrb[0].mxu0 %v535
      %v709 = vpop.f32.mrb[0].mxu0
      %v710 = vadd.f32 0.0, %v709
      %v711 = vpop.f32.mrb[0].mxu0
      %v712 = vpop.f32.mrb[0].mxu0
      %v713 = vadd.f32 0.0, %v712
      %v714 = vpop.f32.mrb[0].mxu0
      %715 = vmatprep.mubr.bf16.mxu0 0
      %716 = vmatmul.mubr.bf16.gmra.mrb[0].mxu0 %v538
      %v717 = vpop.f32.mrb[0].mxu0
      %v718 = vadd.f32 0.0, %v717
      %v719 = vpop.f32.mrb[0].mxu0
      %v720 = vpop.f32.mrb[0].mxu0
      %v721 = vadd.f32 0.0, %v720
      %v722 = vpop.f32.mrb[0].mxu0
      %723 = vmatprep.mubr.bf16.mxu0 0
      %724 = vmatmul.mubr.bf16.gmra.mrb[0].mxu0 %v541
      %v725 = vpop.f32.mrb[0].mxu0
      %v726 = vadd.f32 0.0, %v725
      %v727 = vpop.f32.mrb[0].mxu0
      %v728 = vpop.f32.mrb[0].mxu0
      %v729 = vadd.f32 0.0, %v728
      %v730 = vpop.f32.mrb[0].mxu0
      %731 = vmatprep.mubr.bf16.mxu0 0
      %732 = vmatmul.mubr.bf16.gmra.mrb[0].mxu0 %v544
      %v733 = vpop.f32.mrb[0].mxu0
      %v734 = vadd.f32 0.0, %v733
      %v735 = vpop.f32.mrb[0].mxu0
      %v736 = vpop.f32.mrb[0].mxu0
      %v737 = vadd.f32 0.0, %v736
      %v738 = vpop.f32.mrb[0].mxu0
      %739 = vmatprep.mubr.bf16.mxu0 0
      %740 = vmatmul.mubr.bf16.gmra.mrb[0].mxu0 %v547
      %v741 = vpop.f32.mrb[0].mxu0
      %v742 = vadd.f32 0.0, %v741
      %v743 = vpop.f32.mrb[0].mxu0
      %v744 = vpop.f32.mrb[0].mxu0
      %v745 = vadd.f32 0.0, %v744
      %v746 = vpop.f32.mrb[0].mxu0
      %747 = vmatprep.mubr.bf16.mxu0 0
      %748 = vmatmul.mubr.bf16.gmra.mrb[0].mxu0 %v550
      %v749 = vpop.f32.mrb[0].mxu0
      %v750 = vadd.f32 0.0, %v749
      %v751 = vpop.f32.mrb[0].mxu0
      %v752 = vpop.f32.mrb[0].mxu0
      %v753 = vadd.f32 0.0, %v752
      %v754 = vpop.f32.mrb[0].mxu0
      %755 = vmatprep.mubr.bf16.mxu0 0
      %756 = vmatmul.mubr.bf16.gmra.mrb[0].mxu0 %v553
      %v757 = vpop.f32.mrb[0].mxu0
      %v758 = vadd.f32 0.0, %v757
      %v759 = vpop.f32.mrb[0].mxu0
      %v760 = vpop.f32.mrb[0].mxu0
      %v761 = vadd.f32 0.0, %v760
      %v762 = vpop.f32.mrb[0].mxu0
      %763 = vmatprep.mubr.bf16.mxu0 0
      %764 = vmatmul.mubr.bf16.gmra.mrb[0].mxu0 %v556
      %v765 = vpop.f32.mrb[0].mxu0
      %v766 = vadd.f32 0.0, %v765
      %v767 = vpop.f32.mrb[0].mxu0
      %v768 = vpop.f32.mrb[0].mxu0
      %v769 = vadd.f32 0.0, %v768
      %v770 = vpop.f32.mrb[0].mxu0
      %771 = vmatprep.mubr.bf16.mxu0 0
      %772 = vmatmul.mubr.bf16.gmra.mrb[0].mxu0 %v559
      %v773 = vpop.f32.mrb[0].mxu0
      %v774 = vadd.f32 0.0, %v773
      %v775 = vpop.f32.mrb[0].mxu0
      %v776 = vpop.f32.mrb[0].mxu0
      %v777 = vadd.f32 0.0, %v776
      %v778 = vpop.f32.mrb[0].mxu0
      %779 = vmatprep.mubr.bf16.mxu0 0
      %780 = vmatmul.mubr.bf16.gmra.mrb[0].mxu0 %v562
      %v781 = vpop.f32.mrb[0].mxu0
      %v782 = vadd.f32 0.0, %v781
      %v783 = vpop.f32.mrb[0].mxu0
      %v784 = vpop.f32.mrb[0].mxu0
      %v785 = vadd.f32 0.0, %v784
      %v786 = vpop.f32.mrb[0].mxu0
      %787 = vmatprep.mubr.bf16.mxu0 0
      %788 = vmatmul.mubr.bf16.gmra.mrb[0].mxu0 %v565
      %v789 = vpop.f32.mrb[0].mxu0
      %v790 = vadd.f32 0.0, %v789
      %v791 = vpop.f32.mrb[0].mxu0
      %v792 = vpop.f32.mrb[0].mxu0
      %v793 = vadd.f32 0.0, %v792
      %v794 = vpop.f32.mrb[0].mxu0
      %795 = vmatprep.mubr.bf16.mxu0 0
      %796 = vmatmul.mubr.bf16.gmra.mrb[0].mxu0 %v568
      %v797 = vpop.f32.mrb[0].mxu0
      %v798 = vadd.f32 0.0, %v797
      %v799 = vpop.f32.mrb[0].mxu0
      %v800 = vpop.f32.mrb[0].mxu0
      %v801 = vadd.f32 0.0, %v800
      %v802 = vpop.f32.mrb[0].mxu0
      %803 = vmatprep.mubr.bf16.mxu0 0
      %804 = vmatmul.mubr.bf16.gmra.mrb[0].mxu0 %v571
      %v805 = vpop.f32.mrb[0].mxu0
      %v806 = vadd.f32 0.0, %v805
      %v807 = vpop.f32.mrb[0].mxu0
      %v808 = vpop.f32.mrb[0].mxu0
      %v809 = vadd.f32 0.0, %v808
      %v810 = vpop.f32.mrb[0].mxu0
      %811 = vmatprep.mubr.bf16.mxu0 0
      %812 = vmatmul.mubr.bf16.gmra.mrb[0].mxu0 %v574
      %v813 = vpop.f32.mrb[0].mxu0
      %v814 = vadd.f32 0.0, %v813
      %v815 = vpop.f32.mrb[0].mxu0
      %v816 = vpop.f32.mrb[0].mxu0
      %v817 = vadd.f32 0.0, %v816
      %v818 = vpop.f32.mrb[0].mxu0
      %819 = vmatprep.mubr.bf16.mxu0 0
      %820 = vmatmul.mubr.bf16.gmra.mrb[0].mxu0 %v577
      %v821 = vpop.f32.mrb[0].mxu0
      %v822 = vadd.f32 0.0, %v821
      %v823 = vpop.f32.mrb[0].mxu0
      %v824 = vpop.f32.mrb[0].mxu0
      %v825 = vadd.f32 0.0, %v824
      %v826 = vpop.f32.mrb[0].mxu0
      %827 = vmatprep.mubr.bf16.mxu0 0
      %828 = vmatmul.mubr.bf16.gmra.mrb[0].mxu0 %v580
      %v829 = vpop.f32.mrb[0].mxu0
      %v830 = vadd.f32 0.0, %v829
      %v831 = vpop.f32.mrb[0].mxu0
      %v832 = vpop.f32.mrb[0].mxu0
      %v833 = vadd.f32 0.0, %v832
      %v834 = vpop.f32.mrb[0].mxu0
      %835 = vmatprep.mubr.bf16.mxu0 0
      %836 = vmatmul.mubr.bf16.gmra.mrb[0].mxu0 %v583
      %v837 = vpop.f32.mrb[0].mxu0
      %v838 = vadd.f32 0.0, %v837
      %v839 = vpop.f32.mrb[0].mxu0
      %v840 = vpop.f32.mrb[0].mxu0
      %v841 = vadd.f32 0.0, %v840
      %v842 = vpop.f32.mrb[0].mxu0
      %843 = vmatprep.mubr.bf16.mxu0 0
      %844 = vmatmul.mubr.bf16.gmra.mrb[0].mxu0 %v586
      %v845 = vpop.f32.mrb[0].mxu0
      %v846 = vadd.f32 0.0, %v845
      %v847 = vpop.f32.mrb[0].mxu0
      %v848 = vpop.f32.mrb[0].mxu0
      %v849 = vadd.f32 0.0, %v848
      %v850 = vpop.f32.mrb[0].mxu0
      %851 = vmatprep.mubr.bf16.mxu0 0
      %852 = vmatmul.mubr.bf16.gmra.mrb[0].mxu0 %v589
      %v853 = vpop.f32.mrb[0].mxu0
      %v854 = vadd.f32 0.0, %v853
      %v855 = vpop.f32.mrb[0].mxu0
      %v856 = vpop.f32.mrb[0].mxu0
      %v857 = vadd.f32 0.0, %v856
      %v858 = vpop.f32.mrb[0].mxu0
      %859 = vmatprep.mubr.bf16.mxu0 0
      %860 = vmatmul.mubr.bf16.gmra.mrb[0].mxu0 %v592
      %v861 = vpop.f32.mrb[0].mxu0
      %v862 = vadd.f32 0.0, %v861
      %v863 = vpop.f32.mrb[0].mxu0
      %v864 = vpop.f32.mrb[0].mxu0
      %v865 = vadd.f32 0.0, %v864
      %v866 = vpop.f32.mrb[0].mxu0
      %867 = vmatprep.mubr.bf16.mxu0 0
      %868 = vmatmul.mubr.bf16.gmra.mrb[0].mxu0 %v595
      %v869 = vpop.f32.mrb[0].mxu0
      %v870 = vadd.f32 0.0, %v869
      %v871 = vpop.f32.mrb[0].mxu0
      %v872 = vpop.f32.mrb[0].mxu0
      %v873 = vadd.f32 0.0, %v872
      %v874 = vpop.f32.mrb[0].mxu0
      %875 = vmatprep.mubr.bf16.mxu0 0
      %876 = vmatmul.mubr.bf16.gmra.mrb[0].mxu0 %v598
      %v877 = vpop.f32.mrb[0].mxu0
      %v878 = vadd.f32 0.0, %v877
      %v879 = vpop.f32.mrb[0].mxu0
      %v880 = vpop.f32.mrb[0].mxu0
      %v881 = vadd.f32 0.0, %v880
      %v882 = vpop.f32.mrb[0].mxu0
      %883 = vmatprep.mubr.bf16.mxu0 0
      %884 = vmatmul.mubr.bf16.gmra.mrb[0].mxu0 %v601
      %v885 = vpop.f32.mrb[0].mxu0
      %v886 = vadd.f32 0.0, %v885
      %v887 = vpop.f32.mrb[0].mxu0
      %v888 = vpop.f32.mrb[0].mxu0
      %v889 = vadd.f32 0.0, %v888
      %v890 = vpop.f32.mrb[0].mxu0
      %891 = vdwg.mxu0
      %892 = vst [vmem:[%s240] sm:$0xff] %v638
      %893 = vst [vmem:[%s240 + $0x8] sm:$0xff] %v641
      %894 = vst [vmem:[%s240 + $0x10] sm:$0xff] %v646
      %895 = vst [vmem:[%s240 + $0x18] sm:$0xff] %v649
      %896 = vst [vmem:[%s240 + $0x20] sm:$0xff] %v654
      %897 = vst [vmem:[%s240 + $0x28] sm:$0xff] %v657
      %898 = vst [vmem:[%s240 + $0x30] sm:$0xff] %v662
      %899 = vst [vmem:[%s240 + $0x38] sm:$0xff] %v665
      %900 = vst [vmem:[%s240 + $0x40] sm:$0xff] %v670
      %901 = vst [vmem:[%s240 + $0x48] sm:$0xff] %v673
      %902 = vst [vmem:[%s240 + $0x50] sm:$0xff] %v678
      %903 = vst [vmem:[%s240 + $0x58] sm:$0xff] %v681
      %904 = vst [vmem:[%s240 + $0x60] sm:$0xff] %v686
      %905 = vst [vmem:[%s240 + $0x68] sm:$0xff] %v689
      %906 = vst [vmem:[%s240 + $0x70] sm:$0xff] %v694
      %907 = vst [vmem:[%s240 + $0x78] sm:$0xff] %v697
      %908 = vst [vmem:[%s240 + $0x80] sm:$0xff] %v702
      %909 = vst [vmem:[%s240 + $0x88] sm:$0xff] %v705
      %910 = vst [vmem:[%s240 + $0x90] sm:$0xff] %v710
      %911 = vst [vmem:[%s240 + $0x98] sm:$0xff] %v713
      %912 = vst [vmem:[%s240 + $0xa0] sm:$0xff] %v718
      %913 = vst [vmem:[%s240 + $0xa8] sm:$0xff] %v721
      %914 = vst [vmem:[%s240 + $0xb0] sm:$0xff] %v726
      %915 = vst [vmem:[%s240 + $0xb8] sm:$0xff] %v729
      %916 = vst [vmem:[%s240 + $0xc0] sm:$0xff] %v734
      %917 = vst [vmem:[%s240 + $0xc8] sm:$0xff] %v737
      %918 = vst [vmem:[%s240 + $0xd0] sm:$0xff] %v742
      %919 = vst [vmem:[%s240 + $0xd8] sm:$0xff] %v745
      %920 = vst [vmem:[%s240 + $0xe0] sm:$0xff] %v750
      %921 = vst [vmem:[%s240 + $0xe8] sm:$0xff] %v753
      %922 = vst [vmem:[%s240 + $0xf0] sm:$0xff] %v758
      %923 = vst [vmem:[%s240 + $0xf8] sm:$0xff] %v761
      %924 = vst [vmem:[%s240 + $0x100] sm:$0xff] %v766
      %925 = vst [vmem:[%s240 + $0x108] sm:$0xff] %v769
      %926 = vst [vmem:[%s240 + $0x110] sm:$0xff] %v774
      %927 = vst [vmem:[%s240 + $0x118] sm:$0xff] %v777
      %928 = vst [vmem:[%s240 + $0x120] sm:$0xff] %v782
      %929 = vst [vmem:[%s240 + $0x128] sm:$0xff] %v785
      %930 = vst [vmem:[%s240 + $0x130] sm:$0xff] %v790
      %931 = vst [vmem:[%s240 + $0x138] sm:$0xff] %v793
      %932 = vst [vmem:[%s240 + $0x140] sm:$0xff] %v798
      %933 = vst [vmem:[%s240 + $0x148] sm:$0xff] %v801
      %934 = vst [vmem:[%s240 + $0x150] sm:$0xff] %v806
      %935 = vst [vmem:[%s240 + $0x158] sm:$0xff] %v809
      %936 = vst [vmem:[%s240 + $0x160] sm:$0xff] %v814
      %937 = vst [vmem:[%s240 + $0x168] sm:$0xff] %v817
      %938 = vst [vmem:[%s240 + $0x170] sm:$0xff] %v822
      %939 = vst [vmem:[%s240 + $0x178] sm:$0xff] %v825
      %940 = vst [vmem:[%s240 + $0x180] sm:$0xff] %v830
      %941 = vst [vmem:[%s240 + $0x188] sm:$0xff] %v833
      %942 = vst [vmem:[%s240 + $0x190] sm:$0xff] %v838
      %943 = vst [vmem:[%s240 + $0x198] sm:$0xff] %v841
      %944 = vst [vmem:[%s240 + $0x1a0] sm:$0xff] %v846
      %945 = vst [vmem:[%s240 + $0x1a8] sm:$0xff] %v849
      %946 = vst [vmem:[%s240 + $0x1b0] sm:$0xff] %v854
      %947 = vst [vmem:[%s240 + $0x1b8] sm:$0xff] %v857
      %948 = vst [vmem:[%s240 + $0x1c0] sm:$0xff] %v862
      %949 = vst [vmem:[%s240 + $0x1c8] sm:$0xff] %v865
      %950 = vst [vmem:[%s240 + $0x1d0] sm:$0xff] %v870
      %951 = vst [vmem:[%s240 + $0x1d8] sm:$0xff] %v873
      %952 = vst [vmem:[%s240 + $0x1e0] sm:$0xff] %v878
      %953 = vst [vmem:[%s240 + $0x1e8] sm:$0xff] %v881
      %954 = vst [vmem:[%s240 + $0x1f0] sm:$0xff] %v886
      %955 = vst [vmem:[%s240 + $0x1f8] sm:$0xff] %v889
      %v956 = vadd.f32 %v638, %v641
      %v957 = vadd.f32 %v956, %v646
      %v958 = vadd.f32 %v957, %v649
      %v959 = vadd.f32 %v958, %v654
      %v960 = vadd.f32 %v959, %v657
      %v961 = vadd.f32 %v960, %v662
      %v962 = vadd.f32 %v961, %v665
      %v963 = vadd.f32 %v962, %v670
      %v964 = vadd.f32 %v963, %v673
      %v965 = vadd.f32 %v964, %v678
      %v966 = vadd.f32 %v965, %v681
      %v967 = vadd.f32 %v966, %v686
      %v968 = vadd.f32 %v967, %v689
      %v969 = vadd.f32 %v968, %v694
      %v970 = vadd.f32 %v969, %v697
      %v971 = vadd.f32 %v970, %v702
      %v972 = vadd.f32 %v971, %v705
      %v973 = vadd.f32 %v972, %v710
      %v974 = vadd.f32 %v973, %v713
      %v975 = vadd.f32 %v974, %v718
      %v976 = vadd.f32 %v975, %v721
      %v977 = vadd.f32 %v976, %v726
      %v978 = vadd.f32 %v977, %v729
      %v979 = vadd.f32 %v978, %v734
      %v980 = vadd.f32 %v979, %v737
      %v981 = vadd.f32 %v980, %v742
      %v982 = vadd.f32 %v981, %v745
      %v983 = vadd.f32 %v982, %v750
      %v984 = vadd.f32 %v983, %v753
      %v985 = vadd.f32 %v984, %v758
      %v986 = vadd.f32 %v985, %v761
      %v987 = vadd.f32 %v986, %v766
      %v988 = vadd.f32 %v987, %v769
      %v989 = vadd.f32 %v988, %v774
      %v990 = vadd.f32 %v989, %v777
      %v991 = vadd.f32 %v990, %v782
      %v992 = vadd.f32 %v991, %v785
      %v993 = vadd.f32 %v992, %v790
      %v994 = vadd.f32 %v993, %v793
      %v995 = vadd.f32 %v994, %v798
      %v996 = vadd.f32 %v995, %v801
      %v997 = vadd.f32 %v996, %v806
      %v998 = vadd.f32 %v997, %v809
      %v999 = vadd.f32 %v998, %v814
      %v1000 = vadd.f32 %v999, %v817
      %v1001 = vadd.f32 %v1000, %v822
      %v1002 = vadd.f32 %v1001, %v825
      %v1003 = vadd.f32 %v1002, %v830
      %v1004 = vadd.f32 %v1003, %v833
      %v1005 = vadd.f32 %v1004, %v838
      %v1006 = vadd.f32 %v1005, %v841
      %v1007 = vadd.f32 %v1006, %v846
      %v1008 = vadd.f32 %v1007, %v849
      %v1009 = vadd.f32 %v1008, %v854
      %v1010 = vadd.f32 %v1009, %v857
      %v1011 = vadd.f32 %v1010, %v862
      %v1012 = vadd.f32 %v1011, %v865
      %v1013 = vadd.f32 %v1012, %v870
      %v1014 = vadd.f32 %v1013, %v873
      %v1015 = vadd.f32 %v1014, %v878
      %v1016 = vadd.f32 %v1015, %v881
      %v1017 = vadd.f32 %v1016, %v886
      %v1018 = vadd.f32 %v1017, %v889
      %v1019 = vrot.slane %v1018, 4
      %v1020 = vadd.f32 %v1018, %v1019
      %v1021 = vrot.slane %v1020, 2
      %v1022 = vadd.f32 %v1020, %v1021
      %v1023 = vrot.slane %v1022, 1
      %v1024 = vadd.f32 %v1022, %v1023
      %v1025 = vmul.f32 %v638, %v638
      %v1026 = vmul.f32 %v641, %v641
      %v1027 = vmul.f32 %v646, %v646
      %v1028 = vmul.f32 %v649, %v649
      %v1029 = vmul.f32 %v654, %v654
      %v1030 = vmul.f32 %v657, %v657
      %v1031 = vmul.f32 %v662, %v662
      %v1032 = vmul.f32 %v665, %v665
      %v1033 = vmul.f32 %v670, %v670
      %v1034 = vmul.f32 %v673, %v673
      %v1035 = vmul.f32 %v678, %v678
      %v1036 = vmul.f32 %v681, %v681
      %v1037 = vmul.f32 %v686, %v686
      %v1038 = vmul.f32 %v689, %v689
      %v1039 = vmul.f32 %v694, %v694
      %v1040 = vmul.f32 %v697, %v697
      %v1041 = vmul.f32 %v702, %v702
      %v1042 = vmul.f32 %v705, %v705
      %v1043 = vmul.f32 %v710, %v710
      %v1044 = vmul.f32 %v713, %v713
      %v1045 = vmul.f32 %v718, %v718
      %v1046 = vmul.f32 %v721, %v721
      %v1047 = vmul.f32 %v726, %v726
      %v1048 = vmul.f32 %v729, %v729
      %v1049 = vmul.f32 %v734, %v734
      %v1050 = vmul.f32 %v737, %v737
      %v1051 = vmul.f32 %v742, %v742
      %v1052 = vmul.f32 %v745, %v745
      %v1053 = vmul.f32 %v750, %v750
      %v1054 = vmul.f32 %v753, %v753
      %v1055 = vmul.f32 %v758, %v758
      %v1056 = vmul.f32 %v761, %v761
      %v1057 = vmul.f32 %v766, %v766
      %v1058 = vmul.f32 %v769, %v769
      %v1059 = vmul.f32 %v774, %v774
      %v1060 = vmul.f32 %v777, %v777
      %v1061 = vmul.f32 %v782, %v782
      %v1062 = vmul.f32 %v785, %v785
      %v1063 = vmul.f32 %v790, %v790
      %v1064 = vmul.f32 %v793, %v793
      %v1065 = vmul.f32 %v798, %v798
      %v1066 = vmul.f32 %v801, %v801
      %v1067 = vmul.f32 %v806, %v806
      %v1068 = vmul.f32 %v809, %v809
      %v1069 = vmul.f32 %v814, %v814
      %v1070 = vmul.f32 %v817, %v817
      %v1071 = vmul.f32 %v822, %v822
      %v1072 = vmul.f32 %v825, %v825
      %v1073 = vmul.f32 %v830, %v830
      %v1074 = vmul.f32 %v833, %v833
      %v1075 = vmul.f32 %v838, %v838
      %v1076 = vmul.f32 %v841, %v841
      %v1077 = vmul.f32 %v846, %v846
      %v1078 = vmul.f32 %v849, %v849
      %v1079 = vmul.f32 %v854, %v854
      %v1080 = vmul.f32 %v857, %v857
      %v1081 = vmul.f32 %v862, %v862
      %v1082 = vmul.f32 %v865, %v865
      %v1083 = vmul.f32 %v870, %v870
      %v1084 = vmul.f32 %v873, %v873
      %v1085 = vmul.f32 %v878, %v878
      %v1086 = vmul.f32 %v881, %v881
      %v1087 = vmul.f32 %v886, %v886
      %v1088 = vmul.f32 %v889, %v889
      %v1089 = vadd.f32 %v1025, %v1026
      %v1090 = vadd.f32 %v1089, %v1027
      %v1091 = vadd.f32 %v1090, %v1028
      %v1092 = vadd.f32 %v1091, %v1029
      %v1093 = vadd.f32 %v1092, %v1030
      %v1094 = vadd.f32 %v1093, %v1031
      %v1095 = vadd.f32 %v1094, %v1032
      %v1096 = vadd.f32 %v1095, %v1033
      %v1097 = vadd.f32 %v1096, %v1034
      %v1098 = vadd.f32 %v1097, %v1035
      %v1099 = vadd.f32 %v1098, %v1036
      %v1100 = vadd.f32 %v1099, %v1037
      %v1101 = vadd.f32 %v1100, %v1038
      %v1102 = vadd.f32 %v1101, %v1039
      %v1103 = vadd.f32 %v1102, %v1040
      %v1104 = vadd.f32 %v1103, %v1041
      %v1105 = vadd.f32 %v1104, %v1042
      %v1106 = vadd.f32 %v1105, %v1043
      %v1107 = vadd.f32 %v1106, %v1044
      %v1108 = vadd.f32 %v1107, %v1045
      %v1109 = vadd.f32 %v1108, %v1046
      %v1110 = vadd.f32 %v1109, %v1047
      %v1111 = vadd.f32 %v1110, %v1048
      %v1112 = vadd.f32 %v1111, %v1049
      %v1113 = vadd.f32 %v1112, %v1050
      %v1114 = vadd.f32 %v1113, %v1051
      %v1115 = vadd.f32 %v1114, %v1052
      %v1116 = vadd.f32 %v1115, %v1053
      %v1117 = vadd.f32 %v1116, %v1054
      %v1118 = vadd.f32 %v1117, %v1055
      %v1119 = vadd.f32 %v1118, %v1056
      %v1120 = vadd.f32 %v1119, %v1057
      %v1121 = vadd.f32 %v1120, %v1058
      %v1122 = vadd.f32 %v1121, %v1059
      %v1123 = vadd.f32 %v1122, %v1060
      %v1124 = vadd.f32 %v1123, %v1061
      %v1125 = vadd.f32 %v1124, %v1062
      %v1126 = vadd.f32 %v1125, %v1063
      %v1127 = vadd.f32 %v1126, %v1064
      %v1128 = vadd.f32 %v1127, %v1065
      %v1129 = vadd.f32 %v1128, %v1066
      %v1130 = vadd.f32 %v1129, %v1067
      %v1131 = vadd.f32 %v1130, %v1068
      %v1132 = vadd.f32 %v1131, %v1069
      %v1133 = vadd.f32 %v1132, %v1070
      %v1134 = vadd.f32 %v1133, %v1071
      %v1135 = vadd.f32 %v1134, %v1072
      %v1136 = vadd.f32 %v1135, %v1073
      %v1137 = vadd.f32 %v1136, %v1074
      %v1138 = vadd.f32 %v1137, %v1075
      %v1139 = vadd.f32 %v1138, %v1076
      %v1140 = vadd.f32 %v1139, %v1077
      %v1141 = vadd.f32 %v1140, %v1078
      %v1142 = vadd.f32 %v1141, %v1079
      %v1143 = vadd.f32 %v1142, %v1080
      %v1144 = vadd.f32 %v1143, %v1081
      %v1145 = vadd.f32 %v1144, %v1082
      %v1146 = vadd.f32 %v1145, %v1083
      %v1147 = vadd.f32 %v1146, %v1084
      %v1148 = vadd.f32 %v1147, %v1085
      %v1149 = vadd.f32 %v1148, %v1086
      %v1150 = vadd.f32 %v1149, %v1087
      %v1151 = vadd.f32 %v1150, %v1088
      %v1152 = vrot.slane %v1151, 4
      %v1153 = vadd.f32 %v1151, %v1152
      %v1154 = vrot.slane %v1153, 2
      %v1155 = vadd.f32 %v1153, %v1154
      %v1156 = vrot.slane %v1155, 1
      %v1157 = vadd.f32 %v1155, %v1156
      %vm1158 = vcmask 1040384
      %v1159 = vsel %vm1158, %v1024, %v1157
      %1160 = vst [vmem:[%s248] sm:$0x3] %v1159
      %s1161 = smul.u32 64, %s20
      %p1162 = scmp.lt.s32.totalorder %s19, 3
      %s1163 = scalar_select %p1162, %s19, 3
      %p1164 = scmp.lt.s32.totalorder %s1161, 63
      %s1165 = scalar_select %p1164, %s1161, 63
      %s1166 = smul.addr %s1163, 64
      %s1167 = sadd.s32 %s1165, %s1166
      %s1168 = smul.addr %s1167, 8
      %s1169 = scalar_lea.vmem %s2, %s1168
      %p1170 = scmp.lt.s32.totalorder %s19, 3
      %s1171 = scalar_select %p1170, %s19, 3
      %p1172 = scmp.lt.s32.totalorder %s20, 0
      %s1173 = scalar_select %p1172, %s20, 0
      %s1174 = sadd.s32 %s1173, %s1171
      %s1175 = smul.addr %s1174, 2
      %s1176 = scalar_lea.vmem %s3, %s1175
      // Predicated region
      $region29: #{_lambda_.15} parent=27 // pred_check
        %p1177 = pneg %p101
      $region30: #{_lambda_.15} parent=27 // pred_check_branch
        %1179 = sbr.rel (%p1177) target = $region32
      $region31: #{_lambda_.15} parent=27 // pred_region
        %s1180 = smul.u32 64, %s20
      $region32: #{_lambda_.15} parent=27 // pred_fallthru
        _
      // Predicated region
      $region33: #{_lambda_.15} parent=27 // pred_check
        %p1181 = pneg %p129
      $region34: #{_lambda_.15} parent=27 // pred_check_branch
        %1183 = sbr.rel (%p1181) target = $region36
      $region35: #{_lambda_.15} parent=27 // pred_region
        _
      $region36: #{_lambda_.15} parent=27 // pred_fallthru
        _
    $region28: #{_lambda_.15} parent=5 // pred_fallthru
      _
    %p1184 = scmp.le.s32.totalorder 2, %s10
    // Predicated region
    $region37: #{_lambda_.15} parent=5 // pred_check
      %p1185 = pneg %p1184
    $region38: #{_lambda_.15} parent=5 // pred_check_branch
      %1187 = sbr.rel (%p1185) target = $region40
    $region39: #{_lambda_.15} parent=5 // pred_region
      %s1188 = ssub.s32 %s10, 2
      // Predicated region
      $region41: #{_lambda_.15} parent=39 // pred_check
        %p1189 = pneg %p107
      $region42: #{_lambda_.15} parent=39 // pred_check_branch
        %1191 = sbr.rel (%p1189) target = $region44
      $region43: #{_lambda_.15} parent=39 // pred_region
        %s1192 = smul.u32 64, %s22
        %p1193 = scmp.lt.s32.totalorder %s21, 3
        %s1194 = scalar_select %p1193, %s21, 3
        %p1195 = scmp.lt.s32.totalorder %s1192, 63
        %s1196 = scalar_select %p1195, %s1192, 63
        %s1197 = smul.addr %s1194, 64
        %s1198 = sadd.s32 %s1196, %s1197
        %s1199 = smul.addr %s1198, 8
        %s1200 = scalar_lea.vmem %s2, %s1199
      $region44: #{_lambda_.15} parent=39 // pred_fallthru
        _
      // Predicated region
      $region45: #{_lambda_.15} parent=39 // pred_check
        %p1201 = pneg %p135
      $region46: #{_lambda_.15} parent=39 // pred_check_branch
        %1203 = sbr.rel (%p1201) target = $region48
      $region47: #{_lambda_.15} parent=39 // pred_region
        %p1204 = scmp.lt.s32.totalorder %s21, 3
        %s1205 = scalar_select %p1204, %s21, 3
        %p1206 = scmp.lt.s32.totalorder %s22, 0
        %s1207 = scalar_select %p1206, %s22, 0
        %s1208 = sadd.s32 %s1207, %s1205
        %s1209 = smul.addr %s1208, 2
        %s1210 = scalar_lea.vmem %s3, %s1209
      $region48: #{_lambda_.15} parent=39 // pred_fallthru
        _
    $region40: #{_lambda_.15} parent=5 // pred_fallthru
      _
  $region6: #{_lambda_.15} parent=0 // loop_footer
    %s14 = sadd.s32 1, %s10
  $region7: #{_lambda_.15} parent=0 // loop_footer_branch
    %9 = sbr.rel target = $region3
  $region8: #{_lambda_.15} parent=0 // loop_exit
    _

// kernel: _lambda_.16
$region0: #{_lambda_.16}
  #allocation0 [shape = 'u32[]', space=smem, size = 0x4, offset = 0x4, fixed_abs, tag = 'smem constant byte address 0x4 - core index']
  #allocation1 [shape = 'u32[144,128]{1,0:T(1,128)}', space=vmem, size = 0x12000, scoped, tag = 'internal scratch']
  %s0 = inlined_call_operand.vmem [shape: f32[4,512,128], index: 0, kind: input, shape index: {}]
  %s1 = inlined_call_operand.vmem [shape: f32[1,128], index: 1, kind: input, shape index: {}]
  %s2 = inlined_call_operand.vmem [shape: f32[1,128], index: 2, kind: input, shape index: {}]
  %s3 = inlined_call_operand.vmem [shape: f32[4,512,128], index: 3, kind: output, shape index: {}]
  %s4 = sld [smem:[#allocation0]]
  $region45: #{_lambda_.16} parent=0
    _
  %s6 = ssub.s32 1, %s4
  %s7 = scalar_select 0, %s6, %s4
  loop: start=0, step=1, limit=6
  $region2: #{_lambda_.16} parent=0 // loop_pre_header
    _
  $region3: #{_lambda_.16} parent=0 // loop_header
    %s9 = sphi 0, %s13
    %p10 = scmp.ge.s32.totalorder %s9, 6
    %s16 = sphi 0, %s28
    %s17 = sphi 0, %s24
    %s18 = sphi 0, %s16
    %s19 = sphi 0, %s17
    %s20 = sphi 0, %s18
    %s21 = sphi 0, %s19
    %s33 = sphi 0, %s35
    %s36 = sphi 0, %s33
    %s37 = sphi 0, %s36
    %s53 = sphi 0, %s37
    %s57 = sphi 0, %s57
    %s59 = sphi 0, %s57
    %s60 = sphi 0, %s59
    %s74 = sphi 0, %s60
    %s78 = sphi 0, %s78
    %s80 = sphi 0, %s78
    %s81 = sphi 0, %s80
    %s95 = sphi 0, %s81
    %s103 = sphi 0, %s105
    %s106 = sphi 0, %s103
    %s107 = sphi 0, %s106
    %s123 = sphi 0, %s107
  $region4: #{_lambda_.16} parent=0 // loop_header_branch
    %12 = sbr.rel (%p10) target = $region8
  $region5: #{_lambda_.16} parent=0 // loop_body
    %s14 = ssub.s32 %s9, 1
    %s15 = ssub.s32 %s9, 2
    %s22 = sadd.s32 1, %s17
    %p23 = scmp.ge.s32.totalorder %s22, 1
    %s24 = scalar_select %p23, 0, %s22
    %s25 = sadd.s32 1, %s16
    %s26 = scalar_select %p23, %s25, %s16
    %p27 = scmp.ge.s32.totalorder %s26, 4
    %s28 = scalar_select %p27, 0, %s26
    %s29 = ssub.s32 %s16, %s28
    %s30 = ssub.s32 %s17, %s24
    %s31 = sor.u32 %s29, %s30
    %p32 = scmp.eq.s32.totalorder %s31, 0
    %s34 = sadd.s32 %s33, 1
    %s35 = scalar_select %p32, %s33, %s34
    %p38 = pneg %p32
    %p39 = scmp.eq.s32.totalorder %s9, 3
    %p40 = por %p38, %p39
    %p41 = scmp.ne.s32.totalorder %s33, %s36
    %p42 = scmp.eq.s32.totalorder %s9, 0
    %p43 = por %p41, %p42
    %p44 = scmp.ne.s32.totalorder %s33, %s36
    %p45 = scmp.eq.s32.totalorder %s14, 3
    %p46 = por %p44, %p45
    %p47 = scmp.ne.s32.totalorder %s36, %s37
    %p48 = scmp.eq.s32.totalorder %s14, 0
    %p49 = por %p47, %p48
    %p50 = scmp.ne.s32.totalorder %s36, %s37
    %p51 = scmp.eq.s32.totalorder %s15, 3
    %p52 = por %p50, %p51
    %p54 = scmp.ne.s32.totalorder %s37, %s53
    %p55 = scmp.eq.s32.totalorder %s15, 0
    %p56 = por %p54, %p55
    %s58 = sadd.s32 %s57, 1
    %p61 = scmp.eq.s32.totalorder %s9, 3
    %p62 = scmp.ne.s32.totalorder %s57, %s59
    %p63 = scmp.eq.s32.totalorder %s9, 0
    %p64 = por %p62, %p63
    %p65 = scmp.ne.s32.totalorder %s57, %s59
    %p66 = scmp.eq.s32.totalorder %s14, 3
    %p67 = por %p65, %p66
    %p68 = scmp.ne.s32.totalorder %s59, %s60
    %p69 = scmp.eq.s32.totalorder %s14, 0
    %p70 = por %p68, %p69
    %p71 = scmp.ne.s32.totalorder %s59, %s60
    %p72 = scmp.eq.s32.totalorder %s15, 3
    %p73 = por %p71, %p72
    %p75 = scmp.ne.s32.totalorder %s60, %s74
    %p76 = scmp.eq.s32.totalorder %s15, 0
    %p77 = por %p75, %p76
    %s79 = sadd.s32 %s78, 1
    %p82 = scmp.eq.s32.totalorder %s9, 3
    %p83 = scmp.ne.s32.totalorder %s78, %s80
    %p84 = scmp.eq.s32.totalorder %s9, 0
    %p85 = por %p83, %p84
    %p86 = scmp.ne.s32.totalorder %s78, %s80
    %p87 = scmp.eq.s32.totalorder %s14, 3
    %p88 = por %p86, %p87
    %p89 = scmp.ne.s32.totalorder %s80, %s81
    %p90 = scmp.eq.s32.totalorder %s14, 0
    %p91 = por %p89, %p90
    %p92 = scmp.ne.s32.totalorder %s80, %s81
    %p93 = scmp.eq.s32.totalorder %s15, 3
    %p94 = por %p92, %p93
    %p96 = scmp.ne.s32.totalorder %s81, %s95
    %p97 = scmp.eq.s32.totalorder %s15, 0
    %p98 = por %p96, %p97
    %s99 = ssub.s32 %s16, %s28
    %s100 = ssub.s32 %s17, %s24
    %s101 = sor.u32 %s99, %s100
    %p102 = scmp.eq.s32.totalorder %s101, 0
    %s104 = sadd.s32 %s103, 1
    %s105 = scalar_select %p102, %s103, %s104
    %p108 = pneg %p102
    %p109 = scmp.eq.s32.totalorder %s9, 3
    %p110 = por %p108, %p109
    %p111 = scmp.ne.s32.totalorder %s103, %s106
    %p112 = scmp.eq.s32.totalorder %s9, 0
    %p113 = por %p111, %p112
    %p114 = scmp.ne.s32.totalorder %s103, %s106
    %p115 = scmp.eq.s32.totalorder %s14, 3
    %p116 = por %p114, %p115
    %p117 = scmp.ne.s32.totalorder %s106, %s107
    %p118 = scmp.eq.s32.totalorder %s14, 0
    %p119 = por %p117, %p118
    %p120 = scmp.ne.s32.totalorder %s106, %s107
    %p121 = scmp.eq.s32.totalorder %s15, 3
    %p122 = por %p120, %p121
    %p124 = scmp.ne.s32.totalorder %s107, %s123
    %p125 = scmp.eq.s32.totalorder %s15, 0
    %p126 = por %p124, %p125
    %p127 = scmp.le.s32.totalorder 1, %s9
    %p128 = scmp.lt.s32.totalorder %s9, 5
    %p129 = pnand %p127, %p128
    %p130 = pneg %p129
    // Predicated region
    $region9: #{_lambda_.16} parent=5 // pred_check
      _
    $region10: #{_lambda_.16} parent=5 // pred_check_branch
      %132 = sbr.rel (%p129) target = $region12
    $region11: #{_lambda_.16} parent=5 // pred_region
      %s133 = ssub.s32 %s9, 1
      // Predicated region
      $region13: #{_lambda_.16} parent=11 // pred_check
        %p134 = pneg %p70
      $region14: #{_lambda_.16} parent=11 // pred_check_branch
        %136 = sbr.rel (%p134) target = $region16
      $region15: #{_lambda_.16} parent=11 // pred_region
        _
      $region16: #{_lambda_.16} parent=11 // pred_fallthru
        _
      // Predicated region
      $region17: #{_lambda_.16} parent=11 // pred_check
        %p137 = pneg %p91
      $region18: #{_lambda_.16} parent=11 // pred_check_branch
        %139 = sbr.rel (%p137) target = $region20
      $region19: #{_lambda_.16} parent=11 // pred_region
        _
      $region20: #{_lambda_.16} parent=11 // pred_fallthru
        _
    $region12: #{_lambda_.16} parent=5 // pred_fallthru
      _
    %p140 = scmp.lt.s32.totalorder %s9, 4
    // Predicated region
    $region21: #{_lambda_.16} parent=5 // pred_check
      %p141 = pneg %p140
    $region22: #{_lambda_.16} parent=5 // pred_check_branch
      %143 = sbr.rel (%p141) target = $region24
    $region23: #{_lambda_.16} parent=5 // pred_region
      // Predicated region
      $region25: #{_lambda_.16} parent=23 // pred_check
        %p144 = pneg %p43
      $region26: #{_lambda_.16} parent=23 // pred_check_branch
        %146 = sbr.rel (%p144) target = $region28
      $region27: #{_lambda_.16} parent=23 // pred_region
        %s147 = smul.u32 64, %s17
        %p148 = scmp.lt.s32.totalorder %s16, 3
        %s149 = scalar_select %p148, %s16, 3
        %p150 = scmp.lt.s32.totalorder %s147, 63
        %s151 = scalar_select %p150, %s147, 63
        %s152 = smul.addr %s149, 64
        %s153 = sadd.s32 %s151, %s152
        %s154 = smul.addr %s153, 8
        %s155 = scalar_lea.vmem %s0, %s154
        %s156 = smul.u32 64, %s17
      $region28: #{_lambda_.16} parent=23 // pred_fallthru
        _
    $region24: #{_lambda_.16} parent=5 // pred_fallthru
      _
    %p157 = scmp.le.s32.totalorder 1, %s9
    %p158 = scmp.lt.s32.totalorder %s9, 5
    %p159 = pnand %p157, %p158
    %p160 = pneg %p159
    // Predicated region
    $region29: #{_lambda_.16} parent=5 // pred_check
      _
    $region30: #{_lambda_.16} parent=5 // pred_check_branch
      %162 = sbr.rel (%p159) target = $region32
    $region31: #{_lambda_.16} parent=5 // pred_region
      %s163 = ssub.s32 %s9, 1
      %s164 = smul.u32 64, %s19
      %p165 = scmp.lt.s32.totalorder %s18, 3
      %s166 = scalar_select %p165, %s18, 3
      %p167 = scmp.lt.s32.totalorder %s164, 63
      %s168 = scalar_select %p167, %s164, 63
      %s169 = smul.addr %s166, 64
      %s170 = sadd.s32 %s168, %s169
      %s171 = smul.addr %s170, 8
      %s172 = scalar_lea.vmem %s0, %s171
      %p173 = pneg %p49
      %p174 = pneg %p46
      %p175 = pneg %p70
      %p176 = pneg %p67
      %p177 = pneg %p91
      %p178 = pneg %p88
      %p179 = pneg %p119
      %p180 = pneg %p116
      %s181 = smul.u32 64, %s19
      %p182 = scmp.lt.s32.totalorder %s18, 3
      %s183 = scalar_select %p182, %s18, 3
      %p184 = scmp.lt.s32.totalorder %s181, 63
      %s185 = scalar_select %p184, %s181, 63
      %s186 = smul.addr %s183, 64
      %s187 = sadd.s32 %s185, %s186
      %s188 = smul.addr %s187, 8
      %s189 = scalar_lea.vmem %s3, %s188
      %s190 = smul.u32 64, %s19
      %p191 = scmp.lt.s32.totalorder %s18, 3
      %s192 = scalar_select %p191, %s18, 3
      %p193 = scmp.lt.s32.totalorder %s190, 63
      %s194 = scalar_select %p193, %s190, 63
      %s195 = smul.addr %s192, 64
      %s196 = sadd.s32 %s194, %s195
      %s197 = smul.addr %s196, 8
      %s198 = scalar_lea.vmem %s0, %s197
      %s199 = smul.u32 64, %s19
      %s200 = smul.u32 64, %s19
      %p201 = scmp.lt.s32.totalorder %s18, 3
      %s202 = scalar_select %p201, %s18, 3
      %p203 = scmp.lt.s32.totalorder %s200, 63
      %s204 = scalar_select %p203, %s200, 63
      %s205 = smul.addr %s202, 64
      %s206 = sadd.s32 %s204, %s205
      %s207 = smul.addr %s206, 8
      %s208 = scalar_lea.vmem %s3, %s207
      %s209 = smul.u32 64, %s19
      %v210 = vld [vmem:[%s198] sm:$0xff]
      %v211 = vld [vmem:[%s198 + $0x8] sm:$0xff]
      %v212 = vld [vmem:[%s198 + $0x10] sm:$0xff]
      %v213 = vld [vmem:[%s198 + $0x18] sm:$0xff]
      %v214 = vld [vmem:[%s198 + $0x20] sm:$0xff]
      %v215 = vld [vmem:[%s198 + $0x28] sm:$0xff]
      %v216 = vld [vmem:[%s198 + $0x30] sm:$0xff]
      %v217 = vld [vmem:[%s198 + $0x38] sm:$0xff]
      %v218 = vld [vmem:[%s198 + $0x40] sm:$0xff]
      %v219 = vld [vmem:[%s198 + $0x48] sm:$0xff]
      %v220 = vld [vmem:[%s198 + $0x50] sm:$0xff]
      %v221 = vld [vmem:[%s198 + $0x58] sm:$0xff]
      %v222 = vld [vmem:[%s198 + $0x60] sm:$0xff]
      %v223 = vld [vmem:[%s198 + $0x68] sm:$0xff]
      %v224 = vld [vmem:[%s198 + $0x70] sm:$0xff]
      %v225 = vld [vmem:[%s198 + $0x78] sm:$0xff]
      %v226 = vld [vmem:[%s198 + $0x80] sm:$0xff]
      %v227 = vld [vmem:[%s198 + $0x88] sm:$0xff]
      %v228 = vld [vmem:[%s198 + $0x90] sm:$0xff]
      %v229 = vld [vmem:[%s198 + $0x98] sm:$0xff]
      %v230 = vld [vmem:[%s198 + $0xa0] sm:$0xff]
      %v231 = vld [vmem:[%s198 + $0xa8] sm:$0xff]
      %v232 = vld [vmem:[%s198 + $0xb0] sm:$0xff]
      %v233 = vld [vmem:[%s198 + $0xb8] sm:$0xff]
      %v234 = vld [vmem:[%s198 + $0xc0] sm:$0xff]
      %v235 = vld [vmem:[%s198 + $0xc8] sm:$0xff]
      %v236 = vld [vmem:[%s198 + $0xd0] sm:$0xff]
      %v237 = vld [vmem:[%s198 + $0xd8] sm:$0xff]
      %v238 = vld [vmem:[%s198 + $0xe0] sm:$0xff]
      %v239 = vld [vmem:[%s198 + $0xe8] sm:$0xff]
      %v240 = vld [vmem:[%s198 + $0xf0] sm:$0xff]
      %v241 = vld [vmem:[%s198 + $0xf8] sm:$0xff]
      %v242 = vld [vmem:[%s198 + $0x100] sm:$0xff]
      %v243 = vld [vmem:[%s198 + $0x108] sm:$0xff]
      %v244 = vld [vmem:[%s198 + $0x110] sm:$0xff]
      %v245 = vld [vmem:[%s198 + $0x118] sm:$0xff]
      %v246 = vld [vmem:[%s198 + $0x120] sm:$0xff]
      %v247 = vld [vmem:[%s198 + $0x128] sm:$0xff]
      %v248 = vld [vmem:[%s198 + $0x130] sm:$0xff]
      %v249 = vld [vmem:[%s198 + $0x138] sm:$0xff]
      %v250 = vld [vmem:[%s198 + $0x140] sm:$0xff]
      %v251 = vld [vmem:[%s198 + $0x148] sm:$0xff]
      %v252 = vld [vmem:[%s198 + $0x150] sm:$0xff]
      %v253 = vld [vmem:[%s198 + $0x158] sm:$0xff]
      %v254 = vld [vmem:[%s198 + $0x160] sm:$0xff]
      %v255 = vld [vmem:[%s198 + $0x168] sm:$0xff]
      %v256 = vld [vmem:[%s198 + $0x170] sm:$0xff]
      %v257 = vld [vmem:[%s198 + $0x178] sm:$0xff]
      %v258 = vld [vmem:[%s198 + $0x180] sm:$0xff]
      %v259 = vld [vmem:[%s198 + $0x188] sm:$0xff]
      %v260 = vld [vmem:[%s198 + $0x190] sm:$0xff]
      %v261 = vld [vmem:[%s198 + $0x198] sm:$0xff]
      %v262 = vld [vmem:[%s198 + $0x1a0] sm:$0xff]
      %v263 = vld [vmem:[%s198 + $0x1a8] sm:$0xff]
      %v264 = vld [vmem:[%s198 + $0x1b0] sm:$0xff]
      %v265 = vld [vmem:[%s198 + $0x1b8] sm:$0xff]
      %v266 = vld [vmem:[%s198 + $0x1c0] sm:$0xff]
      %v267 = vld [vmem:[%s198 + $0x1c8] sm:$0xff]
      %v268 = vld [vmem:[%s198 + $0x1d0] sm:$0xff]
      %v269 = vld [vmem:[%s198 + $0x1d8] sm:$0xff]
      %v270 = vld [vmem:[%s198 + $0x1e0] sm:$0xff]
      %v271 = vld [vmem:[%s198 + $0x1e8] sm:$0xff]
      %v272 = vld [vmem:[%s198 + $0x1f0] sm:$0xff]
      %v273 = vld [vmem:[%s198 + $0x1f8] sm:$0xff]
      %v274 = vld [vmem:[%s1] sm:$0x1]
      %v276 = vlaneseq
      %v277 = vshrl.u32 %v276, 7
      %v278 = vsub.s32 0, %v277
      %v279 = vrot.slane %v274, %v278
      %v281 = vmul.f32 %v210, %v279
      %v282 = vmul.f32 %v211, %v279
      %v283 = vmul.f32 %v212, %v279
      %v284 = vmul.f32 %v213, %v279
      %v285 = vmul.f32 %v214, %v279
      %v286 = vmul.f32 %v215, %v279
      %v287 = vmul.f32 %v216, %v279
      %v288 = vmul.f32 %v217, %v279
      %v289 = vmul.f32 %v218, %v279
      %v290 = vmul.f32 %v219, %v279
      %v291 = vmul.f32 %v220, %v279
      %v292 = vmul.f32 %v221, %v279
      %v293 = vmul.f32 %v222, %v279
      %v294 = vmul.f32 %v223, %v279
      %v295 = vmul.f32 %v224, %v279
      %v296 = vmul.f32 %v225, %v279
      %v297 = vmul.f32 %v226, %v279
      %v298 = vmul.f32 %v227, %v279
      %v299 = vmul.f32 %v228, %v279
      %v300 = vmul.f32 %v229, %v279
      %v301 = vmul.f32 %v230, %v279
      %v302 = vmul.f32 %v231, %v279
      %v303 = vmul.f32 %v232, %v279
      %v304 = vmul.f32 %v233, %v279
      %v305 = vmul.f32 %v234, %v279
      %v306 = vmul.f32 %v235, %v279
      %v307 = vmul.f32 %v236, %v279
      %v308 = vmul.f32 %v237, %v279
      %v309 = vmul.f32 %v238, %v279
      %v310 = vmul.f32 %v239, %v279
      %v311 = vmul.f32 %v240, %v279
      %v312 = vmul.f32 %v241, %v279
      %v313 = vmul.f32 %v242, %v279
      %v314 = vmul.f32 %v243, %v279
      %v315 = vmul.f32 %v244, %v279
      %v316 = vmul.f32 %v245, %v279
      %v317 = vmul.f32 %v246, %v279
      %v318 = vmul.f32 %v247, %v279
      %v319 = vmul.f32 %v248, %v279
      %v320 = vmul.f32 %v249, %v279
      %v321 = vmul.f32 %v250, %v279
      %v322 = vmul.f32 %v251, %v279
      %v323 = vmul.f32 %v252, %v279
      %v324 = vmul.f32 %v253, %v279
      %v325 = vmul.f32 %v254, %v279
      %v326 = vmul.f32 %v255, %v279
      %v327 = vmul.f32 %v256, %v279
      %v328 = vmul.f32 %v257, %v279
      %v329 = vmul.f32 %v258, %v279
      %v330 = vmul.f32 %v259, %v279
      %v331 = vmul.f32 %v260, %v279
      %v332 = vmul.f32 %v261, %v279
      %v333 = vmul.f32 %v262, %v279
      %v334 = vmul.f32 %v263, %v279
      %v335 = vmul.f32 %v264, %v279
      %v336 = vmul.f32 %v265, %v279
      %v337 = vmul.f32 %v266, %v279
      %v338 = vmul.f32 %v267, %v279
      %v339 = vmul.f32 %v268, %v279
      %v340 = vmul.f32 %v269, %v279
      %v341 = vmul.f32 %v270, %v279
      %v342 = vmul.f32 %v271, %v279
      %v343 = vmul.f32 %v272, %v279
      %v344 = vmul.f32 %v273, %v279
      %v345 = vld [vmem:[%s2] sm:$0x1]
      %v347 = vlaneseq
      %v348 = vshrl.u32 %v347, 7
      %v349 = vsub.s32 0, %v348
      %v350 = vrot.slane %v345, %v349
      %v352 = vadd.f32 %v281, %v350
      %v353 = vadd.f32 %v282, %v350
      %v354 = vadd.f32 %v283, %v350
      %v355 = vadd.f32 %v284, %v350
      %v356 = vadd.f32 %v285, %v350
      %v357 = vadd.f32 %v286, %v350
      %v358 = vadd.f32 %v287, %v350
      %v359 = vadd.f32 %v288, %v350
      %v360 = vadd.f32 %v289, %v350
      %v361 = vadd.f32 %v290, %v350
      %v362 = vadd.f32 %v291, %v350
      %v363 = vadd.f32 %v292, %v350
      %v364 = vadd.f32 %v293, %v350
      %v365 = vadd.f32 %v294, %v350
      %v366 = vadd.f32 %v295, %v350
      %v367 = vadd.f32 %v296, %v350
      %v368 = vadd.f32 %v297, %v350
      %v369 = vadd.f32 %v298, %v350
      %v370 = vadd.f32 %v299, %v350
      %v371 = vadd.f32 %v300, %v350
      %v372 = vadd.f32 %v301, %v350
      %v373 = vadd.f32 %v302, %v350
      %v374 = vadd.f32 %v303, %v350
      %v375 = vadd.f32 %v304, %v350
      %v376 = vadd.f32 %v305, %v350
      %v377 = vadd.f32 %v306, %v350
      %v378 = vadd.f32 %v307, %v350
      %v379 = vadd.f32 %v308, %v350
      %v380 = vadd.f32 %v309, %v350
      %v381 = vadd.f32 %v310, %v350
      %v382 = vadd.f32 %v311, %v350
      %v383 = vadd.f32 %v312, %v350
      %v384 = vadd.f32 %v313, %v350
      %v385 = vadd.f32 %v314, %v350
      %v386 = vadd.f32 %v315, %v350
      %v387 = vadd.f32 %v316, %v350
      %v388 = vadd.f32 %v317, %v350
      %v389 = vadd.f32 %v318, %v350
      %v390 = vadd.f32 %v319, %v350
      %v391 = vadd.f32 %v320, %v350
      %v392 = vadd.f32 %v321, %v350
      %v393 = vadd.f32 %v322, %v350
      %v394 = vadd.f32 %v323, %v350
      %v395 = vadd.f32 %v324, %v350
      %v396 = vadd.f32 %v325, %v350
      %v397 = vadd.f32 %v326, %v350
      %v398 = vadd.f32 %v327, %v350
      %v399 = vadd.f32 %v328, %v350
      %v400 = vadd.f32 %v329, %v350
      %v401 = vadd.f32 %v330, %v350
      %v402 = vadd.f32 %v331, %v350
      %v403 = vadd.f32 %v332, %v350
      %v404 = vadd.f32 %v333, %v350
      %v405 = vadd.f32 %v334, %v350
      %v406 = vadd.f32 %v335, %v350
      %v407 = vadd.f32 %v336, %v350
      %v408 = vadd.f32 %v337, %v350
      %v409 = vadd.f32 %v338, %v350
      %v410 = vadd.f32 %v339, %v350
      %v411 = vadd.f32 %v340, %v350
      %v412 = vadd.f32 %v341, %v350
      %v413 = vadd.f32 %v342, %v350
      %v414 = vadd.f32 %v343, %v350
      %v415 = vadd.f32 %v344, %v350
      %v416 = vmax.f32 %v352, 0.0
      %v417 = vmax.f32 %v353, 0.0
      %v418 = vmax.f32 %v354, 0.0
      %v419 = vmax.f32 %v355, 0.0
      %v420 = vmax.f32 %v356, 0.0
      %v421 = vmax.f32 %v357, 0.0
      %v422 = vmax.f32 %v358, 0.0
      %v423 = vmax.f32 %v359, 0.0
      %v424 = vmax.f32 %v360, 0.0
      %v425 = vmax.f32 %v361, 0.0
      %v426 = vmax.f32 %v362, 0.0
      %v427 = vmax.f32 %v363, 0.0
      %v428 = vmax.f32 %v364, 0.0
      %v429 = vmax.f32 %v365, 0.0
      %v430 = vmax.f32 %v366, 0.0
      %v431 = vmax.f32 %v367, 0.0
      %v432 = vmax.f32 %v368, 0.0
      %v433 = vmax.f32 %v369, 0.0
      %v434 = vmax.f32 %v370, 0.0
      %v435 = vmax.f32 %v371, 0.0
      %v436 = vmax.f32 %v372, 0.0
      %v437 = vmax.f32 %v373, 0.0
      %v438 = vmax.f32 %v374, 0.0
      %v439 = vmax.f32 %v375, 0.0
      %v440 = vmax.f32 %v376, 0.0
      %v441 = vmax.f32 %v377, 0.0
      %v442 = vmax.f32 %v378, 0.0
      %v443 = vmax.f32 %v379, 0.0
      %v444 = vmax.f32 %v380, 0.0
      %v445 = vmax.f32 %v381, 0.0
      %v446 = vmax.f32 %v382, 0.0
      %v447 = vmax.f32 %v383, 0.0
      %v448 = vmax.f32 %v384, 0.0
      %v449 = vmax.f32 %v385, 0.0
      %v450 = vmax.f32 %v386, 0.0
      %v451 = vmax.f32 %v387, 0.0
      %v452 = vmax.f32 %v388, 0.0
      %v453 = vmax.f32 %v389, 0.0
      %v454 = vmax.f32 %v390, 0.0
      %v455 = vmax.f32 %v391, 0.0
      %v456 = vmax.f32 %v392, 0.0
      %v457 = vmax.f32 %v393, 0.0
      %v458 = vmax.f32 %v394, 0.0
      %v459 = vmax.f32 %v395, 0.0
      %v460 = vmax.f32 %v396, 0.0
      %v461 = vmax.f32 %v397, 0.0
      %v462 = vmax.f32 %v398, 0.0
      %v463 = vmax.f32 %v399, 0.0
      %v464 = vmax.f32 %v400, 0.0
      %v465 = vmax.f32 %v401, 0.0
      %v466 = vmax.f32 %v402, 0.0
      %v467 = vmax.f32 %v403, 0.0
      %v468 = vmax.f32 %v404, 0.0
      %v469 = vmax.f32 %v405, 0.0
      %v470 = vmax.f32 %v406, 0.0
      %v471 = vmax.f32 %v407, 0.0
      %v472 = vmax.f32 %v408, 0.0
      %v473 = vmax.f32 %v409, 0.0
      %v474 = vmax.f32 %v410, 0.0
      %v475 = vmax.f32 %v411, 0.0
      %v476 = vmax.f32 %v412, 0.0
      %v477 = vmax.f32 %v413, 0.0
      %v478 = vmax.f32 %v414, 0.0
      %v479 = vmax.f32 %v415, 0.0
      %480 = vst [vmem:[%s208] sm:$0xff] %v416
      %481 = vst [vmem:[%s208 + $0x8] sm:$0xff] %v417
      %482 = vst [vmem:[%s208 + $0x10] sm:$0xff] %v418
      %483 = vst [vmem:[%s208 + $0x18] sm:$0xff] %v419
      %484 = vst [vmem:[%s208 + $0x20] sm:$0xff] %v420
      %485 = vst [vmem:[%s208 + $0x28] sm:$0xff] %v421
      %486 = vst [vmem:[%s208 + $0x30] sm:$0xff] %v422
      %487 = vst [vmem:[%s208 + $0x38] sm:$0xff] %v423
      %488 = vst [vmem:[%s208 + $0x40] sm:$0xff] %v424
      %489 = vst [vmem:[%s208 + $0x48] sm:$0xff] %v425
      %490 = vst [vmem:[%s208 + $0x50] sm:$0xff] %v426
      %491 = vst [vmem:[%s208 + $0x58] sm:$0xff] %v427
      %492 = vst [vmem:[%s208 + $0x60] sm:$0xff] %v428
      %493 = vst [vmem:[%s208 + $0x68] sm:$0xff] %v429
      %494 = vst [vmem:[%s208 + $0x70] sm:$0xff] %v430
      %495 = vst [vmem:[%s208 + $0x78] sm:$0xff] %v431
      %496 = vst [vmem:[%s208 + $0x80] sm:$0xff] %v432
      %497 = vst [vmem:[%s208 + $0x88] sm:$0xff] %v433
      %498 = vst [vmem:[%s208 + $0x90] sm:$0xff] %v434
      %499 = vst [vmem:[%s208 + $0x98] sm:$0xff] %v435
      %500 = vst [vmem:[%s208 + $0xa0] sm:$0xff] %v436
      %501 = vst [vmem:[%s208 + $0xa8] sm:$0xff] %v437
      %502 = vst [vmem:[%s208 + $0xb0] sm:$0xff] %v438
      %503 = vst [vmem:[%s208 + $0xb8] sm:$0xff] %v439
      %504 = vst [vmem:[%s208 + $0xc0] sm:$0xff] %v440
      %505 = vst [vmem:[%s208 + $0xc8] sm:$0xff] %v441
      %506 = vst [vmem:[%s208 + $0xd0] sm:$0xff] %v442
      %507 = vst [vmem:[%s208 + $0xd8] sm:$0xff] %v443
      %508 = vst [vmem:[%s208 + $0xe0] sm:$0xff] %v444
      %509 = vst [vmem:[%s208 + $0xe8] sm:$0xff] %v445
      %510 = vst [vmem:[%s208 + $0xf0] sm:$0xff] %v446
      %511 = vst [vmem:[%s208 + $0xf8] sm:$0xff] %v447
      %512 = vst [vmem:[%s208 + $0x100] sm:$0xff] %v448
      %513 = vst [vmem:[%s208 + $0x108] sm:$0xff] %v449
      %514 = vst [vmem:[%s208 + $0x110] sm:$0xff] %v450
      %515 = vst [vmem:[%s208 + $0x118] sm:$0xff] %v451
      %516 = vst [vmem:[%s208 + $0x120] sm:$0xff] %v452
      %517 = vst [vmem:[%s208 + $0x128] sm:$0xff] %v453
      %518 = vst [vmem:[%s208 + $0x130] sm:$0xff] %v454
      %519 = vst [vmem:[%s208 + $0x138] sm:$0xff] %v455
      %520 = vst [vmem:[%s208 + $0x140] sm:$0xff] %v456
      %521 = vst [vmem:[%s208 + $0x148] sm:$0xff] %v457
      %522 = vst [vmem:[%s208 + $0x150] sm:$0xff] %v458
      %523 = vst [vmem:[%s208 + $0x158] sm:$0xff] %v459
      %524 = vst [vmem:[%s208 + $0x160] sm:$0xff] %v460
      %525 = vst [vmem:[%s208 + $0x168] sm:$0xff] %v461
      %526 = vst [vmem:[%s208 + $0x170] sm:$0xff] %v462
      %527 = vst [vmem:[%s208 + $0x178] sm:$0xff] %v463
      %528 = vst [vmem:[%s208 + $0x180] sm:$0xff] %v464
      %529 = vst [vmem:[%s208 + $0x188] sm:$0xff] %v465
      %530 = vst [vmem:[%s208 + $0x190] sm:$0xff] %v466
      %531 = vst [vmem:[%s208 + $0x198] sm:$0xff] %v467
      %532 = vst [vmem:[%s208 + $0x1a0] sm:$0xff] %v468
      %533 = vst [vmem:[%s208 + $0x1a8] sm:$0xff] %v469
      %534 = vst [vmem:[%s208 + $0x1b0] sm:$0xff] %v470
      %535 = vst [vmem:[%s208 + $0x1b8] sm:$0xff] %v471
      %536 = vst [vmem:[%s208 + $0x1c0] sm:$0xff] %v472
      %537 = vst [vmem:[%s208 + $0x1c8] sm:$0xff] %v473
      %538 = vst [vmem:[%s208 + $0x1d0] sm:$0xff] %v474
      %539 = vst [vmem:[%s208 + $0x1d8] sm:$0xff] %v475
      %540 = vst [vmem:[%s208 + $0x1e0] sm:$0xff] %v476
      %541 = vst [vmem:[%s208 + $0x1e8] sm:$0xff] %v477
      %542 = vst [vmem:[%s208 + $0x1f0] sm:$0xff] %v478
      %543 = vst [vmem:[%s208 + $0x1f8] sm:$0xff] %v479
      %s544 = smul.u32 64, %s19
      %p545 = scmp.lt.s32.totalorder %s18, 3
      %s546 = scalar_select %p545, %s18, 3
      %p547 = scmp.lt.s32.totalorder %s544, 63
      %s548 = scalar_select %p547, %s544, 63
      %s549 = smul.addr %s546, 64
      %s550 = sadd.s32 %s548, %s549
      %s551 = smul.addr %s550, 8
      %s552 = scalar_lea.vmem %s3, %s551
      // Predicated region
      $region33: #{_lambda_.16} parent=31 // pred_check
        %p553 = pneg %p116
      $region34: #{_lambda_.16} parent=31 // pred_check_branch
        %555 = sbr.rel (%p553) target = $region36
      $region35: #{_lambda_.16} parent=31 // pred_region
        %s556 = smul.u32 64, %s19
      $region36: #{_lambda_.16} parent=31 // pred_fallthru
        _
    $region32: #{_lambda_.16} parent=5 // pred_fallthru
      _
    %p557 = scmp.le.s32.totalorder 2, %s9
    // Predicated region
    $region37: #{_lambda_.16} parent=5 // pred_check
      %p558 = pneg %p557
    $region38: #{_lambda_.16} parent=5 // pred_check_branch
      %560 = sbr.rel (%p558) target = $region40
    $region39: #{_lambda_.16} parent=5 // pred_region
      %s561 = ssub.s32 %s9, 2
      // Predicated region
      $region41: #{_lambda_.16} parent=39 // pred_check
        %p562 = pneg %p122
      $region42: #{_lambda_.16} parent=39 // pred_check_branch
        %564 = sbr.rel (%p562) target = $region44
      $region43: #{_lambda_.16} parent=39 // pred_region
        %s565 = smul.u32 64, %s21
        %p566 = scmp.lt.s32.totalorder %s20, 3
        %s567 = scalar_select %p566, %s20, 3
        %p568 = scmp.lt.s32.totalorder %s565, 63
        %s569 = scalar_select %p568, %s565, 63
        %s570 = smul.addr %s567, 64
        %s571 = sadd.s32 %s569, %s570
        %s572 = smul.addr %s571, 8
        %s573 = scalar_lea.vmem %s3, %s572
      $region44: #{_lambda_.16} parent=39 // pred_fallthru
        _
    $region40: #{_lambda_.16} parent=5 // pred_fallthru
      _
  $region6: #{_lambda_.16} parent=0 // loop_footer
    %s13 = sadd.s32 1, %s9
  $region7: #{_lambda_.16} parent=0 // loop_footer_branch
    %8 = sbr.rel target = $region3
  $region8: #{_lambda_.16} parent=0 // loop_exit
    _

// kernel: _lambda_.17
$region0: #{_lambda_.17}
  #allocation0 [shape = 'u32[]', space=smem, size = 0x4, offset = 0x4, fixed_abs, tag = 'smem constant byte address 0x4 - core index']
  #allocation1 [shape = 'u32[144,128]{1,0:T(1,128)}', space=vmem, size = 0x12000, scoped, tag = 'internal scratch']
  %s0 = inlined_call_operand.vmem [shape: bf16[4,2048,32], index: 0, kind: input, shape index: {}]
  %s1 = inlined_call_operand.vmem [shape: bf16[4,32,128], index: 1, kind: input, shape index: {}]
  %s2 = inlined_call_operand.vmem [shape: f32[1,128], index: 2, kind: input, shape index: {}]
  %s3 = inlined_call_operand.vmem [shape: f32[4,2048,128], index: 3, kind: output, shape index: {}]
  %s4 = sld [smem:[#allocation0]]
  $region45: #{_lambda_.17} parent=0
    _
  %s6 = ssub.s32 1, %s4
  %s7 = scalar_select 0, %s6, %s4
  loop: start=0, step=1, limit=10
  $region2: #{_lambda_.17} parent=0 // loop_pre_header
    _
  $region3: #{_lambda_.17} parent=0 // loop_header
    %s9 = sphi 0, %s13
    %p10 = scmp.ge.s32.totalorder %s9, 10
    %s16 = sphi 0, %s28
    %s17 = sphi 0, %s24
    %s18 = sphi 0, %s16
    %s19 = sphi 0, %s17
    %s20 = sphi 0, %s18
    %s21 = sphi 0, %s19
    %s33 = sphi 0, %s35
    %s36 = sphi 0, %s33
    %s37 = sphi 0, %s36
    %s53 = sphi 0, %s37
    %s59 = sphi 0, %s61
    %s62 = sphi 0, %s59
    %s63 = sphi 0, %s62
    %s79 = sphi 0, %s63
    %s83 = sphi 0, %s83
    %s85 = sphi 0, %s83
    %s86 = sphi 0, %s85
    %s100 = sphi 0, %s86
    %s108 = sphi 0, %s110
    %s111 = sphi 0, %s108
    %s112 = sphi 0, %s111
    %s128 = sphi 0, %s112
  $region4: #{_lambda_.17} parent=0 // loop_header_branch
    %12 = sbr.rel (%p10) target = $region8
  $region5: #{_lambda_.17} parent=0 // loop_body
    %s14 = ssub.s32 %s9, 1
    %s15 = ssub.s32 %s9, 2
    %s22 = sadd.s32 1, %s17
    %p23 = scmp.ge.s32.totalorder %s22, 2
    %s24 = scalar_select %p23, 0, %s22
    %s25 = sadd.s32 1, %s16
    %s26 = scalar_select %p23, %s25, %s16
    %p27 = scmp.ge.s32.totalorder %s26, 4
    %s28 = scalar_select %p27, 0, %s26
    %s29 = ssub.s32 %s16, %s28
    %s30 = ssub.s32 %s17, %s24
    %s31 = sor.u32 %s29, %s30
    %p32 = scmp.eq.s32.totalorder %s31, 0
    %s34 = sadd.s32 %s33, 1
    %s35 = scalar_select %p32, %s33, %s34
    %p38 = pneg %p32
    %p39 = scmp.eq.s32.totalorder %s9, 7
    %p40 = por %p38, %p39
    %p41 = scmp.ne.s32.totalorder %s33, %s36
    %p42 = scmp.eq.s32.totalorder %s9, 0
    %p43 = por %p41, %p42
    %p44 = scmp.ne.s32.totalorder %s33, %s36
    %p45 = scmp.eq.s32.totalorder %s14, 7
    %p46 = por %p44, %p45
    %p47 = scmp.ne.s32.totalorder %s36, %s37
    %p48 = scmp.eq.s32.totalorder %s14, 0
    %p49 = por %p47, %p48
    %p50 = scmp.ne.s32.totalorder %s36, %s37
    %p51 = scmp.eq.s32.totalorder %s15, 7
    %p52 = por %p50, %p51
    %p54 = scmp.ne.s32.totalorder %s37, %s53
    %p55 = scmp.eq.s32.totalorder %s15, 0
    %p56 = por %p54, %p55
    %s57 = ssub.s32 %s16, %s28
    %p58 = scmp.eq.s32.totalorder %s57, 0
    %s60 = sadd.s32 %s59, 1
    %s61 = scalar_select %p58, %s59, %s60
    %p64 = pneg %p58
    %p65 = scmp.eq.s32.totalorder %s9, 7
    %p66 = por %p64, %p65
    %p67 = scmp.ne.s32.totalorder %s59, %s62
    %p68 = scmp.eq.s32.totalorder %s9, 0
    %p69 = por %p67, %p68
    %p70 = scmp.ne.s32.totalorder %s59, %s62
    %p71 = scmp.eq.s32.totalorder %s14, 7
    %p72 = por %p70, %p71
    %p73 = scmp.ne.s32.totalorder %s62, %s63
    %p74 = scmp.eq.s32.totalorder %s14, 0
    %p75 = por %p73, %p74
    %p76 = scmp.ne.s32.totalorder %s62, %s63
    %p77 = scmp.eq.s32.totalorder %s15, 7
    %p78 = por %p76, %p77
    %p80 = scmp.ne.s32.totalorder %s63, %s79
    %p81 = scmp.eq.s32.totalorder %s15, 0
    %p82 = por %p80, %p81
    %s84 = sadd.s32 %s83, 1
    %p87 = scmp.eq.s32.totalorder %s9, 7
    %p88 = scmp.ne.s32.totalorder %s83, %s85
    %p89 = scmp.eq.s32.totalorder %s9, 0
    %p90 = por %p88, %p89
    %p91 = scmp.ne.s32.totalorder %s83, %s85
    %p92 = scmp.eq.s32.totalorder %s14, 7
    %p93 = por %p91, %p92
    %p94 = scmp.ne.s32.totalorder %s85, %s86
    %p95 = scmp.eq.s32.totalorder %s14, 0
    %p96 = por %p94, %p95
    %p97 = scmp.ne.s32.totalorder %s85, %s86
    %p98 = scmp.eq.s32.totalorder %s15, 7
    %p99 = por %p97, %p98
    %p101 = scmp.ne.s32.totalorder %s86, %s100
    %p102 = scmp.eq.s32.totalorder %s15, 0
    %p103 = por %p101, %p102
    %s104 = ssub.s32 %s16, %s28
    %s105 = ssub.s32 %s17, %s24
    %s106 = sor.u32 %s104, %s105
    %p107 = scmp.eq.s32.totalorder %s106, 0
    %s109 = sadd.s32 %s108, 1
    %s110 = scalar_select %p107, %s108, %s109
    %p113 = pneg %p107
    %p114 = scmp.eq.s32.totalorder %s9, 7
    %p115 = por %p113, %p114
    %p116 = scmp.ne.s32.totalorder %s108, %s111
    %p117 = scmp.eq.s32.totalorder %s9, 0
    %p118 = por %p116, %p117
    %p119 = scmp.ne.s32.totalorder %s108, %s111
    %p120 = scmp.eq.s32.totalorder %s14, 7
    %p121 = por %p119, %p120
    %p122 = scmp.ne.s32.totalorder %s111, %s112
    %p123 = scmp.eq.s32.totalorder %s14, 0
    %p124 = por %p122, %p123
    %p125 = scmp.ne.s32.totalorder %s111, %s112
    %p126 = scmp.eq.s32.totalorder %s15, 7
    %p127 = por %p125, %p126
    %p129 = scmp.ne.s32.totalorder %s112, %s128
    %p130 = scmp.eq.s32.totalorder %s15, 0
    %p131 = por %p129, %p130
    %p132 = scmp.le.s32.totalorder 1, %s9
    %p133 = scmp.lt.s32.totalorder %s9, 9
    %p134 = pnand %p132, %p133
    %p135 = pneg %p134
    // Predicated region
    $region9: #{_lambda_.17} parent=5 // pred_check
      _
    $region10: #{_lambda_.17} parent=5 // pred_check_branch
      %137 = sbr.rel (%p134) target = $region12
    $region11: #{_lambda_.17} parent=5 // pred_region
      %s138 = ssub.s32 %s9, 1
      // Predicated region
      $region13: #{_lambda_.17} parent=11 // pred_check
        %p139 = pneg %p96
      $region14: #{_lambda_.17} parent=11 // pred_check_branch
        %141 = sbr.rel (%p139) target = $region16
      $region15: #{_lambda_.17} parent=11 // pred_region
        _
      $region16: #{_lambda_.17} parent=11 // pred_fallthru
        _
    $region12: #{_lambda_.17} parent=5 // pred_fallthru
      _
    %p142 = scmp.lt.s32.totalorder %s9, 8
    // Predicated region
    $region17: #{_lambda_.17} parent=5 // pred_check
      %p143 = pneg %p142
    $region18: #{_lambda_.17} parent=5 // pred_check_branch
      %145 = sbr.rel (%p143) target = $region20
    $region19: #{_lambda_.17} parent=5 // pred_region
      // Predicated region
      $region21: #{_lambda_.17} parent=19 // pred_check
        %p146 = pneg %p43
      $region22: #{_lambda_.17} parent=19 // pred_check_branch
        %148 = sbr.rel (%p146) target = $region24
      $region23: #{_lambda_.17} parent=19 // pred_region
        %s149 = smul.u32 128, %s17
        %p150 = scmp.lt.s32.totalorder %s16, 3
        %s151 = scalar_select %p150, %s16, 3
        %p152 = scmp.lt.s32.totalorder %s149, 255
        %s153 = scalar_select %p152, %s149, 255
        %s154 = smul.addr %s151, 256
        %s155 = sadd.s32 %s153, %s154
        %s156 = smul.addr %s155, 4
        %s157 = scalar_lea.vmem %s0, %s156
        %s158 = smul.u32 128, %s17
      $region24: #{_lambda_.17} parent=19 // pred_fallthru
        _
      // Predicated region
      $region25: #{_lambda_.17} parent=19 // pred_check
        %p159 = pneg %p69
      $region26: #{_lambda_.17} parent=19 // pred_check_branch
        %161 = sbr.rel (%p159) target = $region28
      $region27: #{_lambda_.17} parent=19 // pred_region
        %p162 = scmp.lt.s32.totalorder %s16, 3
        %s163 = scalar_select %p162, %s16, 3
        %s164 = smul.addr %s163, 4
        %s165 = smul.addr %s164, 4
        %s166 = scalar_lea.vmem %s1, %s165
      $region28: #{_lambda_.17} parent=19 // pred_fallthru
        _
    $region20: #{_lambda_.17} parent=5 // pred_fallthru
      _
    %p167 = scmp.le.s32.totalorder 1, %s9
    %p168 = scmp.lt.s32.totalorder %s9, 9
    %p169 = pnand %p167, %p168
    %p170 = pneg %p169
    // Predicated region
    $region29: #{_lambda_.17} parent=5 // pred_check
      _
    $region30: #{_lambda_.17} parent=5 // pred_check_branch
      %172 = sbr.rel (%p169) target = $region32
    $region31: #{_lambda_.17} parent=5 // pred_region
      %s173 = ssub.s32 %s9, 1
      %s174 = smul.u32 128, %s19
      %p175 = scmp.lt.s32.totalorder %s18, 3
      %s176 = scalar_select %p175, %s18, 3
      %p177 = scmp.lt.s32.totalorder %s174, 255
      %s178 = scalar_select %p177, %s174, 255
      %s179 = smul.addr %s176, 256
      %s180 = sadd.s32 %s178, %s179
      %s181 = smul.addr %s180, 4
      %s182 = scalar_lea.vmem %s0, %s181
      %p183 = pneg %p49
      %p184 = pneg %p46
      %p185 = scmp.lt.s32.totalorder %s18, 3
      %s186 = scalar_select %p185, %s18, 3
      %s187 = smul.addr %s186, 4
      %s188 = smul.addr %s187, 4
      %s189 = scalar_lea.vmem %s1, %s188
      %p190 = pneg %p75
      %p191 = pneg %p72
      %p192 = pneg %p96
      %p193 = pneg %p93
      %p194 = pneg %p124
      %p195 = pneg %p121
      %s196 = smul.u32 128, %s19
      %p197 = scmp.lt.s32.totalorder %s18, 3
      %s198 = scalar_select %p197, %s18, 3
      %p199 = scmp.lt.s32.totalorder %s196, 255
      %s200 = scalar_select %p199, %s196, 255
      %s201 = smul.addr %s198, 256
      %s202 = sadd.s32 %s200, %s201
      %s203 = smul.addr %s202, 8
      %s204 = scalar_lea.vmem %s3, %s203
      %s205 = smul.u32 128, %s19
      %p206 = scmp.lt.s32.totalorder %s18, 3
      %s207 = scalar_select %p206, %s18, 3
      %p208 = scmp.lt.s32.totalorder %s205, 255
      %s209 = scalar_select %p208, %s205, 255
      %s210 = smul.addr %s207, 256
      %s211 = sadd.s32 %s209, %s210
      %s212 = smul.addr %s211, 4
      %s213 = scalar_lea.vmem %s0, %s212
      %s214 = smul.u32 128, %s19
      %p215 = scmp.lt.s32.totalorder %s18, 3
      %s216 = scalar_select %p215, %s18, 3
      %s217 = smul.addr %s216, 4
      %s218 = smul.addr %s217, 4
      %s219 = scalar_lea.vmem %s1, %s218
      %s220 = smul.u32 128, %s19
      %p221 = scmp.lt.s32.totalorder %s18, 3
      %s222 = scalar_select %p221, %s18, 3
      %p223 = scmp.lt.s32.totalorder %s220, 255
      %s224 = scalar_select %p223, %s220, 255
      %s225 = smul.addr %s222, 256
      %s226 = sadd.s32 %s224, %s225
      %s227 = smul.addr %s226, 8
      %s228 = scalar_lea.vmem %s3, %s227
      %s229 = smul.u32 128, %s19
      %v231 = vld [vmem:[%s213] sm:$0xf]
      %v232 = vld [vmem:[%s213 + $0x4] sm:$0xf]
      %v233 = vld [vmem:[%s213 + $0x8] sm:$0xf]
      %v234 = vld [vmem:[%s213 + $0xc] sm:$0xf]
      %v235 = vld [vmem:[%s213 + $0x10] sm:$0xf]
      %v236 = vld [vmem:[%s213 + $0x14] sm:$0xf]
      %v237 = vld [vmem:[%s213 + $0x18] sm:$0xf]
      %v238 = vld [vmem:[%s213 + $0x1c] sm:$0xf]
      %v239 = vld [vmem:[%s213 + $0x20] sm:$0xf]
      %v240 = vld [vmem:[%s213 + $0x24] sm:$0xf]
      %v241 = vld [vmem:[%s213 + $0x28] sm:$0xf]
      %v242 = vld [vmem:[%s213 + $0x2c] sm:$0xf]
      %v243 = vld [vmem:[%s213 + $0x30] sm:$0xf]
      %v244 = vld [vmem:[%s213 + $0x34] sm:$0xf]
      %v245 = vld [vmem:[%s213 + $0x38] sm:$0xf]
      %v246 = vld [vmem:[%s213 + $0x3c] sm:$0xf]
      %v247 = vld [vmem:[%s213 + $0x40] sm:$0xf]
      %v248 = vld [vmem:[%s213 + $0x44] sm:$0xf]
      %v249 = vld [vmem:[%s213 + $0x48] sm:$0xf]
      %v250 = vld [vmem:[%s213 + $0x4c] sm:$0xf]
      %v251 = vld [vmem:[%s213 + $0x50] sm:$0xf]
      %v252 = vld [vmem:[%s213 + $0x54] sm:$0xf]
      %v253 = vld [vmem:[%s213 + $0x58] sm:$0xf]
      %v254 = vld [vmem:[%s213 + $0x5c] sm:$0xf]
      %v255 = vld [vmem:[%s213 + $0x60] sm:$0xf]
      %v256 = vld [vmem:[%s213 + $0x64] sm:$0xf]
      %v257 = vld [vmem:[%s213 + $0x68] sm:$0xf]
      %v258 = vld [vmem:[%s213 + $0x6c] sm:$0xf]
      %v259 = vld [vmem:[%s213 + $0x70] sm:$0xf]
      %v260 = vld [vmem:[%s213 + $0x74] sm:$0xf]
      %v261 = vld [vmem:[%s213 + $0x78] sm:$0xf]
      %v262 = vld [vmem:[%s213 + $0x7c] sm:$0xf]
      %v263 = vld [vmem:[%s213 + $0x80] sm:$0xf]
      %v264 = vld [vmem:[%s213 + $0x84] sm:$0xf]
      %v265 = vld [vmem:[%s213 + $0x88] sm:$0xf]
      %v266 = vld [vmem:[%s213 + $0x8c] sm:$0xf]
      %v267 = vld [vmem:[%s213 + $0x90] sm:$0xf]
      %v268 = vld [vmem:[%s213 + $0x94] sm:$0xf]
      %v269 = vld [vmem:[%s213 + $0x98] sm:$0xf]
      %v270 = vld [vmem:[%s213 + $0x9c] sm:$0xf]
      %v271 = vld [vmem:[%s213 + $0xa0] sm:$0xf]
      %v272 = vld [vmem:[%s213 + $0xa4] sm:$0xf]
      %v273 = vld [vmem:[%s213 + $0xa8] sm:$0xf]
      %v274 = vld [vmem:[%s213 + $0xac] sm:$0xf]
      %v275 = vld [vmem:[%s213 + $0xb0] sm:$0xf]
      %v276 = vld [vmem:[%s213 + $0xb4] sm:$0xf]
      %v277 = vld [vmem:[%s213 + $0xb8] sm:$0xf]
      %v278 = vld [vmem:[%s213 + $0xbc] sm:$0xf]
      %v279 = vld [vmem:[%s213 + $0xc0] sm:$0xf]
      %v280 = vld [vmem:[%s213 + $0xc4] sm:$0xf]
      %v281 = vld [vmem:[%s213 + $0xc8] sm:$0xf]
      %v282 = vld [vmem:[%s213 + $0xcc] sm:$0xf]
      %v283 = vld [vmem:[%s213 + $0xd0] sm:$0xf]
      %v284 = vld [vmem:[%s213 + $0xd4] sm:$0xf]
      %v285 = vld [vmem:[%s213 + $0xd8] sm:$0xf]
      %v286 = vld [vmem:[%s213 + $0xdc] sm:$0xf]
      %v287 = vld [vmem:[%s213 + $0xe0] sm:$0xf]
      %v288 = vld [vmem:[%s213 + $0xe4] sm:$0xf]
      %v289 = vld [vmem:[%s213 + $0xe8] sm:$0xf]
      %v290 = vld [vmem:[%s213 + $0xec] sm:$0xf]
      %v291 = vld [vmem:[%s213 + $0xf0] sm:$0xf]
      %v292 = vld [vmem:[%s213 + $0xf4] sm:$0xf]
      %v293 = vld [vmem:[%s213 + $0xf8] sm:$0xf]
      %v294 = vld [vmem:[%s213 + $0xfc] sm:$0xf]
      %v295 = vld [vmem:[%s213 + $0x100] sm:$0xf]
      %v296 = vld [vmem:[%s213 + $0x104] sm:$0xf]
      %v297 = vld [vmem:[%s213 + $0x108] sm:$0xf]
      %v298 = vld [vmem:[%s213 + $0x10c] sm:$0xf]
      %v299 = vld [vmem:[%s213 + $0x110] sm:$0xf]
      %v300 = vld [vmem:[%s213 + $0x114] sm:$0xf]
      %v301 = vld [vmem:[%s213 + $0x118] sm:$0xf]
      %v302 = vld [vmem:[%s213 + $0x11c] sm:$0xf]
      %v303 = vld [vmem:[%s213 + $0x120] sm:$0xf]
      %v304 = vld [vmem:[%s213 + $0x124] sm:$0xf]
      %v305 = vld [vmem:[%s213 + $0x128] sm:$0xf]
      %v306 = vld [vmem:[%s213 + $0x12c] sm:$0xf]
      %v307 = vld [vmem:[%s213 + $0x130] sm:$0xf]
      %v308 = vld [vmem:[%s213 + $0x134] sm:$0xf]
      %v309 = vld [vmem:[%s213 + $0x138] sm:$0xf]
      %v310 = vld [vmem:[%s213 + $0x13c] sm:$0xf]
      %v311 = vld [vmem:[%s213 + $0x140] sm:$0xf]
      %v312 = vld [vmem:[%s213 + $0x144] sm:$0xf]
      %v313 = vld [vmem:[%s213 + $0x148] sm:$0xf]
      %v314 = vld [vmem:[%s213 + $0x14c] sm:$0xf]
      %v315 = vld [vmem:[%s213 + $0x150] sm:$0xf]
      %v316 = vld [vmem:[%s213 + $0x154] sm:$0xf]
      %v317 = vld [vmem:[%s213 + $0x158] sm:$0xf]
      %v318 = vld [vmem:[%s213 + $0x15c] sm:$0xf]
      %v319 = vld [vmem:[%s213 + $0x160] sm:$0xf]
      %v320 = vld [vmem:[%s213 + $0x164] sm:$0xf]
      %v321 = vld [vmem:[%s213 + $0x168] sm:$0xf]
      %v322 = vld [vmem:[%s213 + $0x16c] sm:$0xf]
      %v323 = vld [vmem:[%s213 + $0x170] sm:$0xf]
      %v324 = vld [vmem:[%s213 + $0x174] sm:$0xf]
      %v325 = vld [vmem:[%s213 + $0x178] sm:$0xf]
      %v326 = vld [vmem:[%s213 + $0x17c] sm:$0xf]
      %v327 = vld [vmem:[%s213 + $0x180] sm:$0xf]
      %v328 = vld [vmem:[%s213 + $0x184] sm:$0xf]
      %v329 = vld [vmem:[%s213 + $0x188] sm:$0xf]
      %v330 = vld [vmem:[%s213 + $0x18c] sm:$0xf]
      %v331 = vld [vmem:[%s213 + $0x190] sm:$0xf]
      %v332 = vld [vmem:[%s213 + $0x194] sm:$0xf]
      %v333 = vld [vmem:[%s213 + $0x198] sm:$0xf]
      %v334 = vld [vmem:[%s213 + $0x19c] sm:$0xf]
      %v335 = vld [vmem:[%s213 + $0x1a0] sm:$0xf]
      %v336 = vld [vmem:[%s213 + $0x1a4] sm:$0xf]
      %v337 = vld [vmem:[%s213 + $0x1a8] sm:$0xf]
      %v338 = vld [vmem:[%s213 + $0x1ac] sm:$0xf]
      %v339 = vld [vmem:[%s213 + $0x1b0] sm:$0xf]
      %v340 = vld [vmem:[%s213 + $0x1b4] sm:$0xf]
      %v341 = vld [vmem:[%s213 + $0x1b8] sm:$0xf]
      %v342 = vld [vmem:[%s213 + $0x1bc] sm:$0xf]
      %v343 = vld [vmem:[%s213 + $0x1c0] sm:$0xf]
      %v344 = vld [vmem:[%s213 + $0x1c4] sm:$0xf]
      %v345 = vld [vmem:[%s213 + $0x1c8] sm:$0xf]
      %v346 = vld [vmem:[%s213 + $0x1cc] sm:$0xf]
      %v347 = vld [vmem:[%s213 + $0x1d0] sm:$0xf]
      %v348 = vld [vmem:[%s213 + $0x1d4] sm:$0xf]
      %v349 = vld [vmem:[%s213 + $0x1d8] sm:$0xf]
      %v350 = vld [vmem:[%s213 + $0x1dc] sm:$0xf]
      %v351 = vld [vmem:[%s213 + $0x1e0] sm:$0xf]
      %v352 = vld [vmem:[%s213 + $0x1e4] sm:$0xf]
      %v353 = vld [vmem:[%s213 + $0x1e8] sm:$0xf]
      %v354 = vld [vmem:[%s213 + $0x1ec] sm:$0xf]
      %v355 = vld [vmem:[%s213 + $0x1f0] sm:$0xf]
      %v356 = vld [vmem:[%s213 + $0x1f4] sm:$0xf]
      %v357 = vld [vmem:[%s213 + $0x1f8] sm:$0xf]
      %v358 = vld [vmem:[%s213 + $0x1fc] sm:$0xf]
      %v359 = vld [vmem:[%s219] sm:$0xf]
      %v360 = vld [vmem:[%s219 + $0x4] sm:$0xf]
      %v361 = vld [vmem:[%s219 + $0x8] sm:$0xf]
      %v362 = vld [vmem:[%s219 + $0xc] sm:$0xf]
      %v363 = vld [vmem:[%s2] sm:$0x1]
      %v365 = vlaneseq
      %v366 = vshrl.u32 %v365, 7
      %v367 = vsub.s32 0, %v366
      %v368 = vrot.slane %v363, %v367
      %v498 = vunpack.c.l.b16 %v231
      %v499 = vunpack.c.l.b16 %v232
      %v500 = vunpack.c.l.b16 %v233
      %v501 = vunpack.c.l.b16 %v234
      %v502 = vunpack.c.l.b16 %v235
      %v503 = vunpack.c.l.b16 %v236
      %v504 = vunpack.c.l.b16 %v237
      %v505 = vunpack.c.l.b16 %v238
      %v506 = vunpack.c.l.b16 %v239
      %v507 = vunpack.c.l.b16 %v240
      %v508 = vunpack.c.l.b16 %v241
      %v509 = vunpack.c.l.b16 %v242
      %v510 = vunpack.c.l.b16 %v243
      %v511 = vunpack.c.l.b16 %v244
      %v512 = vunpack.c.l.b16 %v245
      %v513 = vunpack.c.l.b16 %v246
      %v514 = vunpack.c.l.b16 %v247
      %v515 = vunpack.c.l.b16 %v248
      %v516 = vunpack.c.l.b16 %v249
      %v517 = vunpack.c.l.b16 %v250
      %v518 = vunpack.c.l.b16 %v251
      %v519 = vunpack.c.l.b16 %v252
      %v520 = vunpack.c.l.b16 %v253
      %v521 = vunpack.c.l.b16 %v254
      %v522 = vunpack.c.l.b16 %v255
      %v523 = vunpack.c.l.b16 %v256
      %v524 = vunpack.c.l.b16 %v257
      %v525 = vunpack.c.l.b16 %v258
      %v526 = vunpack.c.l.b16 %v259
      %v527 = vunpack.c.l.b16 %v260
      %v528 = vunpack.c.l.b16 %v261
      %v529 = vunpack.c.l.b16 %v262
      %v530 = vunpack.c.l.b16 %v263
      %v531 = vunpack.c.l.b16 %v264
      %v532 = vunpack.c.l.b16 %v265
      %v533 = vunpack.c.l.b16 %v266
      %v534 = vunpack.c.l.b16 %v267
      %v535 = vunpack.c.l.b16 %v268
      %v536 = vunpack.c.l.b16 %v269
      %v537 = vunpack.c.l.b16 %v270
      %v538 = vunpack.c.l.b16 %v271
      %v539 = vunpack.c.l.b16 %v272
      %v540 = vunpack.c.l.b16 %v273
      %v541 = vunpack.c.l.b16 %v274
      %v542 = vunpack.c.l.b16 %v275
      %v543 = vunpack.c.l.b16 %v276
      %v544 = vunpack.c.l.b16 %v277
      %v545 = vunpack.c.l.b16 %v278
      %v546 = vunpack.c.l.b16 %v279
      %v547 = vunpack.c.l.b16 %v280
      %v548 = vunpack.c.l.b16 %v281
      %v549 = vunpack.c.l.b16 %v282
      %v550 = vunpack.c.l.b16 %v283
      %v551 = vunpack.c.l.b16 %v284
      %v552 = vunpack.c.l.b16 %v285
      %v553 = vunpack.c.l.b16 %v286
      %v554 = vunpack.c.l.b16 %v287
      %v555 = vunpack.c.l.b16 %v288
      %v556 = vunpack.c.l.b16 %v289
      %v557 = vunpack.c.l.b16 %v290
      %v558 = vunpack.c.l.b16 %v291
      %v559 = vunpack.c.l.b16 %v292
      %v560 = vunpack.c.l.b16 %v293
      %v561 = vunpack.c.l.b16 %v294
      %v562 = vunpack.c.l.b16 %v295
      %v563 = vunpack.c.l.b16 %v296
      %v564 = vunpack.c.l.b16 %v297
      %v565 = vunpack.c.l.b16 %v298
      %v566 = vunpack.c.l.b16 %v299
      %v567 = vunpack.c.l.b16 %v300
      %v568 = vunpack.c.l.b16 %v301
      %v569 = vunpack.c.l.b16 %v302
      %v570 = vunpack.c.l.b16 %v303
      %v571 = vunpack.c.l.b16 %v304
      %v572 = vunpack.c.l.b16 %v305
      %v573 = vunpack.c.l.b16 %v306
      %v574 = vunpack.c.l.b16 %v307
      %v575 = vunpack.c.l.b16 %v308
      %v576 = vunpack.c.l.b16 %v309
      %v577 = vunpack.c.l.b16 %v310
      %v578 = vunpack.c.l.b16 %v311
      %v579 = vunpack.c.l.b16 %v312
      %v580 = vunpack.c.l.b16 %v313
      %v581 = vunpack.c.l.b16 %v314
      %v582 = vunpack.c.l.b16 %v315
      %v583 = vunpack.c.l.b16 %v316
      %v584 = vunpack.c.l.b16 %v317
      %v585 = vunpack.c.l.b16 %v318
      %v586 = vunpack.c.l.b16 %v319
      %v587 = vunpack.c.l.b16 %v320
      %v588 = vunpack.c.l.b16 %v321
      %v589 = vunpack.c.l.b16 %v322
      %v590 = vunpack.c.l.b16 %v323
      %v591 = vunpack.c.l.b16 %v324
      %v592 = vunpack.c.l.b16 %v325
      %v593 = vunpack.c.l.b16 %v326
      %v594 = vunpack.c.l.b16 %v327
      %v595 = vunpack.c.l.b16 %v328
      %v596 = vunpack.c.l.b16 %v329
      %v597 = vunpack.c.l.b16 %v330
      %v598 = vunpack.c.l.b16 %v331
      %v599 = vunpack.c.l.b16 %v332
      %v600 = vunpack.c.l.b16 %v333
      %v601 = vunpack.c.l.b16 %v334
      %v602 = vunpack.c.l.b16 %v335
      %v603 = vunpack.c.l.b16 %v336
      %v604 = vunpack.c.l.b16 %v337
      %v605 = vunpack.c.l.b16 %v338
      %v606 = vunpack.c.l.b16 %v339
      %v607 = vunpack.c.l.b16 %v340
      %v608 = vunpack.c.l.b16 %v341
      %v609 = vunpack.c.l.b16 %v342
      %v610 = vunpack.c.l.b16 %v343
      %v611 = vunpack.c.l.b16 %v344
      %v612 = vunpack.c.l.b16 %v345
      %v613 = vunpack.c.l.b16 %v346
      %v614 = vunpack.c.l.b16 %v347
      %v615 = vunpack.c.l.b16 %v348
      %v616 = vunpack.c.l.b16 %v349
      %v617 = vunpack.c.l.b16 %v350
      %v618 = vunpack.c.l.b16 %v351
      %v619 = vunpack.c.l.b16 %v352
      %v620 = vunpack.c.l.b16 %v353
      %v621 = vunpack.c.l.b16 %v354
      %v622 = vunpack.c.l.b16 %v355
      %v623 = vunpack.c.l.b16 %v356
      %v624 = vunpack.c.l.b16 %v357
      %v625 = vunpack.c.l.b16 %v358
      %v626 = vpack.c.b16 %v499, %v498
      %v627 = vpack.c.b16 %v501, %v500
      %v628 = vpack.c.b16 %v503, %v502
      %v629 = vpack.c.b16 %v505, %v504
      %v630 = vpack.c.b16 %v507, %v506
      %v631 = vpack.c.b16 %v509, %v508
      %v632 = vpack.c.b16 %v511, %v510
      %v633 = vpack.c.b16 %v513, %v512
      %v634 = vpack.c.b16 %v515, %v514
      %v635 = vpack.c.b16 %v517, %v516
      %v636 = vpack.c.b16 %v519, %v518
      %v637 = vpack.c.b16 %v521, %v520
      %v638 = vpack.c.b16 %v523, %v522
      %v639 = vpack.c.b16 %v525, %v524
      %v640 = vpack.c.b16 %v527, %v526
      %v641 = vpack.c.b16 %v529, %v528
      %v642 = vpack.c.b16 %v531, %v530
      %v643 = vpack.c.b16 %v533, %v532
      %v644 = vpack.c.b16 %v535, %v534
      %v645 = vpack.c.b16 %v537, %v536
      %v646 = vpack.c.b16 %v539, %v538
      %v647 = vpack.c.b16 %v541, %v540
      %v648 = vpack.c.b16 %v543, %v542
      %v649 = vpack.c.b16 %v545, %v544
      %v650 = vpack.c.b16 %v547, %v546
      %v651 = vpack.c.b16 %v549, %v548
      %v652 = vpack.c.b16 %v551, %v550
      %v653 = vpack.c.b16 %v553, %v552
      %v654 = vpack.c.b16 %v555, %v554
      %v655 = vpack.c.b16 %v557, %v556
      %v656 = vpack.c.b16 %v559, %v558
      %v657 = vpack.c.b16 %v561, %v560
      %v658 = vpack.c.b16 %v563, %v562
      %v659 = vpack.c.b16 %v565, %v564
      %v660 = vpack.c.b16 %v567, %v566
      %v661 = vpack.c.b16 %v569, %v568
      %v662 = vpack.c.b16 %v571, %v570
      %v663 = vpack.c.b16 %v573, %v572
      %v664 = vpack.c.b16 %v575, %v574
      %v665 = vpack.c.b16 %v577, %v576
      %v666 = vpack.c.b16 %v579, %v578
      %v667 = vpack.c.b16 %v581, %v580
      %v668 = vpack.c.b16 %v583, %v582
      %v669 = vpack.c.b16 %v585, %v584
      %v670 = vpack.c.b16 %v587, %v586
      %v671 = vpack.c.b16 %v589, %v588
      %v672 = vpack.c.b16 %v591, %v590
      %v673 = vpack.c.b16 %v593, %v592
      %v674 = vpack.c.b16 %v595, %v594
      %v675 = vpack.c.b16 %v597, %v596
      %v676 = vpack.c.b16 %v599, %v598
      %v677 = vpack.c.b16 %v601, %v600
      %v678 = vpack.c.b16 %v603, %v602
      %v679 = vpack.c.b16 %v605, %v604
      %v680 = vpack.c.b16 %v607, %v606
      %v681 = vpack.c.b16 %v609, %v608
      %v682 = vpack.c.b16 %v611, %v610
      %v683 = vpack.c.b16 %v613, %v612
      %v684 = vpack.c.b16 %v615, %v614
      %v685 = vpack.c.b16 %v617, %v616
      %v686 = vpack.c.b16 %v619, %v618
      %v687 = vpack.c.b16 %v621, %v620
      %v688 = vpack.c.b16 %v623, %v622
      %v689 = vpack.c.b16 %v625, %v624
      %v694 = vunpack.c.l.b16 %v359
      %v695 = vunpack.c.l.b16 %v360
      %v696 = vunpack.c.l.b16 %v361
      %v697 = vunpack.c.l.b16 %v362
      %v698 = vpack.c.b16 %v695, %v694
      %v699 = vpack.c.b16 %v697, %v696
      %vm702 = vcmask 261120
      %v704 = vsel %vm702, %v626, 0
      %v707 = vsel %vm702, %v627, 0
      %v710 = vsel %vm702, %v628, 0
      %v713 = vsel %vm702, %v629, 0
      %v716 = vsel %vm702, %v630, 0
      %v719 = vsel %vm702, %v631, 0
      %v722 = vsel %vm702, %v632, 0
      %v725 = vsel %vm702, %v633, 0
      %v728 = vsel %vm702, %v634, 0
      %v731 = vsel %vm702, %v635, 0
      %v734 = vsel %vm702, %v636, 0
      %v737 = vsel %vm702, %v637, 0
      %v740 = vsel %vm702, %v638, 0
      %v743 = vsel %vm702, %v639, 0
      %v746 = vsel %vm702, %v640, 0
      %v749 = vsel %vm702, %v641, 0
      %v752 = vsel %vm702, %v642, 0
      %v755 = vsel %vm702, %v643, 0
      %v758 = vsel %vm702, %v644, 0
      %v761 = vsel %vm702, %v645, 0
      %v764 = vsel %vm702, %v646, 0
      %v767 = vsel %vm702, %v647, 0
      %v770 = vsel %vm702, %v648, 0
      %v773 = vsel %vm702, %v649, 0
      %v776 = vsel %vm702, %v650, 0
      %v779 = vsel %vm702, %v651, 0
      %v782 = vsel %vm702, %v652, 0
      %v785 = vsel %vm702, %v653, 0
      %v788 = vsel %vm702, %v654, 0
      %v791 = vsel %vm702, %v655, 0
      %v794 = vsel %vm702, %v656, 0
      %v797 = vsel %vm702, %v657, 0
      %v800 = vsel %vm702, %v658, 0
      %v803 = vsel %vm702, %v659, 0
      %v806 = vsel %vm702, %v660, 0
      %v809 = vsel %vm702, %v661, 0
      %v812 = vsel %vm702, %v662, 0
      %v815 = vsel %vm702, %v663, 0
      %v818 = vsel %vm702, %v664, 0
      %v821 = vsel %vm702, %v665, 0
      %v824 = vsel %vm702, %v666, 0
      %v827 = vsel %vm702, %v667, 0
      %v830 = vsel %vm702, %v668, 0
      %v833 = vsel %vm702, %v669, 0
      %v836 = vsel %vm702, %v670, 0
      %v839 = vsel %vm702, %v671, 0
      %v842 = vsel %vm702, %v672, 0
      %v845 = vsel %vm702, %v673, 0
      %v848 = vsel %vm702, %v674, 0
      %v851 = vsel %vm702, %v675, 0
      %v854 = vsel %vm702, %v676, 0
      %v857 = vsel %vm702, %v677, 0
      %v860 = vsel %vm702, %v678, 0
      %v863 = vsel %vm702, %v679, 0
      %v866 = vsel %vm702, %v680, 0
      %v869 = vsel %vm702, %v681, 0
      %v872 = vsel %vm702, %v682, 0
      %v875 = vsel %vm702, %v683, 0
      %v878 = vsel %vm702, %v684, 0
      %v881 = vsel %vm702, %v685, 0
      %v884 = vsel %vm702, %v686, 0
      %v887 = vsel %vm702, %v687, 0
      %v890 = vsel %vm702, %v688, 0
      %v893 = vsel %vm702, %v689, 0
      %895 = vmatprep.subr.bf16.mxu0 0
      %896 = vmatpush1.bf16.msra.mxu0 %v698
      %897 = vmatprep.subr.bf16.mxu0 0
      %898 = vmatpush1.bf16.msra.mxu0 %v699
      %899 = vmatprep.subr.bf16.mxu0 0
      %900 = vmatpush1.bf16.msra.mxu0 0
      %901 = vmatprep.subr.bf16.mxu0 0
      %902 = vmatpush1.bf16.msra.mxu0 0
      %903 = vmatprep.subr.bf16.mxu0 0
      %904 = vmatpush1.bf16.msra.mxu0 0
      %905 = vmatprep.subr.bf16.mxu0 0
      %906 = vmatpush1.bf16.msra.mxu0 0
      %907 = vmatprep.subr.bf16.mxu0 0
      %908 = vmatpush1.bf16.msra.mxu0 0
      %909 = vmatprep.subr.bf16.mxu0 0
      %910 = vmatpush1.bf16.msra.mxu0 0
      %911 = vmatprep.subr.bf16.mxu0 0
      %912 = vmatpush1.bf16.msra.mxu0 0
      %913 = vmatprep.subr.bf16.mxu0 0
      %914 = vmatpush1.bf16.msra.mxu0 0
      %915 = vmatprep.subr.bf16.mxu0 0
      %916 = vmatpush1.bf16.msra.mxu0 0
      %917 = vmatprep.subr.bf16.mxu0 0
      %918 = vmatpush1.bf16.msra.mxu0 0
      %919 = vmatprep.subr.bf16.mxu0 0
      %920 = vmatpush1.bf16.msra.mxu0 0
      %921 = vmatprep.subr.bf16.mxu0 0
      %922 = vmatpush1.bf16.msra.mxu0 0
      %923 = vmatprep.subr.bf16.mxu0 0
      %924 = vmatpush1.bf16.msra.mxu0 0
      %925 = vmatprep.subr.bf16.mxu0 0
      %926 = vmatpush1.bf16.msra.mxu0 0
      %927 = vmatprep.mubr.bf16.mxu0 0
      %928 = vmatmul.mubr.bf16.gmra.mrb[0].mxu0 %v704
      %v929 = vpop.f32.mrb[0].mxu0
      %v930 = vadd.f32 %v368, %v929
      %v931 = vpop.f32.mrb[0].mxu0
      %v932 = vpop.f32.mrb[0].mxu0
      %v933 = vadd.f32 %v368, %v932
      %v934 = vpop.f32.mrb[0].mxu0
      %935 = vmatprep.mubr.bf16.mxu0 0
      %936 = vmatmul.mubr.bf16.gmra.mrb[0].mxu0 %v707
      %v937 = vpop.f32.mrb[0].mxu0
      %v938 = vadd.f32 %v368, %v937
      %v939 = vpop.f32.mrb[0].mxu0
      %v940 = vpop.f32.mrb[0].mxu0
      %v941 = vadd.f32 %v368, %v940
      %v942 = vpop.f32.mrb[0].mxu0
      %943 = vmatprep.mubr.bf16.mxu0 0
      %944 = vmatmul.mubr.bf16.gmra.mrb[0].mxu0 %v710
      %v945 = vpop.f32.mrb[0].mxu0
      %v946 = vadd.f32 %v368, %v945
      %v947 = vpop.f32.mrb[0].mxu0
      %v948 = vpop.f32.mrb[0].mxu0
      %v949 = vadd.f32 %v368, %v948
      %v950 = vpop.f32.mrb[0].mxu0
      %951 = vmatprep.mubr.bf16.mxu0 0
      %952 = vmatmul.mubr.bf16.gmra.mrb[0].mxu0 %v713
      %v953 = vpop.f32.mrb[0].mxu0
      %v954 = vadd.f32 %v368, %v953
      %v955 = vpop.f32.mrb[0].mxu0
      %v956 = vpop.f32.mrb[0].mxu0
      %v957 = vadd.f32 %v368, %v956
      %v958 = vpop.f32.mrb[0].mxu0
      %959 = vmatprep.mubr.bf16.mxu0 0
      %960 = vmatmul.mubr.bf16.gmra.mrb[0].mxu0 %v716
      %v961 = vpop.f32.mrb[0].mxu0
      %v962 = vadd.f32 %v368, %v961
      %v963 = vpop.f32.mrb[0].mxu0
      %v964 = vpop.f32.mrb[0].mxu0
      %v965 = vadd.f32 %v368, %v964
      %v966 = vpop.f32.mrb[0].mxu0
      %967 = vmatprep.mubr.bf16.mxu0 0
      %968 = vmatmul.mubr.bf16.gmra.mrb[0].mxu0 %v719
      %v969 = vpop.f32.mrb[0].mxu0
      %v970 = vadd.f32 %v368, %v969
      %v971 = vpop.f32.mrb[0].mxu0
      %v972 = vpop.f32.mrb[0].mxu0
      %v973 = vadd.f32 %v368, %v972
      %v974 = vpop.f32.mrb[0].mxu0
      %975 = vmatprep.mubr.bf16.mxu0 0
      %976 = vmatmul.mubr.bf16.gmra.mrb[0].mxu0 %v722
      %v977 = vpop.f32.mrb[0].mxu0
      %v978 = vadd.f32 %v368, %v977
      %v979 = vpop.f32.mrb[0].mxu0
      %v980 = vpop.f32.mrb[0].mxu0
      %v981 = vadd.f32 %v368, %v980
      %v982 = vpop.f32.mrb[0].mxu0
      %983 = vmatprep.mubr.bf16.mxu0 0
      %984 = vmatmul.mubr.bf16.gmra.mrb[0].mxu0 %v725
      %v985 = vpop.f32.mrb[0].mxu0
      %v986 = vadd.f32 %v368, %v985
      %v987 = vpop.f32.mrb[0].mxu0
      %v988 = vpop.f32.mrb[0].mxu0
      %v989 = vadd.f32 %v368, %v988
      %v990 = vpop.f32.mrb[0].mxu0
      %991 = vmatprep.mubr.bf16.mxu0 0
      %992 = vmatmul.mubr.bf16.gmra.mrb[0].mxu0 %v728
      %v993 = vpop.f32.mrb[0].mxu0
      %v994 = vadd.f32 %v368, %v993
      %v995 = vpop.f32.mrb[0].mxu0
      %v996 = vpop.f32.mrb[0].mxu0
      %v997 = vadd.f32 %v368, %v996
      %v998 = vpop.f32.mrb[0].mxu0
      %999 = vmatprep.mubr.bf16.mxu0 0
      %1000 = vmatmul.mubr.bf16.gmra.mrb[0].mxu0 %v731
      %v1001 = vpop.f32.mrb[0].mxu0
      %v1002 = vadd.f32 %v368, %v1001
      %v1003 = vpop.f32.mrb[0].mxu0
      %v1004 = vpop.f32.mrb[0].mxu0
      %v1005 = vadd.f32 %v368, %v1004
      %v1006 = vpop.f32.mrb[0].mxu0
      %1007 = vmatprep.mubr.bf16.mxu0 0
      %1008 = vmatmul.mubr.bf16.gmra.mrb[0].mxu0 %v734
      %v1009 = vpop.f32.mrb[0].mxu0
      %v1010 = vadd.f32 %v368, %v1009
      %v1011 = vpop.f32.mrb[0].mxu0
      %v1012 = vpop.f32.mrb[0].mxu0
      %v1013 = vadd.f32 %v368, %v1012
      %v1014 = vpop.f32.mrb[0].mxu0
      %1015 = vmatprep.mubr.bf16.mxu0 0
      %1016 = vmatmul.mubr.bf16.gmra.mrb[0].mxu0 %v737
      %v1017 = vpop.f32.mrb[0].mxu0
      %v1018 = vadd.f32 %v368, %v1017
      %v1019 = vpop.f32.mrb[0].mxu0
      %v1020 = vpop.f32.mrb[0].mxu0
      %v1021 = vadd.f32 %v368, %v1020
      %v1022 = vpop.f32.mrb[0].mxu0
      %1023 = vmatprep.mubr.bf16.mxu0 0
      %1024 = vmatmul.mubr.bf16.gmra.mrb[0].mxu0 %v740
      %v1025 = vpop.f32.mrb[0].mxu0
      %v1026 = vadd.f32 %v368, %v1025
      %v1027 = vpop.f32.mrb[0].mxu0
      %v1028 = vpop.f32.mrb[0].mxu0
      %v1029 = vadd.f32 %v368, %v1028
      %v1030 = vpop.f32.mrb[0].mxu0
      %1031 = vmatprep.mubr.bf16.mxu0 0
      %1032 = vmatmul.mubr.bf16.gmra.mrb[0].mxu0 %v743
      %v1033 = vpop.f32.mrb[0].mxu0
      %v1034 = vadd.f32 %v368, %v1033
      %v1035 = vpop.f32.mrb[0].mxu0
      %v1036 = vpop.f32.mrb[0].mxu0
      %v1037 = vadd.f32 %v368, %v1036
      %v1038 = vpop.f32.mrb[0].mxu0
      %1039 = vmatprep.mubr.bf16.mxu0 0
      %1040 = vmatmul.mubr.bf16.gmra.mrb[0].mxu0 %v746
      %v1041 = vpop.f32.mrb[0].mxu0
      %v1042 = vadd.f32 %v368, %v1041
      %v1043 = vpop.f32.mrb[0].mxu0
      %v1044 = vpop.f32.mrb[0].mxu0
      %v1045 = vadd.f32 %v368, %v1044
      %v1046 = vpop.f32.mrb[0].mxu0
      %1047 = vmatprep.mubr.bf16.mxu0 0
      %1048 = vmatmul.mubr.bf16.gmra.mrb[0].mxu0 %v749
      %v1049 = vpop.f32.mrb[0].mxu0
      %v1050 = vadd.f32 %v368, %v1049
      %v1051 = vpop.f32.mrb[0].mxu0
      %v1052 = vpop.f32.mrb[0].mxu0
      %v1053 = vadd.f32 %v368, %v1052
      %v1054 = vpop.f32.mrb[0].mxu0
      %1055 = vmatprep.mubr.bf16.mxu0 0
      %1056 = vmatmul.mubr.bf16.gmra.mrb[0].mxu0 %v752
      %v1057 = vpop.f32.mrb[0].mxu0
      %v1058 = vadd.f32 %v368, %v1057
      %v1059 = vpop.f32.mrb[0].mxu0
      %v1060 = vpop.f32.mrb[0].mxu0
      %v1061 = vadd.f32 %v368, %v1060
      %v1062 = vpop.f32.mrb[0].mxu0
      %1063 = vmatprep.mubr.bf16.mxu0 0
      %1064 = vmatmul.mubr.bf16.gmra.mrb[0].mxu0 %v755
      %v1065 = vpop.f32.mrb[0].mxu0
      %v1066 = vadd.f32 %v368, %v1065
      %v1067 = vpop.f32.mrb[0].mxu0
      %v1068 = vpop.f32.mrb[0].mxu0
      %v1069 = vadd.f32 %v368, %v1068
      %v1070 = vpop.f32.mrb[0].mxu0
      %1071 = vmatprep.mubr.bf16.mxu0 0
      %1072 = vmatmul.mubr.bf16.gmra.mrb[0].mxu0 %v758
      %v1073 = vpop.f32.mrb[0].mxu0
      %v1074 = vadd.f32 %v368, %v1073
      %v1075 = vpop.f32.mrb[0].mxu0
      %v1076 = vpop.f32.mrb[0].mxu0
      %v1077 = vadd.f32 %v368, %v1076
      %v1078 = vpop.f32.mrb[0].mxu0
      %1079 = vmatprep.mubr.bf16.mxu0 0
      %1080 = vmatmul.mubr.bf16.gmra.mrb[0].mxu0 %v761
      %v1081 = vpop.f32.mrb[0].mxu0
      %v1082 = vadd.f32 %v368, %v1081
      %v1083 = vpop.f32.mrb[0].mxu0
      %v1084 = vpop.f32.mrb[0].mxu0
      %v1085 = vadd.f32 %v368, %v1084
      %v1086 = vpop.f32.mrb[0].mxu0
      %1087 = vmatprep.mubr.bf16.mxu0 0
      %1088 = vmatmul.mubr.bf16.gmra.mrb[0].mxu0 %v764
      %v1089 = vpop.f32.mrb[0].mxu0
      %v1090 = vadd.f32 %v368, %v1089
      %v1091 = vpop.f32.mrb[0].mxu0
      %v1092 = vpop.f32.mrb[0].mxu0
      %v1093 = vadd.f32 %v368, %v1092
      %v1094 = vpop.f32.mrb[0].mxu0
      %1095 = vmatprep.mubr.bf16.mxu0 0
      %1096 = vmatmul.mubr.bf16.gmra.mrb[0].mxu0 %v767
      %v1097 = vpop.f32.mrb[0].mxu0
      %v1098 = vadd.f32 %v368, %v1097
      %v1099 = vpop.f32.mrb[0].mxu0
      %v1100 = vpop.f32.mrb[0].mxu0
      %v1101 = vadd.f32 %v368, %v1100
      %v1102 = vpop.f32.mrb[0].mxu0
      %1103 = vmatprep.mubr.bf16.mxu0 0
      %1104 = vmatmul.mubr.bf16.gmra.mrb[0].mxu0 %v770
      %v1105 = vpop.f32.mrb[0].mxu0
      %v1106 = vadd.f32 %v368, %v1105
      %v1107 = vpop.f32.mrb[0].mxu0
      %v1108 = vpop.f32.mrb[0].mxu0
      %v1109 = vadd.f32 %v368, %v1108
      %v1110 = vpop.f32.mrb[0].mxu0
      %1111 = vmatprep.mubr.bf16.mxu0 0
      %1112 = vmatmul.mubr.bf16.gmra.mrb[0].mxu0 %v773
      %v1113 = vpop.f32.mrb[0].mxu0
      %v1114 = vadd.f32 %v368, %v1113
      %v1115 = vpop.f32.mrb[0].mxu0
      %v1116 = vpop.f32.mrb[0].mxu0
      %v1117 = vadd.f32 %v368, %v1116
      %v1118 = vpop.f32.mrb[0].mxu0
      %1119 = vmatprep.mubr.bf16.mxu0 0
      %1120 = vmatmul.mubr.bf16.gmra.mrb[0].mxu0 %v776
      %v1121 = vpop.f32.mrb[0].mxu0
      %v1122 = vadd.f32 %v368, %v1121
      %v1123 = vpop.f32.mrb[0].mxu0
      %v1124 = vpop.f32.mrb[0].mxu0
      %v1125 = vadd.f32 %v368, %v1124
      %v1126 = vpop.f32.mrb[0].mxu0
      %1127 = vmatprep.mubr.bf16.mxu0 0
      %1128 = vmatmul.mubr.bf16.gmra.mrb[0].mxu0 %v779
      %v1129 = vpop.f32.mrb[0].mxu0
      %v1130 = vadd.f32 %v368, %v1129
      %v1131 = vpop.f32.mrb[0].mxu0
      %v1132 = vpop.f32.mrb[0].mxu0
      %v1133 = vadd.f32 %v368, %v1132
      %v1134 = vpop.f32.mrb[0].mxu0
      %1135 = vmatprep.mubr.bf16.mxu0 0
      %1136 = vmatmul.mubr.bf16.gmra.mrb[0].mxu0 %v782
      %v1137 = vpop.f32.mrb[0].mxu0
      %v1138 = vadd.f32 %v368, %v1137
      %v1139 = vpop.f32.mrb[0].mxu0
      %v1140 = vpop.f32.mrb[0].mxu0
      %v1141 = vadd.f32 %v368, %v1140
      %v1142 = vpop.f32.mrb[0].mxu0
      %1143 = vmatprep.mubr.bf16.mxu0 0
      %1144 = vmatmul.mubr.bf16.gmra.mrb[0].mxu0 %v785
      %v1145 = vpop.f32.mrb[0].mxu0
      %v1146 = vadd.f32 %v368, %v1145
      %v1147 = vpop.f32.mrb[0].mxu0
      %v1148 = vpop.f32.mrb[0].mxu0
      %v1149 = vadd.f32 %v368, %v1148
      %v1150 = vpop.f32.mrb[0].mxu0
      %1151 = vmatprep.mubr.bf16.mxu0 0
      %1152 = vmatmul.mubr.bf16.gmra.mrb[0].mxu0 %v788
      %v1153 = vpop.f32.mrb[0].mxu0
      %v1154 = vadd.f32 %v368, %v1153
      %v1155 = vpop.f32.mrb[0].mxu0
      %v1156 = vpop.f32.mrb[0].mxu0
      %v1157 = vadd.f32 %v368, %v1156
      %v1158 = vpop.f32.mrb[0].mxu0
      %1159 = vmatprep.mubr.bf16.mxu0 0
      %1160 = vmatmul.mubr.bf16.gmra.mrb[0].mxu0 %v791
      %v1161 = vpop.f32.mrb[0].mxu0
      %v1162 = vadd.f32 %v368, %v1161
      %v1163 = vpop.f32.mrb[0].mxu0
      %v1164 = vpop.f32.mrb[0].mxu0
      %v1165 = vadd.f32 %v368, %v1164
      %v1166 = vpop.f32.mrb[0].mxu0
      %1167 = vmatprep.mubr.bf16.mxu0 0
      %1168 = vmatmul.mubr.bf16.gmra.mrb[0].mxu0 %v794
      %v1169 = vpop.f32.mrb[0].mxu0
      %v1170 = vadd.f32 %v368, %v1169
      %v1171 = vpop.f32.mrb[0].mxu0
      %v1172 = vpop.f32.mrb[0].mxu0
      %v1173 = vadd.f32 %v368, %v1172
      %v1174 = vpop.f32.mrb[0].mxu0
      %1175 = vmatprep.mubr.bf16.mxu0 0
      %1176 = vmatmul.mubr.bf16.gmra.mrb[0].mxu0 %v797
      %v1177 = vpop.f32.mrb[0].mxu0
      %v1178 = vadd.f32 %v368, %v1177
      %v1179 = vpop.f32.mrb[0].mxu0
      %v1180 = vpop.f32.mrb[0].mxu0
      %v1181 = vadd.f32 %v368, %v1180
      %v1182 = vpop.f32.mrb[0].mxu0
      %1183 = vmatprep.mubr.bf16.mxu0 0
      %1184 = vmatmul.mubr.bf16.gmra.mrb[0].mxu0 %v800
      %v1185 = vpop.f32.mrb[0].mxu0
      %v1186 = vadd.f32 %v368, %v1185
      %v1187 = vpop.f32.mrb[0].mxu0
      %v1188 = vpop.f32.mrb[0].mxu0
      %v1189 = vadd.f32 %v368, %v1188
      %v1190 = vpop.f32.mrb[0].mxu0
      %1191 = vmatprep.mubr.bf16.mxu0 0
      %1192 = vmatmul.mubr.bf16.gmra.mrb[0].mxu0 %v803
      %v1193 = vpop.f32.mrb[0].mxu0
      %v1194 = vadd.f32 %v368, %v1193
      %v1195 = vpop.f32.mrb[0].mxu0
      %v1196 = vpop.f32.mrb[0].mxu0
      %v1197 = vadd.f32 %v368, %v1196
      %v1198 = vpop.f32.mrb[0].mxu0
      %1199 = vmatprep.mubr.bf16.mxu0 0
      %1200 = vmatmul.mubr.bf16.gmra.mrb[0].mxu0 %v806
      %v1201 = vpop.f32.mrb[0].mxu0
      %v1202 = vadd.f32 %v368, %v1201
      %v1203 = vpop.f32.mrb[0].mxu0
      %v1204 = vpop.f32.mrb[0].mxu0
      %v1205 = vadd.f32 %v368, %v1204
      %v1206 = vpop.f32.mrb[0].mxu0
      %1207 = vmatprep.mubr.bf16.mxu0 0
      %1208 = vmatmul.mubr.bf16.gmra.mrb[0].mxu0 %v809
      %v1209 = vpop.f32.mrb[0].mxu0
      %v1210 = vadd.f32 %v368, %v1209
      %v1211 = vpop.f32.mrb[0].mxu0
      %v1212 = vpop.f32.mrb[0].mxu0
      %v1213 = vadd.f32 %v368, %v1212
      %v1214 = vpop.f32.mrb[0].mxu0
      %1215 = vmatprep.mubr.bf16.mxu0 0
      %1216 = vmatmul.mubr.bf16.gmra.mrb[0].mxu0 %v812
      %v1217 = vpop.f32.mrb[0].mxu0
      %v1218 = vadd.f32 %v368, %v1217
      %v1219 = vpop.f32.mrb[0].mxu0
      %v1220 = vpop.f32.mrb[0].mxu0
      %v1221 = vadd.f32 %v368, %v1220
      %v1222 = vpop.f32.mrb[0].mxu0
      %1223 = vmatprep.mubr.bf16.mxu0 0
      %1224 = vmatmul.mubr.bf16.gmra.mrb[0].mxu0 %v815
      %v1225 = vpop.f32.mrb[0].mxu0
      %v1226 = vadd.f32 %v368, %v1225
      %v1227 = vpop.f32.mrb[0].mxu0
      %v1228 = vpop.f32.mrb[0].mxu0
      %v1229 = vadd.f32 %v368, %v1228
      %v1230 = vpop.f32.mrb[0].mxu0
      %1231 = vmatprep.mubr.bf16.mxu0 0
      %1232 = vmatmul.mubr.bf16.gmra.mrb[0].mxu0 %v818
      %v1233 = vpop.f32.mrb[0].mxu0
      %v1234 = vadd.f32 %v368, %v1233
      %v1235 = vpop.f32.mrb[0].mxu0
      %v1236 = vpop.f32.mrb[0].mxu0
      %v1237 = vadd.f32 %v368, %v1236
      %v1238 = vpop.f32.mrb[0].mxu0
      %1239 = vmatprep.mubr.bf16.mxu0 0
      %1240 = vmatmul.mubr.bf16.gmra.mrb[0].mxu0 %v821
      %v1241 = vpop.f32.mrb[0].mxu0
      %v1242 = vadd.f32 %v368, %v1241
      %v1243 = vpop.f32.mrb[0].mxu0
      %v1244 = vpop.f32.mrb[0].mxu0
      %v1245 = vadd.f32 %v368, %v1244
      %v1246 = vpop.f32.mrb[0].mxu0
      %1247 = vmatprep.mubr.bf16.mxu0 0
      %1248 = vmatmul.mubr.bf16.gmra.mrb[0].mxu0 %v824
      %v1249 = vpop.f32.mrb[0].mxu0
      %v1250 = vadd.f32 %v368, %v1249
      %v1251 = vpop.f32.mrb[0].mxu0
      %v1252 = vpop.f32.mrb[0].mxu0
      %v1253 = vadd.f32 %v368, %v1252
      %v1254 = vpop.f32.mrb[0].mxu0
      %1255 = vmatprep.mubr.bf16.mxu0 0
      %1256 = vmatmul.mubr.bf16.gmra.mrb[0].mxu0 %v827
      %v1257 = vpop.f32.mrb[0].mxu0
      %v1258 = vadd.f32 %v368, %v1257
      %v1259 = vpop.f32.mrb[0].mxu0
      %v1260 = vpop.f32.mrb[0].mxu0
      %v1261 = vadd.f32 %v368, %v1260
      %v1262 = vpop.f32.mrb[0].mxu0
      %1263 = vmatprep.mubr.bf16.mxu0 0
      %1264 = vmatmul.mubr.bf16.gmra.mrb[0].mxu0 %v830
      %v1265 = vpop.f32.mrb[0].mxu0
      %v1266 = vadd.f32 %v368, %v1265
      %v1267 = vpop.f32.mrb[0].mxu0
      %v1268 = vpop.f32.mrb[0].mxu0
      %v1269 = vadd.f32 %v368, %v1268
      %v1270 = vpop.f32.mrb[0].mxu0
      %1271 = vmatprep.mubr.bf16.mxu0 0
      %1272 = vmatmul.mubr.bf16.gmra.mrb[0].mxu0 %v833
      %v1273 = vpop.f32.mrb[0].mxu0
      %v1274 = vadd.f32 %v368, %v1273
      %v1275 = vpop.f32.mrb[0].mxu0
      %v1276 = vpop.f32.mrb[0].mxu0
      %v1277 = vadd.f32 %v368, %v1276
      %v1278 = vpop.f32.mrb[0].mxu0
      %1279 = vmatprep.mubr.bf16.mxu0 0
      %1280 = vmatmul.mubr.bf16.gmra.mrb[0].mxu0 %v836
      %v1281 = vpop.f32.mrb[0].mxu0
      %v1282 = vadd.f32 %v368, %v1281
      %v1283 = vpop.f32.mrb[0].mxu0
      %v1284 = vpop.f32.mrb[0].mxu0
      %v1285 = vadd.f32 %v368, %v1284
      %v1286 = vpop.f32.mrb[0].mxu0
      %1287 = vmatprep.mubr.bf16.mxu0 0
      %1288 = vmatmul.mubr.bf16.gmra.mrb[0].mxu0 %v839
      %v1289 = vpop.f32.mrb[0].mxu0
      %v1290 = vadd.f32 %v368, %v1289
      %v1291 = vpop.f32.mrb[0].mxu0
      %v1292 = vpop.f32.mrb[0].mxu0
      %v1293 = vadd.f32 %v368, %v1292
      %v1294 = vpop.f32.mrb[0].mxu0
      %1295 = vmatprep.mubr.bf16.mxu0 0
      %1296 = vmatmul.mubr.bf16.gmra.mrb[0].mxu0 %v842
      %v1297 = vpop.f32.mrb[0].mxu0
      %v1298 = vadd.f32 %v368, %v1297
      %v1299 = vpop.f32.mrb[0].mxu0
      %v1300 = vpop.f32.mrb[0].mxu0
      %v1301 = vadd.f32 %v368, %v1300
      %v1302 = vpop.f32.mrb[0].mxu0
      %1303 = vmatprep.mubr.bf16.mxu0 0
      %1304 = vmatmul.mubr.bf16.gmra.mrb[0].mxu0 %v845
      %v1305 = vpop.f32.mrb[0].mxu0
      %v1306 = vadd.f32 %v368, %v1305
      %v1307 = vpop.f32.mrb[0].mxu0
      %v1308 = vpop.f32.mrb[0].mxu0
      %v1309 = vadd.f32 %v368, %v1308
      %v1310 = vpop.f32.mrb[0].mxu0
      %1311 = vmatprep.mubr.bf16.mxu0 0
      %1312 = vmatmul.mubr.bf16.gmra.mrb[0].mxu0 %v848
      %v1313 = vpop.f32.mrb[0].mxu0
      %v1314 = vadd.f32 %v368, %v1313
      %v1315 = vpop.f32.mrb[0].mxu0
      %v1316 = vpop.f32.mrb[0].mxu0
      %v1317 = vadd.f32 %v368, %v1316
      %v1318 = vpop.f32.mrb[0].mxu0
      %1319 = vmatprep.mubr.bf16.mxu0 0
      %1320 = vmatmul.mubr.bf16.gmra.mrb[0].mxu0 %v851
      %v1321 = vpop.f32.mrb[0].mxu0
      %v1322 = vadd.f32 %v368, %v1321
      %v1323 = vpop.f32.mrb[0].mxu0
      %v1324 = vpop.f32.mrb[0].mxu0
      %v1325 = vadd.f32 %v368, %v1324
      %v1326 = vpop.f32.mrb[0].mxu0
      %1327 = vmatprep.mubr.bf16.mxu0 0
      %1328 = vmatmul.mubr.bf16.gmra.mrb[0].mxu0 %v854
      %v1329 = vpop.f32.mrb[0].mxu0
      %v1330 = vadd.f32 %v368, %v1329
      %v1331 = vpop.f32.mrb[0].mxu0
      %v1332 = vpop.f32.mrb[0].mxu0
      %v1333 = vadd.f32 %v368, %v1332
      %v1334 = vpop.f32.mrb[0].mxu0
      %1335 = vmatprep.mubr.bf16.mxu0 0
      %1336 = vmatmul.mubr.bf16.gmra.mrb[0].mxu0 %v857
      %v1337 = vpop.f32.mrb[0].mxu0
      %v1338 = vadd.f32 %v368, %v1337
      %v1339 = vpop.f32.mrb[0].mxu0
      %v1340 = vpop.f32.mrb[0].mxu0
      %v1341 = vadd.f32 %v368, %v1340
      %v1342 = vpop.f32.mrb[0].mxu0
      %1343 = vmatprep.mubr.bf16.mxu0 0
      %1344 = vmatmul.mubr.bf16.gmra.mrb[0].mxu0 %v860
      %v1345 = vpop.f32.mrb[0].mxu0
      %v1346 = vadd.f32 %v368, %v1345
      %v1347 = vpop.f32.mrb[0].mxu0
      %v1348 = vpop.f32.mrb[0].mxu0
      %v1349 = vadd.f32 %v368, %v1348
      %v1350 = vpop.f32.mrb[0].mxu0
      %1351 = vmatprep.mubr.bf16.mxu0 0
      %1352 = vmatmul.mubr.bf16.gmra.mrb[0].mxu0 %v863
      %v1353 = vpop.f32.mrb[0].mxu0
      %v1354 = vadd.f32 %v368, %v1353
      %v1355 = vpop.f32.mrb[0].mxu0
      %v1356 = vpop.f32.mrb[0].mxu0
      %v1357 = vadd.f32 %v368, %v1356
      %v1358 = vpop.f32.mrb[0].mxu0
      %1359 = vmatprep.mubr.bf16.mxu0 0
      %1360 = vmatmul.mubr.bf16.gmra.mrb[0].mxu0 %v866
      %v1361 = vpop.f32.mrb[0].mxu0
      %v1362 = vadd.f32 %v368, %v1361
      %v1363 = vpop.f32.mrb[0].mxu0
      %v1364 = vpop.f32.mrb[0].mxu0
      %v1365 = vadd.f32 %v368, %v1364
      %v1366 = vpop.f32.mrb[0].mxu0
      %1367 = vmatprep.mubr.bf16.mxu0 0
      %1368 = vmatmul.mubr.bf16.gmra.mrb[0].mxu0 %v869
      %v1369 = vpop.f32.mrb[0].mxu0
      %v1370 = vadd.f32 %v368, %v1369
      %v1371 = vpop.f32.mrb[0].mxu0
      %v1372 = vpop.f32.mrb[0].mxu0
      %v1373 = vadd.f32 %v368, %v1372
      %v1374 = vpop.f32.mrb[0].mxu0
      %1375 = vmatprep.mubr.bf16.mxu0 0
      %1376 = vmatmul.mubr.bf16.gmra.mrb[0].mxu0 %v872
      %v1377 = vpop.f32.mrb[0].mxu0
      %v1378 = vadd.f32 %v368, %v1377
      %v1379 = vpop.f32.mrb[0].mxu0
      %v1380 = vpop.f32.mrb[0].mxu0
      %v1381 = vadd.f32 %v368, %v1380
      %v1382 = vpop.f32.mrb[0].mxu0
      %1383 = vmatprep.mubr.bf16.mxu0 0
      %1384 = vmatmul.mubr.bf16.gmra.mrb[0].mxu0 %v875
      %v1385 = vpop.f32.mrb[0].mxu0
      %v1386 = vadd.f32 %v368, %v1385
      %v1387 = vpop.f32.mrb[0].mxu0
      %v1388 = vpop.f32.mrb[0].mxu0
      %v1389 = vadd.f32 %v368, %v1388
      %v1390 = vpop.f32.mrb[0].mxu0
      %1391 = vmatprep.mubr.bf16.mxu0 0
      %1392 = vmatmul.mubr.bf16.gmra.mrb[0].mxu0 %v878
      %v1393 = vpop.f32.mrb[0].mxu0
      %v1394 = vadd.f32 %v368, %v1393
      %v1395 = vpop.f32.mrb[0].mxu0
      %v1396 = vpop.f32.mrb[0].mxu0
      %v1397 = vadd.f32 %v368, %v1396
      %v1398 = vpop.f32.mrb[0].mxu0
      %1399 = vmatprep.mubr.bf16.mxu0 0
      %1400 = vmatmul.mubr.bf16.gmra.mrb[0].mxu0 %v881
      %v1401 = vpop.f32.mrb[0].mxu0
      %v1402 = vadd.f32 %v368, %v1401
      %v1403 = vpop.f32.mrb[0].mxu0
      %v1404 = vpop.f32.mrb[0].mxu0
      %v1405 = vadd.f32 %v368, %v1404
      %v1406 = vpop.f32.mrb[0].mxu0
      %1407 = vmatprep.mubr.bf16.mxu0 0
      %1408 = vmatmul.mubr.bf16.gmra.mrb[0].mxu0 %v884
      %v1409 = vpop.f32.mrb[0].mxu0
      %v1410 = vadd.f32 %v368, %v1409
      %v1411 = vpop.f32.mrb[0].mxu0
      %v1412 = vpop.f32.mrb[0].mxu0
      %v1413 = vadd.f32 %v368, %v1412
      %v1414 = vpop.f32.mrb[0].mxu0
      %1415 = vmatprep.mubr.bf16.mxu0 0
      %1416 = vmatmul.mubr.bf16.gmra.mrb[0].mxu0 %v887
      %v1417 = vpop.f32.mrb[0].mxu0
      %v1418 = vadd.f32 %v368, %v1417
      %v1419 = vpop.f32.mrb[0].mxu0
      %v1420 = vpop.f32.mrb[0].mxu0
      %v1421 = vadd.f32 %v368, %v1420
      %v1422 = vpop.f32.mrb[0].mxu0
      %1423 = vmatprep.mubr.bf16.mxu0 0
      %1424 = vmatmul.mubr.bf16.gmra.mrb[0].mxu0 %v890
      %v1425 = vpop.f32.mrb[0].mxu0
      %v1426 = vadd.f32 %v368, %v1425
      %v1427 = vpop.f32.mrb[0].mxu0
      %v1428 = vpop.f32.mrb[0].mxu0
      %v1429 = vadd.f32 %v368, %v1428
      %v1430 = vpop.f32.mrb[0].mxu0
      %1431 = vmatprep.mubr.bf16.mxu0 0
      %1432 = vmatmul.mubr.bf16.gmra.mrb[0].mxu0 %v893
      %v1433 = vpop.f32.mrb[0].mxu0
      %v1434 = vadd.f32 %v368, %v1433
      %v1435 = vpop.f32.mrb[0].mxu0
      %v1436 = vpop.f32.mrb[0].mxu0
      %v1437 = vadd.f32 %v368, %v1436
      %v1438 = vpop.f32.mrb[0].mxu0
      %1439 = vdwg.mxu0
      %v1440 = vtanh.pop %v930
      %v1441 = vtanh.pop %v933
      %v1442 = vtanh.pop %v938
      %v1443 = vtanh.pop %v941
      %v1444 = vtanh.pop %v946
      %v1445 = vtanh.pop %v949
      %v1446 = vtanh.pop %v954
      %v1447 = vtanh.pop %v957
      %v1448 = vtanh.pop %v962
      %v1449 = vtanh.pop %v965
      %v1450 = vtanh.pop %v970
      %v1451 = vtanh.pop %v973
      %v1452 = vtanh.pop %v978
      %v1453 = vtanh.pop %v981
      %v1454 = vtanh.pop %v986
      %v1455 = vtanh.pop %v989
      %v1456 = vtanh.pop %v994
      %v1457 = vtanh.pop %v997
      %v1458 = vtanh.pop %v1002
      %v1459 = vtanh.pop %v1005
      %v1460 = vtanh.pop %v1010
      %v1461 = vtanh.pop %v1013
      %v1462 = vtanh.pop %v1018
      %v1463 = vtanh.pop %v1021
      %v1464 = vtanh.pop %v1026
      %v1465 = vtanh.pop %v1029
      %v1466 = vtanh.pop %v1034
      %v1467 = vtanh.pop %v1037
      %v1468 = vtanh.pop %v1042
      %v1469 = vtanh.pop %v1045
      %v1470 = vtanh.pop %v1050
      %v1471 = vtanh.pop %v1053
      %v1472 = vtanh.pop %v1058
      %v1473 = vtanh.pop %v1061
      %v1474 = vtanh.pop %v1066
      %v1475 = vtanh.pop %v1069
      %v1476 = vtanh.pop %v1074
      %v1477 = vtanh.pop %v1077
      %v1478 = vtanh.pop %v1082
      %v1479 = vtanh.pop %v1085
      %v1480 = vtanh.pop %v1090
      %v1481 = vtanh.pop %v1093
      %v1482 = vtanh.pop %v1098
      %v1483 = vtanh.pop %v1101
      %v1484 = vtanh.pop %v1106
      %v1485 = vtanh.pop %v1109
      %v1486 = vtanh.pop %v1114
      %v1487 = vtanh.pop %v1117
      %v1488 = vtanh.pop %v1122
      %v1489 = vtanh.pop %v1125
      %v1490 = vtanh.pop %v1130
      %v1491 = vtanh.pop %v1133
      %v1492 = vtanh.pop %v1138
      %v1493 = vtanh.pop %v1141
      %v1494 = vtanh.pop %v1146
      %v1495 = vtanh.pop %v1149
      %v1496 = vtanh.pop %v1154
      %v1497 = vtanh.pop %v1157
      %v1498 = vtanh.pop %v1162
      %v1499 = vtanh.pop %v1165
      %v1500 = vtanh.pop %v1170
      %v1501 = vtanh.pop %v1173
      %v1502 = vtanh.pop %v1178
      %v1503 = vtanh.pop %v1181
      %v1504 = vtanh.pop %v1186
      %v1505 = vtanh.pop %v1189
      %v1506 = vtanh.pop %v1194
      %v1507 = vtanh.pop %v1197
      %v1508 = vtanh.pop %v1202
      %v1509 = vtanh.pop %v1205
      %v1510 = vtanh.pop %v1210
      %v1511 = vtanh.pop %v1213
      %v1512 = vtanh.pop %v1218
      %v1513 = vtanh.pop %v1221
      %v1514 = vtanh.pop %v1226
      %v1515 = vtanh.pop %v1229
      %v1516 = vtanh.pop %v1234
      %v1517 = vtanh.pop %v1237
      %v1518 = vtanh.pop %v1242
      %v1519 = vtanh.pop %v1245
      %v1520 = vtanh.pop %v1250
      %v1521 = vtanh.pop %v1253
      %v1522 = vtanh.pop %v1258
      %v1523 = vtanh.pop %v1261
      %v1524 = vtanh.pop %v1266
      %v1525 = vtanh.pop %v1269
      %v1526 = vtanh.pop %v1274
      %v1527 = vtanh.pop %v1277
      %v1528 = vtanh.pop %v1282
      %v1529 = vtanh.pop %v1285
      %v1530 = vtanh.pop %v1290
      %v1531 = vtanh.pop %v1293
      %v1532 = vtanh.pop %v1298
      %v1533 = vtanh.pop %v1301
      %v1534 = vtanh.pop %v1306
      %v1535 = vtanh.pop %v1309
      %v1536 = vtanh.pop %v1314
      %v1537 = vtanh.pop %v1317
      %v1538 = vtanh.pop %v1322
      %v1539 = vtanh.pop %v1325
      %v1540 = vtanh.pop %v1330
      %v1541 = vtanh.pop %v1333
      %v1542 = vtanh.pop %v1338
      %v1543 = vtanh.pop %v1341
      %v1544 = vtanh.pop %v1346
      %v1545 = vtanh.pop %v1349
      %v1546 = vtanh.pop %v1354
      %v1547 = vtanh.pop %v1357
      %v1548 = vtanh.pop %v1362
      %v1549 = vtanh.pop %v1365
      %v1550 = vtanh.pop %v1370
      %v1551 = vtanh.pop %v1373
      %v1552 = vtanh.pop %v1378
      %v1553 = vtanh.pop %v1381
      %v1554 = vtanh.pop %v1386
      %v1555 = vtanh.pop %v1389
      %v1556 = vtanh.pop %v1394
      %v1557 = vtanh.pop %v1397
      %v1558 = vtanh.pop %v1402
      %v1559 = vtanh.pop %v1405
      %v1560 = vtanh.pop %v1410
      %v1561 = vtanh.pop %v1413
      %v1562 = vtanh.pop %v1418
      %v1563 = vtanh.pop %v1421
      %v1564 = vtanh.pop %v1426
      %v1565 = vtanh.pop %v1429
      %v1566 = vtanh.pop %v1434
      %v1567 = vtanh.pop %v1437
      %1568 = vst [vmem:[%s228] sm:$0xff] %v1440
      %1569 = vst [vmem:[%s228 + $0x8] sm:$0xff] %v1441
      %1570 = vst [vmem:[%s228 + $0x10] sm:$0xff] %v1442
      %1571 = vst [vmem:[%s228 + $0x18] sm:$0xff] %v1443
      %1572 = vst [vmem:[%s228 + $0x20] sm:$0xff] %v1444
      %1573 = vst [vmem:[%s228 + $0x28] sm:$0xff] %v1445
      %1574 = vst [vmem:[%s228 + $0x30] sm:$0xff] %v1446
      %1575 = vst [vmem:[%s228 + $0x38] sm:$0xff] %v1447
      %1576 = vst [vmem:[%s228 + $0x40] sm:$0xff] %v1448
      %1577 = vst [vmem:[%s228 + $0x48] sm:$0xff] %v1449
      %1578 = vst [vmem:[%s228 + $0x50] sm:$0xff] %v1450
      %1579 = vst [vmem:[%s228 + $0x58] sm:$0xff] %v1451
      %1580 = vst [vmem:[%s228 + $0x60] sm:$0xff] %v1452
      %1581 = vst [vmem:[%s228 + $0x68] sm:$0xff] %v1453
      %1582 = vst [vmem:[%s228 + $0x70] sm:$0xff] %v1454
      %1583 = vst [vmem:[%s228 + $0x78] sm:$0xff] %v1455
      %1584 = vst [vmem:[%s228 + $0x80] sm:$0xff] %v1456
      %1585 = vst [vmem:[%s228 + $0x88] sm:$0xff] %v1457
      %1586 = vst [vmem:[%s228 + $0x90] sm:$0xff] %v1458
      %1587 = vst [vmem:[%s228 + $0x98] sm:$0xff] %v1459
      %1588 = vst [vmem:[%s228 + $0xa0] sm:$0xff] %v1460
      %1589 = vst [vmem:[%s228 + $0xa8] sm:$0xff] %v1461
      %1590 = vst [vmem:[%s228 + $0xb0] sm:$0xff] %v1462
      %1591 = vst [vmem:[%s228 + $0xb8] sm:$0xff] %v1463
      %1592 = vst [vmem:[%s228 + $0xc0] sm:$0xff] %v1464
      %1593 = vst [vmem:[%s228 + $0xc8] sm:$0xff] %v1465
      %1594 = vst [vmem:[%s228 + $0xd0] sm:$0xff] %v1466
      %1595 = vst [vmem:[%s228 + $0xd8] sm:$0xff] %v1467
      %1596 = vst [vmem:[%s228 + $0xe0] sm:$0xff] %v1468
      %1597 = vst [vmem:[%s228 + $0xe8] sm:$0xff] %v1469
      %1598 = vst [vmem:[%s228 + $0xf0] sm:$0xff] %v1470
      %1599 = vst [vmem:[%s228 + $0xf8] sm:$0xff] %v1471
      %1600 = vst [vmem:[%s228 + $0x100] sm:$0xff] %v1472
      %1601 = vst [vmem:[%s228 + $0x108] sm:$0xff] %v1473
      %1602 = vst [vmem:[%s228 + $0x110] sm:$0xff] %v1474
      %1603 = vst [vmem:[%s228 + $0x118] sm:$0xff] %v1475
      %1604 = vst [vmem:[%s228 + $0x120] sm:$0xff] %v1476
      %1605 = vst [vmem:[%s228 + $0x128] sm:$0xff] %v1477
      %1606 = vst [vmem:[%s228 + $0x130] sm:$0xff] %v1478
      %1607 = vst [vmem:[%s228 + $0x138] sm:$0xff] %v1479
      %1608 = vst [vmem:[%s228 + $0x140] sm:$0xff] %v1480
      %1609 = vst [vmem:[%s228 + $0x148] sm:$0xff] %v1481
      %1610 = vst [vmem:[%s228 + $0x150] sm:$0xff] %v1482
      %1611 = vst [vmem:[%s228 + $0x158] sm:$0xff] %v1483
      %1612 = vst [vmem:[%s228 + $0x160] sm:$0xff] %v1484
      %1613 = vst [vmem:[%s228 + $0x168] sm:$0xff] %v1485
      %1614 = vst [vmem:[%s228 + $0x170] sm:$0xff] %v1486
      %1615 = vst [vmem:[%s228 + $0x178] sm:$0xff] %v1487
      %1616 = vst [vmem:[%s228 + $0x180] sm:$0xff] %v1488
      %1617 = vst [vmem:[%s228 + $0x188] sm:$0xff] %v1489
      %1618 = vst [vmem:[%s228 + $0x190] sm:$0xff] %v1490
      %1619 = vst [vmem:[%s228 + $0x198] sm:$0xff] %v1491
      %1620 = vst [vmem:[%s228 + $0x1a0] sm:$0xff] %v1492
      %1621 = vst [vmem:[%s228 + $0x1a8] sm:$0xff] %v1493
      %1622 = vst [vmem:[%s228 + $0x1b0] sm:$0xff] %v1494
      %1623 = vst [vmem:[%s228 + $0x1b8] sm:$0xff] %v1495
      %1624 = vst [vmem:[%s228 + $0x1c0] sm:$0xff] %v1496
      %1625 = vst [vmem:[%s228 + $0x1c8] sm:$0xff] %v1497
      %1626 = vst [vmem:[%s228 + $0x1d0] sm:$0xff] %v1498
      %1627 = vst [vmem:[%s228 + $0x1d8] sm:$0xff] %v1499
      %1628 = vst [vmem:[%s228 + $0x1e0] sm:$0xff] %v1500
      %1629 = vst [vmem:[%s228 + $0x1e8] sm:$0xff] %v1501
      %1630 = vst [vmem:[%s228 + $0x1f0] sm:$0xff] %v1502
      %1631 = vst [vmem:[%s228 + $0x1f8] sm:$0xff] %v1503
      %1632 = vst [vmem:[%s228 + $0x200] sm:$0xff] %v1504
      %1633 = vst [vmem:[%s228 + $0x208] sm:$0xff] %v1505
      %1634 = vst [vmem:[%s228 + $0x210] sm:$0xff] %v1506
      %1635 = vst [vmem:[%s228 + $0x218] sm:$0xff] %v1507
      %1636 = vst [vmem:[%s228 + $0x220] sm:$0xff] %v1508
      %1637 = vst [vmem:[%s228 + $0x228] sm:$0xff] %v1509
      %1638 = vst [vmem:[%s228 + $0x230] sm:$0xff] %v1510
      %1639 = vst [vmem:[%s228 + $0x238] sm:$0xff] %v1511
      %1640 = vst [vmem:[%s228 + $0x240] sm:$0xff] %v1512
      %1641 = vst [vmem:[%s228 + $0x248] sm:$0xff] %v1513
      %1642 = vst [vmem:[%s228 + $0x250] sm:$0xff] %v1514
      %1643 = vst [vmem:[%s228 + $0x258] sm:$0xff] %v1515
      %1644 = vst [vmem:[%s228 + $0x260] sm:$0xff] %v1516
      %1645 = vst [vmem:[%s228 + $0x268] sm:$0xff] %v1517
      %1646 = vst [vmem:[%s228 + $0x270] sm:$0xff] %v1518
      %1647 = vst [vmem:[%s228 + $0x278] sm:$0xff] %v1519
      %1648 = vst [vmem:[%s228 + $0x280] sm:$0xff] %v1520
      %1649 = vst [vmem:[%s228 + $0x288] sm:$0xff] %v1521
      %1650 = vst [vmem:[%s228 + $0x290] sm:$0xff] %v1522
      %1651 = vst [vmem:[%s228 + $0x298] sm:$0xff] %v1523
      %1652 = vst [vmem:[%s228 + $0x2a0] sm:$0xff] %v1524
      %1653 = vst [vmem:[%s228 + $0x2a8] sm:$0xff] %v1525
      %1654 = vst [vmem:[%s228 + $0x2b0] sm:$0xff] %v1526
      %1655 = vst [vmem:[%s228 + $0x2b8] sm:$0xff] %v1527
      %1656 = vst [vmem:[%s228 + $0x2c0] sm:$0xff] %v1528
      %1657 = vst [vmem:[%s228 + $0x2c8] sm:$0xff] %v1529
      %1658 = vst [vmem:[%s228 + $0x2d0] sm:$0xff] %v1530
      %1659 = vst [vmem:[%s228 + $0x2d8] sm:$0xff] %v1531
      %1660 = vst [vmem:[%s228 + $0x2e0] sm:$0xff] %v1532
      %1661 = vst [vmem:[%s228 + $0x2e8] sm:$0xff] %v1533
      %1662 = vst [vmem:[%s228 + $0x2f0] sm:$0xff] %v1534
      %1663 = vst [vmem:[%s228 + $0x2f8] sm:$0xff] %v1535
      %1664 = vst [vmem:[%s228 + $0x300] sm:$0xff] %v1536
      %1665 = vst [vmem:[%s228 + $0x308] sm:$0xff] %v1537
      %1666 = vst [vmem:[%s228 + $0x310] sm:$0xff] %v1538
      %1667 = vst [vmem:[%s228 + $0x318] sm:$0xff] %v1539
      %1668 = vst [vmem:[%s228 + $0x320] sm:$0xff] %v1540
      %1669 = vst [vmem:[%s228 + $0x328] sm:$0xff] %v1541
      %1670 = vst [vmem:[%s228 + $0x330] sm:$0xff] %v1542
      %1671 = vst [vmem:[%s228 + $0x338] sm:$0xff] %v1543
      %1672 = vst [vmem:[%s228 + $0x340] sm:$0xff] %v1544
      %1673 = vst [vmem:[%s228 + $0x348] sm:$0xff] %v1545
      %1674 = vst [vmem:[%s228 + $0x350] sm:$0xff] %v1546
      %1675 = vst [vmem:[%s228 + $0x358] sm:$0xff] %v1547
      %1676 = vst [vmem:[%s228 + $0x360] sm:$0xff] %v1548
      %1677 = vst [vmem:[%s228 + $0x368] sm:$0xff] %v1549
      %1678 = vst [vmem:[%s228 + $0x370] sm:$0xff] %v1550
      %1679 = vst [vmem:[%s228 + $0x378] sm:$0xff] %v1551
      %1680 = vst [vmem:[%s228 + $0x380] sm:$0xff] %v1552
      %1681 = vst [vmem:[%s228 + $0x388] sm:$0xff] %v1553
      %1682 = vst [vmem:[%s228 + $0x390] sm:$0xff] %v1554
      %1683 = vst [vmem:[%s228 + $0x398] sm:$0xff] %v1555
      %1684 = vst [vmem:[%s228 + $0x3a0] sm:$0xff] %v1556
      %1685 = vst [vmem:[%s228 + $0x3a8] sm:$0xff] %v1557
      %1686 = vst [vmem:[%s228 + $0x3b0] sm:$0xff] %v1558
      %1687 = vst [vmem:[%s228 + $0x3b8] sm:$0xff] %v1559
      %1688 = vst [vmem:[%s228 + $0x3c0] sm:$0xff] %v1560
      %1689 = vst [vmem:[%s228 + $0x3c8] sm:$0xff] %v1561
      %1690 = vst [vmem:[%s228 + $0x3d0] sm:$0xff] %v1562
      %1691 = vst [vmem:[%s228 + $0x3d8] sm:$0xff] %v1563
      %1692 = vst [vmem:[%s228 + $0x3e0] sm:$0xff] %v1564
      %1693 = vst [vmem:[%s228 + $0x3e8] sm:$0xff] %v1565
      %1694 = vst [vmem:[%s228 + $0x3f0] sm:$0xff] %v1566
      %1695 = vst [vmem:[%s228 + $0x3f8] sm:$0xff] %v1567
      %s1696 = smul.u32 128, %s19
      %p1697 = scmp.lt.s32.totalorder %s18, 3
      %s1698 = scalar_select %p1697, %s18, 3
      %p1699 = scmp.lt.s32.totalorder %s1696, 255
      %s1700 = scalar_select %p1699, %s1696, 255
      %s1701 = smul.addr %s1698, 256
      %s1702 = sadd.s32 %s1700, %s1701
      %s1703 = smul.addr %s1702, 8
      %s1704 = scalar_lea.vmem %s3, %s1703
      // Predicated region
      $region33: #{_lambda_.17} parent=31 // pred_check
        %p1705 = pneg %p121
      $region34: #{_lambda_.17} parent=31 // pred_check_branch
        %1707 = sbr.rel (%p1705) target = $region36
      $region35: #{_lambda_.17} parent=31 // pred_region
        %s1708 = smul.u32 128, %s19
      $region36: #{_lambda_.17} parent=31 // pred_fallthru
        _
    $region32: #{_lambda_.17} parent=5 // pred_fallthru
      _
    %p1709 = scmp.le.s32.totalorder 2, %s9
    // Predicated region
    $region37: #{_lambda_.17} parent=5 // pred_check
      %p1710 = pneg %p1709
    $region38: #{_lambda_.17} parent=5 // pred_check_branch
      %1712 = sbr.rel (%p1710) target = $region40
    $region39: #{_lambda_.17} parent=5 // pred_region
      %s1713 = ssub.s32 %s9, 2
      // Predicated region
      $region41: #{_lambda_.17} parent=39 // pred_check
        %p1714 = pneg %p127
      $region42: #{_lambda_.17} parent=39 // pred_check_branch
        %1716 = sbr.rel (%p1714) target = $region44
      $region43: #{_lambda_.17} parent=39 // pred_region
        %s1717 = smul.u32 128, %s21
        %p1718 = scmp.lt.s32.totalorder %s20, 3
        %s1719 = scalar_select %p1718, %s20, 3
        %p1720 = scmp.lt.s32.totalorder %s1717, 255
        %s1721 = scalar_select %p1720, %s1717, 255
        %s1722 = smul.addr %s1719, 256
        %s1723 = sadd.s32 %s1721, %s1722
        %s1724 = smul.addr %s1723, 8
        %s1725 = scalar_lea.vmem %s3, %s1724
      $region44: #{_lambda_.17} parent=39 // pred_fallthru
        _
    $region40: #{_lambda_.17} parent=5 // pred_fallthru
      _
  $region6: #{_lambda_.17} parent=0 // loop_footer
    %s13 = sadd.s32 1, %s9
  $region7: #{_lambda_.17} parent=0 // loop_footer_branch
    %8 = sbr.rel target = $region3
  $region8: #{_lambda_.17} parent=0 // loop_exit
    _

</llo_original>
